<compile_context>
chip_gen: v7x
topology: tpu7x:2x2x1
jax: 0.10.0
libtpu: 0.0.40
codegen_flags: <defaults>
</compile_context>

<pallas_src>
import jax
import jax.numpy as jnp
from jax.experimental import pallas as pl
from jax.experimental.pallas import tpu as pltpu

NEG_SLOPE = 0.01      # LeakyReLU negative_slope
BN_EPS = 1e-5         # nn.BatchNorm2d default eps

# Conv2d hyper-parameters shared by all three layers.
KH, KW = 5, 3         # kernel
SH, SW = 3, 1         # stride
DH, DW = 2, 1         # dilation
PH, PW = 12, 1        # padding

W_IN = 30             # width (preserved by every layer: stride 1, pad 1, k=3)
W_EXT = 32            # width incl. 2 discarded cols -> 8/16-aligned sublanes


def _conv_h_out(h_in):
    return (h_in + 2 * PH - (DH * (KH - 1) + 1)) // SH + 1


# --------------------------------------------------------------------------- #
# Fused Pallas kernel (whole network for one sample per grid step, all in VMEM)
# --------------------------------------------------------------------------- #
def _make_net_kernel(layer_dims):
    """layer_dims = ((H1, HP1, C1), (H2, HP2, C2), (H3, HP3, C3))."""
    (H1, HP1, C1), (H2, HP2, C2), (H3, HP3, C3) = layer_dims
    Q2, Q3 = H2 + 2, H3 + 2          # q extent of the padded-row scratches

    def bn_lrelu_pool(acc, sc_ref, sh_ref, h_out, hp, cout):
        # acc: (h_out * W_EXT, cout) f32 conv output (conv bias folded into BN).
        y = acc * sc_ref[...] + sh_ref[...]
        y = jnp.maximum(y, NEG_SLOPE * y)                 # LeakyReLU, slope<1
        y = y.reshape(h_out, W_EXT, cout)[: 2 * hp]       # floor-mode pooling
        y = y.reshape(hp, 2, W_EXT, cout)
        return jnp.maximum(y[:, 0], y[:, 1])              # (hp, W_EXT, cout)

    def store_rows_banded(dst_ref, pooled, hp, cout, col_mask):
        # Mask the 2 junk columns, build the three kw-shifted channel bands in
        # f32 (the shifted-in zeros ARE the conv's left/right zero padding),
        # cast to bf16 and store each pooled row as ONE full-width aligned slab
        # at padded row PH + p = 3*q + r.
        pm = pooled * col_mask                                       # (hp,32,cout)
        zcol = jnp.zeros((hp, 1, cout), jnp.float32)
        b0 = jnp.concatenate([zcol, pm[:, : W_EXT - 1, :]], axis=1)  # kw=0: x[j-1]
        b2 = jnp.concatenate([pm[:, 1:, :], zcol], axis=1)           # kw=2: x[j+1]
        bands = jnp.concatenate([b0, pm, b2], axis=2).astype(jnp.bfloat16)
        for p in range(hp):
            q, r = divmod(PH + p, SH)
            dst_ref[q, r, :, :] = bands[p]

    def init_scratch(dst_ref, hp, q_dim, c3):
        # Zero only the padding (q, r) rows that the conv taps read; the rows
        # holding valid data are fully overwritten by store_rows_banded.
        q_lo = PH // SH
        q_hi = (PH + hp - 1) // SH
        if q_lo > 0:
            dst_ref[0:q_lo, :, :, :] = jnp.zeros((q_lo, SH, W_EXT, c3),
                                                 jnp.bfloat16)
        if q_hi + 1 < q_dim:
            dst_ref[q_hi + 1:q_dim, :, :, :] = jnp.zeros(
                (q_dim - q_hi - 1, SH, W_EXT, c3), jnp.bfloat16)
        for q in range(q_lo, q_hi + 1):
            for r in range(SH):
                if not (PH <= SH * q + r < PH + hp):
                    dst_ref[q, r, :, :] = jnp.zeros((W_EXT, c3), jnp.bfloat16)

    def conv_grouped(src_ref, w_ref, h_out, kcin, cout):
        # 5 accumulated per-kh matmuls, each K = KW*cin (kw taps are pre-banded
        # on the channel axis of the scratch).  Padded row 3h + 2*kh maps to a
        # contiguous, aligned (q, r) slab: q in [dq, dq+h_out), r fixed.
        m = h_out * W_EXT
        acc = None
        for kh in range(KH):
            dq, r = divmod(DH * kh, SH)
            a = src_ref[dq:dq + h_out, r, :, :].reshape(m, kcin)     # bf16
            contrib = jnp.dot(a, w_ref[kh], preferred_element_type=jnp.float32)
            acc = contrib if acc is None else acc + contrib
        return acc                                                   # (m, cout)

    def kernel(x1_ref, w1_ref, sc1_ref, sh1_ref,
               w2_ref, sc2_ref, sh2_ref,
               w3_ref, sc3_ref, sh3_ref,
               wfc_ref, bfc_ref,
               out_ref, s2_ref, s3_ref):
        col_ids = jax.lax.broadcasted_iota(jnp.int32, (1, W_EXT, 1), 1)
        col_mask = (col_ids < W_IN).astype(jnp.float32)

        init_scratch(s2_ref, HP1, Q2, KW * C1)
        init_scratch(s3_ref, HP2, Q3, KW * C2)

        # ---- layer 1 (Cin = 1): wrapper-side im2col -> one shallow matmul ----
        acc1 = jnp.dot(x1_ref[0, :, :], w1_ref[...],
                       preferred_element_type=jnp.float32)
        pooled1 = bn_lrelu_pool(acc1, sc1_ref, sh1_ref, H1, HP1, C1)
        store_rows_banded(s2_ref, pooled1, HP1, C1, col_mask)

        # ---- layer 2 ----------------------------------------------------------
        acc2 = conv_grouped(s2_ref, w2_ref, H2, KW * C1, C2)
        pooled2 = bn_lrelu_pool(acc2, sc2_ref, sh2_ref, H2, HP2, C2)
        store_rows_banded(s3_ref, pooled2, HP2, C2, col_mask)

        # ---- layer 3 ----------------------------------------------------------
        acc3 = conv_grouped(s3_ref, w3_ref, H3, KW * C2, C3)
        pooled3 = bn_lrelu_pool(acc3, sc3_ref, sh3_ref, H3, HP3, C3)

        # ---- fc1 (Linear 23040 -> 2) + Softmax --------------------------------
        # TODO(synk): nn.Dropout(p=0.5) is identity in eval/inference mode.
        # wfc is lane-dense (2, HP3, 32, C3) with zero weights on the two junk
        # columns; one broadcasted multiply feeds both logits' reductions.
        prod = pooled3[None] * wfc_ref[...].astype(jnp.float32)   # (2,HP3,32,C3)
        red = jnp.sum(prod, axis=3, keepdims=True)                # lane reduce
        red = jnp.sum(red, axis=2, keepdims=True)                 # sublane reduce
        red = jnp.sum(red, axis=1, keepdims=True)                 # (2,1,1,1)
        logits = red.reshape(2, 1) + bfc_ref[...]                 # (2,1)
        l0, l1 = logits[0:1, :], logits[1:2, :]
        mx = jnp.maximum(l0, l1)
        e0 = jnp.exp(l0 - mx)
        e1 = jnp.exp(l1 - mx)
        inv = 1.0 / (e0 + e1)
        p0 = e0 * inv
        p1 = e1 * inv
        lane = jax.lax.broadcasted_iota(jnp.int32, (8, 128), 1)
        out_ref[0, :, :] = jnp.where(lane == 0, p0,
                                     jnp.where(lane == 1, p1, 0.0))

    return kernel


# --------------------------------------------------------------------------- #
# Wrapper glue (tiny XLA-side prep; the hot path is one pallas_call)
# --------------------------------------------------------------------------- #
def _fold_bn(conv_b, gamma, beta, mean, var):
    scale = gamma / jnp.sqrt(var + BN_EPS)
    shift = (conv_b - mean) * scale + beta
    return scale, shift


def _layer1_im2col(x_hw, h_out):
    """(N, H, W) f32 -> (N, h_out*W_EXT, 16) bf16 im2col of the layer-1 input.

    Tap order t = kh*KW + kw (15 real taps + 1 zero tap to pad K 15 -> 16)."""
    n, h, w = x_hw.shape
    rows = SH * (h_out + 2)                      # covers padded rows 0..3h+8
    cols = W_EXT + KW - 1                        # covers padded cols 0..33
    x_pad = jnp.pad(x_hw, ((0, 0), (PH, rows - PH - h), (PW, cols - PW - w)))
    taps = [x_pad[:, DH * kh: DH * kh + SH * h_out: SH, kw: kw + W_EXT]
            for kh in range(KH) for kw in range(KW)]
    taps.append(jnp.zeros_like(taps[0]))
    x1 = jnp.stack(taps, axis=-1)                # (N, h_out, W_EXT, 16)
    return x1.reshape(n, h_out * W_EXT, KH * KW + 1).astype(jnp.bfloat16)


def _prep_fc_weight(wf, c3, hp3):
    """(23040, 2) FC weight, feature order = PyTorch NCHW flatten (c, h, w),
    -> lane-dense (2, hp3, W_EXT, c3) bf16 with zeros on the 2 extra columns."""
    w = wf.reshape(c3, hp3, W_IN, 2)
    w = jnp.transpose(w, (3, 1, 2, 0))           # (2, hp3, 30, c3)
    w = jnp.pad(w, ((0, 0), (0, 0), (0, W_EXT - W_IN), (0, 0)))
    return w.astype(jnp.bfloat16)


def _resident(arr):
    """Full-array block that stays resident across the batch grid."""
    zeros = (0,) * arr.ndim
    return pl.BlockSpec(arr.shape, lambda b, z=zeros: z)


@jax.jit
def net_forward(x_nchw, p1, p2, p3, wf, bf):
    """Forward pass == Net.forward (inference: dropout identity, BN running stats)."""
    n = x_nchw.shape[0]
    h_in = x_nchw.shape[2]
    H1 = _conv_h_out(h_in); HP1 = H1 // 2        # 12, 6
    H2 = _conv_h_out(HP1);  HP2 = H2 // 2        # 8, 4
    H3 = _conv_h_out(HP2);  HP3 = H3 // 2        # 7, 3
    C1, C2, C3 = p1["w"].shape[-1], p2["w"].shape[-1], p3["w"].shape[-1]

    # Layer-1 im2col on the tiny raw input (layers 2/3 are banded in-kernel).
    x1 = _layer1_im2col(x_nchw[:, 0].astype(jnp.float32), H1)

    # Conv weights HWIO -> grouped-K layout.  Layer-1: (16, C1) with a zero
    # 16th tap; layers 2/3: (KH, KW*Cin, Cout), K index = kw*Cin + cin.
    w1 = jnp.concatenate(
        [p1["w"].reshape(KH * KW, C1), jnp.zeros((1, C1), p1["w"].dtype)],
        axis=0).astype(jnp.bfloat16)
    w2 = p2["w"].reshape(KH, KW * C1, C2).astype(jnp.bfloat16)
    w3 = p3["w"].reshape(KH, KW * C2, C3).astype(jnp.bfloat16)

    sc1, sh1 = _fold_bn(p1["b"], p1["gamma"], p1["beta"], p1["mean"], p1["var"])
    sc2, sh2 = _fold_bn(p2["b"], p2["gamma"], p2["beta"], p2["mean"], p2["var"])
    sc3, sh3 = _fold_bn(p3["b"], p3["gamma"], p3["beta"], p3["mean"], p3["var"])
    sc1, sh1 = sc1.reshape(1, C1), sh1.reshape(1, C1)
    sc2, sh2 = sc2.reshape(1, C2), sh2.reshape(1, C2)
    sc3, sh3 = sc3.reshape(1, C3), sh3.reshape(1, C3)

    wfc = _prep_fc_weight(wf, C3, HP3)                   # (2, 3, 32, 256) bf16
    bfc = bf.astype(jnp.float32).reshape(2, 1)

    kernel = _make_net_kernel(((H1, HP1, C1), (H2, HP2, C2), (H3, HP3, C3)))

    out = pl.pallas_call(
        kernel,
        out_shape=jax.ShapeDtypeStruct((n, 8, 128), jnp.float32),
        grid=(n,),
        in_specs=[
            pl.BlockSpec((1, H1 * W_EXT, KH * KW + 1), lambda b: (b, 0, 0)),
            _resident(w1), _resident(sc1), _resident(sh1),
            _resident(w2), _resident(sc2), _resident(sh2),
            _resident(w3), _resident(sc3), _resident(sh3),
            _resident(wfc), _resident(bfc),
        ],
        out_specs=pl.BlockSpec((1, 8, 128), lambda b: (b, 0, 0)),
        scratch_shapes=[
            pltpu.VMEM((H2 + 2, SH, W_EXT, KW * C1), jnp.bfloat16),  # layer-2 in
            pltpu.VMEM((H3 + 2, SH, W_EXT, KW * C2), jnp.bfloat16),  # layer-3 in
        ],
        compiler_params=pltpu.CompilerParams(
            dimension_semantics=("parallel",),
            vmem_limit_bytes=32 * 1024 * 1024),
    )(x1, w1, sc1, sh1, w2, sc2, sh2, w3, sc3, sh3, wfc, bfc)

    return out[:, 0, :2]                                 # (N, 2) probabilities


# --------------------------------------------------------------------------- #
# Pure-XLA float32 reference (mirrors the PyTorch module) for validation
# --------------------------------------------------------------------------- #
def net_forward_reference(x_nchw, p1, p2, p3, wf, bf):
    def block(x, p):
        w_oihw = jnp.transpose(p["w"], (3, 2, 0, 1))
        y = jax.lax.conv_general_dilated(
            x, w_oihw, window_strides=(SH, SW),
            padding=((PH, PH), (PW, PW)), rhs_dilation=(DH, DW),
            dimension_numbers=("NCHW", "OIHW", "NCHW"))
        y = y + p["b"][None, :, None, None]
        scale = p["gamma"] / jnp.sqrt(p["var"] + BN_EPS)
        y = (y - p["mean"][None, :, None, None]) * scale[None, :, None, None] \
            + p["beta"][None, :, None, None]
        y = jnp.where(y > 0, y, NEG_SLOPE * y)
        return jax.lax.reduce_window(y, -jnp.inf, jax.lax.max,
                                     (1, 1, 2, 1), (1, 1, 2, 1), "VALID")

    x = x_nchw.astype(jnp.float32)
    x = block(x, p1)
    x = block(x, p2)
    x = block(x, p3)
    logits = x.reshape(x.shape[0], -1) @ wf + bf
    return jax.nn.softmax(logits, axis=1)


# --------------------------------------------------------------------------- #
# Parameters (deterministic, synthetic; HWIO conv weights, (in,out) FC weight)
# --------------------------------------------------------------------------- #
def init_params(key):
    def conv_block(k, cin, cout):
        ks = jax.random.split(k, 6)
        return dict(
            w=jax.random.normal(ks[0], (KH, KW, cin, cout), jnp.float32)
              * (1.0 / jnp.sqrt(KH * KW * cin)),
            b=0.01 * jax.random.normal(ks[1], (cout,), jnp.float32),
            gamma=1.0 + 0.1 * jax.random.normal(ks[2], (cout,), jnp.float32),
            beta=0.1 * jax.random.normal(ks[3], (cout,), jnp.float32),
            mean=0.1 * jax.random.normal(ks[4], (cout,), jnp.float32),
            var=1.0 + 0.1 * jax.random.uniform(ks[5], (cout,), jnp.float32),
        )

    ks = jax.random.split(key, 5)
    p1 = conv_block(ks[0], 1, 64)
    p2 = conv_block(ks[1], 64, 128)
    p3 = conv_block(ks[2], 128, 256)
    wf = jax.random.normal(ks[3], (23040, 2), jnp.float32) / jnp.sqrt(23040.0)
    bf = 0.01 * jax.random.normal(ks[4], (2,), jnp.float32)
    return p1, p2, p3, wf, bf


if __name__ == "__main__":
    key = jax.random.PRNGKey(0)
    kx, kp = jax.random.split(key)

    # Input (NCHW): (batch=2, channels=1, H=20, W=30).  The three conv/pool
    # stages give (2, 256, 3, 30) -> 23040 features == nn.Linear(23040, 2).
    x = jax.random.normal(kx, (2, 1, 20, 30), jnp.float32)
    params = init_params(kp)

    out = net_forward(x, *params)
    out = jax.block_until_ready(out)

    assert out.shape == (2, 2), out.shape
    assert bool(jnp.all(jnp.isfinite(out)))
    assert bool(jnp.allclose(jnp.sum(out, axis=1), 1.0, atol=1e-5))

    ref = jax.jit(net_forward_reference)(x, *params)
    assert bool(jnp.allclose(out, ref, atol=5e-2)), (out, ref)

    print("KERNEL_OK")
</pallas_src>

<mosaic_0001>
module attributes {stable_mosaic.version = 11 : i64} {
  func.func @kernel(%arg0: i32, %arg1: memref<1x384x16xbf16, #tpu.memory_space<vmem>>, %arg2: memref<16x64xbf16, #tpu.memory_space<vmem>>, %arg3: memref<1x64xf32, #tpu.memory_space<vmem>>, %arg4: memref<1x64xf32, #tpu.memory_space<vmem>>, %arg5: memref<5x192x128xbf16, #tpu.memory_space<vmem>>, %arg6: memref<1x128xf32, #tpu.memory_space<vmem>>, %arg7: memref<1x128xf32, #tpu.memory_space<vmem>>, %arg8: memref<5x384x256xbf16, #tpu.memory_space<vmem>>, %arg9: memref<1x256xf32, #tpu.memory_space<vmem>>, %arg10: memref<1x256xf32, #tpu.memory_space<vmem>>, %arg11: memref<2x3x32x256xbf16, #tpu.memory_space<vmem>>, %arg12: memref<2x1xf32, #tpu.memory_space<vmem>>, %arg13: memref<1x8x128xf32, #tpu.memory_space<vmem>>, %arg14: memref<10x3x32x192xbf16, #tpu.memory_space<vmem>>, %arg15: memref<9x3x32x384xbf16, #tpu.memory_space<vmem>>) attributes {dimension_semantics = [#tpu.dimension_semantics<parallel>], iteration_bounds = array<i64: 2>, scalar_prefetch = 0 : i64, scratch_operands = 2 : i64, tpu.core_type = #tpu.core_type<tc>, window_params = [{transform_indices = @transform_0, window_bounds = array<i64: 1, 384, 16>}, {pipeline_mode = #tpu.pipeline_mode<synchronous>, transform_indices = @transform_1, window_bounds = array<i64: 16, 64>}, {pipeline_mode = #tpu.pipeline_mode<synchronous>, transform_indices = @transform_2, window_bounds = array<i64: 1, 64>}, {pipeline_mode = #tpu.pipeline_mode<synchronous>, transform_indices = @transform_3, window_bounds = array<i64: 1, 64>}, {pipeline_mode = #tpu.pipeline_mode<synchronous>, transform_indices = @transform_4, window_bounds = array<i64: 5, 192, 128>}, {pipeline_mode = #tpu.pipeline_mode<synchronous>, transform_indices = @transform_5, window_bounds = array<i64: 1, 128>}, {pipeline_mode = #tpu.pipeline_mode<synchronous>, transform_indices = @transform_6, window_bounds = array<i64: 1, 128>}, {pipeline_mode = #tpu.pipeline_mode<synchronous>, transform_indices = @transform_7, window_bounds = array<i64: 5, 384, 256>}, {pipeline_mode = #tpu.pipeline_mode<synchronous>, transform_indices = @transform_8, window_bounds = array<i64: 1, 256>}, {pipeline_mode = #tpu.pipeline_mode<synchronous>, transform_indices = @transform_9, window_bounds = array<i64: 1, 256>}, {pipeline_mode = #tpu.pipeline_mode<synchronous>, transform_indices = @transform_10, window_bounds = array<i64: 2, 3, 32, 256>}, {pipeline_mode = #tpu.pipeline_mode<synchronous>, transform_indices = @transform_11, window_bounds = array<i64: 2, 1>}, {transform_indices = @transform_12, window_bounds = array<i64: 1, 8, 128>}]} {
    %0 = tpu.iota {dimensions = array<i32: 1>} : vector<1x32x1xi32>
    %c30_i32 = arith.constant 30 : i32
    %1 = vector.broadcast %c30_i32 : i32 to vector<1x32x1xi32>
    %2 = arith.cmpi slt, %0, %1 : vector<1x32x1xi32>
    %3 = arith.extui %2 : vector<1x32x1xi1> to vector<1x32x1xi32>
    %4 = arith.sitofp %3 : vector<1x32x1xi32> to vector<1x32x1xf32>
    %cst = arith.constant 0.000000e+00 : bf16
    %5 = vector.broadcast %cst : bf16 to vector<4x3x32x192xbf16>
    %c0 = arith.constant 0 : index
    %c0_0 = arith.constant 0 : index
    %c0_1 = arith.constant 0 : index
    %c0_2 = arith.constant 0 : index
    %6 = vector.load %arg14[%c0, %c0_0, %c0_1, %c0_2] : memref<10x3x32x192xbf16, #tpu.memory_space<vmem>>, vector<4x3x32x192xbf16>
    tpu.vector_store %arg14[%c0, %c0_0, %c0_1, %c0_2], %5 {strides = array<i32>} : memref<10x3x32x192xbf16, #tpu.memory_space<vmem>>, vector<4x3x32x192xbf16>,
    %cst_3 = arith.constant 0.000000e+00 : bf16
    %7 = vector.broadcast %cst_3 : bf16 to vector<4x3x32x192xbf16>
    %c6 = arith.constant 6 : index
    %c0_4 = arith.constant 0 : index
    %c0_5 = arith.constant 0 : index
    %c0_6 = arith.constant 0 : index
    %8 = vector.load %arg14[%c6, %c0_4, %c0_5, %c0_6] : memref<10x3x32x192xbf16, #tpu.memory_space<vmem>>, vector<4x3x32x192xbf16>
    tpu.vector_store %arg14[%c6, %c0_4, %c0_5, %c0_6], %7 {strides = array<i32>} : memref<10x3x32x192xbf16, #tpu.memory_space<vmem>>, vector<4x3x32x192xbf16>,
    %cst_7 = arith.constant 0.000000e+00 : bf16
    %9 = vector.broadcast %cst_7 : bf16 to vector<4x3x32x384xbf16>
    %c0_8 = arith.constant 0 : index
    %c0_9 = arith.constant 0 : index
    %c0_10 = arith.constant 0 : index
    %c0_11 = arith.constant 0 : index
    %10 = vector.load %arg15[%c0_8, %c0_9, %c0_10, %c0_11] : memref<9x3x32x384xbf16, #tpu.memory_space<vmem>>, vector<4x3x32x384xbf16>
    tpu.vector_store %arg15[%c0_8, %c0_9, %c0_10, %c0_11], %9 {strides = array<i32>} : memref<9x3x32x384xbf16, #tpu.memory_space<vmem>>, vector<4x3x32x384xbf16>,
    %cst_12 = arith.constant 0.000000e+00 : bf16
    %11 = vector.broadcast %cst_12 : bf16 to vector<3x3x32x384xbf16>
    %c6_13 = arith.constant 6 : index
    %c0_14 = arith.constant 0 : index
    %c0_15 = arith.constant 0 : index
    %c0_16 = arith.constant 0 : index
    %12 = vector.load %arg15[%c6_13, %c0_14, %c0_15, %c0_16] : memref<9x3x32x384xbf16, #tpu.memory_space<vmem>>, vector<3x3x32x384xbf16>
    tpu.vector_store %arg15[%c6_13, %c0_14, %c0_15, %c0_16], %11 {strides = array<i32>} : memref<9x3x32x384xbf16, #tpu.memory_space<vmem>>, vector<3x3x32x384xbf16>,
    %cst_17 = arith.constant 0.000000e+00 : bf16
    %13 = vector.broadcast %cst_17 : bf16 to vector<32x384xbf16>
    %c5 = arith.constant 5 : index
    %c1 = arith.constant 1 : index
    %c0_18 = arith.constant 0 : index
    %c0_19 = arith.constant 0 : index
    %14 = vector.load %arg15[%c5, %c1, %c0_18, %c0_19] : memref<9x3x32x384xbf16, #tpu.memory_space<vmem>>, vector<1x1x32x384xbf16>
    %15 = vector.shape_cast %14 : vector<1x1x32x384xbf16> to vector<32x384xbf16>
    %16 = vector.shape_cast %13 : vector<32x384xbf16> to vector<1x1x32x384xbf16>
    tpu.vector_store %arg15[%c5, %c1, %c0_18, %c0_19], %16 {strides = array<i32>} : memref<9x3x32x384xbf16, #tpu.memory_space<vmem>>, vector<1x1x32x384xbf16>,
    %cst_20 = arith.constant 0.000000e+00 : bf16
    %17 = vector.broadcast %cst_20 : bf16 to vector<32x384xbf16>
    %c5_21 = arith.constant 5 : index
    %c2 = arith.constant 2 : index
    %c0_22 = arith.constant 0 : index
    %c0_23 = arith.constant 0 : index
    %18 = vector.load %arg15[%c5_21, %c2, %c0_22, %c0_23] : memref<9x3x32x384xbf16, #tpu.memory_space<vmem>>, vector<1x1x32x384xbf16>
    %19 = vector.shape_cast %18 : vector<1x1x32x384xbf16> to vector<32x384xbf16>
    %20 = vector.shape_cast %17 : vector<32x384xbf16> to vector<1x1x32x384xbf16>
    tpu.vector_store %arg15[%c5_21, %c2, %c0_22, %c0_23], %20 {strides = array<i32>} : memref<9x3x32x384xbf16, #tpu.memory_space<vmem>>, vector<1x1x32x384xbf16>,
    %c0_24 = arith.constant 0 : index
    %c0_25 = arith.constant 0 : index
    %c0_26 = arith.constant 0 : index
    %21 = vector.load %arg1[%c0_24, %c0_25, %c0_26] : memref<1x384x16xbf16, #tpu.memory_space<vmem>>, vector<1x384x16xbf16>
    %22 = vector.shape_cast %21 : vector<1x384x16xbf16> to vector<384x16xbf16>
    %c0_27 = arith.constant 0 : index
    %c0_28 = arith.constant 0 : index
    %23 = vector.load %arg2[%c0_27, %c0_28] : memref<16x64xbf16, #tpu.memory_space<vmem>>, vector<16x64xbf16>
    %cst_29 = arith.constant dense<0.000000e+00> : vector<384x64xf32>
    %24 = tpu.matmul %22, %23, %cst_29 {dimension_numbers = #tpu.dot_dimension_numbers<[1], [0], [0], [1], [0, 0, 1, 1], [], []>} : vector<384x16xbf16>, vector<16x64xbf16>, vector<384x64xf32> -> vector<384x64xf32>
    %c0_30 = arith.constant 0 : index
    %c0_31 = arith.constant 0 : index
    %25 = vector.load %arg3[%c0_30, %c0_31] : memref<1x64xf32, #tpu.memory_space<vmem>>, vector<1x64xf32>
    %26 = vector.broadcast %25 : vector<1x64xf32> to vector<384x64xf32>
    %27 = arith.mulf %24, %26 : vector<384x64xf32>
    %c0_32 = arith.constant 0 : index
    %c0_33 = arith.constant 0 : index
    %28 = vector.load %arg4[%c0_32, %c0_33] : memref<1x64xf32, #tpu.memory_space<vmem>>, vector<1x64xf32>
    %29 = vector.broadcast %28 : vector<1x64xf32> to vector<384x64xf32>
    %30 = arith.addf %27, %29 : vector<384x64xf32>
    %cst_34 = arith.constant 0.00999999977 : f32
    %31 = vector.broadcast %cst_34 : f32 to vector<384x64xf32>
    %32 = arith.mulf %31, %30 : vector<384x64xf32>
    %33 = arith.maximumf %30, %32 : vector<384x64xf32>
    %34 = vector.shape_cast %33 : vector<384x64xf32> to vector<12x32x64xf32>
    %35 = vector.shape_cast %34 : vector<12x32x64xf32> to vector<6x2x32x64xf32>
    %36 = vector.extract_strided_slice %35 {offsets = [0, 0, 0, 0], sizes = [6, 1, 32, 64], strides = [1, 1, 1, 1]} : vector<6x2x32x64xf32> to vector<6x1x32x64xf32>
    %37 = vector.shape_cast %36 : vector<6x1x32x64xf32> to vector<6x32x64xf32>
    %38 = vector.extract_strided_slice %35 {offsets = [0, 1, 0, 0], sizes = [6, 1, 32, 64], strides = [1, 1, 1, 1]} : vector<6x2x32x64xf32> to vector<6x1x32x64xf32>
    %39 = vector.shape_cast %38 : vector<6x1x32x64xf32> to vector<6x32x64xf32>
    %40 = arith.maximumf %37, %39 : vector<6x32x64xf32>
    %41 = vector.broadcast %4 : vector<1x32x1xf32> to vector<6x32x64xf32>
    %42 = arith.mulf %40, %41 : vector<6x32x64xf32>
    %cst_35 = arith.constant 0.000000e+00 : f32
    %43 = vector.broadcast %cst_35 : f32 to vector<6x1x64xf32>
    %44 = vector.extract_strided_slice %42 {offsets = [0, 0, 0], sizes = [6, 31, 64], strides = [1, 1, 1]} : vector<6x32x64xf32> to vector<6x31x64xf32>
    %45 = tpu.concatenate %43, %44 in 1 : vector<6x1x64xf32>, vector<6x31x64xf32> -> vector<6x32x64xf32>
    %46 = vector.extract_strided_slice %42 {offsets = [0, 1, 0], sizes = [6, 31, 64], strides = [1, 1, 1]} : vector<6x32x64xf32> to vector<6x31x64xf32>
    %47 = tpu.concatenate %46, %43 in 1 : vector<6x31x64xf32>, vector<6x1x64xf32> -> vector<6x32x64xf32>
    %48 = tpu.concatenate %45, %42, %47 in 2 : vector<6x32x64xf32>, vector<6x32x64xf32>, vector<6x32x64xf32> -> vector<6x32x192xf32>
    %49 = arith.truncf %48 : vector<6x32x192xf32> to vector<6x32x192xbf16>
    %50 = vector.extract_strided_slice %49 {offsets = [0, 0, 0], sizes = [1, 32, 192], strides = [1, 1, 1]} : vector<6x32x192xbf16> to vector<1x32x192xbf16>
    %51 = vector.shape_cast %50 : vector<1x32x192xbf16> to vector<32x192xbf16>
    %c4 = arith.constant 4 : index
    %c0_36 = arith.constant 0 : index
    %c0_37 = arith.constant 0 : index
    %c0_38 = arith.constant 0 : index
    %52 = vector.load %arg14[%c4, %c0_36, %c0_37, %c0_38] : memref<10x3x32x192xbf16, #tpu.memory_space<vmem>>, vector<1x1x32x192xbf16>
    %53 = vector.shape_cast %52 : vector<1x1x32x192xbf16> to vector<32x192xbf16>
    %54 = vector.shape_cast %51 : vector<32x192xbf16> to vector<1x1x32x192xbf16>
    tpu.vector_store %arg14[%c4, %c0_36, %c0_37, %c0_38], %54 {strides = array<i32>} : memref<10x3x32x192xbf16, #tpu.memory_space<vmem>>, vector<1x1x32x192xbf16>,
    %55 = vector.extract_strided_slice %49 {offsets = [1, 0, 0], sizes = [1, 32, 192], strides = [1, 1, 1]} : vector<6x32x192xbf16> to vector<1x32x192xbf16>
    %56 = vector.shape_cast %55 : vector<1x32x192xbf16> to vector<32x192xbf16>
    %c4_39 = arith.constant 4 : index
    %c1_40 = arith.constant 1 : index
    %c0_41 = arith.constant 0 : index
    %c0_42 = arith.constant 0 : index
    %57 = vector.load %arg14[%c4_39, %c1_40, %c0_41, %c0_42] : memref<10x3x32x192xbf16, #tpu.memory_space<vmem>>, vector<1x1x32x192xbf16>
    %58 = vector.shape_cast %57 : vector<1x1x32x192xbf16> to vector<32x192xbf16>
    %59 = vector.shape_cast %56 : vector<32x192xbf16> to vector<1x1x32x192xbf16>
    tpu.vector_store %arg14[%c4_39, %c1_40, %c0_41, %c0_42], %59 {strides = array<i32>} : memref<10x3x32x192xbf16, #tpu.memory_space<vmem>>, vector<1x1x32x192xbf16>,
    %60 = vector.extract_strided_slice %49 {offsets = [2, 0, 0], sizes = [1, 32, 192], strides = [1, 1, 1]} : vector<6x32x192xbf16> to vector<1x32x192xbf16>
    %61 = vector.shape_cast %60 : vector<1x32x192xbf16> to vector<32x192xbf16>
    %c4_43 = arith.constant 4 : index
    %c2_44 = arith.constant 2 : index
    %c0_45 = arith.constant 0 : index
    %c0_46 = arith.constant 0 : index
    %62 = vector.load %arg14[%c4_43, %c2_44, %c0_45, %c0_46] : memref<10x3x32x192xbf16, #tpu.memory_space<vmem>>, vector<1x1x32x192xbf16>
    %63 = vector.shape_cast %62 : vector<1x1x32x192xbf16> to vector<32x192xbf16>
    %64 = vector.shape_cast %61 : vector<32x192xbf16> to vector<1x1x32x192xbf16>
    tpu.vector_store %arg14[%c4_43, %c2_44, %c0_45, %c0_46], %64 {strides = array<i32>} : memref<10x3x32x192xbf16, #tpu.memory_space<vmem>>, vector<1x1x32x192xbf16>,
    %65 = vector.extract_strided_slice %49 {offsets = [3, 0, 0], sizes = [1, 32, 192], strides = [1, 1, 1]} : vector<6x32x192xbf16> to vector<1x32x192xbf16>
    %66 = vector.shape_cast %65 : vector<1x32x192xbf16> to vector<32x192xbf16>
    %c5_47 = arith.constant 5 : index
    %c0_48 = arith.constant 0 : index
    %c0_49 = arith.constant 0 : index
    %c0_50 = arith.constant 0 : index
    %67 = vector.load %arg14[%c5_47, %c0_48, %c0_49, %c0_50] : memref<10x3x32x192xbf16, #tpu.memory_space<vmem>>, vector<1x1x32x192xbf16>
    %68 = vector.shape_cast %67 : vector<1x1x32x192xbf16> to vector<32x192xbf16>
    %69 = vector.shape_cast %66 : vector<32x192xbf16> to vector<1x1x32x192xbf16>
    tpu.vector_store %arg14[%c5_47, %c0_48, %c0_49, %c0_50], %69 {strides = array<i32>} : memref<10x3x32x192xbf16, #tpu.memory_space<vmem>>, vector<1x1x32x192xbf16>,
    %70 = vector.extract_strided_slice %49 {offsets = [4, 0, 0], sizes = [1, 32, 192], strides = [1, 1, 1]} : vector<6x32x192xbf16> to vector<1x32x192xbf16>
    %71 = vector.shape_cast %70 : vector<1x32x192xbf16> to vector<32x192xbf16>
    %c5_51 = arith.constant 5 : index
    %c1_52 = arith.constant 1 : index
    %c0_53 = arith.constant 0 : index
    %c0_54 = arith.constant 0 : index
    %72 = vector.load %arg14[%c5_51, %c1_52, %c0_53, %c0_54] : memref<10x3x32x192xbf16, #tpu.memory_space<vmem>>, vector<1x1x32x192xbf16>
    %73 = vector.shape_cast %72 : vector<1x1x32x192xbf16> to vector<32x192xbf16>
    %74 = vector.shape_cast %71 : vector<32x192xbf16> to vector<1x1x32x192xbf16>
    tpu.vector_store %arg14[%c5_51, %c1_52, %c0_53, %c0_54], %74 {strides = array<i32>} : memref<10x3x32x192xbf16, #tpu.memory_space<vmem>>, vector<1x1x32x192xbf16>,
    %75 = vector.extract_strided_slice %49 {offsets = [5, 0, 0], sizes = [1, 32, 192], strides = [1, 1, 1]} : vector<6x32x192xbf16> to vector<1x32x192xbf16>
    %76 = vector.shape_cast %75 : vector<1x32x192xbf16> to vector<32x192xbf16>
    %c5_55 = arith.constant 5 : index
    %c2_56 = arith.constant 2 : index
    %c0_57 = arith.constant 0 : index
    %c0_58 = arith.constant 0 : index
    %77 = vector.load %arg14[%c5_55, %c2_56, %c0_57, %c0_58] : memref<10x3x32x192xbf16, #tpu.memory_space<vmem>>, vector<1x1x32x192xbf16>
    %78 = vector.shape_cast %77 : vector<1x1x32x192xbf16> to vector<32x192xbf16>
    %79 = vector.shape_cast %76 : vector<32x192xbf16> to vector<1x1x32x192xbf16>
    tpu.vector_store %arg14[%c5_55, %c2_56, %c0_57, %c0_58], %79 {strides = array<i32>} : memref<10x3x32x192xbf16, #tpu.memory_space<vmem>>, vector<1x1x32x192xbf16>,
    %c0_59 = arith.constant 0 : index
    %c0_60 = arith.constant 0 : index
    %c0_61 = arith.constant 0 : index
    %c0_62 = arith.constant 0 : index
    %80 = vector.load %arg14[%c0_59, %c0_60, %c0_61, %c0_62] : memref<10x3x32x192xbf16, #tpu.memory_space<vmem>>, vector<8x1x32x192xbf16>
    %81 = vector.shape_cast %80 : vector<8x1x32x192xbf16> to vector<8x32x192xbf16>
    %82 = vector.shape_cast %81 : vector<8x32x192xbf16> to vector<256x192xbf16>
    %c0_63 = arith.constant 0 : index
    %c0_64 = arith.constant 0 : index
    %c0_65 = arith.constant 0 : index
    %83 = vector.load %arg5[%c0_63, %c0_64, %c0_65] : memref<5x192x128xbf16, #tpu.memory_space<vmem>>, vector<1x192x128xbf16>
    %84 = vector.shape_cast %83 : vector<1x192x128xbf16> to vector<192x128xbf16>
    %cst_66 = arith.constant dense<0.000000e+00> : vector<256x128xf32>
    %85 = tpu.matmul %82, %84, %cst_66 {dimension_numbers = #tpu.dot_dimension_numbers<[1], [0], [0], [1], [0, 0, 1, 1], [], []>} : vector<256x192xbf16>, vector<192x128xbf16>, vector<256x128xf32> -> vector<256x128xf32>
    %c0_67 = arith.constant 0 : index
    %c2_68 = arith.constant 2 : index
    %c0_69 = arith.constant 0 : index
    %c0_70 = arith.constant 0 : index
    %86 = vector.load %arg14[%c0_67, %c2_68, %c0_69, %c0_70] : memref<10x3x32x192xbf16, #tpu.memory_space<vmem>>, vector<8x1x32x192xbf16>
    %87 = vector.shape_cast %86 : vector<8x1x32x192xbf16> to vector<8x32x192xbf16>
    %88 = vector.shape_cast %87 : vector<8x32x192xbf16> to vector<256x192xbf16>
    %c1_71 = arith.constant 1 : index
    %c0_72 = arith.constant 0 : index
    %c0_73 = arith.constant 0 : index
    %89 = vector.load %arg5[%c1_71, %c0_72, %c0_73] : memref<5x192x128xbf16, #tpu.memory_space<vmem>>, vector<1x192x128xbf16>
    %90 = vector.shape_cast %89 : vector<1x192x128xbf16> to vector<192x128xbf16>
    %cst_74 = arith.constant dense<0.000000e+00> : vector<256x128xf32>
    %91 = tpu.matmul %88, %90, %cst_74 {dimension_numbers = #tpu.dot_dimension_numbers<[1], [0], [0], [1], [0, 0, 1, 1], [], []>} : vector<256x192xbf16>, vector<192x128xbf16>, vector<256x128xf32> -> vector<256x128xf32>
    %92 = arith.addf %85, %91 : vector<256x128xf32>
    %c1_75 = arith.constant 1 : index
    %c1_76 = arith.constant 1 : index
    %c0_77 = arith.constant 0 : index
    %c0_78 = arith.constant 0 : index
    %93 = vector.load %arg14[%c1_75, %c1_76, %c0_77, %c0_78] : memref<10x3x32x192xbf16, #tpu.memory_space<vmem>>, vector<8x1x32x192xbf16>
    %94 = vector.shape_cast %93 : vector<8x1x32x192xbf16> to vector<8x32x192xbf16>
    %95 = vector.shape_cast %94 : vector<8x32x192xbf16> to vector<256x192xbf16>
    %c2_79 = arith.constant 2 : index
    %c0_80 = arith.constant 0 : index
    %c0_81 = arith.constant 0 : index
    %96 = vector.load %arg5[%c2_79, %c0_80, %c0_81] : memref<5x192x128xbf16, #tpu.memory_space<vmem>>, vector<1x192x128xbf16>
    %97 = vector.shape_cast %96 : vector<1x192x128xbf16> to vector<192x128xbf16>
    %cst_82 = arith.constant dense<0.000000e+00> : vector<256x128xf32>
    %98 = tpu.matmul %95, %97, %cst_82 {dimension_numbers = #tpu.dot_dimension_numbers<[1], [0], [0], [1], [0, 0, 1, 1], [], []>} : vector<256x192xbf16>, vector<192x128xbf16>, vector<256x128xf32> -> vector<256x128xf32>
    %99 = arith.addf %92, %98 : vector<256x128xf32>
    %c2_83 = arith.constant 2 : index
    %c0_84 = arith.constant 0 : index
    %c0_85 = arith.constant 0 : index
    %c0_86 = arith.constant 0 : index
    %100 = vector.load %arg14[%c2_83, %c0_84, %c0_85, %c0_86] : memref<10x3x32x192xbf16, #tpu.memory_space<vmem>>, vector<8x1x32x192xbf16>
    %101 = vector.shape_cast %100 : vector<8x1x32x192xbf16> to vector<8x32x192xbf16>
    %102 = vector.shape_cast %101 : vector<8x32x192xbf16> to vector<256x192xbf16>
    %c3 = arith.constant 3 : index
    %c0_87 = arith.constant 0 : index
    %c0_88 = arith.constant 0 : index
    %103 = vector.load %arg5[%c3, %c0_87, %c0_88] : memref<5x192x128xbf16, #tpu.memory_space<vmem>>, vector<1x192x128xbf16>
    %104 = vector.shape_cast %103 : vector<1x192x128xbf16> to vector<192x128xbf16>
    %cst_89 = arith.constant dense<0.000000e+00> : vector<256x128xf32>
    %105 = tpu.matmul %102, %104, %cst_89 {dimension_numbers = #tpu.dot_dimension_numbers<[1], [0], [0], [1], [0, 0, 1, 1], [], []>} : vector<256x192xbf16>, vector<192x128xbf16>, vector<256x128xf32> -> vector<256x128xf32>
    %106 = arith.addf %99, %105 : vector<256x128xf32>
    %c2_90 = arith.constant 2 : index
    %c2_91 = arith.constant 2 : index
    %c0_92 = arith.constant 0 : index
    %c0_93 = arith.constant 0 : index
    %107 = vector.load %arg14[%c2_90, %c2_91, %c0_92, %c0_93] : memref<10x3x32x192xbf16, #tpu.memory_space<vmem>>, vector<8x1x32x192xbf16>
    %108 = vector.shape_cast %107 : vector<8x1x32x192xbf16> to vector<8x32x192xbf16>
    %109 = vector.shape_cast %108 : vector<8x32x192xbf16> to vector<256x192xbf16>
    %c4_94 = arith.constant 4 : index
    %c0_95 = arith.constant 0 : index
    %c0_96 = arith.constant 0 : index
    %110 = vector.load %arg5[%c4_94, %c0_95, %c0_96] : memref<5x192x128xbf16, #tpu.memory_space<vmem>>, vector<1x192x128xbf16>
    %111 = vector.shape_cast %110 : vector<1x192x128xbf16> to vector<192x128xbf16>
    %cst_97 = arith.constant dense<0.000000e+00> : vector<256x128xf32>
    %112 = tpu.matmul %109, %111, %cst_97 {dimension_numbers = #tpu.dot_dimension_numbers<[1], [0], [0], [1], [0, 0, 1, 1], [], []>} : vector<256x192xbf16>, vector<192x128xbf16>, vector<256x128xf32> -> vector<256x128xf32>
    %113 = arith.addf %106, %112 : vector<256x128xf32>
    %c0_98 = arith.constant 0 : index
    %c0_99 = arith.constant 0 : index
    %114 = vector.load %arg6[%c0_98, %c0_99] : memref<1x128xf32, #tpu.memory_space<vmem>>, vector<1x128xf32>
    %115 = vector.broadcast %114 : vector<1x128xf32> to vector<256x128xf32>
    %116 = arith.mulf %113, %115 : vector<256x128xf32>
    %c0_100 = arith.constant 0 : index
    %c0_101 = arith.constant 0 : index
    %117 = vector.load %arg7[%c0_100, %c0_101] : memref<1x128xf32, #tpu.memory_space<vmem>>, vector<1x128xf32>
    %118 = vector.broadcast %117 : vector<1x128xf32> to vector<256x128xf32>
    %119 = arith.addf %116, %118 : vector<256x128xf32>
    %cst_102 = arith.constant 0.00999999977 : f32
    %120 = vector.broadcast %cst_102 : f32 to vector<256x128xf32>
    %121 = arith.mulf %120, %119 : vector<256x128xf32>
    %122 = arith.maximumf %119, %121 : vector<256x128xf32>
    %123 = vector.shape_cast %122 : vector<256x128xf32> to vector<8x32x128xf32>
    %124 = vector.shape_cast %123 : vector<8x32x128xf32> to vector<4x2x32x128xf32>
    %125 = vector.extract_strided_slice %124 {offsets = [0, 0, 0, 0], sizes = [4, 1, 32, 128], strides = [1, 1, 1, 1]} : vector<4x2x32x128xf32> to vector<4x1x32x128xf32>
    %126 = vector.shape_cast %125 : vector<4x1x32x128xf32> to vector<4x32x128xf32>
    %127 = vector.extract_strided_slice %124 {offsets = [0, 1, 0, 0], sizes = [4, 1, 32, 128], strides = [1, 1, 1, 1]} : vector<4x2x32x128xf32> to vector<4x1x32x128xf32>
    %128 = vector.shape_cast %127 : vector<4x1x32x128xf32> to vector<4x32x128xf32>
    %129 = arith.maximumf %126, %128 : vector<4x32x128xf32>
    %130 = vector.broadcast %4 : vector<1x32x1xf32> to vector<4x32x128xf32>
    %131 = arith.mulf %129, %130 : vector<4x32x128xf32>
    %cst_103 = arith.constant 0.000000e+00 : f32
    %132 = vector.broadcast %cst_103 : f32 to vector<4x1x128xf32>
    %133 = vector.extract_strided_slice %131 {offsets = [0, 0, 0], sizes = [4, 31, 128], strides = [1, 1, 1]} : vector<4x32x128xf32> to vector<4x31x128xf32>
    %134 = tpu.concatenate %132, %133 in 1 : vector<4x1x128xf32>, vector<4x31x128xf32> -> vector<4x32x128xf32>
    %135 = vector.extract_strided_slice %131 {offsets = [0, 1, 0], sizes = [4, 31, 128], strides = [1, 1, 1]} : vector<4x32x128xf32> to vector<4x31x128xf32>
    %136 = tpu.concatenate %135, %132 in 1 : vector<4x31x128xf32>, vector<4x1x128xf32> -> vector<4x32x128xf32>
    %137 = tpu.concatenate %134, %131, %136 in 2 : vector<4x32x128xf32>, vector<4x32x128xf32>, vector<4x32x128xf32> -> vector<4x32x384xf32>
    %138 = arith.truncf %137 : vector<4x32x384xf32> to vector<4x32x384xbf16>
    %139 = vector.extract_strided_slice %138 {offsets = [0, 0, 0], sizes = [1, 32, 384], strides = [1, 1, 1]} : vector<4x32x384xbf16> to vector<1x32x384xbf16>
    %140 = vector.shape_cast %139 : vector<1x32x384xbf16> to vector<32x384xbf16>
    %c4_104 = arith.constant 4 : index
    %c0_105 = arith.constant 0 : index
    %c0_106 = arith.constant 0 : index
    %c0_107 = arith.constant 0 : index
    %141 = vector.load %arg15[%c4_104, %c0_105, %c0_106, %c0_107] : memref<9x3x32x384xbf16, #tpu.memory_space<vmem>>, vector<1x1x32x384xbf16>
    %142 = vector.shape_cast %141 : vector<1x1x32x384xbf16> to vector<32x384xbf16>
    %143 = vector.shape_cast %140 : vector<32x384xbf16> to vector<1x1x32x384xbf16>
    tpu.vector_store %arg15[%c4_104, %c0_105, %c0_106, %c0_107], %143 {strides = array<i32>} : memref<9x3x32x384xbf16, #tpu.memory_space<vmem>>, vector<1x1x32x384xbf16>,
    %144 = vector.extract_strided_slice %138 {offsets = [1, 0, 0], sizes = [1, 32, 384], strides = [1, 1, 1]} : vector<4x32x384xbf16> to vector<1x32x384xbf16>
    %145 = vector.shape_cast %144 : vector<1x32x384xbf16> to vector<32x384xbf16>
    %c4_108 = arith.constant 4 : index
    %c1_109 = arith.constant 1 : index
    %c0_110 = arith.constant 0 : index
    %c0_111 = arith.constant 0 : index
    %146 = vector.load %arg15[%c4_108, %c1_109, %c0_110, %c0_111] : memref<9x3x32x384xbf16, #tpu.memory_space<vmem>>, vector<1x1x32x384xbf16>
    %147 = vector.shape_cast %146 : vector<1x1x32x384xbf16> to vector<32x384xbf16>
    %148 = vector.shape_cast %145 : vector<32x384xbf16> to vector<1x1x32x384xbf16>
    tpu.vector_store %arg15[%c4_108, %c1_109, %c0_110, %c0_111], %148 {strides = array<i32>} : memref<9x3x32x384xbf16, #tpu.memory_space<vmem>>, vector<1x1x32x384xbf16>,
    %149 = vector.extract_strided_slice %138 {offsets = [2, 0, 0], sizes = [1, 32, 384], strides = [1, 1, 1]} : vector<4x32x384xbf16> to vector<1x32x384xbf16>
    %150 = vector.shape_cast %149 : vector<1x32x384xbf16> to vector<32x384xbf16>
    %c4_112 = arith.constant 4 : index
    %c2_113 = arith.constant 2 : index
    %c0_114 = arith.constant 0 : index
    %c0_115 = arith.constant 0 : index
    %151 = vector.load %arg15[%c4_112, %c2_113, %c0_114, %c0_115] : memref<9x3x32x384xbf16, #tpu.memory_space<vmem>>, vector<1x1x32x384xbf16>
    %152 = vector.shape_cast %151 : vector<1x1x32x384xbf16> to vector<32x384xbf16>
    %153 = vector.shape_cast %150 : vector<32x384xbf16> to vector<1x1x32x384xbf16>
    tpu.vector_store %arg15[%c4_112, %c2_113, %c0_114, %c0_115], %153 {strides = array<i32>} : memref<9x3x32x384xbf16, #tpu.memory_space<vmem>>, vector<1x1x32x384xbf16>,
    %154 = vector.extract_strided_slice %138 {offsets = [3, 0, 0], sizes = [1, 32, 384], strides = [1, 1, 1]} : vector<4x32x384xbf16> to vector<1x32x384xbf16>
    %155 = vector.shape_cast %154 : vector<1x32x384xbf16> to vector<32x384xbf16>
    %c5_116 = arith.constant 5 : index
    %c0_117 = arith.constant 0 : index
    %c0_118 = arith.constant 0 : index
    %c0_119 = arith.constant 0 : index
    %156 = vector.load %arg15[%c5_116, %c0_117, %c0_118, %c0_119] : memref<9x3x32x384xbf16, #tpu.memory_space<vmem>>, vector<1x1x32x384xbf16>
    %157 = vector.shape_cast %156 : vector<1x1x32x384xbf16> to vector<32x384xbf16>
    %158 = vector.shape_cast %155 : vector<32x384xbf16> to vector<1x1x32x384xbf16>
    tpu.vector_store %arg15[%c5_116, %c0_117, %c0_118, %c0_119], %158 {strides = array<i32>} : memref<9x3x32x384xbf16, #tpu.memory_space<vmem>>, vector<1x1x32x384xbf16>,
    %c0_120 = arith.constant 0 : index
    %c0_121 = arith.constant 0 : index
    %c0_122 = arith.constant 0 : index
    %c0_123 = arith.constant 0 : index
    %159 = vector.load %arg15[%c0_120, %c0_121, %c0_122, %c0_123] : memref<9x3x32x384xbf16, #tpu.memory_space<vmem>>, vector<7x1x32x384xbf16>
    %160 = vector.shape_cast %159 : vector<7x1x32x384xbf16> to vector<7x32x384xbf16>
    %161 = vector.shape_cast %160 : vector<7x32x384xbf16> to vector<224x384xbf16>
    %c0_124 = arith.constant 0 : index
    %c0_125 = arith.constant 0 : index
    %c0_126 = arith.constant 0 : index
    %162 = vector.load %arg8[%c0_124, %c0_125, %c0_126] : memref<5x384x256xbf16, #tpu.memory_space<vmem>>, vector<1x384x256xbf16>
    %163 = vector.shape_cast %162 : vector<1x384x256xbf16> to vector<384x256xbf16>
    %cst_127 = arith.constant dense<0.000000e+00> : vector<224x256xf32>
    %164 = tpu.matmul %161, %163, %cst_127 {dimension_numbers = #tpu.dot_dimension_numbers<[1], [0], [0], [1], [0, 0, 1, 1], [], []>} : vector<224x384xbf16>, vector<384x256xbf16>, vector<224x256xf32> -> vector<224x256xf32>
    %c0_128 = arith.constant 0 : index
    %c2_129 = arith.constant 2 : index
    %c0_130 = arith.constant 0 : index
    %c0_131 = arith.constant 0 : index
    %165 = vector.load %arg15[%c0_128, %c2_129, %c0_130, %c0_131] : memref<9x3x32x384xbf16, #tpu.memory_space<vmem>>, vector<7x1x32x384xbf16>
    %166 = vector.shape_cast %165 : vector<7x1x32x384xbf16> to vector<7x32x384xbf16>
    %167 = vector.shape_cast %166 : vector<7x32x384xbf16> to vector<224x384xbf16>
    %c1_132 = arith.constant 1 : index
    %c0_133 = arith.constant 0 : index
    %c0_134 = arith.constant 0 : index
    %168 = vector.load %arg8[%c1_132, %c0_133, %c0_134] : memref<5x384x256xbf16, #tpu.memory_space<vmem>>, vector<1x384x256xbf16>
    %169 = vector.shape_cast %168 : vector<1x384x256xbf16> to vector<384x256xbf16>
    %cst_135 = arith.constant dense<0.000000e+00> : vector<224x256xf32>
    %170 = tpu.matmul %167, %169, %cst_135 {dimension_numbers = #tpu.dot_dimension_numbers<[1], [0], [0], [1], [0, 0, 1, 1], [], []>} : vector<224x384xbf16>, vector<384x256xbf16>, vector<224x256xf32> -> vector<224x256xf32>
    %171 = arith.addf %164, %170 : vector<224x256xf32>
    %c1_136 = arith.constant 1 : index
    %c1_137 = arith.constant 1 : index
    %c0_138 = arith.constant 0 : index
    %c0_139 = arith.constant 0 : index
    %172 = vector.load %arg15[%c1_136, %c1_137, %c0_138, %c0_139] : memref<9x3x32x384xbf16, #tpu.memory_space<vmem>>, vector<7x1x32x384xbf16>
    %173 = vector.shape_cast %172 : vector<7x1x32x384xbf16> to vector<7x32x384xbf16>
    %174 = vector.shape_cast %173 : vector<7x32x384xbf16> to vector<224x384xbf16>
    %c2_140 = arith.constant 2 : index
    %c0_141 = arith.constant 0 : index
    %c0_142 = arith.constant 0 : index
    %175 = vector.load %arg8[%c2_140, %c0_141, %c0_142] : memref<5x384x256xbf16, #tpu.memory_space<vmem>>, vector<1x384x256xbf16>
    %176 = vector.shape_cast %175 : vector<1x384x256xbf16> to vector<384x256xbf16>
    %cst_143 = arith.constant dense<0.000000e+00> : vector<224x256xf32>
    %177 = tpu.matmul %174, %176, %cst_143 {dimension_numbers = #tpu.dot_dimension_numbers<[1], [0], [0], [1], [0, 0, 1, 1], [], []>} : vector<224x384xbf16>, vector<384x256xbf16>, vector<224x256xf32> -> vector<224x256xf32>
    %178 = arith.addf %171, %177 : vector<224x256xf32>
    %c2_144 = arith.constant 2 : index
    %c0_145 = arith.constant 0 : index
    %c0_146 = arith.constant 0 : index
    %c0_147 = arith.constant 0 : index
    %179 = vector.load %arg15[%c2_144, %c0_145, %c0_146, %c0_147] : memref<9x3x32x384xbf16, #tpu.memory_space<vmem>>, vector<7x1x32x384xbf16>
    %180 = vector.shape_cast %179 : vector<7x1x32x384xbf16> to vector<7x32x384xbf16>
    %181 = vector.shape_cast %180 : vector<7x32x384xbf16> to vector<224x384xbf16>
    %c3_148 = arith.constant 3 : index
    %c0_149 = arith.constant 0 : index
    %c0_150 = arith.constant 0 : index
    %182 = vector.load %arg8[%c3_148, %c0_149, %c0_150] : memref<5x384x256xbf16, #tpu.memory_space<vmem>>, vector<1x384x256xbf16>
    %183 = vector.shape_cast %182 : vector<1x384x256xbf16> to vector<384x256xbf16>
    %cst_151 = arith.constant dense<0.000000e+00> : vector<224x256xf32>
    %184 = tpu.matmul %181, %183, %cst_151 {dimension_numbers = #tpu.dot_dimension_numbers<[1], [0], [0], [1], [0, 0, 1, 1], [], []>} : vector<224x384xbf16>, vector<384x256xbf16>, vector<224x256xf32> -> vector<224x256xf32>
    %185 = arith.addf %178, %184 : vector<224x256xf32>
    %c2_152 = arith.constant 2 : index
    %c2_153 = arith.constant 2 : index
    %c0_154 = arith.constant 0 : index
    %c0_155 = arith.constant 0 : index
    %186 = vector.load %arg15[%c2_152, %c2_153, %c0_154, %c0_155] : memref<9x3x32x384xbf16, #tpu.memory_space<vmem>>, vector<7x1x32x384xbf16>
    %187 = vector.shape_cast %186 : vector<7x1x32x384xbf16> to vector<7x32x384xbf16>
    %188 = vector.shape_cast %187 : vector<7x32x384xbf16> to vector<224x384xbf16>
    %c4_156 = arith.constant 4 : index
    %c0_157 = arith.constant 0 : index
    %c0_158 = arith.constant 0 : index
    %189 = vector.load %arg8[%c4_156, %c0_157, %c0_158] : memref<5x384x256xbf16, #tpu.memory_space<vmem>>, vector<1x384x256xbf16>
    %190 = vector.shape_cast %189 : vector<1x384x256xbf16> to vector<384x256xbf16>
    %cst_159 = arith.constant dense<0.000000e+00> : vector<224x256xf32>
    %191 = tpu.matmul %188, %190, %cst_159 {dimension_numbers = #tpu.dot_dimension_numbers<[1], [0], [0], [1], [0, 0, 1, 1], [], []>} : vector<224x384xbf16>, vector<384x256xbf16>, vector<224x256xf32> -> vector<224x256xf32>
    %192 = arith.addf %185, %191 : vector<224x256xf32>
    %c0_160 = arith.constant 0 : index
    %c0_161 = arith.constant 0 : index
    %193 = vector.load %arg9[%c0_160, %c0_161] : memref<1x256xf32, #tpu.memory_space<vmem>>, vector<1x256xf32>
    %194 = vector.broadcast %193 : vector<1x256xf32> to vector<224x256xf32>
    %195 = arith.mulf %192, %194 : vector<224x256xf32>
    %c0_162 = arith.constant 0 : index
    %c0_163 = arith.constant 0 : index
    %196 = vector.load %arg10[%c0_162, %c0_163] : memref<1x256xf32, #tpu.memory_space<vmem>>, vector<1x256xf32>
    %197 = vector.broadcast %196 : vector<1x256xf32> to vector<224x256xf32>
    %198 = arith.addf %195, %197 : vector<224x256xf32>
    %cst_164 = arith.constant 0.00999999977 : f32
    %199 = vector.broadcast %cst_164 : f32 to vector<224x256xf32>
    %200 = arith.mulf %199, %198 : vector<224x256xf32>
    %201 = arith.maximumf %198, %200 : vector<224x256xf32>
    %202 = vector.shape_cast %201 : vector<224x256xf32> to vector<7x32x256xf32>
    %203 = vector.extract_strided_slice %202 {offsets = [0, 0, 0], sizes = [6, 32, 256], strides = [1, 1, 1]} : vector<7x32x256xf32> to vector<6x32x256xf32>
    %204 = vector.shape_cast %203 : vector<6x32x256xf32> to vector<3x2x32x256xf32>
    %205 = vector.extract_strided_slice %204 {offsets = [0, 0, 0, 0], sizes = [3, 1, 32, 256], strides = [1, 1, 1, 1]} : vector<3x2x32x256xf32> to vector<3x1x32x256xf32>
    %206 = vector.shape_cast %205 : vector<3x1x32x256xf32> to vector<3x32x256xf32>
    %207 = vector.extract_strided_slice %204 {offsets = [0, 1, 0, 0], sizes = [3, 1, 32, 256], strides = [1, 1, 1, 1]} : vector<3x2x32x256xf32> to vector<3x1x32x256xf32>
    %208 = vector.shape_cast %207 : vector<3x1x32x256xf32> to vector<3x32x256xf32>
    %209 = arith.maximumf %206, %208 : vector<3x32x256xf32>
    %210 = vector.shape_cast %209 : vector<3x32x256xf32> to vector<1x3x32x256xf32>
    %c0_165 = arith.constant 0 : index
    %c0_166 = arith.constant 0 : index
    %c0_167 = arith.constant 0 : index
    %c0_168 = arith.constant 0 : index
    %211 = vector.load %arg11[%c0_165, %c0_166, %c0_167, %c0_168] : memref<2x3x32x256xbf16, #tpu.memory_space<vmem>>, vector<2x3x32x256xbf16>
    %212 = arith.extf %211 : vector<2x3x32x256xbf16> to vector<2x3x32x256xf32>
    %213 = vector.broadcast %210 : vector<1x3x32x256xf32> to vector<2x3x32x256xf32>
    %214 = arith.mulf %213, %212 : vector<2x3x32x256xf32>
    %cst_169 = arith.constant dense<0.000000e+00> : vector<2x3x32xf32>
    %215 = vector.multi_reduction <add>, %214, %cst_169 [3] : vector<2x3x32x256xf32> to vector<2x3x32xf32>
    %216 = vector.shape_cast %215 : vector<2x3x32xf32> to vector<2x3x32x1xf32>
    %cst_170 = arith.constant dense<0.000000e+00> : vector<2x3x1xf32>
    %217 = vector.multi_reduction <add>, %216, %cst_170 [2] : vector<2x3x32x1xf32> to vector<2x3x1xf32>
    %218 = vector.shape_cast %217 : vector<2x3x1xf32> to vector<2x3x1x1xf32>
    %cst_171 = arith.constant dense<0.000000e+00> : vector<2x1x1xf32>
    %219 = vector.multi_reduction <add>, %218, %cst_171 [1] : vector<2x3x1x1xf32> to vector<2x1x1xf32>
    %220 = vector.shape_cast %219 : vector<2x1x1xf32> to vector<2x1x1x1xf32>
    %221 = vector.shape_cast %220 : vector<2x1x1x1xf32> to vector<2x1xf32>
    %c0_172 = arith.constant 0 : index
    %c0_173 = arith.constant 0 : index
    %222 = vector.load %arg12[%c0_172, %c0_173] : memref<2x1xf32, #tpu.memory_space<vmem>>, vector<2x1xf32>
    %223 = arith.addf %221, %222 : vector<2x1xf32>
    %224 = vector.extract_strided_slice %223 {offsets = [0, 0], sizes = [1, 1], strides = [1, 1]} : vector<2x1xf32> to vector<1x1xf32>
    %225 = vector.extract_strided_slice %223 {offsets = [1, 0], sizes = [1, 1], strides = [1, 1]} : vector<2x1xf32> to vector<1x1xf32>
    %226 = arith.maximumf %224, %225 : vector<1x1xf32>
    %227 = arith.subf %224, %226 : vector<1x1xf32>
    %228 = math.exp %227 : vector<1x1xf32>
    %229 = arith.subf %225, %226 : vector<1x1xf32>
    %230 = math.exp %229 : vector<1x1xf32>
    %231 = arith.addf %228, %230 : vector<1x1xf32>
    %cst_174 = arith.constant 1.000000e+00 : f32
    %232 = vector.broadcast %cst_174 : f32 to vector<1x1xf32>
    %233 = arith.divf %232, %231 : vector<1x1xf32>
    %234 = arith.mulf %228, %233 : vector<1x1xf32>
    %235 = arith.mulf %230, %233 : vector<1x1xf32>
    %236 = tpu.iota {dimensions = array<i32: 1>} : vector<8x128xi32>
    %c0_i32 = arith.constant 0 : i32
    %237 = vector.broadcast %c0_i32 : i32 to vector<8x128xi32>
    %238 = arith.cmpi eq, %236, %237 : vector<8x128xi32>
    %c1_i32 = arith.constant 1 : i32
    %239 = vector.broadcast %c1_i32 : i32 to vector<8x128xi32>
    %240 = arith.cmpi eq, %236, %239 : vector<8x128xi32>
    %cst_175 = arith.constant 0.000000e+00 : f32
    %241 = vector.shape_cast %235 : vector<1x1xf32> to vector<1x1xf32>
    %242 = vector.broadcast %241 : vector<1x1xf32> to vector<8x128xf32>
    %243 = vector.broadcast %cst_175 : f32 to vector<8x128xf32>
    %244 = arith.select %240, %242, %243 : vector<8x128xi1>, vector<8x128xf32>
    %245 = vector.shape_cast %234 : vector<1x1xf32> to vector<1x1xf32>
    %246 = vector.broadcast %245 : vector<1x1xf32> to vector<8x128xf32>
    %247 = arith.select %238, %246, %244 : vector<8x128xi1>, vector<8x128xf32>
    %c0_176 = arith.constant 0 : index
    %c0_177 = arith.constant 0 : index
    %c0_178 = arith.constant 0 : index
    %248 = vector.load %arg13[%c0_176, %c0_177, %c0_178] : memref<1x8x128xf32, #tpu.memory_space<vmem>>, vector<1x8x128xf32>
    %249 = vector.shape_cast %248 : vector<1x8x128xf32> to vector<8x128xf32>
    %250 = vector.shape_cast %247 : vector<8x128xf32> to vector<1x8x128xf32>
    tpu.vector_store %arg13[%c0_176, %c0_177, %c0_178], %250 {strides = array<i32>} : memref<1x8x128xf32, #tpu.memory_space<vmem>>, vector<1x8x128xf32>,
    return
  }
  func.func @transform_0(%arg0: i32) -> (i32, i32, i32) {
    %c0_i32 = arith.constant 0 : i32
    %c0_i32_0 = arith.constant 0 : i32
    %c0_i32_1 = arith.constant 0 : i32
    return %arg0, %c0_i32, %c0_i32_0 : i32, i32, i32
  }
  func.func @transform_1(%arg0: i32) -> (i32, i32) {
    %c0_i32 = arith.constant 0 : i32
    %c0_i32_0 = arith.constant 0 : i32
    %c0_i32_1 = arith.constant 0 : i32
    return %c0_i32, %c0_i32_0 : i32, i32
  }
  func.func @transform_2(%arg0: i32) -> (i32, i32) {
    %c0_i32 = arith.constant 0 : i32
    %c0_i32_0 = arith.constant 0 : i32
    %c0_i32_1 = arith.constant 0 : i32
    return %c0_i32, %c0_i32_0 : i32, i32
  }
  func.func @transform_3(%arg0: i32) -> (i32, i32) {
    %c0_i32 = arith.constant 0 : i32
    %c0_i32_0 = arith.constant 0 : i32
    %c0_i32_1 = arith.constant 0 : i32
    return %c0_i32, %c0_i32_0 : i32, i32
  }
  func.func @transform_4(%arg0: i32) -> (i32, i32, i32) {
    %c0_i32 = arith.constant 0 : i32
    %c0_i32_0 = arith.constant 0 : i32
    %c0_i32_1 = arith.constant 0 : i32
    %c0_i32_2 = arith.constant 0 : i32
    return %c0_i32, %c0_i32_0, %c0_i32_1 : i32, i32, i32
  }
  func.func @transform_5(%arg0: i32) -> (i32, i32) {
    %c0_i32 = arith.constant 0 : i32
    %c0_i32_0 = arith.constant 0 : i32
    %c0_i32_1 = arith.constant 0 : i32
    return %c0_i32, %c0_i32_0 : i32, i32
  }
  func.func @transform_6(%arg0: i32) -> (i32, i32) {
    %c0_i32 = arith.constant 0 : i32
    %c0_i32_0 = arith.constant 0 : i32
    %c0_i32_1 = arith.constant 0 : i32
    return %c0_i32, %c0_i32_0 : i32, i32
  }
  func.func @transform_7(%arg0: i32) -> (i32, i32, i32) {
    %c0_i32 = arith.constant 0 : i32
    %c0_i32_0 = arith.constant 0 : i32
    %c0_i32_1 = arith.constant 0 : i32
    %c0_i32_2 = arith.constant 0 : i32
    return %c0_i32, %c0_i32_0, %c0_i32_1 : i32, i32, i32
  }
  func.func @transform_8(%arg0: i32) -> (i32, i32) {
    %c0_i32 = arith.constant 0 : i32
    %c0_i32_0 = arith.constant 0 : i32
    %c0_i32_1 = arith.constant 0 : i32
    return %c0_i32, %c0_i32_0 : i32, i32
  }
  func.func @transform_9(%arg0: i32) -> (i32, i32) {
    %c0_i32 = arith.constant 0 : i32
    %c0_i32_0 = arith.constant 0 : i32
    %c0_i32_1 = arith.constant 0 : i32
    return %c0_i32, %c0_i32_0 : i32, i32
  }
  func.func @transform_10(%arg0: i32) -> (i32, i32, i32, i32) {
    %c0_i32 = arith.constant 0 : i32
    %c0_i32_0 = arith.constant 0 : i32
    %c0_i32_1 = arith.constant 0 : i32
    %c0_i32_2 = arith.constant 0 : i32
    %c0_i32_3 = arith.constant 0 : i32
    return %c0_i32, %c0_i32_0, %c0_i32_1, %c0_i32_2 : i32, i32, i32, i32
  }
  func.func @transform_11(%arg0: i32) -> (i32, i32) {
    %c0_i32 = arith.constant 0 : i32
    %c0_i32_0 = arith.constant 0 : i32
    %c0_i32_1 = arith.constant 0 : i32
    return %c0_i32, %c0_i32_0 : i32, i32
  }
  func.func @transform_12(%arg0: i32) -> (i32, i32, i32) {
    %c0_i32 = arith.constant 0 : i32
    %c0_i32_0 = arith.constant 0 : i32
    %c0_i32_1 = arith.constant 0 : i32
    return %arg0, %c0_i32, %c0_i32_0 : i32, i32, i32
  }
}

</mosaic_0001>

<llo_original>
// kernel: net_forward.1
$region0: #{net_forward.1}
  #allocation0 [shape = 'u32[]', space=smem, size = 0x4, offset = 0x4, fixed_abs, tag = 'smem constant byte address 0x4 - core index']
  #allocation1 [shape = 'u32[144,128]{1,0:T(1,128)}', space=vmem, size = 0x12000, scoped, tag = 'internal scratch']
  #allocation2 [shape = 'bf16[10,3,32,192]{3,2,1,0:T(16,128)(2,1)}', space=vmem, size = 0x78000, scoped, tag = 'scratch operand']
  #allocation3 [shape = 'bf16[9,3,32,384]{3,2,1,0:T(16,128)(2,1)}', space=vmem, size = 0xa2000, scoped, tag = 'scratch operand']
  %s0 = inlined_call_operand.vmem [shape: bf16[2,384,16], index: 0, kind: input, shape index: {}]
  %s1 = inlined_call_operand.vmem [shape: bf16[16,64], index: 1, kind: input, shape index: {}]
  %s2 = inlined_call_operand.vmem [shape: f32[1,64], index: 2, kind: input, shape index: {}]
  %s3 = inlined_call_operand.vmem [shape: f32[1,64], index: 3, kind: input, shape index: {}]
  %s4 = inlined_call_operand.vmem [shape: bf16[5,192,128], index: 4, kind: input, shape index: {}]
  %s5 = inlined_call_operand.vmem [shape: f32[1,128], index: 5, kind: input, shape index: {}]
  %s6 = inlined_call_operand.vmem [shape: f32[1,128], index: 6, kind: input, shape index: {}]
  %s7 = inlined_call_operand.vmem [shape: bf16[5,384,256], index: 7, kind: input, shape index: {}]
  %s8 = inlined_call_operand.vmem [shape: f32[1,256], index: 8, kind: input, shape index: {}]
  %s9 = inlined_call_operand.vmem [shape: f32[1,256], index: 9, kind: input, shape index: {}]
  %s10 = inlined_call_operand.vmem [shape: bf16[2,3,32,256], index: 10, kind: input, shape index: {}]
  %s11 = inlined_call_operand.vmem [shape: f32[2,1], index: 11, kind: input, shape index: {}]
  %s12 = inlined_call_operand.vmem [shape: f32[2,8,128], index: 12, kind: output, shape index: {}]
  %s13 = sld [smem:[#allocation0]]
  $region81: #{net_forward.1} parent=0
    _
  %s15 = ssub.s32 1, %s13
  %s16 = scalar_select 0, %s15, %s13
  loop: start=0, step=1, limit=4
  $region2: #{net_forward.1} parent=0 // loop_pre_header
    _
  $region3: #{net_forward.1} parent=0 // loop_header
    %s18 = sphi 0, %s22
    %p19 = scmp.ge.s32.totalorder %s18, 4
    %s28 = sphi 0, %s30
    %s31 = sphi 0, %s28
    %s32 = sphi 0, %s31
    %s48 = sphi 0, %s32
    %s52 = sphi 0, %s52
    %s54 = sphi 0, %s52
    %s55 = sphi 0, %s54
    %s69 = sphi 0, %s55
    %s73 = sphi 0, %s73
    %s75 = sphi 0, %s73
    %s76 = sphi 0, %s75
    %s90 = sphi 0, %s76
    %s94 = sphi 0, %s94
    %s96 = sphi 0, %s94
    %s97 = sphi 0, %s96
    %s111 = sphi 0, %s97
    %s115 = sphi 0, %s115
    %s117 = sphi 0, %s115
    %s118 = sphi 0, %s117
    %s132 = sphi 0, %s118
    %s136 = sphi 0, %s136
    %s138 = sphi 0, %s136
    %s139 = sphi 0, %s138
    %s153 = sphi 0, %s139
    %s157 = sphi 0, %s157
    %s159 = sphi 0, %s157
    %s160 = sphi 0, %s159
    %s174 = sphi 0, %s160
    %s178 = sphi 0, %s178
    %s180 = sphi 0, %s178
    %s181 = sphi 0, %s180
    %s195 = sphi 0, %s181
    %s199 = sphi 0, %s199
    %s201 = sphi 0, %s199
    %s202 = sphi 0, %s201
    %s216 = sphi 0, %s202
    %s220 = sphi 0, %s220
    %s222 = sphi 0, %s220
    %s223 = sphi 0, %s222
    %s237 = sphi 0, %s223
    %s241 = sphi 0, %s241
    %s243 = sphi 0, %s241
    %s244 = sphi 0, %s243
    %s258 = sphi 0, %s244
    %s262 = sphi 0, %s262
    %s264 = sphi 0, %s262
    %s265 = sphi 0, %s264
    %s279 = sphi 0, %s265
    %s285 = sphi 0, %s287
    %s288 = sphi 0, %s285
    %s289 = sphi 0, %s288
    %s305 = sphi 0, %s289
  $region4: #{net_forward.1} parent=0 // loop_header_branch
    %21 = sbr.rel (%p19) target = $region8
  $region5: #{net_forward.1} parent=0 // loop_body
    %s23 = ssub.s32 %s18, 1
    %s24 = ssub.s32 %s18, 2
    %s25 = sadd.s32 %s18, 1
    %s26 = ssub.s32 %s18, %s25
    %p27 = scmp.eq.s32.totalorder %s26, 0
    %s29 = sadd.s32 %s28, 1
    %s30 = scalar_select %p27, %s28, %s29
    %p33 = pneg %p27
    %p34 = scmp.eq.s32.totalorder %s18, 1
    %p35 = por %p33, %p34
    %p36 = scmp.ne.s32.totalorder %s28, %s31
    %p37 = scmp.eq.s32.totalorder %s18, 0
    %p38 = por %p36, %p37
    %p39 = scmp.ne.s32.totalorder %s28, %s31
    %p40 = scmp.eq.s32.totalorder %s23, 1
    %p41 = por %p39, %p40
    %p42 = scmp.ne.s32.totalorder %s31, %s32
    %p43 = scmp.eq.s32.totalorder %s23, 0
    %p44 = por %p42, %p43
    %p45 = scmp.ne.s32.totalorder %s31, %s32
    %p46 = scmp.eq.s32.totalorder %s24, 1
    %p47 = por %p45, %p46
    %p49 = scmp.ne.s32.totalorder %s32, %s48
    %p50 = scmp.eq.s32.totalorder %s24, 0
    %p51 = por %p49, %p50
    %s53 = sadd.s32 %s52, 1
    %p56 = scmp.eq.s32.totalorder %s18, 1
    %p57 = scmp.ne.s32.totalorder %s52, %s54
    %p58 = scmp.eq.s32.totalorder %s18, 0
    %p59 = por %p57, %p58
    %p60 = scmp.ne.s32.totalorder %s52, %s54
    %p61 = scmp.eq.s32.totalorder %s23, 1
    %p62 = por %p60, %p61
    %p63 = scmp.ne.s32.totalorder %s54, %s55
    %p64 = scmp.eq.s32.totalorder %s23, 0
    %p65 = por %p63, %p64
    %p66 = scmp.ne.s32.totalorder %s54, %s55
    %p67 = scmp.eq.s32.totalorder %s24, 1
    %p68 = por %p66, %p67
    %p70 = scmp.ne.s32.totalorder %s55, %s69
    %p71 = scmp.eq.s32.totalorder %s24, 0
    %p72 = por %p70, %p71
    %s74 = sadd.s32 %s73, 1
    %p77 = scmp.eq.s32.totalorder %s18, 1
    %p78 = scmp.ne.s32.totalorder %s73, %s75
    %p79 = scmp.eq.s32.totalorder %s18, 0
    %p80 = por %p78, %p79
    %p81 = scmp.ne.s32.totalorder %s73, %s75
    %p82 = scmp.eq.s32.totalorder %s23, 1
    %p83 = por %p81, %p82
    %p84 = scmp.ne.s32.totalorder %s75, %s76
    %p85 = scmp.eq.s32.totalorder %s23, 0
    %p86 = por %p84, %p85
    %p87 = scmp.ne.s32.totalorder %s75, %s76
    %p88 = scmp.eq.s32.totalorder %s24, 1
    %p89 = por %p87, %p88
    %p91 = scmp.ne.s32.totalorder %s76, %s90
    %p92 = scmp.eq.s32.totalorder %s24, 0
    %p93 = por %p91, %p92
    %s95 = sadd.s32 %s94, 1
    %p98 = scmp.eq.s32.totalorder %s18, 1
    %p99 = scmp.ne.s32.totalorder %s94, %s96
    %p100 = scmp.eq.s32.totalorder %s18, 0
    %p101 = por %p99, %p100
    %p102 = scmp.ne.s32.totalorder %s94, %s96
    %p103 = scmp.eq.s32.totalorder %s23, 1
    %p104 = por %p102, %p103
    %p105 = scmp.ne.s32.totalorder %s96, %s97
    %p106 = scmp.eq.s32.totalorder %s23, 0
    %p107 = por %p105, %p106
    %p108 = scmp.ne.s32.totalorder %s96, %s97
    %p109 = scmp.eq.s32.totalorder %s24, 1
    %p110 = por %p108, %p109
    %p112 = scmp.ne.s32.totalorder %s97, %s111
    %p113 = scmp.eq.s32.totalorder %s24, 0
    %p114 = por %p112, %p113
    %s116 = sadd.s32 %s115, 1
    %p119 = scmp.eq.s32.totalorder %s18, 1
    %p120 = scmp.ne.s32.totalorder %s115, %s117
    %p121 = scmp.eq.s32.totalorder %s18, 0
    %p122 = por %p120, %p121
    %p123 = scmp.ne.s32.totalorder %s115, %s117
    %p124 = scmp.eq.s32.totalorder %s23, 1
    %p125 = por %p123, %p124
    %p126 = scmp.ne.s32.totalorder %s117, %s118
    %p127 = scmp.eq.s32.totalorder %s23, 0
    %p128 = por %p126, %p127
    %p129 = scmp.ne.s32.totalorder %s117, %s118
    %p130 = scmp.eq.s32.totalorder %s24, 1
    %p131 = por %p129, %p130
    %p133 = scmp.ne.s32.totalorder %s118, %s132
    %p134 = scmp.eq.s32.totalorder %s24, 0
    %p135 = por %p133, %p134
    %s137 = sadd.s32 %s136, 1
    %p140 = scmp.eq.s32.totalorder %s18, 1
    %p141 = scmp.ne.s32.totalorder %s136, %s138
    %p142 = scmp.eq.s32.totalorder %s18, 0
    %p143 = por %p141, %p142
    %p144 = scmp.ne.s32.totalorder %s136, %s138
    %p145 = scmp.eq.s32.totalorder %s23, 1
    %p146 = por %p144, %p145
    %p147 = scmp.ne.s32.totalorder %s138, %s139
    %p148 = scmp.eq.s32.totalorder %s23, 0
    %p149 = por %p147, %p148
    %p150 = scmp.ne.s32.totalorder %s138, %s139
    %p151 = scmp.eq.s32.totalorder %s24, 1
    %p152 = por %p150, %p151
    %p154 = scmp.ne.s32.totalorder %s139, %s153
    %p155 = scmp.eq.s32.totalorder %s24, 0
    %p156 = por %p154, %p155
    %s158 = sadd.s32 %s157, 1
    %p161 = scmp.eq.s32.totalorder %s18, 1
    %p162 = scmp.ne.s32.totalorder %s157, %s159
    %p163 = scmp.eq.s32.totalorder %s18, 0
    %p164 = por %p162, %p163
    %p165 = scmp.ne.s32.totalorder %s157, %s159
    %p166 = scmp.eq.s32.totalorder %s23, 1
    %p167 = por %p165, %p166
    %p168 = scmp.ne.s32.totalorder %s159, %s160
    %p169 = scmp.eq.s32.totalorder %s23, 0
    %p170 = por %p168, %p169
    %p171 = scmp.ne.s32.totalorder %s159, %s160
    %p172 = scmp.eq.s32.totalorder %s24, 1
    %p173 = por %p171, %p172
    %p175 = scmp.ne.s32.totalorder %s160, %s174
    %p176 = scmp.eq.s32.totalorder %s24, 0
    %p177 = por %p175, %p176
    %s179 = sadd.s32 %s178, 1
    %p182 = scmp.eq.s32.totalorder %s18, 1
    %p183 = scmp.ne.s32.totalorder %s178, %s180
    %p184 = scmp.eq.s32.totalorder %s18, 0
    %p185 = por %p183, %p184
    %p186 = scmp.ne.s32.totalorder %s178, %s180
    %p187 = scmp.eq.s32.totalorder %s23, 1
    %p188 = por %p186, %p187
    %p189 = scmp.ne.s32.totalorder %s180, %s181
    %p190 = scmp.eq.s32.totalorder %s23, 0
    %p191 = por %p189, %p190
    %p192 = scmp.ne.s32.totalorder %s180, %s181
    %p193 = scmp.eq.s32.totalorder %s24, 1
    %p194 = por %p192, %p193
    %p196 = scmp.ne.s32.totalorder %s181, %s195
    %p197 = scmp.eq.s32.totalorder %s24, 0
    %p198 = por %p196, %p197
    %s200 = sadd.s32 %s199, 1
    %p203 = scmp.eq.s32.totalorder %s18, 1
    %p204 = scmp.ne.s32.totalorder %s199, %s201
    %p205 = scmp.eq.s32.totalorder %s18, 0
    %p206 = por %p204, %p205
    %p207 = scmp.ne.s32.totalorder %s199, %s201
    %p208 = scmp.eq.s32.totalorder %s23, 1
    %p209 = por %p207, %p208
    %p210 = scmp.ne.s32.totalorder %s201, %s202
    %p211 = scmp.eq.s32.totalorder %s23, 0
    %p212 = por %p210, %p211
    %p213 = scmp.ne.s32.totalorder %s201, %s202
    %p214 = scmp.eq.s32.totalorder %s24, 1
    %p215 = por %p213, %p214
    %p217 = scmp.ne.s32.totalorder %s202, %s216
    %p218 = scmp.eq.s32.totalorder %s24, 0
    %p219 = por %p217, %p218
    %s221 = sadd.s32 %s220, 1
    %p224 = scmp.eq.s32.totalorder %s18, 1
    %p225 = scmp.ne.s32.totalorder %s220, %s222
    %p226 = scmp.eq.s32.totalorder %s18, 0
    %p227 = por %p225, %p226
    %p228 = scmp.ne.s32.totalorder %s220, %s222
    %p229 = scmp.eq.s32.totalorder %s23, 1
    %p230 = por %p228, %p229
    %p231 = scmp.ne.s32.totalorder %s222, %s223
    %p232 = scmp.eq.s32.totalorder %s23, 0
    %p233 = por %p231, %p232
    %p234 = scmp.ne.s32.totalorder %s222, %s223
    %p235 = scmp.eq.s32.totalorder %s24, 1
    %p236 = por %p234, %p235
    %p238 = scmp.ne.s32.totalorder %s223, %s237
    %p239 = scmp.eq.s32.totalorder %s24, 0
    %p240 = por %p238, %p239
    %s242 = sadd.s32 %s241, 1
    %p245 = scmp.eq.s32.totalorder %s18, 1
    %p246 = scmp.ne.s32.totalorder %s241, %s243
    %p247 = scmp.eq.s32.totalorder %s18, 0
    %p248 = por %p246, %p247
    %p249 = scmp.ne.s32.totalorder %s241, %s243
    %p250 = scmp.eq.s32.totalorder %s23, 1
    %p251 = por %p249, %p250
    %p252 = scmp.ne.s32.totalorder %s243, %s244
    %p253 = scmp.eq.s32.totalorder %s23, 0
    %p254 = por %p252, %p253
    %p255 = scmp.ne.s32.totalorder %s243, %s244
    %p256 = scmp.eq.s32.totalorder %s24, 1
    %p257 = por %p255, %p256
    %p259 = scmp.ne.s32.totalorder %s244, %s258
    %p260 = scmp.eq.s32.totalorder %s24, 0
    %p261 = por %p259, %p260
    %s263 = sadd.s32 %s262, 1
    %p266 = scmp.eq.s32.totalorder %s18, 1
    %p267 = scmp.ne.s32.totalorder %s262, %s264
    %p268 = scmp.eq.s32.totalorder %s18, 0
    %p269 = por %p267, %p268
    %p270 = scmp.ne.s32.totalorder %s262, %s264
    %p271 = scmp.eq.s32.totalorder %s23, 1
    %p272 = por %p270, %p271
    %p273 = scmp.ne.s32.totalorder %s264, %s265
    %p274 = scmp.eq.s32.totalorder %s23, 0
    %p275 = por %p273, %p274
    %p276 = scmp.ne.s32.totalorder %s264, %s265
    %p277 = scmp.eq.s32.totalorder %s24, 1
    %p278 = por %p276, %p277
    %p280 = scmp.ne.s32.totalorder %s265, %s279
    %p281 = scmp.eq.s32.totalorder %s24, 0
    %p282 = por %p280, %p281
    %s283 = ssub.s32 %s18, %s25
    %p284 = scmp.eq.s32.totalorder %s283, 0
    %s286 = sadd.s32 %s285, 1
    %s287 = scalar_select %p284, %s285, %s286
    %p290 = pneg %p284
    %p291 = scmp.eq.s32.totalorder %s18, 1
    %p292 = por %p290, %p291
    %p293 = scmp.ne.s32.totalorder %s285, %s288
    %p294 = scmp.eq.s32.totalorder %s18, 0
    %p295 = por %p293, %p294
    %p296 = scmp.ne.s32.totalorder %s285, %s288
    %p297 = scmp.eq.s32.totalorder %s23, 1
    %p298 = por %p296, %p297
    %p299 = scmp.ne.s32.totalorder %s288, %s289
    %p300 = scmp.eq.s32.totalorder %s23, 0
    %p301 = por %p299, %p300
    %p302 = scmp.ne.s32.totalorder %s288, %s289
    %p303 = scmp.eq.s32.totalorder %s24, 1
    %p304 = por %p302, %p303
    %p306 = scmp.ne.s32.totalorder %s289, %s305
    %p307 = scmp.eq.s32.totalorder %s24, 0
    %p308 = por %p306, %p307
    %p309 = scmp.le.s32.totalorder 1, %s18
    %p310 = scmp.lt.s32.totalorder %s18, 3
    %p311 = pnand %p309, %p310
    %p312 = pneg %p311
    // Predicated region
    $region9: #{net_forward.1} parent=5 // pred_check
      _
    $region10: #{net_forward.1} parent=5 // pred_check_branch
      %314 = sbr.rel (%p311) target = $region12
    $region11: #{net_forward.1} parent=5 // pred_region
      %s315 = ssub.s32 %s18, 1
      // Predicated region
      $region13: #{net_forward.1} parent=11 // pred_check
        %p316 = pneg %p65
      $region14: #{net_forward.1} parent=11 // pred_check_branch
        %318 = sbr.rel (%p316) target = $region16
      $region15: #{net_forward.1} parent=11 // pred_region
        _
      $region16: #{net_forward.1} parent=11 // pred_fallthru
        _
      // Predicated region
      $region17: #{net_forward.1} parent=11 // pred_check
        %p319 = pneg %p86
      $region18: #{net_forward.1} parent=11 // pred_check_branch
        %321 = sbr.rel (%p319) target = $region20
      $region19: #{net_forward.1} parent=11 // pred_region
        _
      $region20: #{net_forward.1} parent=11 // pred_fallthru
        _
      // Predicated region
      $region21: #{net_forward.1} parent=11 // pred_check
        %p322 = pneg %p107
      $region22: #{net_forward.1} parent=11 // pred_check_branch
        %324 = sbr.rel (%p322) target = $region24
      $region23: #{net_forward.1} parent=11 // pred_region
        _
      $region24: #{net_forward.1} parent=11 // pred_fallthru
        _
      // Predicated region
      $region25: #{net_forward.1} parent=11 // pred_check
        %p325 = pneg %p128
      $region26: #{net_forward.1} parent=11 // pred_check_branch
        %327 = sbr.rel (%p325) target = $region28
      $region27: #{net_forward.1} parent=11 // pred_region
        _
      $region28: #{net_forward.1} parent=11 // pred_fallthru
        _
      // Predicated region
      $region29: #{net_forward.1} parent=11 // pred_check
        %p328 = pneg %p149
      $region30: #{net_forward.1} parent=11 // pred_check_branch
        %330 = sbr.rel (%p328) target = $region32
      $region31: #{net_forward.1} parent=11 // pred_region
        _
      $region32: #{net_forward.1} parent=11 // pred_fallthru
        _
      // Predicated region
      $region33: #{net_forward.1} parent=11 // pred_check
        %p331 = pneg %p170
      $region34: #{net_forward.1} parent=11 // pred_check_branch
        %333 = sbr.rel (%p331) target = $region36
      $region35: #{net_forward.1} parent=11 // pred_region
        _
      $region36: #{net_forward.1} parent=11 // pred_fallthru
        _
      // Predicated region
      $region37: #{net_forward.1} parent=11 // pred_check
        %p334 = pneg %p191
      $region38: #{net_forward.1} parent=11 // pred_check_branch
        %336 = sbr.rel (%p334) target = $region40
      $region39: #{net_forward.1} parent=11 // pred_region
        _
      $region40: #{net_forward.1} parent=11 // pred_fallthru
        _
      // Predicated region
      $region41: #{net_forward.1} parent=11 // pred_check
        %p337 = pneg %p212
      $region42: #{net_forward.1} parent=11 // pred_check_branch
        %339 = sbr.rel (%p337) target = $region44
      $region43: #{net_forward.1} parent=11 // pred_region
        _
      $region44: #{net_forward.1} parent=11 // pred_fallthru
        _
      // Predicated region
      $region45: #{net_forward.1} parent=11 // pred_check
        %p340 = pneg %p233
      $region46: #{net_forward.1} parent=11 // pred_check_branch
        %342 = sbr.rel (%p340) target = $region48
      $region47: #{net_forward.1} parent=11 // pred_region
        _
      $region48: #{net_forward.1} parent=11 // pred_fallthru
        _
      // Predicated region
      $region49: #{net_forward.1} parent=11 // pred_check
        %p343 = pneg %p254
      $region50: #{net_forward.1} parent=11 // pred_check_branch
        %345 = sbr.rel (%p343) target = $region52
      $region51: #{net_forward.1} parent=11 // pred_region
        _
      $region52: #{net_forward.1} parent=11 // pred_fallthru
        _
      // Predicated region
      $region53: #{net_forward.1} parent=11 // pred_check
        %p346 = pneg %p275
      $region54: #{net_forward.1} parent=11 // pred_check_branch
        %348 = sbr.rel (%p346) target = $region56
      $region55: #{net_forward.1} parent=11 // pred_region
        _
      $region56: #{net_forward.1} parent=11 // pred_fallthru
        _
    $region12: #{net_forward.1} parent=5 // pred_fallthru
      _
    %p349 = scmp.lt.s32.totalorder %s18, 2
    // Predicated region
    $region57: #{net_forward.1} parent=5 // pred_check
      %p350 = pneg %p349
    $region58: #{net_forward.1} parent=5 // pred_check_branch
      %352 = sbr.rel (%p350) target = $region60
    $region59: #{net_forward.1} parent=5 // pred_region
      // Predicated region
      $region61: #{net_forward.1} parent=59 // pred_check
        %p353 = pneg %p38
      $region62: #{net_forward.1} parent=59 // pred_check_branch
        %355 = sbr.rel (%p353) target = $region64
      $region63: #{net_forward.1} parent=59 // pred_region
        %p356 = scmp.lt.s32.totalorder %s18, 1
        %s357 = scalar_select %p356, %s18, 1
        %s358 = smul.addr %s357, 48
        %s359 = smul.addr %s358, 4
        %s360 = scalar_lea.vmem %s0, %s359
      $region64: #{net_forward.1} parent=59 // pred_fallthru
        _
    $region60: #{net_forward.1} parent=5 // pred_fallthru
      _
    %p361 = scmp.le.s32.totalorder 1, %s18
    %p362 = scmp.lt.s32.totalorder %s18, 3
    %p363 = pnand %p361, %p362
    %p364 = pneg %p363
    // Predicated region
    $region65: #{net_forward.1} parent=5 // pred_check
      _
    $region66: #{net_forward.1} parent=5 // pred_check_branch
      %366 = sbr.rel (%p363) target = $region68
    $region67: #{net_forward.1} parent=5 // pred_region
      %s367 = ssub.s32 %s18, 1
      %p368 = scmp.lt.s32.totalorder %s23, 1
      %s369 = scalar_select %p368, %s23, 1
      %s370 = smul.addr %s369, 48
      %s371 = smul.addr %s370, 4
      %s372 = scalar_lea.vmem %s0, %s371
      %p373 = pneg %p44
      %p374 = pneg %p41
      %p375 = pneg %p65
      %p376 = pneg %p62
      %p377 = pneg %p86
      %p378 = pneg %p83
      %p379 = pneg %p107
      %p380 = pneg %p104
      %p381 = pneg %p128
      %p382 = pneg %p125
      %p383 = pneg %p149
      %p384 = pneg %p146
      %p385 = pneg %p170
      %p386 = pneg %p167
      %p387 = pneg %p191
      %p388 = pneg %p188
      %p389 = pneg %p212
      %p390 = pneg %p209
      %p391 = pneg %p233
      %p392 = pneg %p230
      %p393 = pneg %p254
      %p394 = pneg %p251
      %p395 = pneg %p275
      %p396 = pneg %p272
      %p397 = pneg %p301
      %p398 = pneg %p298
      %p399 = scmp.lt.s32.totalorder %s23, 1
      %s400 = scalar_select %p399, %s23, 1
      %s401 = smul.addr %s400, 8
      %s402 = scalar_lea.vmem %s12, %s401
      %p403 = scmp.lt.s32.totalorder %s23, 1
      %s404 = scalar_select %p403, %s23, 1
      %s405 = smul.addr %s404, 48
      %s406 = smul.addr %s405, 4
      %s407 = scalar_lea.vmem %s0, %s406
      %p408 = scmp.lt.s32.totalorder %s23, 1
      %s409 = scalar_select %p408, %s23, 1
      %s410 = smul.addr %s409, 8
      %s411 = scalar_lea.vmem %s12, %s410
      %v413 = vlaneseq
      %v414 = vshrl.u32 %v413, 7
      %v415 = vadd.s32 %v414, 8
      %v416 = vadd.s32 %v414, 16
      %v417 = vadd.s32 %v414, 24
      %vm418 = vcmp.lt.s32.totalorder %v414, 30
      %vm419 = vcmp.lt.s32.totalorder %v415, 30
      %vm420 = vcmp.lt.s32.totalorder %v416, 30
      %vm421 = vcmp.lt.s32.totalorder %v417, 30
      %v422 = vsel %vm418, 1, 0
      %v423 = vsel %vm419, 1, 0
      %v424 = vsel %vm420, 1, 0
      %v425 = vsel %vm421, 1, 0
      %v426 = vcvt.s32.f32 %v422
      %v427 = vcvt.s32.f32 %v423
      %v428 = vcvt.s32.f32 %v424
      %v429 = vcvt.s32.f32 %v425
      %430 = vst [vmem:[#allocation2] sm:$0xff] 0
      %vm431 = vcmask 523264
      %432 = vst.msk [vmem:[#allocation2 + $0x8] sm:$0xff] %vm431, 0
      %433 = vst [vmem:[#allocation2 + $0x10] sm:$0xff] 0
      %434 = vst.msk [vmem:[#allocation2 + $0x18] sm:$0xff] %vm431, 0
      %435 = vst [vmem:[#allocation2 + $0x20] sm:$0xff] 0
      %436 = vst.msk [vmem:[#allocation2 + $0x28] sm:$0xff] %vm431, 0
      %437 = vst [vmem:[#allocation2 + $0x30] sm:$0xff] 0
      %438 = vst.msk [vmem:[#allocation2 + $0x38] sm:$0xff] %vm431, 0
      %439 = vst [vmem:[#allocation2 + $0x40] sm:$0xff] 0
      %440 = vst.msk [vmem:[#allocation2 + $0x48] sm:$0xff] %vm431, 0
      %441 = vst [vmem:[#allocation2 + $0x50] sm:$0xff] 0
      %442 = vst.msk [vmem:[#allocation2 + $0x58] sm:$0xff] %vm431, 0
      %443 = vst [vmem:[#allocation2 + $0x60] sm:$0xff] 0
      %444 = vst.msk [vmem:[#allocation2 + $0x68] sm:$0xff] %vm431, 0
      %445 = vst [vmem:[#allocation2 + $0x70] sm:$0xff] 0
      %446 = vst.msk [vmem:[#allocation2 + $0x78] sm:$0xff] %vm431, 0
      %447 = vst [vmem:[#allocation2 + $0x80] sm:$0xff] 0
      %448 = vst.msk [vmem:[#allocation2 + $0x88] sm:$0xff] %vm431, 0
      %449 = vst [vmem:[#allocation2 + $0x90] sm:$0xff] 0
      %450 = vst.msk [vmem:[#allocation2 + $0x98] sm:$0xff] %vm431, 0
      %451 = vst [vmem:[#allocation2 + $0xa0] sm:$0xff] 0
      %452 = vst.msk [vmem:[#allocation2 + $0xa8] sm:$0xff] %vm431, 0
      %453 = vst [vmem:[#allocation2 + $0xb0] sm:$0xff] 0
      %454 = vst.msk [vmem:[#allocation2 + $0xb8] sm:$0xff] %vm431, 0
      %455 = vst [vmem:[#allocation2 + $0xc0] sm:$0xff] 0
      %456 = vst.msk [vmem:[#allocation2 + $0xc8] sm:$0xff] %vm431, 0
      %457 = vst [vmem:[#allocation2 + $0xd0] sm:$0xff] 0
      %458 = vst.msk [vmem:[#allocation2 + $0xd8] sm:$0xff] %vm431, 0
      %459 = vst [vmem:[#allocation2 + $0xe0] sm:$0xff] 0
      %460 = vst.msk [vmem:[#allocation2 + $0xe8] sm:$0xff] %vm431, 0
      %461 = vst [vmem:[#allocation2 + $0xf0] sm:$0xff] 0
      %462 = vst.msk [vmem:[#allocation2 + $0xf8] sm:$0xff] %vm431, 0
      %463 = vst [vmem:[#allocation2 + $0x100] sm:$0xff] 0
      %464 = vst.msk [vmem:[#allocation2 + $0x108] sm:$0xff] %vm431, 0
      %465 = vst [vmem:[#allocation2 + $0x110] sm:$0xff] 0
      %466 = vst.msk [vmem:[#allocation2 + $0x118] sm:$0xff] %vm431, 0
      %467 = vst [vmem:[#allocation2 + $0x120] sm:$0xff] 0
      %468 = vst.msk [vmem:[#allocation2 + $0x128] sm:$0xff] %vm431, 0
      %469 = vst [vmem:[#allocation2 + $0x130] sm:$0xff] 0
      %470 = vst.msk [vmem:[#allocation2 + $0x138] sm:$0xff] %vm431, 0
      %471 = vst [vmem:[#allocation2 + $0x140] sm:$0xff] 0
      %472 = vst.msk [vmem:[#allocation2 + $0x148] sm:$0xff] %vm431, 0
      %473 = vst [vmem:[#allocation2 + $0x150] sm:$0xff] 0
      %474 = vst.msk [vmem:[#allocation2 + $0x158] sm:$0xff] %vm431, 0
      %475 = vst [vmem:[#allocation2 + $0x160] sm:$0xff] 0
      %476 = vst.msk [vmem:[#allocation2 + $0x168] sm:$0xff] %vm431, 0
      %477 = vst [vmem:[#allocation2 + $0x170] sm:$0xff] 0
      %478 = vst.msk [vmem:[#allocation2 + $0x178] sm:$0xff] %vm431, 0
      %s479 = scalar_lea.vmem [#allocation2], 576
      %480 = vst [vmem:[%s479] sm:$0xff] 0
      %481 = vst.msk [vmem:[%s479 + $0x8] sm:$0xff] %vm431, 0
      %482 = vst [vmem:[%s479 + $0x10] sm:$0xff] 0
      %483 = vst.msk [vmem:[%s479 + $0x18] sm:$0xff] %vm431, 0
      %484 = vst [vmem:[%s479 + $0x20] sm:$0xff] 0
      %485 = vst.msk [vmem:[%s479 + $0x28] sm:$0xff] %vm431, 0
      %486 = vst [vmem:[%s479 + $0x30] sm:$0xff] 0
      %487 = vst.msk [vmem:[%s479 + $0x38] sm:$0xff] %vm431, 0
      %488 = vst [vmem:[%s479 + $0x40] sm:$0xff] 0
      %489 = vst.msk [vmem:[%s479 + $0x48] sm:$0xff] %vm431, 0
      %490 = vst [vmem:[%s479 + $0x50] sm:$0xff] 0
      %491 = vst.msk [vmem:[%s479 + $0x58] sm:$0xff] %vm431, 0
      %492 = vst [vmem:[%s479 + $0x60] sm:$0xff] 0
      %493 = vst.msk [vmem:[%s479 + $0x68] sm:$0xff] %vm431, 0
      %494 = vst [vmem:[%s479 + $0x70] sm:$0xff] 0
      %495 = vst.msk [vmem:[%s479 + $0x78] sm:$0xff] %vm431, 0
      %496 = vst [vmem:[%s479 + $0x80] sm:$0xff] 0
      %497 = vst.msk [vmem:[%s479 + $0x88] sm:$0xff] %vm431, 0
      %498 = vst [vmem:[%s479 + $0x90] sm:$0xff] 0
      %499 = vst.msk [vmem:[%s479 + $0x98] sm:$0xff] %vm431, 0
      %500 = vst [vmem:[%s479 + $0xa0] sm:$0xff] 0
      %501 = vst.msk [vmem:[%s479 + $0xa8] sm:$0xff] %vm431, 0
      %502 = vst [vmem:[%s479 + $0xb0] sm:$0xff] 0
      %503 = vst.msk [vmem:[%s479 + $0xb8] sm:$0xff] %vm431, 0
      %504 = vst [vmem:[%s479 + $0xc0] sm:$0xff] 0
      %505 = vst.msk [vmem:[%s479 + $0xc8] sm:$0xff] %vm431, 0
      %506 = vst [vmem:[%s479 + $0xd0] sm:$0xff] 0
      %507 = vst.msk [vmem:[%s479 + $0xd8] sm:$0xff] %vm431, 0
      %508 = vst [vmem:[%s479 + $0xe0] sm:$0xff] 0
      %509 = vst.msk [vmem:[%s479 + $0xe8] sm:$0xff] %vm431, 0
      %510 = vst [vmem:[%s479 + $0xf0] sm:$0xff] 0
      %511 = vst.msk [vmem:[%s479 + $0xf8] sm:$0xff] %vm431, 0
      %512 = vst [vmem:[%s479 + $0x100] sm:$0xff] 0
      %513 = vst.msk [vmem:[%s479 + $0x108] sm:$0xff] %vm431, 0
      %514 = vst [vmem:[%s479 + $0x110] sm:$0xff] 0
      %515 = vst.msk [vmem:[%s479 + $0x118] sm:$0xff] %vm431, 0
      %516 = vst [vmem:[%s479 + $0x120] sm:$0xff] 0
      %517 = vst.msk [vmem:[%s479 + $0x128] sm:$0xff] %vm431, 0
      %518 = vst [vmem:[%s479 + $0x130] sm:$0xff] 0
      %519 = vst.msk [vmem:[%s479 + $0x138] sm:$0xff] %vm431, 0
      %520 = vst [vmem:[%s479 + $0x140] sm:$0xff] 0
      %521 = vst.msk [vmem:[%s479 + $0x148] sm:$0xff] %vm431, 0
      %522 = vst [vmem:[%s479 + $0x150] sm:$0xff] 0
      %523 = vst.msk [vmem:[%s479 + $0x158] sm:$0xff] %vm431, 0
      %524 = vst [vmem:[%s479 + $0x160] sm:$0xff] 0
      %525 = vst.msk [vmem:[%s479 + $0x168] sm:$0xff] %vm431, 0
      %526 = vst [vmem:[%s479 + $0x170] sm:$0xff] 0
      %527 = vst.msk [vmem:[%s479 + $0x178] sm:$0xff] %vm431, 0
      %528 = vst [vmem:[#allocation3] sm:$0xff] 0
      %529 = vst [vmem:[#allocation3 + $0x8] sm:$0xff] 0
      %530 = vst [vmem:[#allocation3 + $0x10] sm:$0xff] 0
      %531 = vst [vmem:[#allocation3 + $0x18] sm:$0xff] 0
      %532 = vst [vmem:[#allocation3 + $0x20] sm:$0xff] 0
      %533 = vst [vmem:[#allocation3 + $0x28] sm:$0xff] 0
      %534 = vst [vmem:[#allocation3 + $0x30] sm:$0xff] 0
      %535 = vst [vmem:[#allocation3 + $0x38] sm:$0xff] 0
      %536 = vst [vmem:[#allocation3 + $0x40] sm:$0xff] 0
      %537 = vst [vmem:[#allocation3 + $0x48] sm:$0xff] 0
      %538 = vst [vmem:[#allocation3 + $0x50] sm:$0xff] 0
      %539 = vst [vmem:[#allocation3 + $0x58] sm:$0xff] 0
      %540 = vst [vmem:[#allocation3 + $0x60] sm:$0xff] 0
      %541 = vst [vmem:[#allocation3 + $0x68] sm:$0xff] 0
      %542 = vst [vmem:[#allocation3 + $0x70] sm:$0xff] 0
      %543 = vst [vmem:[#allocation3 + $0x78] sm:$0xff] 0
      %544 = vst [vmem:[#allocation3 + $0x80] sm:$0xff] 0
      %545 = vst [vmem:[#allocation3 + $0x88] sm:$0xff] 0
      %546 = vst [vmem:[#allocation3 + $0x90] sm:$0xff] 0
      %547 = vst [vmem:[#allocation3 + $0x98] sm:$0xff] 0
      %548 = vst [vmem:[#allocation3 + $0xa0] sm:$0xff] 0
      %549 = vst [vmem:[#allocation3 + $0xa8] sm:$0xff] 0
      %550 = vst [vmem:[#allocation3 + $0xb0] sm:$0xff] 0
      %551 = vst [vmem:[#allocation3 + $0xb8] sm:$0xff] 0
      %552 = vst [vmem:[#allocation3 + $0xc0] sm:$0xff] 0
      %553 = vst [vmem:[#allocation3 + $0xc8] sm:$0xff] 0
      %554 = vst [vmem:[#allocation3 + $0xd0] sm:$0xff] 0
      %555 = vst [vmem:[#allocation3 + $0xd8] sm:$0xff] 0
      %556 = vst [vmem:[#allocation3 + $0xe0] sm:$0xff] 0
      %557 = vst [vmem:[#allocation3 + $0xe8] sm:$0xff] 0
      %558 = vst [vmem:[#allocation3 + $0xf0] sm:$0xff] 0
      %559 = vst [vmem:[#allocation3 + $0xf8] sm:$0xff] 0
      %560 = vst [vmem:[#allocation3 + $0x100] sm:$0xff] 0
      %561 = vst [vmem:[#allocation3 + $0x108] sm:$0xff] 0
      %562 = vst [vmem:[#allocation3 + $0x110] sm:$0xff] 0
      %563 = vst [vmem:[#allocation3 + $0x118] sm:$0xff] 0
      %564 = vst [vmem:[#allocation3 + $0x120] sm:$0xff] 0
      %565 = vst [vmem:[#allocation3 + $0x128] sm:$0xff] 0
      %566 = vst [vmem:[#allocation3 + $0x130] sm:$0xff] 0
      %567 = vst [vmem:[#allocation3 + $0x138] sm:$0xff] 0
      %568 = vst [vmem:[#allocation3 + $0x140] sm:$0xff] 0
      %569 = vst [vmem:[#allocation3 + $0x148] sm:$0xff] 0
      %570 = vst [vmem:[#allocation3 + $0x150] sm:$0xff] 0
      %571 = vst [vmem:[#allocation3 + $0x158] sm:$0xff] 0
      %572 = vst [vmem:[#allocation3 + $0x160] sm:$0xff] 0
      %573 = vst [vmem:[#allocation3 + $0x168] sm:$0xff] 0
      %574 = vst [vmem:[#allocation3 + $0x170] sm:$0xff] 0
      %575 = vst [vmem:[#allocation3 + $0x178] sm:$0xff] 0
      %576 = vst [vmem:[#allocation3 + $0x180] sm:$0xff] 0
      %577 = vst [vmem:[#allocation3 + $0x188] sm:$0xff] 0
      %578 = vst [vmem:[#allocation3 + $0x190] sm:$0xff] 0
      %579 = vst [vmem:[#allocation3 + $0x198] sm:$0xff] 0
      %580 = vst [vmem:[#allocation3 + $0x1a0] sm:$0xff] 0
      %581 = vst [vmem:[#allocation3 + $0x1a8] sm:$0xff] 0
      %582 = vst [vmem:[#allocation3 + $0x1b0] sm:$0xff] 0
      %583 = vst [vmem:[#allocation3 + $0x1b8] sm:$0xff] 0
      %584 = vst [vmem:[#allocation3 + $0x1c0] sm:$0xff] 0
      %585 = vst [vmem:[#allocation3 + $0x1c8] sm:$0xff] 0
      %586 = vst [vmem:[#allocation3 + $0x1d0] sm:$0xff] 0
      %587 = vst [vmem:[#allocation3 + $0x1d8] sm:$0xff] 0
      %588 = vst [vmem:[#allocation3 + $0x1e0] sm:$0xff] 0
      %589 = vst [vmem:[#allocation3 + $0x1e8] sm:$0xff] 0
      %590 = vst [vmem:[#allocation3 + $0x1f0] sm:$0xff] 0
      %591 = vst [vmem:[#allocation3 + $0x1f8] sm:$0xff] 0
      %592 = vst [vmem:[#allocation3 + $0x200] sm:$0xff] 0
      %593 = vst [vmem:[#allocation3 + $0x208] sm:$0xff] 0
      %594 = vst [vmem:[#allocation3 + $0x210] sm:$0xff] 0
      %595 = vst [vmem:[#allocation3 + $0x218] sm:$0xff] 0
      %596 = vst [vmem:[#allocation3 + $0x220] sm:$0xff] 0
      %597 = vst [vmem:[#allocation3 + $0x228] sm:$0xff] 0
      %598 = vst [vmem:[#allocation3 + $0x230] sm:$0xff] 0
      %599 = vst [vmem:[#allocation3 + $0x238] sm:$0xff] 0
      %s600 = scalar_lea.vmem [#allocation3], 864
      %601 = vst [vmem:[%s600] sm:$0xff] 0
      %602 = vst [vmem:[%s600 + $0x8] sm:$0xff] 0
      %603 = vst [vmem:[%s600 + $0x10] sm:$0xff] 0
      %604 = vst [vmem:[%s600 + $0x18] sm:$0xff] 0
      %605 = vst [vmem:[%s600 + $0x20] sm:$0xff] 0
      %606 = vst [vmem:[%s600 + $0x28] sm:$0xff] 0
      %607 = vst [vmem:[%s600 + $0x30] sm:$0xff] 0
      %608 = vst [vmem:[%s600 + $0x38] sm:$0xff] 0
      %609 = vst [vmem:[%s600 + $0x40] sm:$0xff] 0
      %610 = vst [vmem:[%s600 + $0x48] sm:$0xff] 0
      %611 = vst [vmem:[%s600 + $0x50] sm:$0xff] 0
      %612 = vst [vmem:[%s600 + $0x58] sm:$0xff] 0
      %613 = vst [vmem:[%s600 + $0x60] sm:$0xff] 0
      %614 = vst [vmem:[%s600 + $0x68] sm:$0xff] 0
      %615 = vst [vmem:[%s600 + $0x70] sm:$0xff] 0
      %616 = vst [vmem:[%s600 + $0x78] sm:$0xff] 0
      %617 = vst [vmem:[%s600 + $0x80] sm:$0xff] 0
      %618 = vst [vmem:[%s600 + $0x88] sm:$0xff] 0
      %619 = vst [vmem:[%s600 + $0x90] sm:$0xff] 0
      %620 = vst [vmem:[%s600 + $0x98] sm:$0xff] 0
      %621 = vst [vmem:[%s600 + $0xa0] sm:$0xff] 0
      %622 = vst [vmem:[%s600 + $0xa8] sm:$0xff] 0
      %623 = vst [vmem:[%s600 + $0xb0] sm:$0xff] 0
      %624 = vst [vmem:[%s600 + $0xb8] sm:$0xff] 0
      %625 = vst [vmem:[%s600 + $0xc0] sm:$0xff] 0
      %626 = vst [vmem:[%s600 + $0xc8] sm:$0xff] 0
      %627 = vst [vmem:[%s600 + $0xd0] sm:$0xff] 0
      %628 = vst [vmem:[%s600 + $0xd8] sm:$0xff] 0
      %629 = vst [vmem:[%s600 + $0xe0] sm:$0xff] 0
      %630 = vst [vmem:[%s600 + $0xe8] sm:$0xff] 0
      %631 = vst [vmem:[%s600 + $0xf0] sm:$0xff] 0
      %632 = vst [vmem:[%s600 + $0xf8] sm:$0xff] 0
      %633 = vst [vmem:[%s600 + $0x100] sm:$0xff] 0
      %634 = vst [vmem:[%s600 + $0x108] sm:$0xff] 0
      %635 = vst [vmem:[%s600 + $0x110] sm:$0xff] 0
      %636 = vst [vmem:[%s600 + $0x118] sm:$0xff] 0
      %637 = vst [vmem:[%s600 + $0x120] sm:$0xff] 0
      %638 = vst [vmem:[%s600 + $0x128] sm:$0xff] 0
      %639 = vst [vmem:[%s600 + $0x130] sm:$0xff] 0
      %640 = vst [vmem:[%s600 + $0x138] sm:$0xff] 0
      %641 = vst [vmem:[%s600 + $0x140] sm:$0xff] 0
      %642 = vst [vmem:[%s600 + $0x148] sm:$0xff] 0
      %643 = vst [vmem:[%s600 + $0x150] sm:$0xff] 0
      %644 = vst [vmem:[%s600 + $0x158] sm:$0xff] 0
      %645 = vst [vmem:[%s600 + $0x160] sm:$0xff] 0
      %646 = vst [vmem:[%s600 + $0x168] sm:$0xff] 0
      %647 = vst [vmem:[%s600 + $0x170] sm:$0xff] 0
      %648 = vst [vmem:[%s600 + $0x178] sm:$0xff] 0
      %649 = vst [vmem:[%s600 + $0x180] sm:$0xff] 0
      %650 = vst [vmem:[%s600 + $0x188] sm:$0xff] 0
      %651 = vst [vmem:[%s600 + $0x190] sm:$0xff] 0
      %652 = vst [vmem:[%s600 + $0x198] sm:$0xff] 0
      %653 = vst [vmem:[%s600 + $0x1a0] sm:$0xff] 0
      %654 = vst [vmem:[%s600 + $0x1a8] sm:$0xff] 0
      %s655 = scalar_lea.vmem [#allocation3], 768
      %656 = vst [vmem:[%s655] sm:$0xff] 0
      %657 = vst [vmem:[%s655 + $0x8] sm:$0xff] 0
      %658 = vst [vmem:[%s655 + $0x10] sm:$0xff] 0
      %659 = vst [vmem:[%s655 + $0x18] sm:$0xff] 0
      %660 = vst [vmem:[%s655 + $0x20] sm:$0xff] 0
      %661 = vst [vmem:[%s655 + $0x28] sm:$0xff] 0
      %s662 = scalar_lea.vmem [#allocation3], 816
      %663 = vst [vmem:[%s662] sm:$0xff] 0
      %664 = vst [vmem:[%s662 + $0x8] sm:$0xff] 0
      %665 = vst [vmem:[%s662 + $0x10] sm:$0xff] 0
      %666 = vst [vmem:[%s662 + $0x18] sm:$0xff] 0
      %667 = vst [vmem:[%s662 + $0x20] sm:$0xff] 0
      %668 = vst [vmem:[%s662 + $0x28] sm:$0xff] 0
      %v669 = vld [vmem:[%s407] sm:$0xf]
      %v670 = vld [vmem:[%s407 + $0x4] sm:$0xf]
      %v671 = vld [vmem:[%s407 + $0x8] sm:$0xf]
      %v672 = vld [vmem:[%s407 + $0xc] sm:$0xf]
      %v673 = vld [vmem:[%s407 + $0x10] sm:$0xf]
      %v674 = vld [vmem:[%s407 + $0x14] sm:$0xf]
      %v675 = vld [vmem:[%s407 + $0x18] sm:$0xf]
      %v676 = vld [vmem:[%s407 + $0x1c] sm:$0xf]
      %v677 = vld [vmem:[%s407 + $0x20] sm:$0xf]
      %v678 = vld [vmem:[%s407 + $0x24] sm:$0xf]
      %v679 = vld [vmem:[%s407 + $0x28] sm:$0xf]
      %v680 = vld [vmem:[%s407 + $0x2c] sm:$0xf]
      %v681 = vld [vmem:[%s407 + $0x30] sm:$0xf]
      %v682 = vld [vmem:[%s407 + $0x34] sm:$0xf]
      %v683 = vld [vmem:[%s407 + $0x38] sm:$0xf]
      %v684 = vld [vmem:[%s407 + $0x3c] sm:$0xf]
      %v685 = vld [vmem:[%s407 + $0x40] sm:$0xf]
      %v686 = vld [vmem:[%s407 + $0x44] sm:$0xf]
      %v687 = vld [vmem:[%s407 + $0x48] sm:$0xf]
      %v688 = vld [vmem:[%s407 + $0x4c] sm:$0xf]
      %v689 = vld [vmem:[%s407 + $0x50] sm:$0xf]
      %v690 = vld [vmem:[%s407 + $0x54] sm:$0xf]
      %v691 = vld [vmem:[%s407 + $0x58] sm:$0xf]
      %v692 = vld [vmem:[%s407 + $0x5c] sm:$0xf]
      %v693 = vld [vmem:[%s407 + $0x60] sm:$0xf]
      %v694 = vld [vmem:[%s407 + $0x64] sm:$0xf]
      %v695 = vld [vmem:[%s407 + $0x68] sm:$0xf]
      %v696 = vld [vmem:[%s407 + $0x6c] sm:$0xf]
      %v697 = vld [vmem:[%s407 + $0x70] sm:$0xf]
      %v698 = vld [vmem:[%s407 + $0x74] sm:$0xf]
      %v699 = vld [vmem:[%s407 + $0x78] sm:$0xf]
      %v700 = vld [vmem:[%s407 + $0x7c] sm:$0xf]
      %v701 = vld [vmem:[%s407 + $0x80] sm:$0xf]
      %v702 = vld [vmem:[%s407 + $0x84] sm:$0xf]
      %v703 = vld [vmem:[%s407 + $0x88] sm:$0xf]
      %v704 = vld [vmem:[%s407 + $0x8c] sm:$0xf]
      %v705 = vld [vmem:[%s407 + $0x90] sm:$0xf]
      %v706 = vld [vmem:[%s407 + $0x94] sm:$0xf]
      %v707 = vld [vmem:[%s407 + $0x98] sm:$0xf]
      %v708 = vld [vmem:[%s407 + $0x9c] sm:$0xf]
      %v709 = vld [vmem:[%s407 + $0xa0] sm:$0xf]
      %v710 = vld [vmem:[%s407 + $0xa4] sm:$0xf]
      %v711 = vld [vmem:[%s407 + $0xa8] sm:$0xf]
      %v712 = vld [vmem:[%s407 + $0xac] sm:$0xf]
      %v713 = vld [vmem:[%s407 + $0xb0] sm:$0xf]
      %v714 = vld [vmem:[%s407 + $0xb4] sm:$0xf]
      %v715 = vld [vmem:[%s407 + $0xb8] sm:$0xf]
      %v716 = vld [vmem:[%s407 + $0xbc] sm:$0xf]
      %v717 = vld [vmem:[%s1] sm:$0xf]
      %v718 = vld [vmem:[%s1 + $0x4] sm:$0xf]
      %v767 = vunpack.c.l.b16 %v669
      %v768 = vunpack.c.l.b16 %v670
      %v769 = vunpack.c.l.b16 %v671
      %v770 = vunpack.c.l.b16 %v672
      %v771 = vunpack.c.l.b16 %v673
      %v772 = vunpack.c.l.b16 %v674
      %v773 = vunpack.c.l.b16 %v675
      %v774 = vunpack.c.l.b16 %v676
      %v775 = vunpack.c.l.b16 %v677
      %v776 = vunpack.c.l.b16 %v678
      %v777 = vunpack.c.l.b16 %v679
      %v778 = vunpack.c.l.b16 %v680
      %v779 = vunpack.c.l.b16 %v681
      %v780 = vunpack.c.l.b16 %v682
      %v781 = vunpack.c.l.b16 %v683
      %v782 = vunpack.c.l.b16 %v684
      %v783 = vunpack.c.l.b16 %v685
      %v784 = vunpack.c.l.b16 %v686
      %v785 = vunpack.c.l.b16 %v687
      %v786 = vunpack.c.l.b16 %v688
      %v787 = vunpack.c.l.b16 %v689
      %v788 = vunpack.c.l.b16 %v690
      %v789 = vunpack.c.l.b16 %v691
      %v790 = vunpack.c.l.b16 %v692
      %v791 = vunpack.c.l.b16 %v693
      %v792 = vunpack.c.l.b16 %v694
      %v793 = vunpack.c.l.b16 %v695
      %v794 = vunpack.c.l.b16 %v696
      %v795 = vunpack.c.l.b16 %v697
      %v796 = vunpack.c.l.b16 %v698
      %v797 = vunpack.c.l.b16 %v699
      %v798 = vunpack.c.l.b16 %v700
      %v799 = vunpack.c.l.b16 %v701
      %v800 = vunpack.c.l.b16 %v702
      %v801 = vunpack.c.l.b16 %v703
      %v802 = vunpack.c.l.b16 %v704
      %v803 = vunpack.c.l.b16 %v705
      %v804 = vunpack.c.l.b16 %v706
      %v805 = vunpack.c.l.b16 %v707
      %v806 = vunpack.c.l.b16 %v708
      %v807 = vunpack.c.l.b16 %v709
      %v808 = vunpack.c.l.b16 %v710
      %v809 = vunpack.c.l.b16 %v711
      %v810 = vunpack.c.l.b16 %v712
      %v811 = vunpack.c.l.b16 %v713
      %v812 = vunpack.c.l.b16 %v714
      %v813 = vunpack.c.l.b16 %v715
      %v814 = vunpack.c.l.b16 %v716
      %v815 = vpack.c.b16 %v768, %v767
      %v816 = vpack.c.b16 %v770, %v769
      %v817 = vpack.c.b16 %v772, %v771
      %v818 = vpack.c.b16 %v774, %v773
      %v819 = vpack.c.b16 %v776, %v775
      %v820 = vpack.c.b16 %v778, %v777
      %v821 = vpack.c.b16 %v780, %v779
      %v822 = vpack.c.b16 %v782, %v781
      %v823 = vpack.c.b16 %v784, %v783
      %v824 = vpack.c.b16 %v786, %v785
      %v825 = vpack.c.b16 %v788, %v787
      %v826 = vpack.c.b16 %v790, %v789
      %v827 = vpack.c.b16 %v792, %v791
      %v828 = vpack.c.b16 %v794, %v793
      %v829 = vpack.c.b16 %v796, %v795
      %v830 = vpack.c.b16 %v798, %v797
      %v831 = vpack.c.b16 %v800, %v799
      %v832 = vpack.c.b16 %v802, %v801
      %v833 = vpack.c.b16 %v804, %v803
      %v834 = vpack.c.b16 %v806, %v805
      %v835 = vpack.c.b16 %v808, %v807
      %v836 = vpack.c.b16 %v810, %v809
      %v837 = vpack.c.b16 %v812, %v811
      %v838 = vpack.c.b16 %v814, %v813
      %v841 = vunpack.c.l.b16 %v717
      %v842 = vunpack.c.l.b16 %v718
      %v843 = vpack.c.b16 %v842, %v841
      %vm845 = vcmask 130048
      %v847 = vsel %vm845, %v815, 0
      %v850 = vsel %vm845, %v816, 0
      %v853 = vsel %vm845, %v817, 0
      %v856 = vsel %vm845, %v818, 0
      %v859 = vsel %vm845, %v819, 0
      %v862 = vsel %vm845, %v820, 0
      %v865 = vsel %vm845, %v821, 0
      %v868 = vsel %vm845, %v822, 0
      %v871 = vsel %vm845, %v823, 0
      %v874 = vsel %vm845, %v824, 0
      %v877 = vsel %vm845, %v825, 0
      %v880 = vsel %vm845, %v826, 0
      %v883 = vsel %vm845, %v827, 0
      %v886 = vsel %vm845, %v828, 0
      %v889 = vsel %vm845, %v829, 0
      %v892 = vsel %vm845, %v830, 0
      %v895 = vsel %vm845, %v831, 0
      %v898 = vsel %vm845, %v832, 0
      %v901 = vsel %vm845, %v833, 0
      %v904 = vsel %vm845, %v834, 0
      %v907 = vsel %vm845, %v835, 0
      %v910 = vsel %vm845, %v836, 0
      %v913 = vsel %vm845, %v837, 0
      %v916 = vsel %vm845, %v838, 0
      %918 = vmatprep.subr.bf16.mxu0 0
      %919 = vmatpush1.bf16.msra.mxu0 %v843
      %920 = vmatprep.subr.bf16.mxu0 0
      %921 = vmatpush1.bf16.msra.mxu0 0
      %922 = vmatprep.subr.bf16.mxu0 0
      %923 = vmatpush1.bf16.msra.mxu0 0
      %924 = vmatprep.subr.bf16.mxu0 0
      %925 = vmatpush1.bf16.msra.mxu0 0
      %926 = vmatprep.subr.bf16.mxu0 0
      %927 = vmatpush1.bf16.msra.mxu0 0
      %928 = vmatprep.subr.bf16.mxu0 0
      %929 = vmatpush1.bf16.msra.mxu0 0
      %930 = vmatprep.subr.bf16.mxu0 0
      %931 = vmatpush1.bf16.msra.mxu0 0
      %932 = vmatprep.subr.bf16.mxu0 0
      %933 = vmatpush1.bf16.msra.mxu0 0
      %934 = vmatprep.subr.bf16.mxu0 0
      %935 = vmatpush1.bf16.msra.mxu0 0
      %936 = vmatprep.subr.bf16.mxu0 0
      %937 = vmatpush1.bf16.msra.mxu0 0
      %938 = vmatprep.subr.bf16.mxu0 0
      %939 = vmatpush1.bf16.msra.mxu0 0
      %940 = vmatprep.subr.bf16.mxu0 0
      %941 = vmatpush1.bf16.msra.mxu0 0
      %942 = vmatprep.subr.bf16.mxu0 0
      %943 = vmatpush1.bf16.msra.mxu0 0
      %944 = vmatprep.subr.bf16.mxu0 0
      %945 = vmatpush1.bf16.msra.mxu0 0
      %946 = vmatprep.subr.bf16.mxu0 0
      %947 = vmatpush1.bf16.msra.mxu0 0
      %948 = vmatprep.subr.bf16.mxu0 0
      %949 = vmatpush1.bf16.msra.mxu0 0
      %950 = vmatprep.mubr.bf16.mxu0 0
      %951 = vmatmul.mubr.bf16.gmra.mrb[0].mxu0 %v847
      %v952 = vpop.f32.mrb[0].mxu0
      %v953 = vadd.f32 0.0, %v952
      %v954 = vpop.f32.mrb[0].mxu0
      %v955 = vpop.f32.mrb[0].mxu0
      %v956 = vadd.f32 0.0, %v955
      %v957 = vpop.f32.mrb[0].mxu0
      %958 = vmatprep.mubr.bf16.mxu0 0
      %959 = vmatmul.mubr.bf16.gmra.mrb[0].mxu0 %v850
      %v960 = vpop.f32.mrb[0].mxu0
      %v961 = vadd.f32 0.0, %v960
      %v962 = vpop.f32.mrb[0].mxu0
      %v963 = vpop.f32.mrb[0].mxu0
      %v964 = vadd.f32 0.0, %v963
      %v965 = vpop.f32.mrb[0].mxu0
      %966 = vmatprep.mubr.bf16.mxu0 0
      %967 = vmatmul.mubr.bf16.gmra.mrb[0].mxu0 %v853
      %v968 = vpop.f32.mrb[0].mxu0
      %v969 = vadd.f32 0.0, %v968
      %v970 = vpop.f32.mrb[0].mxu0
      %v971 = vpop.f32.mrb[0].mxu0
      %v972 = vadd.f32 0.0, %v971
      %v973 = vpop.f32.mrb[0].mxu0
      %974 = vmatprep.mubr.bf16.mxu0 0
      %975 = vmatmul.mubr.bf16.gmra.mrb[0].mxu0 %v856
      %v976 = vpop.f32.mrb[0].mxu0
      %v977 = vadd.f32 0.0, %v976
      %v978 = vpop.f32.mrb[0].mxu0
      %v979 = vpop.f32.mrb[0].mxu0
      %v980 = vadd.f32 0.0, %v979
      %v981 = vpop.f32.mrb[0].mxu0
      %982 = vmatprep.mubr.bf16.mxu0 0
      %983 = vmatmul.mubr.bf16.gmra.mrb[0].mxu0 %v859
      %v984 = vpop.f32.mrb[0].mxu0
      %v985 = vadd.f32 0.0, %v984
      %v986 = vpop.f32.mrb[0].mxu0
      %v987 = vpop.f32.mrb[0].mxu0
      %v988 = vadd.f32 0.0, %v987
      %v989 = vpop.f32.mrb[0].mxu0
      %990 = vmatprep.mubr.bf16.mxu0 0
      %991 = vmatmul.mubr.bf16.gmra.mrb[0].mxu0 %v862
      %v992 = vpop.f32.mrb[0].mxu0
      %v993 = vadd.f32 0.0, %v992
      %v994 = vpop.f32.mrb[0].mxu0
      %v995 = vpop.f32.mrb[0].mxu0
      %v996 = vadd.f32 0.0, %v995
      %v997 = vpop.f32.mrb[0].mxu0
      %998 = vmatprep.mubr.bf16.mxu0 0
      %999 = vmatmul.mubr.bf16.gmra.mrb[0].mxu0 %v865
      %v1000 = vpop.f32.mrb[0].mxu0
      %v1001 = vadd.f32 0.0, %v1000
      %v1002 = vpop.f32.mrb[0].mxu0
      %v1003 = vpop.f32.mrb[0].mxu0
      %v1004 = vadd.f32 0.0, %v1003
      %v1005 = vpop.f32.mrb[0].mxu0
      %1006 = vmatprep.mubr.bf16.mxu0 0
      %1007 = vmatmul.mubr.bf16.gmra.mrb[0].mxu0 %v868
      %v1008 = vpop.f32.mrb[0].mxu0
      %v1009 = vadd.f32 0.0, %v1008
      %v1010 = vpop.f32.mrb[0].mxu0
      %v1011 = vpop.f32.mrb[0].mxu0
      %v1012 = vadd.f32 0.0, %v1011
      %v1013 = vpop.f32.mrb[0].mxu0
      %1014 = vmatprep.mubr.bf16.mxu0 0
      %1015 = vmatmul.mubr.bf16.gmra.mrb[0].mxu0 %v871
      %v1016 = vpop.f32.mrb[0].mxu0
      %v1017 = vadd.f32 0.0, %v1016
      %v1018 = vpop.f32.mrb[0].mxu0
      %v1019 = vpop.f32.mrb[0].mxu0
      %v1020 = vadd.f32 0.0, %v1019
      %v1021 = vpop.f32.mrb[0].mxu0
      %1022 = vmatprep.mubr.bf16.mxu0 0
      %1023 = vmatmul.mubr.bf16.gmra.mrb[0].mxu0 %v874
      %v1024 = vpop.f32.mrb[0].mxu0
      %v1025 = vadd.f32 0.0, %v1024
      %v1026 = vpop.f32.mrb[0].mxu0
      %v1027 = vpop.f32.mrb[0].mxu0
      %v1028 = vadd.f32 0.0, %v1027
      %v1029 = vpop.f32.mrb[0].mxu0
      %1030 = vmatprep.mubr.bf16.mxu0 0
      %1031 = vmatmul.mubr.bf16.gmra.mrb[0].mxu0 %v877
      %v1032 = vpop.f32.mrb[0].mxu0
      %v1033 = vadd.f32 0.0, %v1032
      %v1034 = vpop.f32.mrb[0].mxu0
      %v1035 = vpop.f32.mrb[0].mxu0
      %v1036 = vadd.f32 0.0, %v1035
      %v1037 = vpop.f32.mrb[0].mxu0
      %1038 = vmatprep.mubr.bf16.mxu0 0
      %1039 = vmatmul.mubr.bf16.gmra.mrb[0].mxu0 %v880
      %v1040 = vpop.f32.mrb[0].mxu0
      %v1041 = vadd.f32 0.0, %v1040
      %v1042 = vpop.f32.mrb[0].mxu0
      %v1043 = vpop.f32.mrb[0].mxu0
      %v1044 = vadd.f32 0.0, %v1043
      %v1045 = vpop.f32.mrb[0].mxu0
      %1046 = vmatprep.mubr.bf16.mxu0 0
      %1047 = vmatmul.mubr.bf16.gmra.mrb[0].mxu0 %v883
      %v1048 = vpop.f32.mrb[0].mxu0
      %v1049 = vadd.f32 0.0, %v1048
      %v1050 = vpop.f32.mrb[0].mxu0
      %v1051 = vpop.f32.mrb[0].mxu0
      %v1052 = vadd.f32 0.0, %v1051
      %v1053 = vpop.f32.mrb[0].mxu0
      %1054 = vmatprep.mubr.bf16.mxu0 0
      %1055 = vmatmul.mubr.bf16.gmra.mrb[0].mxu0 %v886
      %v1056 = vpop.f32.mrb[0].mxu0
      %v1057 = vadd.f32 0.0, %v1056
      %v1058 = vpop.f32.mrb[0].mxu0
      %v1059 = vpop.f32.mrb[0].mxu0
      %v1060 = vadd.f32 0.0, %v1059
      %v1061 = vpop.f32.mrb[0].mxu0
      %1062 = vmatprep.mubr.bf16.mxu0 0
      %1063 = vmatmul.mubr.bf16.gmra.mrb[0].mxu0 %v889
      %v1064 = vpop.f32.mrb[0].mxu0
      %v1065 = vadd.f32 0.0, %v1064
      %v1066 = vpop.f32.mrb[0].mxu0
      %v1067 = vpop.f32.mrb[0].mxu0
      %v1068 = vadd.f32 0.0, %v1067
      %v1069 = vpop.f32.mrb[0].mxu0
      %1070 = vmatprep.mubr.bf16.mxu0 0
      %1071 = vmatmul.mubr.bf16.gmra.mrb[0].mxu0 %v892
      %v1072 = vpop.f32.mrb[0].mxu0
      %v1073 = vadd.f32 0.0, %v1072
      %v1074 = vpop.f32.mrb[0].mxu0
      %v1075 = vpop.f32.mrb[0].mxu0
      %v1076 = vadd.f32 0.0, %v1075
      %v1077 = vpop.f32.mrb[0].mxu0
      %1078 = vmatprep.mubr.bf16.mxu0 0
      %1079 = vmatmul.mubr.bf16.gmra.mrb[0].mxu0 %v895
      %v1080 = vpop.f32.mrb[0].mxu0
      %v1081 = vadd.f32 0.0, %v1080
      %v1082 = vpop.f32.mrb[0].mxu0
      %v1083 = vpop.f32.mrb[0].mxu0
      %v1084 = vadd.f32 0.0, %v1083
      %v1085 = vpop.f32.mrb[0].mxu0
      %1086 = vmatprep.mubr.bf16.mxu0 0
      %1087 = vmatmul.mubr.bf16.gmra.mrb[0].mxu0 %v898
      %v1088 = vpop.f32.mrb[0].mxu0
      %v1089 = vadd.f32 0.0, %v1088
      %v1090 = vpop.f32.mrb[0].mxu0
      %v1091 = vpop.f32.mrb[0].mxu0
      %v1092 = vadd.f32 0.0, %v1091
      %v1093 = vpop.f32.mrb[0].mxu0
      %1094 = vmatprep.mubr.bf16.mxu0 0
      %1095 = vmatmul.mubr.bf16.gmra.mrb[0].mxu0 %v901
      %v1096 = vpop.f32.mrb[0].mxu0
      %v1097 = vadd.f32 0.0, %v1096
      %v1098 = vpop.f32.mrb[0].mxu0
      %v1099 = vpop.f32.mrb[0].mxu0
      %v1100 = vadd.f32 0.0, %v1099
      %v1101 = vpop.f32.mrb[0].mxu0
      %1102 = vmatprep.mubr.bf16.mxu0 0
      %1103 = vmatmul.mubr.bf16.gmra.mrb[0].mxu0 %v904
      %v1104 = vpop.f32.mrb[0].mxu0
      %v1105 = vadd.f32 0.0, %v1104
      %v1106 = vpop.f32.mrb[0].mxu0
      %v1107 = vpop.f32.mrb[0].mxu0
      %v1108 = vadd.f32 0.0, %v1107
      %v1109 = vpop.f32.mrb[0].mxu0
      %1110 = vmatprep.mubr.bf16.mxu0 0
      %1111 = vmatmul.mubr.bf16.gmra.mrb[0].mxu0 %v907
      %v1112 = vpop.f32.mrb[0].mxu0
      %v1113 = vadd.f32 0.0, %v1112
      %v1114 = vpop.f32.mrb[0].mxu0
      %v1115 = vpop.f32.mrb[0].mxu0
      %v1116 = vadd.f32 0.0, %v1115
      %v1117 = vpop.f32.mrb[0].mxu0
      %1118 = vmatprep.mubr.bf16.mxu0 0
      %1119 = vmatmul.mubr.bf16.gmra.mrb[0].mxu0 %v910
      %v1120 = vpop.f32.mrb[0].mxu0
      %v1121 = vadd.f32 0.0, %v1120
      %v1122 = vpop.f32.mrb[0].mxu0
      %v1123 = vpop.f32.mrb[0].mxu0
      %v1124 = vadd.f32 0.0, %v1123
      %v1125 = vpop.f32.mrb[0].mxu0
      %1126 = vmatprep.mubr.bf16.mxu0 0
      %1127 = vmatmul.mubr.bf16.gmra.mrb[0].mxu0 %v913
      %v1128 = vpop.f32.mrb[0].mxu0
      %v1129 = vadd.f32 0.0, %v1128
      %v1130 = vpop.f32.mrb[0].mxu0
      %v1131 = vpop.f32.mrb[0].mxu0
      %v1132 = vadd.f32 0.0, %v1131
      %v1133 = vpop.f32.mrb[0].mxu0
      %1134 = vmatprep.mubr.bf16.mxu0 0
      %1135 = vmatmul.mubr.bf16.gmra.mrb[0].mxu0 %v916
      %v1136 = vpop.f32.mrb[0].mxu0
      %v1137 = vadd.f32 0.0, %v1136
      %v1138 = vpop.f32.mrb[0].mxu0
      %v1139 = vpop.f32.mrb[0].mxu0
      %v1140 = vadd.f32 0.0, %v1139
      %v1141 = vpop.f32.mrb[0].mxu0
      %1142 = vdwg.mxu0
      %v1143 = vld [vmem:[%s2] sm:$0x1]
      %v1145 = vlaneseq
      %v1146 = vshrl.u32 %v1145, 7
      %v1147 = vsub.s32 0, %v1146
      %v1148 = vrot.slane %v1143, %v1147
      %v1150 = vmul.f32 %v953, %v1148
      %v1151 = vmul.f32 %v956, %v1148
      %v1152 = vmul.f32 %v961, %v1148
      %v1153 = vmul.f32 %v964, %v1148
      %v1154 = vmul.f32 %v969, %v1148
      %v1155 = vmul.f32 %v972, %v1148
      %v1156 = vmul.f32 %v977, %v1148
      %v1157 = vmul.f32 %v980, %v1148
      %v1158 = vmul.f32 %v985, %v1148
      %v1159 = vmul.f32 %v988, %v1148
      %v1160 = vmul.f32 %v993, %v1148
      %v1161 = vmul.f32 %v996, %v1148
      %v1162 = vmul.f32 %v1001, %v1148
      %v1163 = vmul.f32 %v1004, %v1148
      %v1164 = vmul.f32 %v1009, %v1148
      %v1165 = vmul.f32 %v1012, %v1148
      %v1166 = vmul.f32 %v1017, %v1148
      %v1167 = vmul.f32 %v1020, %v1148
      %v1168 = vmul.f32 %v1025, %v1148
      %v1169 = vmul.f32 %v1028, %v1148
      %v1170 = vmul.f32 %v1033, %v1148
      %v1171 = vmul.f32 %v1036, %v1148
      %v1172 = vmul.f32 %v1041, %v1148
      %v1173 = vmul.f32 %v1044, %v1148
      %v1174 = vmul.f32 %v1049, %v1148
      %v1175 = vmul.f32 %v1052, %v1148
      %v1176 = vmul.f32 %v1057, %v1148
      %v1177 = vmul.f32 %v1060, %v1148
      %v1178 = vmul.f32 %v1065, %v1148
      %v1179 = vmul.f32 %v1068, %v1148
      %v1180 = vmul.f32 %v1073, %v1148
      %v1181 = vmul.f32 %v1076, %v1148
      %v1182 = vmul.f32 %v1081, %v1148
      %v1183 = vmul.f32 %v1084, %v1148
      %v1184 = vmul.f32 %v1089, %v1148
      %v1185 = vmul.f32 %v1092, %v1148
      %v1186 = vmul.f32 %v1097, %v1148
      %v1187 = vmul.f32 %v1100, %v1148
      %v1188 = vmul.f32 %v1105, %v1148
      %v1189 = vmul.f32 %v1108, %v1148
      %v1190 = vmul.f32 %v1113, %v1148
      %v1191 = vmul.f32 %v1116, %v1148
      %v1192 = vmul.f32 %v1121, %v1148
      %v1193 = vmul.f32 %v1124, %v1148
      %v1194 = vmul.f32 %v1129, %v1148
      %v1195 = vmul.f32 %v1132, %v1148
      %v1196 = vmul.f32 %v1137, %v1148
      %v1197 = vmul.f32 %v1140, %v1148
      %v1198 = vld [vmem:[%s3] sm:$0x1]
      %v1200 = vlaneseq
      %v1201 = vshrl.u32 %v1200, 7
      %v1202 = vsub.s32 0, %v1201
      %v1203 = vrot.slane %v1198, %v1202
      %v1205 = vadd.f32 %v1150, %v1203
      %v1206 = vadd.f32 %v1151, %v1203
      %v1207 = vadd.f32 %v1152, %v1203
      %v1208 = vadd.f32 %v1153, %v1203
      %v1209 = vadd.f32 %v1154, %v1203
      %v1210 = vadd.f32 %v1155, %v1203
      %v1211 = vadd.f32 %v1156, %v1203
      %v1212 = vadd.f32 %v1157, %v1203
      %v1213 = vadd.f32 %v1158, %v1203
      %v1214 = vadd.f32 %v1159, %v1203
      %v1215 = vadd.f32 %v1160, %v1203
      %v1216 = vadd.f32 %v1161, %v1203
      %v1217 = vadd.f32 %v1162, %v1203
      %v1218 = vadd.f32 %v1163, %v1203
      %v1219 = vadd.f32 %v1164, %v1203
      %v1220 = vadd.f32 %v1165, %v1203
      %v1221 = vadd.f32 %v1166, %v1203
      %v1222 = vadd.f32 %v1167, %v1203
      %v1223 = vadd.f32 %v1168, %v1203
      %v1224 = vadd.f32 %v1169, %v1203
      %v1225 = vadd.f32 %v1170, %v1203
      %v1226 = vadd.f32 %v1171, %v1203
      %v1227 = vadd.f32 %v1172, %v1203
      %v1228 = vadd.f32 %v1173, %v1203
      %v1229 = vadd.f32 %v1174, %v1203
      %v1230 = vadd.f32 %v1175, %v1203
      %v1231 = vadd.f32 %v1176, %v1203
      %v1232 = vadd.f32 %v1177, %v1203
      %v1233 = vadd.f32 %v1178, %v1203
      %v1234 = vadd.f32 %v1179, %v1203
      %v1235 = vadd.f32 %v1180, %v1203
      %v1236 = vadd.f32 %v1181, %v1203
      %v1237 = vadd.f32 %v1182, %v1203
      %v1238 = vadd.f32 %v1183, %v1203
      %v1239 = vadd.f32 %v1184, %v1203
      %v1240 = vadd.f32 %v1185, %v1203
      %v1241 = vadd.f32 %v1186, %v1203
      %v1242 = vadd.f32 %v1187, %v1203
      %v1243 = vadd.f32 %v1188, %v1203
      %v1244 = vadd.f32 %v1189, %v1203
      %v1245 = vadd.f32 %v1190, %v1203
      %v1246 = vadd.f32 %v1191, %v1203
      %v1247 = vadd.f32 %v1192, %v1203
      %v1248 = vadd.f32 %v1193, %v1203
      %v1249 = vadd.f32 %v1194, %v1203
      %v1250 = vadd.f32 %v1195, %v1203
      %v1251 = vadd.f32 %v1196, %v1203
      %v1252 = vadd.f32 %v1197, %v1203
      %v1253 = vmul.f32 %v1205, 0.01
      %v1254 = vmul.f32 %v1206, 0.01
      %v1255 = vmul.f32 %v1207, 0.01
      %v1256 = vmul.f32 %v1208, 0.01
      %v1257 = vmul.f32 %v1209, 0.01
      %v1258 = vmul.f32 %v1210, 0.01
      %v1259 = vmul.f32 %v1211, 0.01
      %v1260 = vmul.f32 %v1212, 0.01
      %v1261 = vmul.f32 %v1213, 0.01
      %v1262 = vmul.f32 %v1214, 0.01
      %v1263 = vmul.f32 %v1215, 0.01
      %v1264 = vmul.f32 %v1216, 0.01
      %v1265 = vmul.f32 %v1217, 0.01
      %v1266 = vmul.f32 %v1218, 0.01
      %v1267 = vmul.f32 %v1219, 0.01
      %v1268 = vmul.f32 %v1220, 0.01
      %v1269 = vmul.f32 %v1221, 0.01
      %v1270 = vmul.f32 %v1222, 0.01
      %v1271 = vmul.f32 %v1223, 0.01
      %v1272 = vmul.f32 %v1224, 0.01
      %v1273 = vmul.f32 %v1225, 0.01
      %v1274 = vmul.f32 %v1226, 0.01
      %v1275 = vmul.f32 %v1227, 0.01
      %v1276 = vmul.f32 %v1228, 0.01
      %v1277 = vmul.f32 %v1229, 0.01
      %v1278 = vmul.f32 %v1230, 0.01
      %v1279 = vmul.f32 %v1231, 0.01
      %v1280 = vmul.f32 %v1232, 0.01
      %v1281 = vmul.f32 %v1233, 0.01
      %v1282 = vmul.f32 %v1234, 0.01
      %v1283 = vmul.f32 %v1235, 0.01
      %v1284 = vmul.f32 %v1236, 0.01
      %v1285 = vmul.f32 %v1237, 0.01
      %v1286 = vmul.f32 %v1238, 0.01
      %v1287 = vmul.f32 %v1239, 0.01
      %v1288 = vmul.f32 %v1240, 0.01
      %v1289 = vmul.f32 %v1241, 0.01
      %v1290 = vmul.f32 %v1242, 0.01
      %v1291 = vmul.f32 %v1243, 0.01
      %v1292 = vmul.f32 %v1244, 0.01
      %v1293 = vmul.f32 %v1245, 0.01
      %v1294 = vmul.f32 %v1246, 0.01
      %v1295 = vmul.f32 %v1247, 0.01
      %v1296 = vmul.f32 %v1248, 0.01
      %v1297 = vmul.f32 %v1249, 0.01
      %v1298 = vmul.f32 %v1250, 0.01
      %v1299 = vmul.f32 %v1251, 0.01
      %v1300 = vmul.f32 %v1252, 0.01
      %v1301 = vmax.f32 %v1205, %v1253
      %v1302 = vmax.f32 %v1206, %v1254
      %v1303 = vmax.f32 %v1207, %v1255
      %v1304 = vmax.f32 %v1208, %v1256
      %v1305 = vmax.f32 %v1209, %v1257
      %v1306 = vmax.f32 %v1210, %v1258
      %v1307 = vmax.f32 %v1211, %v1259
      %v1308 = vmax.f32 %v1212, %v1260
      %v1309 = vmax.f32 %v1213, %v1261
      %v1310 = vmax.f32 %v1214, %v1262
      %v1311 = vmax.f32 %v1215, %v1263
      %v1312 = vmax.f32 %v1216, %v1264
      %v1313 = vmax.f32 %v1217, %v1265
      %v1314 = vmax.f32 %v1218, %v1266
      %v1315 = vmax.f32 %v1219, %v1267
      %v1316 = vmax.f32 %v1220, %v1268
      %v1317 = vmax.f32 %v1221, %v1269
      %v1318 = vmax.f32 %v1222, %v1270
      %v1319 = vmax.f32 %v1223, %v1271
      %v1320 = vmax.f32 %v1224, %v1272
      %v1321 = vmax.f32 %v1225, %v1273
      %v1322 = vmax.f32 %v1226, %v1274
      %v1323 = vmax.f32 %v1227, %v1275
      %v1324 = vmax.f32 %v1228, %v1276
      %v1325 = vmax.f32 %v1229, %v1277
      %v1326 = vmax.f32 %v1230, %v1278
      %v1327 = vmax.f32 %v1231, %v1279
      %v1328 = vmax.f32 %v1232, %v1280
      %v1329 = vmax.f32 %v1233, %v1281
      %v1330 = vmax.f32 %v1234, %v1282
      %v1331 = vmax.f32 %v1235, %v1283
      %v1332 = vmax.f32 %v1236, %v1284
      %v1333 = vmax.f32 %v1237, %v1285
      %v1334 = vmax.f32 %v1238, %v1286
      %v1335 = vmax.f32 %v1239, %v1287
      %v1336 = vmax.f32 %v1240, %v1288
      %v1337 = vmax.f32 %v1241, %v1289
      %v1338 = vmax.f32 %v1242, %v1290
      %v1339 = vmax.f32 %v1243, %v1291
      %v1340 = vmax.f32 %v1244, %v1292
      %v1341 = vmax.f32 %v1245, %v1293
      %v1342 = vmax.f32 %v1246, %v1294
      %v1343 = vmax.f32 %v1247, %v1295
      %v1344 = vmax.f32 %v1248, %v1296
      %v1345 = vmax.f32 %v1249, %v1297
      %v1346 = vmax.f32 %v1250, %v1298
      %v1347 = vmax.f32 %v1251, %v1299
      %v1348 = vmax.f32 %v1252, %v1300
      %v1349 = vmax.f32 %v1301, %v1305
      %v1350 = vmax.f32 %v1302, %v1306
      %v1351 = vmax.f32 %v1303, %v1307
      %v1352 = vmax.f32 %v1304, %v1308
      %v1353 = vmax.f32 %v1309, %v1313
      %v1354 = vmax.f32 %v1310, %v1314
      %v1355 = vmax.f32 %v1311, %v1315
      %v1356 = vmax.f32 %v1312, %v1316
      %v1357 = vmax.f32 %v1317, %v1321
      %v1358 = vmax.f32 %v1318, %v1322
      %v1359 = vmax.f32 %v1319, %v1323
      %v1360 = vmax.f32 %v1320, %v1324
      %v1361 = vmax.f32 %v1325, %v1329
      %v1362 = vmax.f32 %v1326, %v1330
      %v1363 = vmax.f32 %v1327, %v1331
      %v1364 = vmax.f32 %v1328, %v1332
      %v1365 = vmax.f32 %v1333, %v1337
      %v1366 = vmax.f32 %v1334, %v1338
      %v1367 = vmax.f32 %v1335, %v1339
      %v1368 = vmax.f32 %v1336, %v1340
      %v1369 = vmax.f32 %v1341, %v1345
      %v1370 = vmax.f32 %v1342, %v1346
      %v1371 = vmax.f32 %v1343, %v1347
      %v1372 = vmax.f32 %v1344, %v1348
      %v1373 = vmul.f32 %v1349, %v426
      %v1374 = vmul.f32 %v1350, %v427
      %v1375 = vmul.f32 %v1351, %v428
      %v1376 = vmul.f32 %v1352, %v429
      %v1377 = vmul.f32 %v1353, %v426
      %v1378 = vmul.f32 %v1354, %v427
      %v1379 = vmul.f32 %v1355, %v428
      %v1380 = vmul.f32 %v1356, %v429
      %v1381 = vmul.f32 %v1357, %v426
      %v1382 = vmul.f32 %v1358, %v427
      %v1383 = vmul.f32 %v1359, %v428
      %v1384 = vmul.f32 %v1360, %v429
      %v1385 = vmul.f32 %v1361, %v426
      %v1386 = vmul.f32 %v1362, %v427
      %v1387 = vmul.f32 %v1363, %v428
      %v1388 = vmul.f32 %v1364, %v429
      %v1389 = vmul.f32 %v1365, %v426
      %v1390 = vmul.f32 %v1366, %v427
      %v1391 = vmul.f32 %v1367, %v428
      %v1392 = vmul.f32 %v1368, %v429
      %v1393 = vmul.f32 %v1369, %v426
      %v1394 = vmul.f32 %v1370, %v427
      %v1395 = vmul.f32 %v1371, %v428
      %v1396 = vmul.f32 %v1372, %v429
      %vm1421 = vcmask 1040384
      %v1422 = vrot.slane %v1373, 7
      %v1423 = vrot.slane %v1374, 7
      %v1424 = vsel %vm1421, %v1422, %v1423
      %v1425 = vrot.slane %v1375, 7
      %v1426 = vsel %vm1421, %v1423, %v1425
      %v1427 = vrot.slane %v1376, 7
      %v1428 = vsel %vm1421, %v1425, %v1427
      %v1429 = vrot.slane %v1377, 7
      %v1430 = vrot.slane %v1378, 7
      %v1431 = vsel %vm1421, %v1429, %v1430
      %v1432 = vrot.slane %v1379, 7
      %v1433 = vsel %vm1421, %v1430, %v1432
      %v1434 = vrot.slane %v1380, 7
      %v1435 = vsel %vm1421, %v1432, %v1434
      %v1436 = vrot.slane %v1381, 7
      %v1437 = vrot.slane %v1382, 7
      %v1438 = vsel %vm1421, %v1436, %v1437
      %v1439 = vrot.slane %v1383, 7
      %v1440 = vsel %vm1421, %v1437, %v1439
      %v1441 = vrot.slane %v1384, 7
      %v1442 = vsel %vm1421, %v1439, %v1441
      %v1443 = vrot.slane %v1385, 7
      %v1444 = vrot.slane %v1386, 7
      %v1445 = vsel %vm1421, %v1443, %v1444
      %v1446 = vrot.slane %v1387, 7
      %v1447 = vsel %vm1421, %v1444, %v1446
      %v1448 = vrot.slane %v1388, 7
      %v1449 = vsel %vm1421, %v1446, %v1448
      %v1450 = vrot.slane %v1389, 7
      %v1451 = vrot.slane %v1390, 7
      %v1452 = vsel %vm1421, %v1450, %v1451
      %v1453 = vrot.slane %v1391, 7
      %v1454 = vsel %vm1421, %v1451, %v1453
      %v1455 = vrot.slane %v1392, 7
      %v1456 = vsel %vm1421, %v1453, %v1455
      %v1457 = vrot.slane %v1393, 7
      %v1458 = vrot.slane %v1394, 7
      %v1459 = vsel %vm1421, %v1457, %v1458
      %v1460 = vrot.slane %v1395, 7
      %v1461 = vsel %vm1421, %v1458, %v1460
      %v1462 = vrot.slane %v1396, 7
      %v1463 = vsel %vm1421, %v1460, %v1462
      %v1488 = vsel %vm1421, 0.0, %v1422
      %v1489 = vsel %vm1421, 0.0, %v1429
      %v1490 = vsel %vm1421, 0.0, %v1436
      %v1491 = vsel %vm1421, 0.0, %v1443
      %v1492 = vsel %vm1421, 0.0, %v1450
      %v1493 = vsel %vm1421, 0.0, %v1457
      %vm1494 = vcmask 1046528
      %v1495 = vrot.slane %v1373, 1
      %v1496 = vrot.slane %v1374, 1
      %v1497 = vsel %vm1494, %v1495, %v1496
      %v1498 = vrot.slane %v1375, 1
      %v1499 = vsel %vm1494, %v1496, %v1498
      %v1500 = vrot.slane %v1376, 1
      %v1501 = vsel %vm1494, %v1498, %v1500
      %v1502 = vrot.slane %v1377, 1
      %v1503 = vrot.slane %v1378, 1
      %v1504 = vsel %vm1494, %v1502, %v1503
      %v1505 = vrot.slane %v1379, 1
      %v1506 = vsel %vm1494, %v1503, %v1505
      %v1507 = vrot.slane %v1380, 1
      %v1508 = vsel %vm1494, %v1505, %v1507
      %v1509 = vrot.slane %v1381, 1
      %v1510 = vrot.slane %v1382, 1
      %v1511 = vsel %vm1494, %v1509, %v1510
      %v1512 = vrot.slane %v1383, 1
      %v1513 = vsel %vm1494, %v1510, %v1512
      %v1514 = vrot.slane %v1384, 1
      %v1515 = vsel %vm1494, %v1512, %v1514
      %v1516 = vrot.slane %v1385, 1
      %v1517 = vrot.slane %v1386, 1
      %v1518 = vsel %vm1494, %v1516, %v1517
      %v1519 = vrot.slane %v1387, 1
      %v1520 = vsel %vm1494, %v1517, %v1519
      %v1521 = vrot.slane %v1388, 1
      %v1522 = vsel %vm1494, %v1519, %v1521
      %v1523 = vrot.slane %v1389, 1
      %v1524 = vrot.slane %v1390, 1
      %v1525 = vsel %vm1494, %v1523, %v1524
      %v1526 = vrot.slane %v1391, 1
      %v1527 = vsel %vm1494, %v1524, %v1526
      %v1528 = vrot.slane %v1392, 1
      %v1529 = vsel %vm1494, %v1526, %v1528
      %v1530 = vrot.slane %v1393, 1
      %v1531 = vrot.slane %v1394, 1
      %v1532 = vsel %vm1494, %v1530, %v1531
      %v1533 = vrot.slane %v1395, 1
      %v1534 = vsel %vm1494, %v1531, %v1533
      %v1535 = vrot.slane %v1396, 1
      %v1536 = vsel %vm1494, %v1533, %v1535
      %v1561 = vsel %vm1494, %v1500, 0.0
      %v1562 = vsel %vm1494, %v1507, 0.0
      %v1563 = vsel %vm1494, %v1514, 0.0
      %v1564 = vsel %vm1494, %v1521, 0.0
      %v1565 = vsel %vm1494, %v1528, 0.0
      %v1566 = vsel %vm1494, %v1535, 0.0
      %1567 = vrot.lane.b32.xlu0 %v1373, 64
      %v1568 = vpop.permute.xlu0 %1567
      %1569 = vrot.lane.b32.xlu0 %v1374, 64
      %v1570 = vpop.permute.xlu0 %1569
      %1571 = vrot.lane.b32.xlu0 %v1375, 64
      %v1572 = vpop.permute.xlu0 %1571
      %1573 = vrot.lane.b32.xlu0 %v1376, 64
      %v1574 = vpop.permute.xlu0 %1573
      %1575 = vrot.lane.b32.xlu0 %v1377, 64
      %v1576 = vpop.permute.xlu0 %1575
      %1577 = vrot.lane.b32.xlu0 %v1378, 64
      %v1578 = vpop.permute.xlu0 %1577
      %1579 = vrot.lane.b32.xlu0 %v1379, 64
      %v1580 = vpop.permute.xlu0 %1579
      %1581 = vrot.lane.b32.xlu0 %v1380, 64
      %v1582 = vpop.permute.xlu0 %1581
      %1583 = vrot.lane.b32.xlu0 %v1381, 64
      %v1584 = vpop.permute.xlu0 %1583
      %1585 = vrot.lane.b32.xlu0 %v1382, 64
      %v1586 = vpop.permute.xlu0 %1585
      %1587 = vrot.lane.b32.xlu0 %v1383, 64
      %v1588 = vpop.permute.xlu0 %1587
      %1589 = vrot.lane.b32.xlu0 %v1384, 64
      %v1590 = vpop.permute.xlu0 %1589
      %1591 = vrot.lane.b32.xlu0 %v1385, 64
      %v1592 = vpop.permute.xlu0 %1591
      %1593 = vrot.lane.b32.xlu0 %v1386, 64
      %v1594 = vpop.permute.xlu0 %1593
      %1595 = vrot.lane.b32.xlu0 %v1387, 64
      %v1596 = vpop.permute.xlu0 %1595
      %1597 = vrot.lane.b32.xlu0 %v1388, 64
      %v1598 = vpop.permute.xlu0 %1597
      %1599 = vrot.lane.b32.xlu0 %v1389, 64
      %v1600 = vpop.permute.xlu0 %1599
      %1601 = vrot.lane.b32.xlu0 %v1390, 64
      %v1602 = vpop.permute.xlu0 %1601
      %1603 = vrot.lane.b32.xlu0 %v1391, 64
      %v1604 = vpop.permute.xlu0 %1603
      %1605 = vrot.lane.b32.xlu0 %v1392, 64
      %v1606 = vpop.permute.xlu0 %1605
      %1607 = vrot.lane.b32.xlu0 %v1393, 64
      %v1608 = vpop.permute.xlu0 %1607
      %1609 = vrot.lane.b32.xlu0 %v1394, 64
      %v1610 = vpop.permute.xlu0 %1609
      %1611 = vrot.lane.b32.xlu0 %v1395, 64
      %v1612 = vpop.permute.xlu0 %1611
      %1613 = vrot.lane.b32.xlu0 %v1396, 64
      %v1614 = vpop.permute.xlu0 %1613
      %v1639 = vsel %vm431, %v1488, %v1568
      %v1640 = vsel %vm431, %v1424, %v1570
      %v1641 = vsel %vm431, %v1426, %v1572
      %v1642 = vsel %vm431, %v1428, %v1574
      %v1643 = vsel %vm431, %v1489, %v1576
      %v1644 = vsel %vm431, %v1431, %v1578
      %v1645 = vsel %vm431, %v1433, %v1580
      %v1646 = vsel %vm431, %v1435, %v1582
      %v1647 = vsel %vm431, %v1490, %v1584
      %v1648 = vsel %vm431, %v1438, %v1586
      %v1649 = vsel %vm431, %v1440, %v1588
      %v1650 = vsel %vm431, %v1442, %v1590
      %v1651 = vsel %vm431, %v1491, %v1592
      %v1652 = vsel %vm431, %v1445, %v1594
      %v1653 = vsel %vm431, %v1447, %v1596
      %v1654 = vsel %vm431, %v1449, %v1598
      %v1655 = vsel %vm431, %v1492, %v1600
      %v1656 = vsel %vm431, %v1452, %v1602
      %v1657 = vsel %vm431, %v1454, %v1604
      %v1658 = vsel %vm431, %v1456, %v1606
      %v1659 = vsel %vm431, %v1493, %v1608
      %v1660 = vsel %vm431, %v1459, %v1610
      %v1661 = vsel %vm431, %v1461, %v1612
      %v1662 = vsel %vm431, %v1463, %v1614
      %v1663 = vpack.c.bf16 %v1640, %v1639
      %v1664 = vpack.c.bf16 %v1499, %v1497
      %v1665 = vpack.c.bf16 %v1642, %v1641
      %v1666 = vpack.c.bf16 %v1561, %v1501
      %v1667 = vpack.c.bf16 %v1644, %v1643
      %v1668 = vpack.c.bf16 %v1506, %v1504
      %v1669 = vpack.c.bf16 %v1646, %v1645
      %v1670 = vpack.c.bf16 %v1562, %v1508
      %v1671 = vpack.c.bf16 %v1648, %v1647
      %v1672 = vpack.c.bf16 %v1513, %v1511
      %v1673 = vpack.c.bf16 %v1650, %v1649
      %v1674 = vpack.c.bf16 %v1563, %v1515
      %v1675 = vpack.c.bf16 %v1652, %v1651
      %v1676 = vpack.c.bf16 %v1520, %v1518
      %v1677 = vpack.c.bf16 %v1654, %v1653
      %v1678 = vpack.c.bf16 %v1564, %v1522
      %v1679 = vpack.c.bf16 %v1656, %v1655
      %v1680 = vpack.c.bf16 %v1527, %v1525
      %v1681 = vpack.c.bf16 %v1658, %v1657
      %v1682 = vpack.c.bf16 %v1565, %v1529
      %v1683 = vpack.c.bf16 %v1660, %v1659
      %v1684 = vpack.c.bf16 %v1534, %v1532
      %v1685 = vpack.c.bf16 %v1662, %v1661
      %v1686 = vpack.c.bf16 %v1566, %v1536
      %s1687 = scalar_lea.vmem [#allocation2], 384
      %1688 = vst [vmem:[%s1687] sm:$0xff] %v1663
      %1689 = vst.msk [vmem:[%s1687 + $0x8] sm:$0xff] %vm431, %v1664
      %1690 = vst [vmem:[%s1687 + $0x10] sm:$0xff] %v1665
      %1691 = vst.msk [vmem:[%s1687 + $0x18] sm:$0xff] %vm431, %v1666
      %s1692 = scalar_lea.vmem [#allocation2], 416
      %1693 = vst [vmem:[%s1692] sm:$0xff] %v1667
      %1694 = vst.msk [vmem:[%s1692 + $0x8] sm:$0xff] %vm431, %v1668
      %1695 = vst [vmem:[%s1692 + $0x10] sm:$0xff] %v1669
      %1696 = vst.msk [vmem:[%s1692 + $0x18] sm:$0xff] %vm431, %v1670
      %s1697 = scalar_lea.vmem [#allocation2], 448
      %1698 = vst [vmem:[%s1697] sm:$0xff] %v1671
      %1699 = vst.msk [vmem:[%s1697 + $0x8] sm:$0xff] %vm431, %v1672
      %1700 = vst [vmem:[%s1697 + $0x10] sm:$0xff] %v1673
      %1701 = vst.msk [vmem:[%s1697 + $0x18] sm:$0xff] %vm431, %v1674
      %s1702 = scalar_lea.vmem [#allocation2], 480
      %1703 = vst [vmem:[%s1702] sm:$0xff] %v1675
      %1704 = vst.msk [vmem:[%s1702 + $0x8] sm:$0xff] %vm431, %v1676
      %1705 = vst [vmem:[%s1702 + $0x10] sm:$0xff] %v1677
      %1706 = vst.msk [vmem:[%s1702 + $0x18] sm:$0xff] %vm431, %v1678
      %s1707 = scalar_lea.vmem [#allocation2], 512
      %1708 = vst [vmem:[%s1707] sm:$0xff] %v1679
      %1709 = vst.msk [vmem:[%s1707 + $0x8] sm:$0xff] %vm431, %v1680
      %1710 = vst [vmem:[%s1707 + $0x10] sm:$0xff] %v1681
      %1711 = vst.msk [vmem:[%s1707 + $0x18] sm:$0xff] %vm431, %v1682
      %s1712 = scalar_lea.vmem [#allocation2], 544
      %1713 = vst [vmem:[%s1712] sm:$0xff] %v1683
      %1714 = vst.msk [vmem:[%s1712 + $0x8] sm:$0xff] %vm431, %v1684
      %1715 = vst [vmem:[%s1712 + $0x10] sm:$0xff] %v1685
      %1716 = vst.msk [vmem:[%s1712 + $0x18] sm:$0xff] %vm431, %v1686
      %v1717 = vld [vmem:[#allocation2] sm:$0xff]
      %v1718 = vld [vmem:[#allocation2 + $0x8] sm:$0xff]
      %v1719 = vld [vmem:[#allocation2 + $0x10] sm:$0xff]
      %v1720 = vld [vmem:[#allocation2 + $0x18] sm:$0xff]
      %v1721 = vld [vmem:[#allocation2 + $0x60] sm:$0xff]
      %v1722 = vld [vmem:[#allocation2 + $0x68] sm:$0xff]
      %v1723 = vld [vmem:[#allocation2 + $0x70] sm:$0xff]
      %v1724 = vld [vmem:[#allocation2 + $0x78] sm:$0xff]
      %v1725 = vld [vmem:[#allocation2 + $0xc0] sm:$0xff]
      %v1726 = vld [vmem:[#allocation2 + $0xc8] sm:$0xff]
      %v1727 = vld [vmem:[#allocation2 + $0xd0] sm:$0xff]
      %v1728 = vld [vmem:[#allocation2 + $0xd8] sm:$0xff]
      %v1729 = vld [vmem:[#allocation2 + $0x120] sm:$0xff]
      %v1730 = vld [vmem:[#allocation2 + $0x128] sm:$0xff]
      %v1731 = vld [vmem:[#allocation2 + $0x130] sm:$0xff]
      %v1732 = vld [vmem:[#allocation2 + $0x138] sm:$0xff]
      %v1733 = vld [vmem:[#allocation2 + $0x180] sm:$0xff]
      %v1734 = vld [vmem:[#allocation2 + $0x188] sm:$0xff]
      %v1735 = vld [vmem:[#allocation2 + $0x190] sm:$0xff]
      %v1736 = vld [vmem:[#allocation2 + $0x198] sm:$0xff]
      %v1737 = vld [vmem:[#allocation2 + $0x1e0] sm:$0xff]
      %v1738 = vld [vmem:[#allocation2 + $0x1e8] sm:$0xff]
      %v1739 = vld [vmem:[#allocation2 + $0x1f0] sm:$0xff]
      %v1740 = vld [vmem:[#allocation2 + $0x1f8] sm:$0xff]
      %v1741 = vld [vmem:[#allocation2 + $0x240] sm:$0xff]
      %v1742 = vld [vmem:[#allocation2 + $0x248] sm:$0xff]
      %v1743 = vld [vmem:[#allocation2 + $0x250] sm:$0xff]
      %v1744 = vld [vmem:[#allocation2 + $0x258] sm:$0xff]
      %v1745 = vld [vmem:[#allocation2 + $0x2a0] sm:$0xff]
      %v1746 = vld [vmem:[#allocation2 + $0x2a8] sm:$0xff]
      %v1747 = vld [vmem:[#allocation2 + $0x2b0] sm:$0xff]
      %v1748 = vld [vmem:[#allocation2 + $0x2b8] sm:$0xff]
      %v1749 = vld [vmem:[%s4] sm:$0xf]
      %v1750 = vld [vmem:[%s4 + $0x4] sm:$0xf]
      %v1751 = vld [vmem:[%s4 + $0x8] sm:$0xf]
      %v1752 = vld [vmem:[%s4 + $0xc] sm:$0xf]
      %v1753 = vld [vmem:[%s4 + $0x10] sm:$0xf]
      %v1754 = vld [vmem:[%s4 + $0x14] sm:$0xf]
      %v1755 = vld [vmem:[%s4 + $0x18] sm:$0xf]
      %v1756 = vld [vmem:[%s4 + $0x1c] sm:$0xf]
      %v1757 = vld [vmem:[%s4 + $0x20] sm:$0xf]
      %v1758 = vld [vmem:[%s4 + $0x24] sm:$0xf]
      %v1759 = vld [vmem:[%s4 + $0x28] sm:$0xf]
      %v1760 = vld [vmem:[%s4 + $0x2c] sm:$0xf]
      %v1761 = vld [vmem:[%s4 + $0x30] sm:$0xf]
      %v1762 = vld [vmem:[%s4 + $0x34] sm:$0xf]
      %v1763 = vld [vmem:[%s4 + $0x38] sm:$0xf]
      %v1764 = vld [vmem:[%s4 + $0x3c] sm:$0xf]
      %v1765 = vld [vmem:[%s4 + $0x40] sm:$0xf]
      %v1766 = vld [vmem:[%s4 + $0x44] sm:$0xf]
      %v1767 = vld [vmem:[%s4 + $0x48] sm:$0xf]
      %v1768 = vld [vmem:[%s4 + $0x4c] sm:$0xf]
      %v1769 = vld [vmem:[%s4 + $0x50] sm:$0xf]
      %v1770 = vld [vmem:[%s4 + $0x54] sm:$0xf]
      %v1771 = vld [vmem:[%s4 + $0x58] sm:$0xf]
      %v1772 = vld [vmem:[%s4 + $0x5c] sm:$0xf]
      %s1773 = scalar_lea.vmem [#allocation2], 64
      %v1774 = vld [vmem:[%s1773] sm:$0xff]
      %v1775 = vld [vmem:[%s1773 + $0x8] sm:$0xff]
      %v1776 = vld [vmem:[%s1773 + $0x10] sm:$0xff]
      %v1777 = vld [vmem:[%s1773 + $0x18] sm:$0xff]
      %v1778 = vld [vmem:[%s1773 + $0x60] sm:$0xff]
      %v1779 = vld [vmem:[%s1773 + $0x68] sm:$0xff]
      %v1780 = vld [vmem:[%s1773 + $0x70] sm:$0xff]
      %v1781 = vld [vmem:[%s1773 + $0x78] sm:$0xff]
      %v1782 = vld [vmem:[%s1773 + $0xc0] sm:$0xff]
      %v1783 = vld [vmem:[%s1773 + $0xc8] sm:$0xff]
      %v1784 = vld [vmem:[%s1773 + $0xd0] sm:$0xff]
      %v1785 = vld [vmem:[%s1773 + $0xd8] sm:$0xff]
      %v1786 = vld [vmem:[%s1773 + $0x120] sm:$0xff]
      %v1787 = vld [vmem:[%s1773 + $0x128] sm:$0xff]
      %v1788 = vld [vmem:[%s1773 + $0x130] sm:$0xff]
      %v1789 = vld [vmem:[%s1773 + $0x138] sm:$0xff]
      %v1790 = vld [vmem:[%s1773 + $0x180] sm:$0xff]
      %v1791 = vld [vmem:[%s1773 + $0x188] sm:$0xff]
      %v1792 = vld [vmem:[%s1773 + $0x190] sm:$0xff]
      %v1793 = vld [vmem:[%s1773 + $0x198] sm:$0xff]
      %v1794 = vld [vmem:[%s1773 + $0x1e0] sm:$0xff]
      %v1795 = vld [vmem:[%s1773 + $0x1e8] sm:$0xff]
      %v1796 = vld [vmem:[%s1773 + $0x1f0] sm:$0xff]
      %v1797 = vld [vmem:[%s1773 + $0x1f8] sm:$0xff]
      %v1798 = vld [vmem:[%s1773 + $0x240] sm:$0xff]
      %v1799 = vld [vmem:[%s1773 + $0x248] sm:$0xff]
      %v1800 = vld [vmem:[%s1773 + $0x250] sm:$0xff]
      %v1801 = vld [vmem:[%s1773 + $0x258] sm:$0xff]
      %v1802 = vld [vmem:[%s1773 + $0x2a0] sm:$0xff]
      %v1803 = vld [vmem:[%s1773 + $0x2a8] sm:$0xff]
      %v1804 = vld [vmem:[%s1773 + $0x2b0] sm:$0xff]
      %v1805 = vld [vmem:[%s1773 + $0x2b8] sm:$0xff]
      %s1806 = scalar_lea.vmem %s4, 96
      %v1807 = vld [vmem:[%s1806] sm:$0xf]
      %v1808 = vld [vmem:[%s1806 + $0x4] sm:$0xf]
      %v1809 = vld [vmem:[%s1806 + $0x8] sm:$0xf]
      %v1810 = vld [vmem:[%s1806 + $0xc] sm:$0xf]
      %v1811 = vld [vmem:[%s1806 + $0x10] sm:$0xf]
      %v1812 = vld [vmem:[%s1806 + $0x14] sm:$0xf]
      %v1813 = vld [vmem:[%s1806 + $0x18] sm:$0xf]
      %v1814 = vld [vmem:[%s1806 + $0x1c] sm:$0xf]
      %v1815 = vld [vmem:[%s1806 + $0x20] sm:$0xf]
      %v1816 = vld [vmem:[%s1806 + $0x24] sm:$0xf]
      %v1817 = vld [vmem:[%s1806 + $0x28] sm:$0xf]
      %v1818 = vld [vmem:[%s1806 + $0x2c] sm:$0xf]
      %v1819 = vld [vmem:[%s1806 + $0x30] sm:$0xf]
      %v1820 = vld [vmem:[%s1806 + $0x34] sm:$0xf]
      %v1821 = vld [vmem:[%s1806 + $0x38] sm:$0xf]
      %v1822 = vld [vmem:[%s1806 + $0x3c] sm:$0xf]
      %v1823 = vld [vmem:[%s1806 + $0x40] sm:$0xf]
      %v1824 = vld [vmem:[%s1806 + $0x44] sm:$0xf]
      %v1825 = vld [vmem:[%s1806 + $0x48] sm:$0xf]
      %v1826 = vld [vmem:[%s1806 + $0x4c] sm:$0xf]
      %v1827 = vld [vmem:[%s1806 + $0x50] sm:$0xf]
      %v1828 = vld [vmem:[%s1806 + $0x54] sm:$0xf]
      %v1829 = vld [vmem:[%s1806 + $0x58] sm:$0xf]
      %v1830 = vld [vmem:[%s1806 + $0x5c] sm:$0xf]
      %v1855 = vunpack.c.l.b16 %v1807
      %v1856 = vunpack.c.l.b16 %v1808
      %v1857 = vunpack.c.l.b16 %v1809
      %v1858 = vunpack.c.l.b16 %v1810
      %v1859 = vunpack.c.l.b16 %v1811
      %v1860 = vunpack.c.l.b16 %v1812
      %v1861 = vunpack.c.l.b16 %v1813
      %v1862 = vunpack.c.l.b16 %v1814
      %v1863 = vunpack.c.l.b16 %v1815
      %v1864 = vunpack.c.l.b16 %v1816
      %v1865 = vunpack.c.l.b16 %v1817
      %v1866 = vunpack.c.l.b16 %v1818
      %v1867 = vunpack.c.l.b16 %v1819
      %v1868 = vunpack.c.l.b16 %v1820
      %v1869 = vunpack.c.l.b16 %v1821
      %v1870 = vunpack.c.l.b16 %v1822
      %v1871 = vunpack.c.l.b16 %v1823
      %v1872 = vunpack.c.l.b16 %v1824
      %v1873 = vunpack.c.l.b16 %v1825
      %v1874 = vunpack.c.l.b16 %v1826
      %v1875 = vunpack.c.l.b16 %v1827
      %v1876 = vunpack.c.l.b16 %v1828
      %v1877 = vunpack.c.l.b16 %v1829
      %v1878 = vunpack.c.l.b16 %v1830
      %v1879 = vpack.c.b16 %v1856, %v1855
      %v1880 = vpack.c.b16 %v1858, %v1857
      %v1881 = vpack.c.b16 %v1860, %v1859
      %v1882 = vpack.c.b16 %v1862, %v1861
      %v1883 = vpack.c.b16 %v1864, %v1863
      %v1884 = vpack.c.b16 %v1866, %v1865
      %v1885 = vpack.c.b16 %v1868, %v1867
      %v1886 = vpack.c.b16 %v1870, %v1869
      %v1887 = vpack.c.b16 %v1872, %v1871
      %v1888 = vpack.c.b16 %v1874, %v1873
      %v1889 = vpack.c.b16 %v1876, %v1875
      %v1890 = vpack.c.b16 %v1878, %v1877
      %v1904 = vsel %vm431, %v1775, 0
      %v1907 = vsel %vm431, %v1777, 0
      %v1910 = vsel %vm431, %v1779, 0
      %v1913 = vsel %vm431, %v1781, 0
      %v1916 = vsel %vm431, %v1783, 0
      %v1919 = vsel %vm431, %v1785, 0
      %v1922 = vsel %vm431, %v1787, 0
      %v1925 = vsel %vm431, %v1789, 0
      %v1928 = vsel %vm431, %v1791, 0
      %v1931 = vsel %vm431, %v1793, 0
      %v1934 = vsel %vm431, %v1795, 0
      %v1937 = vsel %vm431, %v1797, 0
      %v1940 = vsel %vm431, %v1799, 0
      %v1943 = vsel %vm431, %v1801, 0
      %v1946 = vsel %vm431, %v1803, 0
      %v1949 = vsel %vm431, %v1805, 0
      %1951 = vmatprep.subr.bf16.mxu0 0
      %1952 = vmatpush1.bf16.msra.mxu0 %v1879
      %1953 = vmatprep.subr.bf16.mxu0 0
      %1954 = vmatpush1.bf16.msra.mxu0 %v1880
      %1955 = vmatprep.subr.bf16.mxu0 0
      %1956 = vmatpush1.bf16.msra.mxu0 %v1881
      %1957 = vmatprep.subr.bf16.mxu0 0
      %1958 = vmatpush1.bf16.msra.mxu0 %v1882
      %1959 = vmatprep.subr.bf16.mxu0 0
      %1960 = vmatpush1.bf16.msra.mxu0 %v1883
      %1961 = vmatprep.subr.bf16.mxu0 0
      %1962 = vmatpush1.bf16.msra.mxu0 %v1884
      %1963 = vmatprep.subr.bf16.mxu0 0
      %1964 = vmatpush1.bf16.msra.mxu0 %v1885
      %1965 = vmatprep.subr.bf16.mxu0 0
      %1966 = vmatpush1.bf16.msra.mxu0 %v1886
      %1967 = vmatprep.subr.bf16.mxu0 0
      %1968 = vmatpush1.bf16.msra.mxu0 %v1887
      %1969 = vmatprep.subr.bf16.mxu0 0
      %1970 = vmatpush1.bf16.msra.mxu0 %v1888
      %1971 = vmatprep.subr.bf16.mxu0 0
      %1972 = vmatpush1.bf16.msra.mxu0 %v1889
      %1973 = vmatprep.subr.bf16.mxu0 0
      %1974 = vmatpush1.bf16.msra.mxu0 %v1890
      %1975 = vmatprep.subr.bf16.mxu0 0
      %1976 = vmatpush1.bf16.msra.mxu0 0
      %1977 = vmatprep.subr.bf16.mxu0 0
      %1978 = vmatpush1.bf16.msra.mxu0 0
      %1979 = vmatprep.subr.bf16.mxu0 0
      %1980 = vmatpush1.bf16.msra.mxu0 0
      %1981 = vmatprep.subr.bf16.mxu0 0
      %1982 = vmatpush1.bf16.msra.mxu0 0
      %1983 = vmatprep.mubr.bf16.mxu0 %v1904
      %1984 = vmatmul.mubr.bf16.gmra.mrb[0].mxu0 %v1774
      %v1985 = vpop.f32.mrb[0].mxu0
      %v1986 = vadd.f32 0.0, %v1985
      %v1987 = vpop.f32.mrb[0].mxu0
      %v1988 = vpop.f32.mrb[0].mxu0
      %v1989 = vadd.f32 0.0, %v1988
      %v1990 = vpop.f32.mrb[0].mxu0
      %1991 = vmatprep.mubr.bf16.mxu0 %v1907
      %1992 = vmatmul.mubr.bf16.gmra.mrb[0].mxu0 %v1776
      %v1993 = vpop.f32.mrb[0].mxu0
      %v1994 = vadd.f32 0.0, %v1993
      %v1995 = vpop.f32.mrb[0].mxu0
      %v1996 = vpop.f32.mrb[0].mxu0
      %v1997 = vadd.f32 0.0, %v1996
      %v1998 = vpop.f32.mrb[0].mxu0
      %1999 = vmatprep.mubr.bf16.mxu0 %v1910
      %2000 = vmatmul.mubr.bf16.gmra.mrb[0].mxu0 %v1778
      %v2001 = vpop.f32.mrb[0].mxu0
      %v2002 = vadd.f32 0.0, %v2001
      %v2003 = vpop.f32.mrb[0].mxu0
      %v2004 = vpop.f32.mrb[0].mxu0
      %v2005 = vadd.f32 0.0, %v2004
      %v2006 = vpop.f32.mrb[0].mxu0
      %2007 = vmatprep.mubr.bf16.mxu0 %v1913
      %2008 = vmatmul.mubr.bf16.gmra.mrb[0].mxu0 %v1780
      %v2009 = vpop.f32.mrb[0].mxu0
      %v2010 = vadd.f32 0.0, %v2009
      %v2011 = vpop.f32.mrb[0].mxu0
      %v2012 = vpop.f32.mrb[0].mxu0
      %v2013 = vadd.f32 0.0, %v2012
      %v2014 = vpop.f32.mrb[0].mxu0
      %2015 = vmatprep.mubr.bf16.mxu0 %v1916
      %2016 = vmatmul.mubr.bf16.gmra.mrb[0].mxu0 %v1782
      %v2017 = vpop.f32.mrb[0].mxu0
      %v2018 = vadd.f32 0.0, %v2017
      %v2019 = vpop.f32.mrb[0].mxu0
      %v2020 = vpop.f32.mrb[0].mxu0
      %v2021 = vadd.f32 0.0, %v2020
      %v2022 = vpop.f32.mrb[0].mxu0
      %2023 = vmatprep.mubr.bf16.mxu0 %v1919
      %2024 = vmatmul.mubr.bf16.gmra.mrb[0].mxu0 %v1784
      %v2025 = vpop.f32.mrb[0].mxu0
      %v2026 = vadd.f32 0.0, %v2025
      %v2027 = vpop.f32.mrb[0].mxu0
      %v2028 = vpop.f32.mrb[0].mxu0
      %v2029 = vadd.f32 0.0, %v2028
      %v2030 = vpop.f32.mrb[0].mxu0
      %2031 = vmatprep.mubr.bf16.mxu0 %v1922
      %2032 = vmatmul.mubr.bf16.gmra.mrb[0].mxu0 %v1786
      %v2033 = vpop.f32.mrb[0].mxu0
      %v2034 = vadd.f32 0.0, %v2033
      %v2035 = vpop.f32.mrb[0].mxu0
      %v2036 = vpop.f32.mrb[0].mxu0
      %v2037 = vadd.f32 0.0, %v2036
      %v2038 = vpop.f32.mrb[0].mxu0
      %2039 = vmatprep.mubr.bf16.mxu0 %v1925
      %2040 = vmatmul.mubr.bf16.gmra.mrb[0].mxu0 %v1788
      %v2041 = vpop.f32.mrb[0].mxu0
      %v2042 = vadd.f32 0.0, %v2041
      %v2043 = vpop.f32.mrb[0].mxu0
      %v2044 = vpop.f32.mrb[0].mxu0
      %v2045 = vadd.f32 0.0, %v2044
      %v2046 = vpop.f32.mrb[0].mxu0
      %2047 = vmatprep.mubr.bf16.mxu0 %v1928
      %2048 = vmatmul.mubr.bf16.gmra.mrb[0].mxu0 %v1790
      %v2049 = vpop.f32.mrb[0].mxu0
      %v2050 = vadd.f32 0.0, %v2049
      %v2051 = vpop.f32.mrb[0].mxu0
      %v2052 = vpop.f32.mrb[0].mxu0
      %v2053 = vadd.f32 0.0, %v2052
      %v2054 = vpop.f32.mrb[0].mxu0
      %2055 = vmatprep.mubr.bf16.mxu0 %v1931
      %2056 = vmatmul.mubr.bf16.gmra.mrb[0].mxu0 %v1792
      %v2057 = vpop.f32.mrb[0].mxu0
      %v2058 = vadd.f32 0.0, %v2057
      %v2059 = vpop.f32.mrb[0].mxu0
      %v2060 = vpop.f32.mrb[0].mxu0
      %v2061 = vadd.f32 0.0, %v2060
      %v2062 = vpop.f32.mrb[0].mxu0
      %2063 = vmatprep.mubr.bf16.mxu0 %v1934
      %2064 = vmatmul.mubr.bf16.gmra.mrb[0].mxu0 %v1794
      %v2065 = vpop.f32.mrb[0].mxu0
      %v2066 = vadd.f32 0.0, %v2065
      %v2067 = vpop.f32.mrb[0].mxu0
      %v2068 = vpop.f32.mrb[0].mxu0
      %v2069 = vadd.f32 0.0, %v2068
      %v2070 = vpop.f32.mrb[0].mxu0
      %2071 = vmatprep.mubr.bf16.mxu0 %v1937
      %2072 = vmatmul.mubr.bf16.gmra.mrb[0].mxu0 %v1796
      %v2073 = vpop.f32.mrb[0].mxu0
      %v2074 = vadd.f32 0.0, %v2073
      %v2075 = vpop.f32.mrb[0].mxu0
      %v2076 = vpop.f32.mrb[0].mxu0
      %v2077 = vadd.f32 0.0, %v2076
      %v2078 = vpop.f32.mrb[0].mxu0
      %2079 = vmatprep.mubr.bf16.mxu0 %v1940
      %2080 = vmatmul.mubr.bf16.gmra.mrb[0].mxu0 %v1798
      %v2081 = vpop.f32.mrb[0].mxu0
      %v2082 = vadd.f32 0.0, %v2081
      %v2083 = vpop.f32.mrb[0].mxu0
      %v2084 = vpop.f32.mrb[0].mxu0
      %v2085 = vadd.f32 0.0, %v2084
      %v2086 = vpop.f32.mrb[0].mxu0
      %2087 = vmatprep.mubr.bf16.mxu0 %v1943
      %2088 = vmatmul.mubr.bf16.gmra.mrb[0].mxu0 %v1800
      %v2089 = vpop.f32.mrb[0].mxu0
      %v2090 = vadd.f32 0.0, %v2089
      %v2091 = vpop.f32.mrb[0].mxu0
      %v2092 = vpop.f32.mrb[0].mxu0
      %v2093 = vadd.f32 0.0, %v2092
      %v2094 = vpop.f32.mrb[0].mxu0
      %2095 = vmatprep.mubr.bf16.mxu0 %v1946
      %2096 = vmatmul.mubr.bf16.gmra.mrb[0].mxu0 %v1802
      %v2097 = vpop.f32.mrb[0].mxu0
      %v2098 = vadd.f32 0.0, %v2097
      %v2099 = vpop.f32.mrb[0].mxu0
      %v2100 = vpop.f32.mrb[0].mxu0
      %v2101 = vadd.f32 0.0, %v2100
      %v2102 = vpop.f32.mrb[0].mxu0
      %2103 = vmatprep.mubr.bf16.mxu0 %v1949
      %2104 = vmatmul.mubr.bf16.gmra.mrb[0].mxu0 %v1804
      %v2105 = vpop.f32.mrb[0].mxu0
      %v2106 = vadd.f32 0.0, %v2105
      %v2107 = vpop.f32.mrb[0].mxu0
      %v2108 = vpop.f32.mrb[0].mxu0
      %v2109 = vadd.f32 0.0, %v2108
      %v2110 = vpop.f32.mrb[0].mxu0
      %2111 = vdwg.mxu0
      %v2136 = vunpack.c.l.b16 %v1749
      %v2137 = vunpack.c.l.b16 %v1750
      %v2138 = vunpack.c.l.b16 %v1751
      %v2139 = vunpack.c.l.b16 %v1752
      %v2140 = vunpack.c.l.b16 %v1753
      %v2141 = vunpack.c.l.b16 %v1754
      %v2142 = vunpack.c.l.b16 %v1755
      %v2143 = vunpack.c.l.b16 %v1756
      %v2144 = vunpack.c.l.b16 %v1757
      %v2145 = vunpack.c.l.b16 %v1758
      %v2146 = vunpack.c.l.b16 %v1759
      %v2147 = vunpack.c.l.b16 %v1760
      %v2148 = vunpack.c.l.b16 %v1761
      %v2149 = vunpack.c.l.b16 %v1762
      %v2150 = vunpack.c.l.b16 %v1763
      %v2151 = vunpack.c.l.b16 %v1764
      %v2152 = vunpack.c.l.b16 %v1765
      %v2153 = vunpack.c.l.b16 %v1766
      %v2154 = vunpack.c.l.b16 %v1767
      %v2155 = vunpack.c.l.b16 %v1768
      %v2156 = vunpack.c.l.b16 %v1769
      %v2157 = vunpack.c.l.b16 %v1770
      %v2158 = vunpack.c.l.b16 %v1771
      %v2159 = vunpack.c.l.b16 %v1772
      %v2160 = vpack.c.b16 %v2137, %v2136
      %v2161 = vpack.c.b16 %v2139, %v2138
      %v2162 = vpack.c.b16 %v2141, %v2140
      %v2163 = vpack.c.b16 %v2143, %v2142
      %v2164 = vpack.c.b16 %v2145, %v2144
      %v2165 = vpack.c.b16 %v2147, %v2146
      %v2166 = vpack.c.b16 %v2149, %v2148
      %v2167 = vpack.c.b16 %v2151, %v2150
      %v2168 = vpack.c.b16 %v2153, %v2152
      %v2169 = vpack.c.b16 %v2155, %v2154
      %v2170 = vpack.c.b16 %v2157, %v2156
      %v2171 = vpack.c.b16 %v2159, %v2158
      %v2185 = vsel %vm431, %v1718, 0
      %v2188 = vsel %vm431, %v1720, 0
      %v2191 = vsel %vm431, %v1722, 0
      %v2194 = vsel %vm431, %v1724, 0
      %v2197 = vsel %vm431, %v1726, 0
      %v2200 = vsel %vm431, %v1728, 0
      %v2203 = vsel %vm431, %v1730, 0
      %v2206 = vsel %vm431, %v1732, 0
      %v2209 = vsel %vm431, %v1734, 0
      %v2212 = vsel %vm431, %v1736, 0
      %v2215 = vsel %vm431, %v1738, 0
      %v2218 = vsel %vm431, %v1740, 0
      %v2221 = vsel %vm431, %v1742, 0
      %v2224 = vsel %vm431, %v1744, 0
      %v2227 = vsel %vm431, %v1746, 0
      %v2230 = vsel %vm431, %v1748, 0
      %2232 = vmatprep.subr.bf16.mxu0 0
      %2233 = vmatpush1.bf16.msra.mxu0 %v2160
      %2234 = vmatprep.subr.bf16.mxu0 0
      %2235 = vmatpush1.bf16.msra.mxu0 %v2161
      %2236 = vmatprep.subr.bf16.mxu0 0
      %2237 = vmatpush1.bf16.msra.mxu0 %v2162
      %2238 = vmatprep.subr.bf16.mxu0 0
      %2239 = vmatpush1.bf16.msra.mxu0 %v2163
      %2240 = vmatprep.subr.bf16.mxu0 0
      %2241 = vmatpush1.bf16.msra.mxu0 %v2164
      %2242 = vmatprep.subr.bf16.mxu0 0
      %2243 = vmatpush1.bf16.msra.mxu0 %v2165
      %2244 = vmatprep.subr.bf16.mxu0 0
      %2245 = vmatpush1.bf16.msra.mxu0 %v2166
      %2246 = vmatprep.subr.bf16.mxu0 0
      %2247 = vmatpush1.bf16.msra.mxu0 %v2167
      %2248 = vmatprep.subr.bf16.mxu0 0
      %2249 = vmatpush1.bf16.msra.mxu0 %v2168
      %2250 = vmatprep.subr.bf16.mxu0 0
      %2251 = vmatpush1.bf16.msra.mxu0 %v2169
      %2252 = vmatprep.subr.bf16.mxu0 0
      %2253 = vmatpush1.bf16.msra.mxu0 %v2170
      %2254 = vmatprep.subr.bf16.mxu0 0
      %2255 = vmatpush1.bf16.msra.mxu0 %v2171
      %2256 = vmatprep.subr.bf16.mxu0 0
      %2257 = vmatpush1.bf16.msra.mxu0 0
      %2258 = vmatprep.subr.bf16.mxu0 0
      %2259 = vmatpush1.bf16.msra.mxu0 0
      %2260 = vmatprep.subr.bf16.mxu0 0
      %2261 = vmatpush1.bf16.msra.mxu0 0
      %2262 = vmatprep.subr.bf16.mxu0 0
      %2263 = vmatpush1.bf16.msra.mxu0 0
      %2264 = vmatprep.mubr.bf16.mxu0 %v2185
      %2265 = vmatmul.mubr.bf16.gmra.mrb[0].mxu0 %v1717
      %v2266 = vpop.f32.mrb[0].mxu0
      %v2267 = vadd.f32 %v1986, %v2266
      %v2268 = vpop.f32.mrb[0].mxu0
      %v2269 = vpop.f32.mrb[0].mxu0
      %v2270 = vadd.f32 %v1989, %v2269
      %v2271 = vpop.f32.mrb[0].mxu0
      %2272 = vmatprep.mubr.bf16.mxu0 %v2188
      %2273 = vmatmul.mubr.bf16.gmra.mrb[0].mxu0 %v1719
      %v2274 = vpop.f32.mrb[0].mxu0
      %v2275 = vadd.f32 %v1994, %v2274
      %v2276 = vpop.f32.mrb[0].mxu0
      %v2277 = vpop.f32.mrb[0].mxu0
      %v2278 = vadd.f32 %v1997, %v2277
      %v2279 = vpop.f32.mrb[0].mxu0
      %2280 = vmatprep.mubr.bf16.mxu0 %v2191
      %2281 = vmatmul.mubr.bf16.gmra.mrb[0].mxu0 %v1721
      %v2282 = vpop.f32.mrb[0].mxu0
      %v2283 = vadd.f32 %v2002, %v2282
      %v2284 = vpop.f32.mrb[0].mxu0
      %v2285 = vpop.f32.mrb[0].mxu0
      %v2286 = vadd.f32 %v2005, %v2285
      %v2287 = vpop.f32.mrb[0].mxu0
      %2288 = vmatprep.mubr.bf16.mxu0 %v2194
      %2289 = vmatmul.mubr.bf16.gmra.mrb[0].mxu0 %v1723
      %v2290 = vpop.f32.mrb[0].mxu0
      %v2291 = vadd.f32 %v2010, %v2290
      %v2292 = vpop.f32.mrb[0].mxu0
      %v2293 = vpop.f32.mrb[0].mxu0
      %v2294 = vadd.f32 %v2013, %v2293
      %v2295 = vpop.f32.mrb[0].mxu0
      %2296 = vmatprep.mubr.bf16.mxu0 %v2197
      %2297 = vmatmul.mubr.bf16.gmra.mrb[0].mxu0 %v1725
      %v2298 = vpop.f32.mrb[0].mxu0
      %v2299 = vadd.f32 %v2018, %v2298
      %v2300 = vpop.f32.mrb[0].mxu0
      %v2301 = vpop.f32.mrb[0].mxu0
      %v2302 = vadd.f32 %v2021, %v2301
      %v2303 = vpop.f32.mrb[0].mxu0
      %2304 = vmatprep.mubr.bf16.mxu0 %v2200
      %2305 = vmatmul.mubr.bf16.gmra.mrb[0].mxu0 %v1727
      %v2306 = vpop.f32.mrb[0].mxu0
      %v2307 = vadd.f32 %v2026, %v2306
      %v2308 = vpop.f32.mrb[0].mxu0
      %v2309 = vpop.f32.mrb[0].mxu0
      %v2310 = vadd.f32 %v2029, %v2309
      %v2311 = vpop.f32.mrb[0].mxu0
      %2312 = vmatprep.mubr.bf16.mxu0 %v2203
      %2313 = vmatmul.mubr.bf16.gmra.mrb[0].mxu0 %v1729
      %v2314 = vpop.f32.mrb[0].mxu0
      %v2315 = vadd.f32 %v2034, %v2314
      %v2316 = vpop.f32.mrb[0].mxu0
      %v2317 = vpop.f32.mrb[0].mxu0
      %v2318 = vadd.f32 %v2037, %v2317
      %v2319 = vpop.f32.mrb[0].mxu0
      %2320 = vmatprep.mubr.bf16.mxu0 %v2206
      %2321 = vmatmul.mubr.bf16.gmra.mrb[0].mxu0 %v1731
      %v2322 = vpop.f32.mrb[0].mxu0
      %v2323 = vadd.f32 %v2042, %v2322
      %v2324 = vpop.f32.mrb[0].mxu0
      %v2325 = vpop.f32.mrb[0].mxu0
      %v2326 = vadd.f32 %v2045, %v2325
      %v2327 = vpop.f32.mrb[0].mxu0
      %2328 = vmatprep.mubr.bf16.mxu0 %v2209
      %2329 = vmatmul.mubr.bf16.gmra.mrb[0].mxu0 %v1733
      %v2330 = vpop.f32.mrb[0].mxu0
      %v2331 = vadd.f32 %v2050, %v2330
      %v2332 = vpop.f32.mrb[0].mxu0
      %v2333 = vpop.f32.mrb[0].mxu0
      %v2334 = vadd.f32 %v2053, %v2333
      %v2335 = vpop.f32.mrb[0].mxu0
      %2336 = vmatprep.mubr.bf16.mxu0 %v2212
      %2337 = vmatmul.mubr.bf16.gmra.mrb[0].mxu0 %v1735
      %v2338 = vpop.f32.mrb[0].mxu0
      %v2339 = vadd.f32 %v2058, %v2338
      %v2340 = vpop.f32.mrb[0].mxu0
      %v2341 = vpop.f32.mrb[0].mxu0
      %v2342 = vadd.f32 %v2061, %v2341
      %v2343 = vpop.f32.mrb[0].mxu0
      %2344 = vmatprep.mubr.bf16.mxu0 %v2215
      %2345 = vmatmul.mubr.bf16.gmra.mrb[0].mxu0 %v1737
      %v2346 = vpop.f32.mrb[0].mxu0
      %v2347 = vadd.f32 %v2066, %v2346
      %v2348 = vpop.f32.mrb[0].mxu0
      %v2349 = vpop.f32.mrb[0].mxu0
      %v2350 = vadd.f32 %v2069, %v2349
      %v2351 = vpop.f32.mrb[0].mxu0
      %2352 = vmatprep.mubr.bf16.mxu0 %v2218
      %2353 = vmatmul.mubr.bf16.gmra.mrb[0].mxu0 %v1739
      %v2354 = vpop.f32.mrb[0].mxu0
      %v2355 = vadd.f32 %v2074, %v2354
      %v2356 = vpop.f32.mrb[0].mxu0
      %v2357 = vpop.f32.mrb[0].mxu0
      %v2358 = vadd.f32 %v2077, %v2357
      %v2359 = vpop.f32.mrb[0].mxu0
      %2360 = vmatprep.mubr.bf16.mxu0 %v2221
      %2361 = vmatmul.mubr.bf16.gmra.mrb[0].mxu0 %v1741
      %v2362 = vpop.f32.mrb[0].mxu0
      %v2363 = vadd.f32 %v2082, %v2362
      %v2364 = vpop.f32.mrb[0].mxu0
      %v2365 = vpop.f32.mrb[0].mxu0
      %v2366 = vadd.f32 %v2085, %v2365
      %v2367 = vpop.f32.mrb[0].mxu0
      %2368 = vmatprep.mubr.bf16.mxu0 %v2224
      %2369 = vmatmul.mubr.bf16.gmra.mrb[0].mxu0 %v1743
      %v2370 = vpop.f32.mrb[0].mxu0
      %v2371 = vadd.f32 %v2090, %v2370
      %v2372 = vpop.f32.mrb[0].mxu0
      %v2373 = vpop.f32.mrb[0].mxu0
      %v2374 = vadd.f32 %v2093, %v2373
      %v2375 = vpop.f32.mrb[0].mxu0
      %2376 = vmatprep.mubr.bf16.mxu0 %v2227
      %2377 = vmatmul.mubr.bf16.gmra.mrb[0].mxu0 %v1745
      %v2378 = vpop.f32.mrb[0].mxu0
      %v2379 = vadd.f32 %v2098, %v2378
      %v2380 = vpop.f32.mrb[0].mxu0
      %v2381 = vpop.f32.mrb[0].mxu0
      %v2382 = vadd.f32 %v2101, %v2381
      %v2383 = vpop.f32.mrb[0].mxu0
      %2384 = vmatprep.mubr.bf16.mxu0 %v2230
      %2385 = vmatmul.mubr.bf16.gmra.mrb[0].mxu0 %v1747
      %v2386 = vpop.f32.mrb[0].mxu0
      %v2387 = vadd.f32 %v2106, %v2386
      %v2388 = vpop.f32.mrb[0].mxu0
      %v2389 = vpop.f32.mrb[0].mxu0
      %v2390 = vadd.f32 %v2109, %v2389
      %v2391 = vpop.f32.mrb[0].mxu0
      %2392 = vdwg.mxu0
      %s2393 = scalar_lea.vmem [#allocation2], 128
      %v2394 = vld [vmem:[%s2393] sm:$0xff]
      %v2395 = vld [vmem:[%s2393 + $0x8] sm:$0xff]
      %v2396 = vld [vmem:[%s2393 + $0x10] sm:$0xff]
      %v2397 = vld [vmem:[%s2393 + $0x18] sm:$0xff]
      %v2398 = vld [vmem:[%s2393 + $0x60] sm:$0xff]
      %v2399 = vld [vmem:[%s2393 + $0x68] sm:$0xff]
      %v2400 = vld [vmem:[%s2393 + $0x70] sm:$0xff]
      %v2401 = vld [vmem:[%s2393 + $0x78] sm:$0xff]
      %v2402 = vld [vmem:[%s2393 + $0xc0] sm:$0xff]
      %v2403 = vld [vmem:[%s2393 + $0xc8] sm:$0xff]
      %v2404 = vld [vmem:[%s2393 + $0xd0] sm:$0xff]
      %v2405 = vld [vmem:[%s2393 + $0xd8] sm:$0xff]
      %v2406 = vld [vmem:[%s2393 + $0x120] sm:$0xff]
      %v2407 = vld [vmem:[%s2393 + $0x128] sm:$0xff]
      %v2408 = vld [vmem:[%s2393 + $0x130] sm:$0xff]
      %v2409 = vld [vmem:[%s2393 + $0x138] sm:$0xff]
      %v2410 = vld [vmem:[%s2393 + $0x180] sm:$0xff]
      %v2411 = vld [vmem:[%s2393 + $0x188] sm:$0xff]
      %v2412 = vld [vmem:[%s2393 + $0x190] sm:$0xff]
      %v2413 = vld [vmem:[%s2393 + $0x198] sm:$0xff]
      %v2414 = vld [vmem:[%s2393 + $0x1e0] sm:$0xff]
      %v2415 = vld [vmem:[%s2393 + $0x1e8] sm:$0xff]
      %v2416 = vld [vmem:[%s2393 + $0x1f0] sm:$0xff]
      %v2417 = vld [vmem:[%s2393 + $0x1f8] sm:$0xff]
      %v2418 = vld [vmem:[%s2393 + $0x240] sm:$0xff]
      %v2419 = vld [vmem:[%s2393 + $0x248] sm:$0xff]
      %v2420 = vld [vmem:[%s2393 + $0x250] sm:$0xff]
      %v2421 = vld [vmem:[%s2393 + $0x258] sm:$0xff]
      %v2422 = vld [vmem:[%s2393 + $0x2a0] sm:$0xff]
      %v2423 = vld [vmem:[%s2393 + $0x2a8] sm:$0xff]
      %v2424 = vld [vmem:[%s2393 + $0x2b0] sm:$0xff]
      %v2425 = vld [vmem:[%s2393 + $0x2b8] sm:$0xff]
      %s2426 = scalar_lea.vmem %s4, 192
      %v2427 = vld [vmem:[%s2426] sm:$0xf]
      %v2428 = vld [vmem:[%s2426 + $0x4] sm:$0xf]
      %v2429 = vld [vmem:[%s2426 + $0x8] sm:$0xf]
      %v2430 = vld [vmem:[%s2426 + $0xc] sm:$0xf]
      %v2431 = vld [vmem:[%s2426 + $0x10] sm:$0xf]
      %v2432 = vld [vmem:[%s2426 + $0x14] sm:$0xf]
      %v2433 = vld [vmem:[%s2426 + $0x18] sm:$0xf]
      %v2434 = vld [vmem:[%s2426 + $0x1c] sm:$0xf]
      %v2435 = vld [vmem:[%s2426 + $0x20] sm:$0xf]
      %v2436 = vld [vmem:[%s2426 + $0x24] sm:$0xf]
      %v2437 = vld [vmem:[%s2426 + $0x28] sm:$0xf]
      %v2438 = vld [vmem:[%s2426 + $0x2c] sm:$0xf]
      %v2439 = vld [vmem:[%s2426 + $0x30] sm:$0xf]
      %v2440 = vld [vmem:[%s2426 + $0x34] sm:$0xf]
      %v2441 = vld [vmem:[%s2426 + $0x38] sm:$0xf]
      %v2442 = vld [vmem:[%s2426 + $0x3c] sm:$0xf]
      %v2443 = vld [vmem:[%s2426 + $0x40] sm:$0xf]
      %v2444 = vld [vmem:[%s2426 + $0x44] sm:$0xf]
      %v2445 = vld [vmem:[%s2426 + $0x48] sm:$0xf]
      %v2446 = vld [vmem:[%s2426 + $0x4c] sm:$0xf]
      %v2447 = vld [vmem:[%s2426 + $0x50] sm:$0xf]
      %v2448 = vld [vmem:[%s2426 + $0x54] sm:$0xf]
      %v2449 = vld [vmem:[%s2426 + $0x58] sm:$0xf]
      %v2450 = vld [vmem:[%s2426 + $0x5c] sm:$0xf]
      %v2475 = vunpack.c.l.b16 %v2427
      %v2476 = vunpack.c.l.b16 %v2428
      %v2477 = vunpack.c.l.b16 %v2429
      %v2478 = vunpack.c.l.b16 %v2430
      %v2479 = vunpack.c.l.b16 %v2431
      %v2480 = vunpack.c.l.b16 %v2432
      %v2481 = vunpack.c.l.b16 %v2433
      %v2482 = vunpack.c.l.b16 %v2434
      %v2483 = vunpack.c.l.b16 %v2435
      %v2484 = vunpack.c.l.b16 %v2436
      %v2485 = vunpack.c.l.b16 %v2437
      %v2486 = vunpack.c.l.b16 %v2438
      %v2487 = vunpack.c.l.b16 %v2439
      %v2488 = vunpack.c.l.b16 %v2440
      %v2489 = vunpack.c.l.b16 %v2441
      %v2490 = vunpack.c.l.b16 %v2442
      %v2491 = vunpack.c.l.b16 %v2443
      %v2492 = vunpack.c.l.b16 %v2444
      %v2493 = vunpack.c.l.b16 %v2445
      %v2494 = vunpack.c.l.b16 %v2446
      %v2495 = vunpack.c.l.b16 %v2447
      %v2496 = vunpack.c.l.b16 %v2448
      %v2497 = vunpack.c.l.b16 %v2449
      %v2498 = vunpack.c.l.b16 %v2450
      %v2499 = vpack.c.b16 %v2476, %v2475
      %v2500 = vpack.c.b16 %v2478, %v2477
      %v2501 = vpack.c.b16 %v2480, %v2479
      %v2502 = vpack.c.b16 %v2482, %v2481
      %v2503 = vpack.c.b16 %v2484, %v2483
      %v2504 = vpack.c.b16 %v2486, %v2485
      %v2505 = vpack.c.b16 %v2488, %v2487
      %v2506 = vpack.c.b16 %v2490, %v2489
      %v2507 = vpack.c.b16 %v2492, %v2491
      %v2508 = vpack.c.b16 %v2494, %v2493
      %v2509 = vpack.c.b16 %v2496, %v2495
      %v2510 = vpack.c.b16 %v2498, %v2497
      %v2524 = vsel %vm431, %v2395, 0
      %v2527 = vsel %vm431, %v2397, 0
      %v2530 = vsel %vm431, %v2399, 0
      %v2533 = vsel %vm431, %v2401, 0
      %v2536 = vsel %vm431, %v2403, 0
      %v2539 = vsel %vm431, %v2405, 0
      %v2542 = vsel %vm431, %v2407, 0
      %v2545 = vsel %vm431, %v2409, 0
      %v2548 = vsel %vm431, %v2411, 0
      %v2551 = vsel %vm431, %v2413, 0
      %v2554 = vsel %vm431, %v2415, 0
      %v2557 = vsel %vm431, %v2417, 0
      %v2560 = vsel %vm431, %v2419, 0
      %v2563 = vsel %vm431, %v2421, 0
      %v2566 = vsel %vm431, %v2423, 0
      %v2569 = vsel %vm431, %v2425, 0
      %2571 = vmatprep.subr.bf16.mxu0 0
      %2572 = vmatpush1.bf16.msra.mxu0 %v2499
      %2573 = vmatprep.subr.bf16.mxu0 0
      %2574 = vmatpush1.bf16.msra.mxu0 %v2500
      %2575 = vmatprep.subr.bf16.mxu0 0
      %2576 = vmatpush1.bf16.msra.mxu0 %v2501
      %2577 = vmatprep.subr.bf16.mxu0 0
      %2578 = vmatpush1.bf16.msra.mxu0 %v2502
      %2579 = vmatprep.subr.bf16.mxu0 0
      %2580 = vmatpush1.bf16.msra.mxu0 %v2503
      %2581 = vmatprep.subr.bf16.mxu0 0
      %2582 = vmatpush1.bf16.msra.mxu0 %v2504
      %2583 = vmatprep.subr.bf16.mxu0 0
      %2584 = vmatpush1.bf16.msra.mxu0 %v2505
      %2585 = vmatprep.subr.bf16.mxu0 0
      %2586 = vmatpush1.bf16.msra.mxu0 %v2506
      %2587 = vmatprep.subr.bf16.mxu0 0
      %2588 = vmatpush1.bf16.msra.mxu0 %v2507
      %2589 = vmatprep.subr.bf16.mxu0 0
      %2590 = vmatpush1.bf16.msra.mxu0 %v2508
      %2591 = vmatprep.subr.bf16.mxu0 0
      %2592 = vmatpush1.bf16.msra.mxu0 %v2509
      %2593 = vmatprep.subr.bf16.mxu0 0
      %2594 = vmatpush1.bf16.msra.mxu0 %v2510
      %2595 = vmatprep.subr.bf16.mxu0 0
      %2596 = vmatpush1.bf16.msra.mxu0 0
      %2597 = vmatprep.subr.bf16.mxu0 0
      %2598 = vmatpush1.bf16.msra.mxu0 0
      %2599 = vmatprep.subr.bf16.mxu0 0
      %2600 = vmatpush1.bf16.msra.mxu0 0
      %2601 = vmatprep.subr.bf16.mxu0 0
      %2602 = vmatpush1.bf16.msra.mxu0 0
      %2603 = vmatprep.mubr.bf16.mxu0 %v2524
      %2604 = vmatmul.mubr.bf16.gmra.mrb[0].mxu0 %v2394
      %v2605 = vpop.f32.mrb[0].mxu0
      %v2606 = vadd.f32 0.0, %v2605
      %v2607 = vpop.f32.mrb[0].mxu0
      %v2608 = vpop.f32.mrb[0].mxu0
      %v2609 = vadd.f32 0.0, %v2608
      %v2610 = vpop.f32.mrb[0].mxu0
      %2611 = vmatprep.mubr.bf16.mxu0 %v2527
      %2612 = vmatmul.mubr.bf16.gmra.mrb[0].mxu0 %v2396
      %v2613 = vpop.f32.mrb[0].mxu0
      %v2614 = vadd.f32 0.0, %v2613
      %v2615 = vpop.f32.mrb[0].mxu0
      %v2616 = vpop.f32.mrb[0].mxu0
      %v2617 = vadd.f32 0.0, %v2616
      %v2618 = vpop.f32.mrb[0].mxu0
      %2619 = vmatprep.mubr.bf16.mxu0 %v2530
      %2620 = vmatmul.mubr.bf16.gmra.mrb[0].mxu0 %v2398
      %v2621 = vpop.f32.mrb[0].mxu0
      %v2622 = vadd.f32 0.0, %v2621
      %v2623 = vpop.f32.mrb[0].mxu0
      %v2624 = vpop.f32.mrb[0].mxu0
      %v2625 = vadd.f32 0.0, %v2624
      %v2626 = vpop.f32.mrb[0].mxu0
      %2627 = vmatprep.mubr.bf16.mxu0 %v2533
      %2628 = vmatmul.mubr.bf16.gmra.mrb[0].mxu0 %v2400
      %v2629 = vpop.f32.mrb[0].mxu0
      %v2630 = vadd.f32 0.0, %v2629
      %v2631 = vpop.f32.mrb[0].mxu0
      %v2632 = vpop.f32.mrb[0].mxu0
      %v2633 = vadd.f32 0.0, %v2632
      %v2634 = vpop.f32.mrb[0].mxu0
      %2635 = vmatprep.mubr.bf16.mxu0 %v2536
      %2636 = vmatmul.mubr.bf16.gmra.mrb[0].mxu0 %v2402
      %v2637 = vpop.f32.mrb[0].mxu0
      %v2638 = vadd.f32 0.0, %v2637
      %v2639 = vpop.f32.mrb[0].mxu0
      %v2640 = vpop.f32.mrb[0].mxu0
      %v2641 = vadd.f32 0.0, %v2640
      %v2642 = vpop.f32.mrb[0].mxu0
      %2643 = vmatprep.mubr.bf16.mxu0 %v2539
      %2644 = vmatmul.mubr.bf16.gmra.mrb[0].mxu0 %v2404
      %v2645 = vpop.f32.mrb[0].mxu0
      %v2646 = vadd.f32 0.0, %v2645
      %v2647 = vpop.f32.mrb[0].mxu0
      %v2648 = vpop.f32.mrb[0].mxu0
      %v2649 = vadd.f32 0.0, %v2648
      %v2650 = vpop.f32.mrb[0].mxu0
      %2651 = vmatprep.mubr.bf16.mxu0 %v2542
      %2652 = vmatmul.mubr.bf16.gmra.mrb[0].mxu0 %v2406
      %v2653 = vpop.f32.mrb[0].mxu0
      %v2654 = vadd.f32 0.0, %v2653
      %v2655 = vpop.f32.mrb[0].mxu0
      %v2656 = vpop.f32.mrb[0].mxu0
      %v2657 = vadd.f32 0.0, %v2656
      %v2658 = vpop.f32.mrb[0].mxu0
      %2659 = vmatprep.mubr.bf16.mxu0 %v2545
      %2660 = vmatmul.mubr.bf16.gmra.mrb[0].mxu0 %v2408
      %v2661 = vpop.f32.mrb[0].mxu0
      %v2662 = vadd.f32 0.0, %v2661
      %v2663 = vpop.f32.mrb[0].mxu0
      %v2664 = vpop.f32.mrb[0].mxu0
      %v2665 = vadd.f32 0.0, %v2664
      %v2666 = vpop.f32.mrb[0].mxu0
      %2667 = vmatprep.mubr.bf16.mxu0 %v2548
      %2668 = vmatmul.mubr.bf16.gmra.mrb[0].mxu0 %v2410
      %v2669 = vpop.f32.mrb[0].mxu0
      %v2670 = vadd.f32 0.0, %v2669
      %v2671 = vpop.f32.mrb[0].mxu0
      %v2672 = vpop.f32.mrb[0].mxu0
      %v2673 = vadd.f32 0.0, %v2672
      %v2674 = vpop.f32.mrb[0].mxu0
      %2675 = vmatprep.mubr.bf16.mxu0 %v2551
      %2676 = vmatmul.mubr.bf16.gmra.mrb[0].mxu0 %v2412
      %v2677 = vpop.f32.mrb[0].mxu0
      %v2678 = vadd.f32 0.0, %v2677
      %v2679 = vpop.f32.mrb[0].mxu0
      %v2680 = vpop.f32.mrb[0].mxu0
      %v2681 = vadd.f32 0.0, %v2680
      %v2682 = vpop.f32.mrb[0].mxu0
      %2683 = vmatprep.mubr.bf16.mxu0 %v2554
      %2684 = vmatmul.mubr.bf16.gmra.mrb[0].mxu0 %v2414
      %v2685 = vpop.f32.mrb[0].mxu0
      %v2686 = vadd.f32 0.0, %v2685
      %v2687 = vpop.f32.mrb[0].mxu0
      %v2688 = vpop.f32.mrb[0].mxu0
      %v2689 = vadd.f32 0.0, %v2688
      %v2690 = vpop.f32.mrb[0].mxu0
      %2691 = vmatprep.mubr.bf16.mxu0 %v2557
      %2692 = vmatmul.mubr.bf16.gmra.mrb[0].mxu0 %v2416
      %v2693 = vpop.f32.mrb[0].mxu0
      %v2694 = vadd.f32 0.0, %v2693
      %v2695 = vpop.f32.mrb[0].mxu0
      %v2696 = vpop.f32.mrb[0].mxu0
      %v2697 = vadd.f32 0.0, %v2696
      %v2698 = vpop.f32.mrb[0].mxu0
      %2699 = vmatprep.mubr.bf16.mxu0 %v2560
      %2700 = vmatmul.mubr.bf16.gmra.mrb[0].mxu0 %v2418
      %v2701 = vpop.f32.mrb[0].mxu0
      %v2702 = vadd.f32 0.0, %v2701
      %v2703 = vpop.f32.mrb[0].mxu0
      %v2704 = vpop.f32.mrb[0].mxu0
      %v2705 = vadd.f32 0.0, %v2704
      %v2706 = vpop.f32.mrb[0].mxu0
      %2707 = vmatprep.mubr.bf16.mxu0 %v2563
      %2708 = vmatmul.mubr.bf16.gmra.mrb[0].mxu0 %v2420
      %v2709 = vpop.f32.mrb[0].mxu0
      %v2710 = vadd.f32 0.0, %v2709
      %v2711 = vpop.f32.mrb[0].mxu0
      %v2712 = vpop.f32.mrb[0].mxu0
      %v2713 = vadd.f32 0.0, %v2712
      %v2714 = vpop.f32.mrb[0].mxu0
      %2715 = vmatprep.mubr.bf16.mxu0 %v2566
      %2716 = vmatmul.mubr.bf16.gmra.mrb[0].mxu0 %v2422
      %v2717 = vpop.f32.mrb[0].mxu0
      %v2718 = vadd.f32 0.0, %v2717
      %v2719 = vpop.f32.mrb[0].mxu0
      %v2720 = vpop.f32.mrb[0].mxu0
      %v2721 = vadd.f32 0.0, %v2720
      %v2722 = vpop.f32.mrb[0].mxu0
      %2723 = vmatprep.mubr.bf16.mxu0 %v2569
      %2724 = vmatmul.mubr.bf16.gmra.mrb[0].mxu0 %v2424
      %v2725 = vpop.f32.mrb[0].mxu0
      %v2726 = vadd.f32 0.0, %v2725
      %v2727 = vpop.f32.mrb[0].mxu0
      %v2728 = vpop.f32.mrb[0].mxu0
      %v2729 = vadd.f32 0.0, %v2728
      %v2730 = vpop.f32.mrb[0].mxu0
      %2731 = vdwg.mxu0
      %v2732 = vadd.f32 %v2267, %v2606
      %v2733 = vadd.f32 %v2270, %v2609
      %v2734 = vadd.f32 %v2275, %v2614
      %v2735 = vadd.f32 %v2278, %v2617
      %v2736 = vadd.f32 %v2283, %v2622
      %v2737 = vadd.f32 %v2286, %v2625
      %v2738 = vadd.f32 %v2291, %v2630
      %v2739 = vadd.f32 %v2294, %v2633
      %v2740 = vadd.f32 %v2299, %v2638
      %v2741 = vadd.f32 %v2302, %v2641
      %v2742 = vadd.f32 %v2307, %v2646
      %v2743 = vadd.f32 %v2310, %v2649
      %v2744 = vadd.f32 %v2315, %v2654
      %v2745 = vadd.f32 %v2318, %v2657
      %v2746 = vadd.f32 %v2323, %v2662
      %v2747 = vadd.f32 %v2326, %v2665
      %v2748 = vadd.f32 %v2331, %v2670
      %v2749 = vadd.f32 %v2334, %v2673
      %v2750 = vadd.f32 %v2339, %v2678
      %v2751 = vadd.f32 %v2342, %v2681
      %v2752 = vadd.f32 %v2347, %v2686
      %v2753 = vadd.f32 %v2350, %v2689
      %v2754 = vadd.f32 %v2355, %v2694
      %v2755 = vadd.f32 %v2358, %v2697
      %v2756 = vadd.f32 %v2363, %v2702
      %v2757 = vadd.f32 %v2366, %v2705
      %v2758 = vadd.f32 %v2371, %v2710
      %v2759 = vadd.f32 %v2374, %v2713
      %v2760 = vadd.f32 %v2379, %v2718
      %v2761 = vadd.f32 %v2382, %v2721
      %v2762 = vadd.f32 %v2387, %v2726
      %v2763 = vadd.f32 %v2390, %v2729
      %s2764 = scalar_lea.vmem [#allocation2], 192
      %v2765 = vld [vmem:[%s2764] sm:$0xff]
      %v2766 = vld [vmem:[%s2764 + $0x8] sm:$0xff]
      %v2767 = vld [vmem:[%s2764 + $0x10] sm:$0xff]
      %v2768 = vld [vmem:[%s2764 + $0x18] sm:$0xff]
      %v2769 = vld [vmem:[%s2764 + $0x60] sm:$0xff]
      %v2770 = vld [vmem:[%s2764 + $0x68] sm:$0xff]
      %v2771 = vld [vmem:[%s2764 + $0x70] sm:$0xff]
      %v2772 = vld [vmem:[%s2764 + $0x78] sm:$0xff]
      %v2773 = vld [vmem:[%s2764 + $0xc0] sm:$0xff]
      %v2774 = vld [vmem:[%s2764 + $0xc8] sm:$0xff]
      %v2775 = vld [vmem:[%s2764 + $0xd0] sm:$0xff]
      %v2776 = vld [vmem:[%s2764 + $0xd8] sm:$0xff]
      %v2777 = vld [vmem:[%s2764 + $0x120] sm:$0xff]
      %v2778 = vld [vmem:[%s2764 + $0x128] sm:$0xff]
      %v2779 = vld [vmem:[%s2764 + $0x130] sm:$0xff]
      %v2780 = vld [vmem:[%s2764 + $0x138] sm:$0xff]
      %v2781 = vld [vmem:[%s2764 + $0x180] sm:$0xff]
      %v2782 = vld [vmem:[%s2764 + $0x188] sm:$0xff]
      %v2783 = vld [vmem:[%s2764 + $0x190] sm:$0xff]
      %v2784 = vld [vmem:[%s2764 + $0x198] sm:$0xff]
      %v2785 = vld [vmem:[%s2764 + $0x1e0] sm:$0xff]
      %v2786 = vld [vmem:[%s2764 + $0x1e8] sm:$0xff]
      %v2787 = vld [vmem:[%s2764 + $0x1f0] sm:$0xff]
      %v2788 = vld [vmem:[%s2764 + $0x1f8] sm:$0xff]
      %v2789 = vld [vmem:[%s2764 + $0x240] sm:$0xff]
      %v2790 = vld [vmem:[%s2764 + $0x248] sm:$0xff]
      %v2791 = vld [vmem:[%s2764 + $0x250] sm:$0xff]
      %v2792 = vld [vmem:[%s2764 + $0x258] sm:$0xff]
      %v2793 = vld [vmem:[%s2764 + $0x2a0] sm:$0xff]
      %v2794 = vld [vmem:[%s2764 + $0x2a8] sm:$0xff]
      %v2795 = vld [vmem:[%s2764 + $0x2b0] sm:$0xff]
      %v2796 = vld [vmem:[%s2764 + $0x2b8] sm:$0xff]
      %s2797 = scalar_lea.vmem %s4, 288
      %v2798 = vld [vmem:[%s2797] sm:$0xf]
      %v2799 = vld [vmem:[%s2797 + $0x4] sm:$0xf]
      %v2800 = vld [vmem:[%s2797 + $0x8] sm:$0xf]
      %v2801 = vld [vmem:[%s2797 + $0xc] sm:$0xf]
      %v2802 = vld [vmem:[%s2797 + $0x10] sm:$0xf]
      %v2803 = vld [vmem:[%s2797 + $0x14] sm:$0xf]
      %v2804 = vld [vmem:[%s2797 + $0x18] sm:$0xf]
      %v2805 = vld [vmem:[%s2797 + $0x1c] sm:$0xf]
      %v2806 = vld [vmem:[%s2797 + $0x20] sm:$0xf]
      %v2807 = vld [vmem:[%s2797 + $0x24] sm:$0xf]
      %v2808 = vld [vmem:[%s2797 + $0x28] sm:$0xf]
      %v2809 = vld [vmem:[%s2797 + $0x2c] sm:$0xf]
      %v2810 = vld [vmem:[%s2797 + $0x30] sm:$0xf]
      %v2811 = vld [vmem:[%s2797 + $0x34] sm:$0xf]
      %v2812 = vld [vmem:[%s2797 + $0x38] sm:$0xf]
      %v2813 = vld [vmem:[%s2797 + $0x3c] sm:$0xf]
      %v2814 = vld [vmem:[%s2797 + $0x40] sm:$0xf]
      %v2815 = vld [vmem:[%s2797 + $0x44] sm:$0xf]
      %v2816 = vld [vmem:[%s2797 + $0x48] sm:$0xf]
      %v2817 = vld [vmem:[%s2797 + $0x4c] sm:$0xf]
      %v2818 = vld [vmem:[%s2797 + $0x50] sm:$0xf]
      %v2819 = vld [vmem:[%s2797 + $0x54] sm:$0xf]
      %v2820 = vld [vmem:[%s2797 + $0x58] sm:$0xf]
      %v2821 = vld [vmem:[%s2797 + $0x5c] sm:$0xf]
      %v2846 = vunpack.c.l.b16 %v2798
      %v2847 = vunpack.c.l.b16 %v2799
      %v2848 = vunpack.c.l.b16 %v2800
      %v2849 = vunpack.c.l.b16 %v2801
      %v2850 = vunpack.c.l.b16 %v2802
      %v2851 = vunpack.c.l.b16 %v2803
      %v2852 = vunpack.c.l.b16 %v2804
      %v2853 = vunpack.c.l.b16 %v2805
      %v2854 = vunpack.c.l.b16 %v2806
      %v2855 = vunpack.c.l.b16 %v2807
      %v2856 = vunpack.c.l.b16 %v2808
      %v2857 = vunpack.c.l.b16 %v2809
      %v2858 = vunpack.c.l.b16 %v2810
      %v2859 = vunpack.c.l.b16 %v2811
      %v2860 = vunpack.c.l.b16 %v2812
      %v2861 = vunpack.c.l.b16 %v2813
      %v2862 = vunpack.c.l.b16 %v2814
      %v2863 = vunpack.c.l.b16 %v2815
      %v2864 = vunpack.c.l.b16 %v2816
      %v2865 = vunpack.c.l.b16 %v2817
      %v2866 = vunpack.c.l.b16 %v2818
      %v2867 = vunpack.c.l.b16 %v2819
      %v2868 = vunpack.c.l.b16 %v2820
      %v2869 = vunpack.c.l.b16 %v2821
      %v2870 = vpack.c.b16 %v2847, %v2846
      %v2871 = vpack.c.b16 %v2849, %v2848
      %v2872 = vpack.c.b16 %v2851, %v2850
      %v2873 = vpack.c.b16 %v2853, %v2852
      %v2874 = vpack.c.b16 %v2855, %v2854
      %v2875 = vpack.c.b16 %v2857, %v2856
      %v2876 = vpack.c.b16 %v2859, %v2858
      %v2877 = vpack.c.b16 %v2861, %v2860
      %v2878 = vpack.c.b16 %v2863, %v2862
      %v2879 = vpack.c.b16 %v2865, %v2864
      %v2880 = vpack.c.b16 %v2867, %v2866
      %v2881 = vpack.c.b16 %v2869, %v2868
      %v2895 = vsel %vm431, %v2766, 0
      %v2898 = vsel %vm431, %v2768, 0
      %v2901 = vsel %vm431, %v2770, 0
      %v2904 = vsel %vm431, %v2772, 0
      %v2907 = vsel %vm431, %v2774, 0
      %v2910 = vsel %vm431, %v2776, 0
      %v2913 = vsel %vm431, %v2778, 0
      %v2916 = vsel %vm431, %v2780, 0
      %v2919 = vsel %vm431, %v2782, 0
      %v2922 = vsel %vm431, %v2784, 0
      %v2925 = vsel %vm431, %v2786, 0
      %v2928 = vsel %vm431, %v2788, 0
      %v2931 = vsel %vm431, %v2790, 0
      %v2934 = vsel %vm431, %v2792, 0
      %v2937 = vsel %vm431, %v2794, 0
      %v2940 = vsel %vm431, %v2796, 0
      %2942 = vmatprep.subr.bf16.mxu0 0
      %2943 = vmatpush1.bf16.msra.mxu0 %v2870
      %2944 = vmatprep.subr.bf16.mxu0 0
      %2945 = vmatpush1.bf16.msra.mxu0 %v2871
      %2946 = vmatprep.subr.bf16.mxu0 0
      %2947 = vmatpush1.bf16.msra.mxu0 %v2872
      %2948 = vmatprep.subr.bf16.mxu0 0
      %2949 = vmatpush1.bf16.msra.mxu0 %v2873
      %2950 = vmatprep.subr.bf16.mxu0 0
      %2951 = vmatpush1.bf16.msra.mxu0 %v2874
      %2952 = vmatprep.subr.bf16.mxu0 0
      %2953 = vmatpush1.bf16.msra.mxu0 %v2875
      %2954 = vmatprep.subr.bf16.mxu0 0
      %2955 = vmatpush1.bf16.msra.mxu0 %v2876
      %2956 = vmatprep.subr.bf16.mxu0 0
      %2957 = vmatpush1.bf16.msra.mxu0 %v2877
      %2958 = vmatprep.subr.bf16.mxu0 0
      %2959 = vmatpush1.bf16.msra.mxu0 %v2878
      %2960 = vmatprep.subr.bf16.mxu0 0
      %2961 = vmatpush1.bf16.msra.mxu0 %v2879
      %2962 = vmatprep.subr.bf16.mxu0 0
      %2963 = vmatpush1.bf16.msra.mxu0 %v2880
      %2964 = vmatprep.subr.bf16.mxu0 0
      %2965 = vmatpush1.bf16.msra.mxu0 %v2881
      %2966 = vmatprep.subr.bf16.mxu0 0
      %2967 = vmatpush1.bf16.msra.mxu0 0
      %2968 = vmatprep.subr.bf16.mxu0 0
      %2969 = vmatpush1.bf16.msra.mxu0 0
      %2970 = vmatprep.subr.bf16.mxu0 0
      %2971 = vmatpush1.bf16.msra.mxu0 0
      %2972 = vmatprep.subr.bf16.mxu0 0
      %2973 = vmatpush1.bf16.msra.mxu0 0
      %2974 = vmatprep.mubr.bf16.mxu0 %v2895
      %2975 = vmatmul.mubr.bf16.gmra.mrb[0].mxu0 %v2765
      %v2976 = vpop.f32.mrb[0].mxu0
      %v2977 = vadd.f32 0.0, %v2976
      %v2978 = vpop.f32.mrb[0].mxu0
      %v2979 = vpop.f32.mrb[0].mxu0
      %v2980 = vadd.f32 0.0, %v2979
      %v2981 = vpop.f32.mrb[0].mxu0
      %2982 = vmatprep.mubr.bf16.mxu0 %v2898
      %2983 = vmatmul.mubr.bf16.gmra.mrb[0].mxu0 %v2767
      %v2984 = vpop.f32.mrb[0].mxu0
      %v2985 = vadd.f32 0.0, %v2984
      %v2986 = vpop.f32.mrb[0].mxu0
      %v2987 = vpop.f32.mrb[0].mxu0
      %v2988 = vadd.f32 0.0, %v2987
      %v2989 = vpop.f32.mrb[0].mxu0
      %2990 = vmatprep.mubr.bf16.mxu0 %v2901
      %2991 = vmatmul.mubr.bf16.gmra.mrb[0].mxu0 %v2769
      %v2992 = vpop.f32.mrb[0].mxu0
      %v2993 = vadd.f32 0.0, %v2992
      %v2994 = vpop.f32.mrb[0].mxu0
      %v2995 = vpop.f32.mrb[0].mxu0
      %v2996 = vadd.f32 0.0, %v2995
      %v2997 = vpop.f32.mrb[0].mxu0
      %2998 = vmatprep.mubr.bf16.mxu0 %v2904
      %2999 = vmatmul.mubr.bf16.gmra.mrb[0].mxu0 %v2771
      %v3000 = vpop.f32.mrb[0].mxu0
      %v3001 = vadd.f32 0.0, %v3000
      %v3002 = vpop.f32.mrb[0].mxu0
      %v3003 = vpop.f32.mrb[0].mxu0
      %v3004 = vadd.f32 0.0, %v3003
      %v3005 = vpop.f32.mrb[0].mxu0
      %3006 = vmatprep.mubr.bf16.mxu0 %v2907
      %3007 = vmatmul.mubr.bf16.gmra.mrb[0].mxu0 %v2773
      %v3008 = vpop.f32.mrb[0].mxu0
      %v3009 = vadd.f32 0.0, %v3008
      %v3010 = vpop.f32.mrb[0].mxu0
      %v3011 = vpop.f32.mrb[0].mxu0
      %v3012 = vadd.f32 0.0, %v3011
      %v3013 = vpop.f32.mrb[0].mxu0
      %3014 = vmatprep.mubr.bf16.mxu0 %v2910
      %3015 = vmatmul.mubr.bf16.gmra.mrb[0].mxu0 %v2775
      %v3016 = vpop.f32.mrb[0].mxu0
      %v3017 = vadd.f32 0.0, %v3016
      %v3018 = vpop.f32.mrb[0].mxu0
      %v3019 = vpop.f32.mrb[0].mxu0
      %v3020 = vadd.f32 0.0, %v3019
      %v3021 = vpop.f32.mrb[0].mxu0
      %3022 = vmatprep.mubr.bf16.mxu0 %v2913
      %3023 = vmatmul.mubr.bf16.gmra.mrb[0].mxu0 %v2777
      %v3024 = vpop.f32.mrb[0].mxu0
      %v3025 = vadd.f32 0.0, %v3024
      %v3026 = vpop.f32.mrb[0].mxu0
      %v3027 = vpop.f32.mrb[0].mxu0
      %v3028 = vadd.f32 0.0, %v3027
      %v3029 = vpop.f32.mrb[0].mxu0
      %3030 = vmatprep.mubr.bf16.mxu0 %v2916
      %3031 = vmatmul.mubr.bf16.gmra.mrb[0].mxu0 %v2779
      %v3032 = vpop.f32.mrb[0].mxu0
      %v3033 = vadd.f32 0.0, %v3032
      %v3034 = vpop.f32.mrb[0].mxu0
      %v3035 = vpop.f32.mrb[0].mxu0
      %v3036 = vadd.f32 0.0, %v3035
      %v3037 = vpop.f32.mrb[0].mxu0
      %3038 = vmatprep.mubr.bf16.mxu0 %v2919
      %3039 = vmatmul.mubr.bf16.gmra.mrb[0].mxu0 %v2781
      %v3040 = vpop.f32.mrb[0].mxu0
      %v3041 = vadd.f32 0.0, %v3040
      %v3042 = vpop.f32.mrb[0].mxu0
      %v3043 = vpop.f32.mrb[0].mxu0
      %v3044 = vadd.f32 0.0, %v3043
      %v3045 = vpop.f32.mrb[0].mxu0
      %3046 = vmatprep.mubr.bf16.mxu0 %v2922
      %3047 = vmatmul.mubr.bf16.gmra.mrb[0].mxu0 %v2783
      %v3048 = vpop.f32.mrb[0].mxu0
      %v3049 = vadd.f32 0.0, %v3048
      %v3050 = vpop.f32.mrb[0].mxu0
      %v3051 = vpop.f32.mrb[0].mxu0
      %v3052 = vadd.f32 0.0, %v3051
      %v3053 = vpop.f32.mrb[0].mxu0
      %3054 = vmatprep.mubr.bf16.mxu0 %v2925
      %3055 = vmatmul.mubr.bf16.gmra.mrb[0].mxu0 %v2785
      %v3056 = vpop.f32.mrb[0].mxu0
      %v3057 = vadd.f32 0.0, %v3056
      %v3058 = vpop.f32.mrb[0].mxu0
      %v3059 = vpop.f32.mrb[0].mxu0
      %v3060 = vadd.f32 0.0, %v3059
      %v3061 = vpop.f32.mrb[0].mxu0
      %3062 = vmatprep.mubr.bf16.mxu0 %v2928
      %3063 = vmatmul.mubr.bf16.gmra.mrb[0].mxu0 %v2787
      %v3064 = vpop.f32.mrb[0].mxu0
      %v3065 = vadd.f32 0.0, %v3064
      %v3066 = vpop.f32.mrb[0].mxu0
      %v3067 = vpop.f32.mrb[0].mxu0
      %v3068 = vadd.f32 0.0, %v3067
      %v3069 = vpop.f32.mrb[0].mxu0
      %3070 = vmatprep.mubr.bf16.mxu0 %v2931
      %3071 = vmatmul.mubr.bf16.gmra.mrb[0].mxu0 %v2789
      %v3072 = vpop.f32.mrb[0].mxu0
      %v3073 = vadd.f32 0.0, %v3072
      %v3074 = vpop.f32.mrb[0].mxu0
      %v3075 = vpop.f32.mrb[0].mxu0
      %v3076 = vadd.f32 0.0, %v3075
      %v3077 = vpop.f32.mrb[0].mxu0
      %3078 = vmatprep.mubr.bf16.mxu0 %v2934
      %3079 = vmatmul.mubr.bf16.gmra.mrb[0].mxu0 %v2791
      %v3080 = vpop.f32.mrb[0].mxu0
      %v3081 = vadd.f32 0.0, %v3080
      %v3082 = vpop.f32.mrb[0].mxu0
      %v3083 = vpop.f32.mrb[0].mxu0
      %v3084 = vadd.f32 0.0, %v3083
      %v3085 = vpop.f32.mrb[0].mxu0
      %3086 = vmatprep.mubr.bf16.mxu0 %v2937
      %3087 = vmatmul.mubr.bf16.gmra.mrb[0].mxu0 %v2793
      %v3088 = vpop.f32.mrb[0].mxu0
      %v3089 = vadd.f32 0.0, %v3088
      %v3090 = vpop.f32.mrb[0].mxu0
      %v3091 = vpop.f32.mrb[0].mxu0
      %v3092 = vadd.f32 0.0, %v3091
      %v3093 = vpop.f32.mrb[0].mxu0
      %3094 = vmatprep.mubr.bf16.mxu0 %v2940
      %3095 = vmatmul.mubr.bf16.gmra.mrb[0].mxu0 %v2795
      %v3096 = vpop.f32.mrb[0].mxu0
      %v3097 = vadd.f32 0.0, %v3096
      %v3098 = vpop.f32.mrb[0].mxu0
      %v3099 = vpop.f32.mrb[0].mxu0
      %v3100 = vadd.f32 0.0, %v3099
      %v3101 = vpop.f32.mrb[0].mxu0
      %3102 = vdwg.mxu0
      %v3103 = vadd.f32 %v2732, %v2977
      %v3104 = vadd.f32 %v2733, %v2980
      %v3105 = vadd.f32 %v2734, %v2985
      %v3106 = vadd.f32 %v2735, %v2988
      %v3107 = vadd.f32 %v2736, %v2993
      %v3108 = vadd.f32 %v2737, %v2996
      %v3109 = vadd.f32 %v2738, %v3001
      %v3110 = vadd.f32 %v2739, %v3004
      %v3111 = vadd.f32 %v2740, %v3009
      %v3112 = vadd.f32 %v2741, %v3012
      %v3113 = vadd.f32 %v2742, %v3017
      %v3114 = vadd.f32 %v2743, %v3020
      %v3115 = vadd.f32 %v2744, %v3025
      %v3116 = vadd.f32 %v2745, %v3028
      %v3117 = vadd.f32 %v2746, %v3033
      %v3118 = vadd.f32 %v2747, %v3036
      %v3119 = vadd.f32 %v2748, %v3041
      %v3120 = vadd.f32 %v2749, %v3044
      %v3121 = vadd.f32 %v2750, %v3049
      %v3122 = vadd.f32 %v2751, %v3052
      %v3123 = vadd.f32 %v2752, %v3057
      %v3124 = vadd.f32 %v2753, %v3060
      %v3125 = vadd.f32 %v2754, %v3065
      %v3126 = vadd.f32 %v2755, %v3068
      %v3127 = vadd.f32 %v2756, %v3073
      %v3128 = vadd.f32 %v2757, %v3076
      %v3129 = vadd.f32 %v2758, %v3081
      %v3130 = vadd.f32 %v2759, %v3084
      %v3131 = vadd.f32 %v2760, %v3089
      %v3132 = vadd.f32 %v2761, %v3092
      %v3133 = vadd.f32 %v2762, %v3097
      %v3134 = vadd.f32 %v2763, %v3100
      %s3135 = scalar_lea.vmem [#allocation2], 256
      %v3136 = vld [vmem:[%s3135] sm:$0xff]
      %v3137 = vld [vmem:[%s3135 + $0x8] sm:$0xff]
      %v3138 = vld [vmem:[%s3135 + $0x10] sm:$0xff]
      %v3139 = vld [vmem:[%s3135 + $0x18] sm:$0xff]
      %v3140 = vld [vmem:[%s3135 + $0x60] sm:$0xff]
      %v3141 = vld [vmem:[%s3135 + $0x68] sm:$0xff]
      %v3142 = vld [vmem:[%s3135 + $0x70] sm:$0xff]
      %v3143 = vld [vmem:[%s3135 + $0x78] sm:$0xff]
      %v3144 = vld [vmem:[%s3135 + $0xc0] sm:$0xff]
      %v3145 = vld [vmem:[%s3135 + $0xc8] sm:$0xff]
      %v3146 = vld [vmem:[%s3135 + $0xd0] sm:$0xff]
      %v3147 = vld [vmem:[%s3135 + $0xd8] sm:$0xff]
      %v3148 = vld [vmem:[%s3135 + $0x120] sm:$0xff]
      %v3149 = vld [vmem:[%s3135 + $0x128] sm:$0xff]
      %v3150 = vld [vmem:[%s3135 + $0x130] sm:$0xff]
      %v3151 = vld [vmem:[%s3135 + $0x138] sm:$0xff]
      %v3152 = vld [vmem:[%s3135 + $0x180] sm:$0xff]
      %v3153 = vld [vmem:[%s3135 + $0x188] sm:$0xff]
      %v3154 = vld [vmem:[%s3135 + $0x190] sm:$0xff]
      %v3155 = vld [vmem:[%s3135 + $0x198] sm:$0xff]
      %v3156 = vld [vmem:[%s3135 + $0x1e0] sm:$0xff]
      %v3157 = vld [vmem:[%s3135 + $0x1e8] sm:$0xff]
      %v3158 = vld [vmem:[%s3135 + $0x1f0] sm:$0xff]
      %v3159 = vld [vmem:[%s3135 + $0x1f8] sm:$0xff]
      %v3160 = vld [vmem:[%s3135 + $0x240] sm:$0xff]
      %v3161 = vld [vmem:[%s3135 + $0x248] sm:$0xff]
      %v3162 = vld [vmem:[%s3135 + $0x250] sm:$0xff]
      %v3163 = vld [vmem:[%s3135 + $0x258] sm:$0xff]
      %v3164 = vld [vmem:[%s3135 + $0x2a0] sm:$0xff]
      %v3165 = vld [vmem:[%s3135 + $0x2a8] sm:$0xff]
      %v3166 = vld [vmem:[%s3135 + $0x2b0] sm:$0xff]
      %v3167 = vld [vmem:[%s3135 + $0x2b8] sm:$0xff]
      %s3168 = scalar_lea.vmem %s4, 384
      %v3169 = vld [vmem:[%s3168] sm:$0xf]
      %v3170 = vld [vmem:[%s3168 + $0x4] sm:$0xf]
      %v3171 = vld [vmem:[%s3168 + $0x8] sm:$0xf]
      %v3172 = vld [vmem:[%s3168 + $0xc] sm:$0xf]
      %v3173 = vld [vmem:[%s3168 + $0x10] sm:$0xf]
      %v3174 = vld [vmem:[%s3168 + $0x14] sm:$0xf]
      %v3175 = vld [vmem:[%s3168 + $0x18] sm:$0xf]
      %v3176 = vld [vmem:[%s3168 + $0x1c] sm:$0xf]
      %v3177 = vld [vmem:[%s3168 + $0x20] sm:$0xf]
      %v3178 = vld [vmem:[%s3168 + $0x24] sm:$0xf]
      %v3179 = vld [vmem:[%s3168 + $0x28] sm:$0xf]
      %v3180 = vld [vmem:[%s3168 + $0x2c] sm:$0xf]
      %v3181 = vld [vmem:[%s3168 + $0x30] sm:$0xf]
      %v3182 = vld [vmem:[%s3168 + $0x34] sm:$0xf]
      %v3183 = vld [vmem:[%s3168 + $0x38] sm:$0xf]
      %v3184 = vld [vmem:[%s3168 + $0x3c] sm:$0xf]
      %v3185 = vld [vmem:[%s3168 + $0x40] sm:$0xf]
      %v3186 = vld [vmem:[%s3168 + $0x44] sm:$0xf]
      %v3187 = vld [vmem:[%s3168 + $0x48] sm:$0xf]
      %v3188 = vld [vmem:[%s3168 + $0x4c] sm:$0xf]
      %v3189 = vld [vmem:[%s3168 + $0x50] sm:$0xf]
      %v3190 = vld [vmem:[%s3168 + $0x54] sm:$0xf]
      %v3191 = vld [vmem:[%s3168 + $0x58] sm:$0xf]
      %v3192 = vld [vmem:[%s3168 + $0x5c] sm:$0xf]
      %v3217 = vunpack.c.l.b16 %v3169
      %v3218 = vunpack.c.l.b16 %v3170
      %v3219 = vunpack.c.l.b16 %v3171
      %v3220 = vunpack.c.l.b16 %v3172
      %v3221 = vunpack.c.l.b16 %v3173
      %v3222 = vunpack.c.l.b16 %v3174
      %v3223 = vunpack.c.l.b16 %v3175
      %v3224 = vunpack.c.l.b16 %v3176
      %v3225 = vunpack.c.l.b16 %v3177
      %v3226 = vunpack.c.l.b16 %v3178
      %v3227 = vunpack.c.l.b16 %v3179
      %v3228 = vunpack.c.l.b16 %v3180
      %v3229 = vunpack.c.l.b16 %v3181
      %v3230 = vunpack.c.l.b16 %v3182
      %v3231 = vunpack.c.l.b16 %v3183
      %v3232 = vunpack.c.l.b16 %v3184
      %v3233 = vunpack.c.l.b16 %v3185
      %v3234 = vunpack.c.l.b16 %v3186
      %v3235 = vunpack.c.l.b16 %v3187
      %v3236 = vunpack.c.l.b16 %v3188
      %v3237 = vunpack.c.l.b16 %v3189
      %v3238 = vunpack.c.l.b16 %v3190
      %v3239 = vunpack.c.l.b16 %v3191
      %v3240 = vunpack.c.l.b16 %v3192
      %v3241 = vpack.c.b16 %v3218, %v3217
      %v3242 = vpack.c.b16 %v3220, %v3219
      %v3243 = vpack.c.b16 %v3222, %v3221
      %v3244 = vpack.c.b16 %v3224, %v3223
      %v3245 = vpack.c.b16 %v3226, %v3225
      %v3246 = vpack.c.b16 %v3228, %v3227
      %v3247 = vpack.c.b16 %v3230, %v3229
      %v3248 = vpack.c.b16 %v3232, %v3231
      %v3249 = vpack.c.b16 %v3234, %v3233
      %v3250 = vpack.c.b16 %v3236, %v3235
      %v3251 = vpack.c.b16 %v3238, %v3237
      %v3252 = vpack.c.b16 %v3240, %v3239
      %v3266 = vsel %vm431, %v3137, 0
      %v3269 = vsel %vm431, %v3139, 0
      %v3272 = vsel %vm431, %v3141, 0
      %v3275 = vsel %vm431, %v3143, 0
      %v3278 = vsel %vm431, %v3145, 0
      %v3281 = vsel %vm431, %v3147, 0
      %v3284 = vsel %vm431, %v3149, 0
      %v3287 = vsel %vm431, %v3151, 0
      %v3290 = vsel %vm431, %v3153, 0
      %v3293 = vsel %vm431, %v3155, 0
      %v3296 = vsel %vm431, %v3157, 0
      %v3299 = vsel %vm431, %v3159, 0
      %v3302 = vsel %vm431, %v3161, 0
      %v3305 = vsel %vm431, %v3163, 0
      %v3308 = vsel %vm431, %v3165, 0
      %v3311 = vsel %vm431, %v3167, 0
      %3313 = vmatprep.subr.bf16.mxu0 0
      %3314 = vmatpush1.bf16.msra.mxu0 %v3241
      %3315 = vmatprep.subr.bf16.mxu0 0
      %3316 = vmatpush1.bf16.msra.mxu0 %v3242
      %3317 = vmatprep.subr.bf16.mxu0 0
      %3318 = vmatpush1.bf16.msra.mxu0 %v3243
      %3319 = vmatprep.subr.bf16.mxu0 0
      %3320 = vmatpush1.bf16.msra.mxu0 %v3244
      %3321 = vmatprep.subr.bf16.mxu0 0
      %3322 = vmatpush1.bf16.msra.mxu0 %v3245
      %3323 = vmatprep.subr.bf16.mxu0 0
      %3324 = vmatpush1.bf16.msra.mxu0 %v3246
      %3325 = vmatprep.subr.bf16.mxu0 0
      %3326 = vmatpush1.bf16.msra.mxu0 %v3247
      %3327 = vmatprep.subr.bf16.mxu0 0
      %3328 = vmatpush1.bf16.msra.mxu0 %v3248
      %3329 = vmatprep.subr.bf16.mxu0 0
      %3330 = vmatpush1.bf16.msra.mxu0 %v3249
      %3331 = vmatprep.subr.bf16.mxu0 0
      %3332 = vmatpush1.bf16.msra.mxu0 %v3250
      %3333 = vmatprep.subr.bf16.mxu0 0
      %3334 = vmatpush1.bf16.msra.mxu0 %v3251
      %3335 = vmatprep.subr.bf16.mxu0 0
      %3336 = vmatpush1.bf16.msra.mxu0 %v3252
      %3337 = vmatprep.subr.bf16.mxu0 0
      %3338 = vmatpush1.bf16.msra.mxu0 0
      %3339 = vmatprep.subr.bf16.mxu0 0
      %3340 = vmatpush1.bf16.msra.mxu0 0
      %3341 = vmatprep.subr.bf16.mxu0 0
      %3342 = vmatpush1.bf16.msra.mxu0 0
      %3343 = vmatprep.subr.bf16.mxu0 0
      %3344 = vmatpush1.bf16.msra.mxu0 0
      %3345 = vmatprep.mubr.bf16.mxu0 %v3266
      %3346 = vmatmul.mubr.bf16.gmra.mrb[0].mxu0 %v3136
      %v3347 = vpop.f32.mrb[0].mxu0
      %v3348 = vadd.f32 0.0, %v3347
      %v3349 = vpop.f32.mrb[0].mxu0
      %v3350 = vpop.f32.mrb[0].mxu0
      %v3351 = vadd.f32 0.0, %v3350
      %v3352 = vpop.f32.mrb[0].mxu0
      %3353 = vmatprep.mubr.bf16.mxu0 %v3269
      %3354 = vmatmul.mubr.bf16.gmra.mrb[0].mxu0 %v3138
      %v3355 = vpop.f32.mrb[0].mxu0
      %v3356 = vadd.f32 0.0, %v3355
      %v3357 = vpop.f32.mrb[0].mxu0
      %v3358 = vpop.f32.mrb[0].mxu0
      %v3359 = vadd.f32 0.0, %v3358
      %v3360 = vpop.f32.mrb[0].mxu0
      %3361 = vmatprep.mubr.bf16.mxu0 %v3272
      %3362 = vmatmul.mubr.bf16.gmra.mrb[0].mxu0 %v3140
      %v3363 = vpop.f32.mrb[0].mxu0
      %v3364 = vadd.f32 0.0, %v3363
      %v3365 = vpop.f32.mrb[0].mxu0
      %v3366 = vpop.f32.mrb[0].mxu0
      %v3367 = vadd.f32 0.0, %v3366
      %v3368 = vpop.f32.mrb[0].mxu0
      %3369 = vmatprep.mubr.bf16.mxu0 %v3275
      %3370 = vmatmul.mubr.bf16.gmra.mrb[0].mxu0 %v3142
      %v3371 = vpop.f32.mrb[0].mxu0
      %v3372 = vadd.f32 0.0, %v3371
      %v3373 = vpop.f32.mrb[0].mxu0
      %v3374 = vpop.f32.mrb[0].mxu0
      %v3375 = vadd.f32 0.0, %v3374
      %v3376 = vpop.f32.mrb[0].mxu0
      %3377 = vmatprep.mubr.bf16.mxu0 %v3278
      %3378 = vmatmul.mubr.bf16.gmra.mrb[0].mxu0 %v3144
      %v3379 = vpop.f32.mrb[0].mxu0
      %v3380 = vadd.f32 0.0, %v3379
      %v3381 = vpop.f32.mrb[0].mxu0
      %v3382 = vpop.f32.mrb[0].mxu0
      %v3383 = vadd.f32 0.0, %v3382
      %v3384 = vpop.f32.mrb[0].mxu0
      %3385 = vmatprep.mubr.bf16.mxu0 %v3281
      %3386 = vmatmul.mubr.bf16.gmra.mrb[0].mxu0 %v3146
      %v3387 = vpop.f32.mrb[0].mxu0
      %v3388 = vadd.f32 0.0, %v3387
      %v3389 = vpop.f32.mrb[0].mxu0
      %v3390 = vpop.f32.mrb[0].mxu0
      %v3391 = vadd.f32 0.0, %v3390
      %v3392 = vpop.f32.mrb[0].mxu0
      %3393 = vmatprep.mubr.bf16.mxu0 %v3284
      %3394 = vmatmul.mubr.bf16.gmra.mrb[0].mxu0 %v3148
      %v3395 = vpop.f32.mrb[0].mxu0
      %v3396 = vadd.f32 0.0, %v3395
      %v3397 = vpop.f32.mrb[0].mxu0
      %v3398 = vpop.f32.mrb[0].mxu0
      %v3399 = vadd.f32 0.0, %v3398
      %v3400 = vpop.f32.mrb[0].mxu0
      %3401 = vmatprep.mubr.bf16.mxu0 %v3287
      %3402 = vmatmul.mubr.bf16.gmra.mrb[0].mxu0 %v3150
      %v3403 = vpop.f32.mrb[0].mxu0
      %v3404 = vadd.f32 0.0, %v3403
      %v3405 = vpop.f32.mrb[0].mxu0
      %v3406 = vpop.f32.mrb[0].mxu0
      %v3407 = vadd.f32 0.0, %v3406
      %v3408 = vpop.f32.mrb[0].mxu0
      %3409 = vmatprep.mubr.bf16.mxu0 %v3290
      %3410 = vmatmul.mubr.bf16.gmra.mrb[0].mxu0 %v3152
      %v3411 = vpop.f32.mrb[0].mxu0
      %v3412 = vadd.f32 0.0, %v3411
      %v3413 = vpop.f32.mrb[0].mxu0
      %v3414 = vpop.f32.mrb[0].mxu0
      %v3415 = vadd.f32 0.0, %v3414
      %v3416 = vpop.f32.mrb[0].mxu0
      %3417 = vmatprep.mubr.bf16.mxu0 %v3293
      %3418 = vmatmul.mubr.bf16.gmra.mrb[0].mxu0 %v3154
      %v3419 = vpop.f32.mrb[0].mxu0
      %v3420 = vadd.f32 0.0, %v3419
      %v3421 = vpop.f32.mrb[0].mxu0
      %v3422 = vpop.f32.mrb[0].mxu0
      %v3423 = vadd.f32 0.0, %v3422
      %v3424 = vpop.f32.mrb[0].mxu0
      %3425 = vmatprep.mubr.bf16.mxu0 %v3296
      %3426 = vmatmul.mubr.bf16.gmra.mrb[0].mxu0 %v3156
      %v3427 = vpop.f32.mrb[0].mxu0
      %v3428 = vadd.f32 0.0, %v3427
      %v3429 = vpop.f32.mrb[0].mxu0
      %v3430 = vpop.f32.mrb[0].mxu0
      %v3431 = vadd.f32 0.0, %v3430
      %v3432 = vpop.f32.mrb[0].mxu0
      %3433 = vmatprep.mubr.bf16.mxu0 %v3299
      %3434 = vmatmul.mubr.bf16.gmra.mrb[0].mxu0 %v3158
      %v3435 = vpop.f32.mrb[0].mxu0
      %v3436 = vadd.f32 0.0, %v3435
      %v3437 = vpop.f32.mrb[0].mxu0
      %v3438 = vpop.f32.mrb[0].mxu0
      %v3439 = vadd.f32 0.0, %v3438
      %v3440 = vpop.f32.mrb[0].mxu0
      %3441 = vmatprep.mubr.bf16.mxu0 %v3302
      %3442 = vmatmul.mubr.bf16.gmra.mrb[0].mxu0 %v3160
      %v3443 = vpop.f32.mrb[0].mxu0
      %v3444 = vadd.f32 0.0, %v3443
      %v3445 = vpop.f32.mrb[0].mxu0
      %v3446 = vpop.f32.mrb[0].mxu0
      %v3447 = vadd.f32 0.0, %v3446
      %v3448 = vpop.f32.mrb[0].mxu0
      %3449 = vmatprep.mubr.bf16.mxu0 %v3305
      %3450 = vmatmul.mubr.bf16.gmra.mrb[0].mxu0 %v3162
      %v3451 = vpop.f32.mrb[0].mxu0
      %v3452 = vadd.f32 0.0, %v3451
      %v3453 = vpop.f32.mrb[0].mxu0
      %v3454 = vpop.f32.mrb[0].mxu0
      %v3455 = vadd.f32 0.0, %v3454
      %v3456 = vpop.f32.mrb[0].mxu0
      %3457 = vmatprep.mubr.bf16.mxu0 %v3308
      %3458 = vmatmul.mubr.bf16.gmra.mrb[0].mxu0 %v3164
      %v3459 = vpop.f32.mrb[0].mxu0
      %v3460 = vadd.f32 0.0, %v3459
      %v3461 = vpop.f32.mrb[0].mxu0
      %v3462 = vpop.f32.mrb[0].mxu0
      %v3463 = vadd.f32 0.0, %v3462
      %v3464 = vpop.f32.mrb[0].mxu0
      %3465 = vmatprep.mubr.bf16.mxu0 %v3311
      %3466 = vmatmul.mubr.bf16.gmra.mrb[0].mxu0 %v3166
      %v3467 = vpop.f32.mrb[0].mxu0
      %v3468 = vadd.f32 0.0, %v3467
      %v3469 = vpop.f32.mrb[0].mxu0
      %v3470 = vpop.f32.mrb[0].mxu0
      %v3471 = vadd.f32 0.0, %v3470
      %v3472 = vpop.f32.mrb[0].mxu0
      %3473 = vdwg.mxu0
      %v3474 = vadd.f32 %v3103, %v3348
      %v3475 = vadd.f32 %v3104, %v3351
      %v3476 = vadd.f32 %v3105, %v3356
      %v3477 = vadd.f32 %v3106, %v3359
      %v3478 = vadd.f32 %v3107, %v3364
      %v3479 = vadd.f32 %v3108, %v3367
      %v3480 = vadd.f32 %v3109, %v3372
      %v3481 = vadd.f32 %v3110, %v3375
      %v3482 = vadd.f32 %v3111, %v3380
      %v3483 = vadd.f32 %v3112, %v3383
      %v3484 = vadd.f32 %v3113, %v3388
      %v3485 = vadd.f32 %v3114, %v3391
      %v3486 = vadd.f32 %v3115, %v3396
      %v3487 = vadd.f32 %v3116, %v3399
      %v3488 = vadd.f32 %v3117, %v3404
      %v3489 = vadd.f32 %v3118, %v3407
      %v3490 = vadd.f32 %v3119, %v3412
      %v3491 = vadd.f32 %v3120, %v3415
      %v3492 = vadd.f32 %v3121, %v3420
      %v3493 = vadd.f32 %v3122, %v3423
      %v3494 = vadd.f32 %v3123, %v3428
      %v3495 = vadd.f32 %v3124, %v3431
      %v3496 = vadd.f32 %v3125, %v3436
      %v3497 = vadd.f32 %v3126, %v3439
      %v3498 = vadd.f32 %v3127, %v3444
      %v3499 = vadd.f32 %v3128, %v3447
      %v3500 = vadd.f32 %v3129, %v3452
      %v3501 = vadd.f32 %v3130, %v3455
      %v3502 = vadd.f32 %v3131, %v3460
      %v3503 = vadd.f32 %v3132, %v3463
      %v3504 = vadd.f32 %v3133, %v3468
      %v3505 = vadd.f32 %v3134, %v3471
      %v3506 = vld [vmem:[%s5] sm:$0x1]
      %v3508 = vlaneseq
      %v3509 = vshrl.u32 %v3508, 7
      %v3510 = vsub.s32 0, %v3509
      %v3511 = vrot.slane %v3506, %v3510
      %v3513 = vmul.f32 %v3474, %v3511
      %v3514 = vmul.f32 %v3475, %v3511
      %v3515 = vmul.f32 %v3476, %v3511
      %v3516 = vmul.f32 %v3477, %v3511
      %v3517 = vmul.f32 %v3478, %v3511
      %v3518 = vmul.f32 %v3479, %v3511
      %v3519 = vmul.f32 %v3480, %v3511
      %v3520 = vmul.f32 %v3481, %v3511
      %v3521 = vmul.f32 %v3482, %v3511
      %v3522 = vmul.f32 %v3483, %v3511
      %v3523 = vmul.f32 %v3484, %v3511
      %v3524 = vmul.f32 %v3485, %v3511
      %v3525 = vmul.f32 %v3486, %v3511
      %v3526 = vmul.f32 %v3487, %v3511
      %v3527 = vmul.f32 %v3488, %v3511
      %v3528 = vmul.f32 %v3489, %v3511
      %v3529 = vmul.f32 %v3490, %v3511
      %v3530 = vmul.f32 %v3491, %v3511
      %v3531 = vmul.f32 %v3492, %v3511
      %v3532 = vmul.f32 %v3493, %v3511
      %v3533 = vmul.f32 %v3494, %v3511
      %v3534 = vmul.f32 %v3495, %v3511
      %v3535 = vmul.f32 %v3496, %v3511
      %v3536 = vmul.f32 %v3497, %v3511
      %v3537 = vmul.f32 %v3498, %v3511
      %v3538 = vmul.f32 %v3499, %v3511
      %v3539 = vmul.f32 %v3500, %v3511
      %v3540 = vmul.f32 %v3501, %v3511
      %v3541 = vmul.f32 %v3502, %v3511
      %v3542 = vmul.f32 %v3503, %v3511
      %v3543 = vmul.f32 %v3504, %v3511
      %v3544 = vmul.f32 %v3505, %v3511
      %v3545 = vld [vmem:[%s6] sm:$0x1]
      %v3547 = vlaneseq
      %v3548 = vshrl.u32 %v3547, 7
      %v3549 = vsub.s32 0, %v3548
      %v3550 = vrot.slane %v3545, %v3549
      %v3552 = vadd.f32 %v3513, %v3550
      %v3553 = vadd.f32 %v3514, %v3550
      %v3554 = vadd.f32 %v3515, %v3550
      %v3555 = vadd.f32 %v3516, %v3550
      %v3556 = vadd.f32 %v3517, %v3550
      %v3557 = vadd.f32 %v3518, %v3550
      %v3558 = vadd.f32 %v3519, %v3550
      %v3559 = vadd.f32 %v3520, %v3550
      %v3560 = vadd.f32 %v3521, %v3550
      %v3561 = vadd.f32 %v3522, %v3550
      %v3562 = vadd.f32 %v3523, %v3550
      %v3563 = vadd.f32 %v3524, %v3550
      %v3564 = vadd.f32 %v3525, %v3550
      %v3565 = vadd.f32 %v3526, %v3550
      %v3566 = vadd.f32 %v3527, %v3550
      %v3567 = vadd.f32 %v3528, %v3550
      %v3568 = vadd.f32 %v3529, %v3550
      %v3569 = vadd.f32 %v3530, %v3550
      %v3570 = vadd.f32 %v3531, %v3550
      %v3571 = vadd.f32 %v3532, %v3550
      %v3572 = vadd.f32 %v3533, %v3550
      %v3573 = vadd.f32 %v3534, %v3550
      %v3574 = vadd.f32 %v3535, %v3550
      %v3575 = vadd.f32 %v3536, %v3550
      %v3576 = vadd.f32 %v3537, %v3550
      %v3577 = vadd.f32 %v3538, %v3550
      %v3578 = vadd.f32 %v3539, %v3550
      %v3579 = vadd.f32 %v3540, %v3550
      %v3580 = vadd.f32 %v3541, %v3550
      %v3581 = vadd.f32 %v3542, %v3550
      %v3582 = vadd.f32 %v3543, %v3550
      %v3583 = vadd.f32 %v3544, %v3550
      %v3584 = vmul.f32 %v3552, 0.01
      %v3585 = vmul.f32 %v3553, 0.01
      %v3586 = vmul.f32 %v3554, 0.01
      %v3587 = vmul.f32 %v3555, 0.01
      %v3588 = vmul.f32 %v3556, 0.01
      %v3589 = vmul.f32 %v3557, 0.01
      %v3590 = vmul.f32 %v3558, 0.01
      %v3591 = vmul.f32 %v3559, 0.01
      %v3592 = vmul.f32 %v3560, 0.01
      %v3593 = vmul.f32 %v3561, 0.01
      %v3594 = vmul.f32 %v3562, 0.01
      %v3595 = vmul.f32 %v3563, 0.01
      %v3596 = vmul.f32 %v3564, 0.01
      %v3597 = vmul.f32 %v3565, 0.01
      %v3598 = vmul.f32 %v3566, 0.01
      %v3599 = vmul.f32 %v3567, 0.01
      %v3600 = vmul.f32 %v3568, 0.01
      %v3601 = vmul.f32 %v3569, 0.01
      %v3602 = vmul.f32 %v3570, 0.01
      %v3603 = vmul.f32 %v3571, 0.01
      %v3604 = vmul.f32 %v3572, 0.01
      %v3605 = vmul.f32 %v3573, 0.01
      %v3606 = vmul.f32 %v3574, 0.01
      %v3607 = vmul.f32 %v3575, 0.01
      %v3608 = vmul.f32 %v3576, 0.01
      %v3609 = vmul.f32 %v3577, 0.01
      %v3610 = vmul.f32 %v3578, 0.01
      %v3611 = vmul.f32 %v3579, 0.01
      %v3612 = vmul.f32 %v3580, 0.01
      %v3613 = vmul.f32 %v3581, 0.01
      %v3614 = vmul.f32 %v3582, 0.01
      %v3615 = vmul.f32 %v3583, 0.01
      %v3616 = vmax.f32 %v3552, %v3584
      %v3617 = vmax.f32 %v3553, %v3585
      %v3618 = vmax.f32 %v3554, %v3586
      %v3619 = vmax.f32 %v3555, %v3587
      %v3620 = vmax.f32 %v3556, %v3588
      %v3621 = vmax.f32 %v3557, %v3589
      %v3622 = vmax.f32 %v3558, %v3590
      %v3623 = vmax.f32 %v3559, %v3591
      %v3624 = vmax.f32 %v3560, %v3592
      %v3625 = vmax.f32 %v3561, %v3593
      %v3626 = vmax.f32 %v3562, %v3594
      %v3627 = vmax.f32 %v3563, %v3595
      %v3628 = vmax.f32 %v3564, %v3596
      %v3629 = vmax.f32 %v3565, %v3597
      %v3630 = vmax.f32 %v3566, %v3598
      %v3631 = vmax.f32 %v3567, %v3599
      %v3632 = vmax.f32 %v3568, %v3600
      %v3633 = vmax.f32 %v3569, %v3601
      %v3634 = vmax.f32 %v3570, %v3602
      %v3635 = vmax.f32 %v3571, %v3603
      %v3636 = vmax.f32 %v3572, %v3604
      %v3637 = vmax.f32 %v3573, %v3605
      %v3638 = vmax.f32 %v3574, %v3606
      %v3639 = vmax.f32 %v3575, %v3607
      %v3640 = vmax.f32 %v3576, %v3608
      %v3641 = vmax.f32 %v3577, %v3609
      %v3642 = vmax.f32 %v3578, %v3610
      %v3643 = vmax.f32 %v3579, %v3611
      %v3644 = vmax.f32 %v3580, %v3612
      %v3645 = vmax.f32 %v3581, %v3613
      %v3646 = vmax.f32 %v3582, %v3614
      %v3647 = vmax.f32 %v3583, %v3615
      %v3648 = vmax.f32 %v3616, %v3620
      %v3649 = vmax.f32 %v3617, %v3621
      %v3650 = vmax.f32 %v3618, %v3622
      %v3651 = vmax.f32 %v3619, %v3623
      %v3652 = vmax.f32 %v3624, %v3628
      %v3653 = vmax.f32 %v3625, %v3629
      %v3654 = vmax.f32 %v3626, %v3630
      %v3655 = vmax.f32 %v3627, %v3631
      %v3656 = vmax.f32 %v3632, %v3636
      %v3657 = vmax.f32 %v3633, %v3637
      %v3658 = vmax.f32 %v3634, %v3638
      %v3659 = vmax.f32 %v3635, %v3639
      %v3660 = vmax.f32 %v3640, %v3644
      %v3661 = vmax.f32 %v3641, %v3645
      %v3662 = vmax.f32 %v3642, %v3646
      %v3663 = vmax.f32 %v3643, %v3647
      %v3664 = vmul.f32 %v3648, %v426
      %v3665 = vmul.f32 %v3649, %v427
      %v3666 = vmul.f32 %v3650, %v428
      %v3667 = vmul.f32 %v3651, %v429
      %v3668 = vmul.f32 %v3652, %v426
      %v3669 = vmul.f32 %v3653, %v427
      %v3670 = vmul.f32 %v3654, %v428
      %v3671 = vmul.f32 %v3655, %v429
      %v3672 = vmul.f32 %v3656, %v426
      %v3673 = vmul.f32 %v3657, %v427
      %v3674 = vmul.f32 %v3658, %v428
      %v3675 = vmul.f32 %v3659, %v429
      %v3676 = vmul.f32 %v3660, %v426
      %v3677 = vmul.f32 %v3661, %v427
      %v3678 = vmul.f32 %v3662, %v428
      %v3679 = vmul.f32 %v3663, %v429
      %v3696 = vrot.slane %v3664, 7
      %v3697 = vrot.slane %v3665, 7
      %v3698 = vsel %vm1421, %v3696, %v3697
      %v3699 = vrot.slane %v3666, 7
      %v3700 = vsel %vm1421, %v3697, %v3699
      %v3701 = vrot.slane %v3667, 7
      %v3702 = vsel %vm1421, %v3699, %v3701
      %v3703 = vrot.slane %v3668, 7
      %v3704 = vrot.slane %v3669, 7
      %v3705 = vsel %vm1421, %v3703, %v3704
      %v3706 = vrot.slane %v3670, 7
      %v3707 = vsel %vm1421, %v3704, %v3706
      %v3708 = vrot.slane %v3671, 7
      %v3709 = vsel %vm1421, %v3706, %v3708
      %v3710 = vrot.slane %v3672, 7
      %v3711 = vrot.slane %v3673, 7
      %v3712 = vsel %vm1421, %v3710, %v3711
      %v3713 = vrot.slane %v3674, 7
      %v3714 = vsel %vm1421, %v3711, %v3713
      %v3715 = vrot.slane %v3675, 7
      %v3716 = vsel %vm1421, %v3713, %v3715
      %v3717 = vrot.slane %v3676, 7
      %v3718 = vrot.slane %v3677, 7
      %v3719 = vsel %vm1421, %v3717, %v3718
      %v3720 = vrot.slane %v3678, 7
      %v3721 = vsel %vm1421, %v3718, %v3720
      %v3722 = vrot.slane %v3679, 7
      %v3723 = vsel %vm1421, %v3720, %v3722
      %v3740 = vsel %vm1421, 0.0, %v3696
      %v3741 = vsel %vm1421, 0.0, %v3703
      %v3742 = vsel %vm1421, 0.0, %v3710
      %v3743 = vsel %vm1421, 0.0, %v3717
      %v3744 = vrot.slane %v3664, 1
      %v3745 = vrot.slane %v3665, 1
      %v3746 = vsel %vm1494, %v3744, %v3745
      %v3747 = vrot.slane %v3666, 1
      %v3748 = vsel %vm1494, %v3745, %v3747
      %v3749 = vrot.slane %v3667, 1
      %v3750 = vsel %vm1494, %v3747, %v3749
      %v3751 = vrot.slane %v3668, 1
      %v3752 = vrot.slane %v3669, 1
      %v3753 = vsel %vm1494, %v3751, %v3752
      %v3754 = vrot.slane %v3670, 1
      %v3755 = vsel %vm1494, %v3752, %v3754
      %v3756 = vrot.slane %v3671, 1
      %v3757 = vsel %vm1494, %v3754, %v3756
      %v3758 = vrot.slane %v3672, 1
      %v3759 = vrot.slane %v3673, 1
      %v3760 = vsel %vm1494, %v3758, %v3759
      %v3761 = vrot.slane %v3674, 1
      %v3762 = vsel %vm1494, %v3759, %v3761
      %v3763 = vrot.slane %v3675, 1
      %v3764 = vsel %vm1494, %v3761, %v3763
      %v3765 = vrot.slane %v3676, 1
      %v3766 = vrot.slane %v3677, 1
      %v3767 = vsel %vm1494, %v3765, %v3766
      %v3768 = vrot.slane %v3678, 1
      %v3769 = vsel %vm1494, %v3766, %v3768
      %v3770 = vrot.slane %v3679, 1
      %v3771 = vsel %vm1494, %v3768, %v3770
      %v3788 = vsel %vm1494, %v3749, 0.0
      %v3789 = vsel %vm1494, %v3756, 0.0
      %v3790 = vsel %vm1494, %v3763, 0.0
      %v3791 = vsel %vm1494, %v3770, 0.0
      %v3792 = vpack.c.bf16 %v3698, %v3740
      %v3793 = vpack.c.bf16 %v3665, %v3664
      %v3794 = vpack.c.bf16 %v3748, %v3746
      %v3795 = vpack.c.bf16 %v3702, %v3700
      %v3796 = vpack.c.bf16 %v3667, %v3666
      %v3797 = vpack.c.bf16 %v3788, %v3750
      %v3798 = vpack.c.bf16 %v3705, %v3741
      %v3799 = vpack.c.bf16 %v3669, %v3668
      %v3800 = vpack.c.bf16 %v3755, %v3753
      %v3801 = vpack.c.bf16 %v3709, %v3707
      %v3802 = vpack.c.bf16 %v3671, %v3670
      %v3803 = vpack.c.bf16 %v3789, %v3757
      %v3804 = vpack.c.bf16 %v3712, %v3742
      %v3805 = vpack.c.bf16 %v3673, %v3672
      %v3806 = vpack.c.bf16 %v3762, %v3760
      %v3807 = vpack.c.bf16 %v3716, %v3714
      %v3808 = vpack.c.bf16 %v3675, %v3674
      %v3809 = vpack.c.bf16 %v3790, %v3764
      %v3810 = vpack.c.bf16 %v3719, %v3743
      %v3811 = vpack.c.bf16 %v3677, %v3676
      %v3812 = vpack.c.bf16 %v3769, %v3767
      %v3813 = vpack.c.bf16 %v3723, %v3721
      %v3814 = vpack.c.bf16 %v3679, %v3678
      %v3815 = vpack.c.bf16 %v3791, %v3771
      %s3816 = scalar_lea.vmem [#allocation3], 576
      %3817 = vst [vmem:[%s3816] sm:$0xff] %v3792
      %3818 = vst [vmem:[%s3816 + $0x8] sm:$0xff] %v3793
      %3819 = vst [vmem:[%s3816 + $0x10] sm:$0xff] %v3794
      %3820 = vst [vmem:[%s3816 + $0x18] sm:$0xff] %v3795
      %3821 = vst [vmem:[%s3816 + $0x20] sm:$0xff] %v3796
      %3822 = vst [vmem:[%s3816 + $0x28] sm:$0xff] %v3797
      %s3823 = scalar_lea.vmem [#allocation3], 624
      %3824 = vst [vmem:[%s3823] sm:$0xff] %v3798
      %3825 = vst [vmem:[%s3823 + $0x8] sm:$0xff] %v3799
      %3826 = vst [vmem:[%s3823 + $0x10] sm:$0xff] %v3800
      %3827 = vst [vmem:[%s3823 + $0x18] sm:$0xff] %v3801
      %3828 = vst [vmem:[%s3823 + $0x20] sm:$0xff] %v3802
      %3829 = vst [vmem:[%s3823 + $0x28] sm:$0xff] %v3803
      %s3830 = scalar_lea.vmem [#allocation3], 672
      %3831 = vst [vmem:[%s3830] sm:$0xff] %v3804
      %3832 = vst [vmem:[%s3830 + $0x8] sm:$0xff] %v3805
      %3833 = vst [vmem:[%s3830 + $0x10] sm:$0xff] %v3806
      %3834 = vst [vmem:[%s3830 + $0x18] sm:$0xff] %v3807
      %3835 = vst [vmem:[%s3830 + $0x20] sm:$0xff] %v3808
      %3836 = vst [vmem:[%s3830 + $0x28] sm:$0xff] %v3809
      %s3837 = scalar_lea.vmem [#allocation3], 720
      %3838 = vst [vmem:[%s3837] sm:$0xff] %v3810
      %3839 = vst [vmem:[%s3837 + $0x8] sm:$0xff] %v3811
      %3840 = vst [vmem:[%s3837 + $0x10] sm:$0xff] %v3812
      %3841 = vst [vmem:[%s3837 + $0x18] sm:$0xff] %v3813
      %3842 = vst [vmem:[%s3837 + $0x20] sm:$0xff] %v3814
      %3843 = vst [vmem:[%s3837 + $0x28] sm:$0xff] %v3815
      %v3844 = vld [vmem:[#allocation3] sm:$0xff]
      %v3845 = vld [vmem:[#allocation3 + $0x8] sm:$0xff]
      %v3846 = vld [vmem:[#allocation3 + $0x10] sm:$0xff]
      %v3847 = vld [vmem:[#allocation3 + $0x18] sm:$0xff]
      %v3848 = vld [vmem:[#allocation3 + $0x20] sm:$0xff]
      %v3849 = vld [vmem:[#allocation3 + $0x28] sm:$0xff]
      %v3850 = vld [vmem:[#allocation3 + $0x90] sm:$0xff]
      %v3851 = vld [vmem:[#allocation3 + $0x98] sm:$0xff]
      %v3852 = vld [vmem:[#allocation3 + $0xa0] sm:$0xff]
      %v3853 = vld [vmem:[#allocation3 + $0xa8] sm:$0xff]
      %v3854 = vld [vmem:[#allocation3 + $0xb0] sm:$0xff]
      %v3855 = vld [vmem:[#allocation3 + $0xb8] sm:$0xff]
      %v3856 = vld [vmem:[#allocation3 + $0x120] sm:$0xff]
      %v3857 = vld [vmem:[#allocation3 + $0x128] sm:$0xff]
      %v3858 = vld [vmem:[#allocation3 + $0x130] sm:$0xff]
      %v3859 = vld [vmem:[#allocation3 + $0x138] sm:$0xff]
      %v3860 = vld [vmem:[#allocation3 + $0x140] sm:$0xff]
      %v3861 = vld [vmem:[#allocation3 + $0x148] sm:$0xff]
      %v3862 = vld [vmem:[#allocation3 + $0x1b0] sm:$0xff]
      %v3863 = vld [vmem:[#allocation3 + $0x1b8] sm:$0xff]
      %v3864 = vld [vmem:[#allocation3 + $0x1c0] sm:$0xff]
      %v3865 = vld [vmem:[#allocation3 + $0x1c8] sm:$0xff]
      %v3866 = vld [vmem:[#allocation3 + $0x1d0] sm:$0xff]
      %v3867 = vld [vmem:[#allocation3 + $0x1d8] sm:$0xff]
      %v3868 = vld [vmem:[#allocation3 + $0x240] sm:$0xff]
      %v3869 = vld [vmem:[#allocation3 + $0x248] sm:$0xff]
      %v3870 = vld [vmem:[#allocation3 + $0x250] sm:$0xff]
      %v3871 = vld [vmem:[#allocation3 + $0x258] sm:$0xff]
      %v3872 = vld [vmem:[#allocation3 + $0x260] sm:$0xff]
      %v3873 = vld [vmem:[#allocation3 + $0x268] sm:$0xff]
      %v3874 = vld [vmem:[#allocation3 + $0x2d0] sm:$0xff]
      %v3875 = vld [vmem:[#allocation3 + $0x2d8] sm:$0xff]
      %v3876 = vld [vmem:[#allocation3 + $0x2e0] sm:$0xff]
      %v3877 = vld [vmem:[#allocation3 + $0x2e8] sm:$0xff]
      %v3878 = vld [vmem:[#allocation3 + $0x2f0] sm:$0xff]
      %v3879 = vld [vmem:[#allocation3 + $0x2f8] sm:$0xff]
      %v3880 = vld [vmem:[#allocation3 + $0x360] sm:$0xff]
      %v3881 = vld [vmem:[#allocation3 + $0x368] sm:$0xff]
      %v3882 = vld [vmem:[#allocation3 + $0x370] sm:$0xff]
      %v3883 = vld [vmem:[#allocation3 + $0x378] sm:$0xff]
      %v3884 = vld [vmem:[#allocation3 + $0x380] sm:$0xff]
      %v3885 = vld [vmem:[#allocation3 + $0x388] sm:$0xff]
      %v3886 = vld [vmem:[%s7] sm:$0xff]
      %v3887 = vld [vmem:[%s7 + $0x8] sm:$0xff]
      %v3888 = vld [vmem:[%s7 + $0x10] sm:$0xff]
      %v3889 = vld [vmem:[%s7 + $0x18] sm:$0xff]
      %v3890 = vld [vmem:[%s7 + $0x20] sm:$0xff]
      %v3891 = vld [vmem:[%s7 + $0x28] sm:$0xff]
      %v3892 = vld [vmem:[%s7 + $0x30] sm:$0xff]
      %v3893 = vld [vmem:[%s7 + $0x38] sm:$0xff]
      %v3894 = vld [vmem:[%s7 + $0x40] sm:$0xff]
      %v3895 = vld [vmem:[%s7 + $0x48] sm:$0xff]
      %v3896 = vld [vmem:[%s7 + $0x50] sm:$0xff]
      %v3897 = vld [vmem:[%s7 + $0x58] sm:$0xff]
      %v3898 = vld [vmem:[%s7 + $0x60] sm:$0xff]
      %v3899 = vld [vmem:[%s7 + $0x68] sm:$0xff]
      %v3900 = vld [vmem:[%s7 + $0x70] sm:$0xff]
      %v3901 = vld [vmem:[%s7 + $0x78] sm:$0xff]
      %v3902 = vld [vmem:[%s7 + $0x80] sm:$0xff]
      %v3903 = vld [vmem:[%s7 + $0x88] sm:$0xff]
      %v3904 = vld [vmem:[%s7 + $0x90] sm:$0xff]
      %v3905 = vld [vmem:[%s7 + $0x98] sm:$0xff]
      %v3906 = vld [vmem:[%s7 + $0xa0] sm:$0xff]
      %v3907 = vld [vmem:[%s7 + $0xa8] sm:$0xff]
      %v3908 = vld [vmem:[%s7 + $0xb0] sm:$0xff]
      %v3909 = vld [vmem:[%s7 + $0xb8] sm:$0xff]
      %v3910 = vld [vmem:[%s7 + $0xc0] sm:$0xff]
      %v3911 = vld [vmem:[%s7 + $0xc8] sm:$0xff]
      %v3912 = vld [vmem:[%s7 + $0xd0] sm:$0xff]
      %v3913 = vld [vmem:[%s7 + $0xd8] sm:$0xff]
      %v3914 = vld [vmem:[%s7 + $0xe0] sm:$0xff]
      %v3915 = vld [vmem:[%s7 + $0xe8] sm:$0xff]
      %v3916 = vld [vmem:[%s7 + $0xf0] sm:$0xff]
      %v3917 = vld [vmem:[%s7 + $0xf8] sm:$0xff]
      %v3918 = vld [vmem:[%s7 + $0x100] sm:$0xff]
      %v3919 = vld [vmem:[%s7 + $0x108] sm:$0xff]
      %v3920 = vld [vmem:[%s7 + $0x110] sm:$0xff]
      %v3921 = vld [vmem:[%s7 + $0x118] sm:$0xff]
      %v3922 = vld [vmem:[%s7 + $0x120] sm:$0xff]
      %v3923 = vld [vmem:[%s7 + $0x128] sm:$0xff]
      %v3924 = vld [vmem:[%s7 + $0x130] sm:$0xff]
      %v3925 = vld [vmem:[%s7 + $0x138] sm:$0xff]
      %v3926 = vld [vmem:[%s7 + $0x140] sm:$0xff]
      %v3927 = vld [vmem:[%s7 + $0x148] sm:$0xff]
      %v3928 = vld [vmem:[%s7 + $0x150] sm:$0xff]
      %v3929 = vld [vmem:[%s7 + $0x158] sm:$0xff]
      %v3930 = vld [vmem:[%s7 + $0x160] sm:$0xff]
      %v3931 = vld [vmem:[%s7 + $0x168] sm:$0xff]
      %v3932 = vld [vmem:[%s7 + $0x170] sm:$0xff]
      %v3933 = vld [vmem:[%s7 + $0x178] sm:$0xff]
      %s3934 = scalar_lea.vmem [#allocation3], 96
      %v3935 = vld [vmem:[%s3934] sm:$0xff]
      %v3936 = vld [vmem:[%s3934 + $0x8] sm:$0xff]
      %v3937 = vld [vmem:[%s3934 + $0x10] sm:$0xff]
      %v3938 = vld [vmem:[%s3934 + $0x18] sm:$0xff]
      %v3939 = vld [vmem:[%s3934 + $0x20] sm:$0xff]
      %v3940 = vld [vmem:[%s3934 + $0x28] sm:$0xff]
      %v3941 = vld [vmem:[%s3934 + $0x90] sm:$0xff]
      %v3942 = vld [vmem:[%s3934 + $0x98] sm:$0xff]
      %v3943 = vld [vmem:[%s3934 + $0xa0] sm:$0xff]
      %v3944 = vld [vmem:[%s3934 + $0xa8] sm:$0xff]
      %v3945 = vld [vmem:[%s3934 + $0xb0] sm:$0xff]
      %v3946 = vld [vmem:[%s3934 + $0xb8] sm:$0xff]
      %v3947 = vld [vmem:[%s3934 + $0x120] sm:$0xff]
      %v3948 = vld [vmem:[%s3934 + $0x128] sm:$0xff]
      %v3949 = vld [vmem:[%s3934 + $0x130] sm:$0xff]
      %v3950 = vld [vmem:[%s3934 + $0x138] sm:$0xff]
      %v3951 = vld [vmem:[%s3934 + $0x140] sm:$0xff]
      %v3952 = vld [vmem:[%s3934 + $0x148] sm:$0xff]
      %v3953 = vld [vmem:[%s3934 + $0x1b0] sm:$0xff]
      %v3954 = vld [vmem:[%s3934 + $0x1b8] sm:$0xff]
      %v3955 = vld [vmem:[%s3934 + $0x1c0] sm:$0xff]
      %v3956 = vld [vmem:[%s3934 + $0x1c8] sm:$0xff]
      %v3957 = vld [vmem:[%s3934 + $0x1d0] sm:$0xff]
      %v3958 = vld [vmem:[%s3934 + $0x1d8] sm:$0xff]
      %v3959 = vld [vmem:[%s3934 + $0x240] sm:$0xff]
      %v3960 = vld [vmem:[%s3934 + $0x248] sm:$0xff]
      %v3961 = vld [vmem:[%s3934 + $0x250] sm:$0xff]
      %v3962 = vld [vmem:[%s3934 + $0x258] sm:$0xff]
      %v3963 = vld [vmem:[%s3934 + $0x260] sm:$0xff]
      %v3964 = vld [vmem:[%s3934 + $0x268] sm:$0xff]
      %v3965 = vld [vmem:[%s3934 + $0x2d0] sm:$0xff]
      %v3966 = vld [vmem:[%s3934 + $0x2d8] sm:$0xff]
      %v3967 = vld [vmem:[%s3934 + $0x2e0] sm:$0xff]
      %v3968 = vld [vmem:[%s3934 + $0x2e8] sm:$0xff]
      %v3969 = vld [vmem:[%s3934 + $0x2f0] sm:$0xff]
      %v3970 = vld [vmem:[%s3934 + $0x2f8] sm:$0xff]
      %v3971 = vld [vmem:[%s3934 + $0x360] sm:$0xff]
      %v3972 = vld [vmem:[%s3934 + $0x368] sm:$0xff]
      %v3973 = vld [vmem:[%s3934 + $0x370] sm:$0xff]
      %v3974 = vld [vmem:[%s3934 + $0x378] sm:$0xff]
      %v3975 = vld [vmem:[%s3934 + $0x380] sm:$0xff]
      %v3976 = vld [vmem:[%s3934 + $0x388] sm:$0xff]
      %s3977 = scalar_lea.vmem %s7, 384
      %v3978 = vld [vmem:[%s3977] sm:$0xff]
      %v3979 = vld [vmem:[%s3977 + $0x8] sm:$0xff]
      %v3980 = vld [vmem:[%s3977 + $0x10] sm:$0xff]
      %v3981 = vld [vmem:[%s3977 + $0x18] sm:$0xff]
      %v3982 = vld [vmem:[%s3977 + $0x20] sm:$0xff]
      %v3983 = vld [vmem:[%s3977 + $0x28] sm:$0xff]
      %v3984 = vld [vmem:[%s3977 + $0x30] sm:$0xff]
      %v3985 = vld [vmem:[%s3977 + $0x38] sm:$0xff]
      %v3986 = vld [vmem:[%s3977 + $0x40] sm:$0xff]
      %v3987 = vld [vmem:[%s3977 + $0x48] sm:$0xff]
      %v3988 = vld [vmem:[%s3977 + $0x50] sm:$0xff]
      %v3989 = vld [vmem:[%s3977 + $0x58] sm:$0xff]
      %v3990 = vld [vmem:[%s3977 + $0x60] sm:$0xff]
      %v3991 = vld [vmem:[%s3977 + $0x68] sm:$0xff]
      %v3992 = vld [vmem:[%s3977 + $0x70] sm:$0xff]
      %v3993 = vld [vmem:[%s3977 + $0x78] sm:$0xff]
      %v3994 = vld [vmem:[%s3977 + $0x80] sm:$0xff]
      %v3995 = vld [vmem:[%s3977 + $0x88] sm:$0xff]
      %v3996 = vld [vmem:[%s3977 + $0x90] sm:$0xff]
      %v3997 = vld [vmem:[%s3977 + $0x98] sm:$0xff]
      %v3998 = vld [vmem:[%s3977 + $0xa0] sm:$0xff]
      %v3999 = vld [vmem:[%s3977 + $0xa8] sm:$0xff]
      %v4000 = vld [vmem:[%s3977 + $0xb0] sm:$0xff]
      %v4001 = vld [vmem:[%s3977 + $0xb8] sm:$0xff]
      %v4002 = vld [vmem:[%s3977 + $0xc0] sm:$0xff]
      %v4003 = vld [vmem:[%s3977 + $0xc8] sm:$0xff]
      %v4004 = vld [vmem:[%s3977 + $0xd0] sm:$0xff]
      %v4005 = vld [vmem:[%s3977 + $0xd8] sm:$0xff]
      %v4006 = vld [vmem:[%s3977 + $0xe0] sm:$0xff]
      %v4007 = vld [vmem:[%s3977 + $0xe8] sm:$0xff]
      %v4008 = vld [vmem:[%s3977 + $0xf0] sm:$0xff]
      %v4009 = vld [vmem:[%s3977 + $0xf8] sm:$0xff]
      %v4010 = vld [vmem:[%s3977 + $0x100] sm:$0xff]
      %v4011 = vld [vmem:[%s3977 + $0x108] sm:$0xff]
      %v4012 = vld [vmem:[%s3977 + $0x110] sm:$0xff]
      %v4013 = vld [vmem:[%s3977 + $0x118] sm:$0xff]
      %v4014 = vld [vmem:[%s3977 + $0x120] sm:$0xff]
      %v4015 = vld [vmem:[%s3977 + $0x128] sm:$0xff]
      %v4016 = vld [vmem:[%s3977 + $0x130] sm:$0xff]
      %v4017 = vld [vmem:[%s3977 + $0x138] sm:$0xff]
      %v4018 = vld [vmem:[%s3977 + $0x140] sm:$0xff]
      %v4019 = vld [vmem:[%s3977 + $0x148] sm:$0xff]
      %v4020 = vld [vmem:[%s3977 + $0x150] sm:$0xff]
      %v4021 = vld [vmem:[%s3977 + $0x158] sm:$0xff]
      %v4022 = vld [vmem:[%s3977 + $0x160] sm:$0xff]
      %v4023 = vld [vmem:[%s3977 + $0x168] sm:$0xff]
      %v4024 = vld [vmem:[%s3977 + $0x170] sm:$0xff]
      %v4025 = vld [vmem:[%s3977 + $0x178] sm:$0xff]
      %v4074 = vunpack.c.l.b16 %v3978
      %v4075 = vunpack.c.h.b16 %v3978
      %v4076 = vunpack.c.l.b16 %v3979
      %v4077 = vunpack.c.h.b16 %v3979
      %v4078 = vunpack.c.l.b16 %v3980
      %v4079 = vunpack.c.h.b16 %v3980
      %v4080 = vunpack.c.l.b16 %v3981
      %v4081 = vunpack.c.h.b16 %v3981
      %v4082 = vunpack.c.l.b16 %v3982
      %v4083 = vunpack.c.h.b16 %v3982
      %v4084 = vunpack.c.l.b16 %v3983
      %v4085 = vunpack.c.h.b16 %v3983
      %v4086 = vunpack.c.l.b16 %v3984
      %v4087 = vunpack.c.h.b16 %v3984
      %v4088 = vunpack.c.l.b16 %v3985
      %v4089 = vunpack.c.h.b16 %v3985
      %v4090 = vunpack.c.l.b16 %v3986
      %v4091 = vunpack.c.h.b16 %v3986
      %v4092 = vunpack.c.l.b16 %v3987
      %v4093 = vunpack.c.h.b16 %v3987
      %v4094 = vunpack.c.l.b16 %v3988
      %v4095 = vunpack.c.h.b16 %v3988
      %v4096 = vunpack.c.l.b16 %v3989
      %v4097 = vunpack.c.h.b16 %v3989
      %v4098 = vunpack.c.l.b16 %v3990
      %v4099 = vunpack.c.h.b16 %v3990
      %v4100 = vunpack.c.l.b16 %v3991
      %v4101 = vunpack.c.h.b16 %v3991
      %v4102 = vunpack.c.l.b16 %v3992
      %v4103 = vunpack.c.h.b16 %v3992
      %v4104 = vunpack.c.l.b16 %v3993
      %v4105 = vunpack.c.h.b16 %v3993
      %v4106 = vunpack.c.l.b16 %v3994
      %v4107 = vunpack.c.h.b16 %v3994
      %v4108 = vunpack.c.l.b16 %v3995
      %v4109 = vunpack.c.h.b16 %v3995
      %v4110 = vunpack.c.l.b16 %v3996
      %v4111 = vunpack.c.h.b16 %v3996
      %v4112 = vunpack.c.l.b16 %v3997
      %v4113 = vunpack.c.h.b16 %v3997
      %v4114 = vunpack.c.l.b16 %v3998
      %v4115 = vunpack.c.h.b16 %v3998
      %v4116 = vunpack.c.l.b16 %v3999
      %v4117 = vunpack.c.h.b16 %v3999
      %v4118 = vunpack.c.l.b16 %v4000
      %v4119 = vunpack.c.h.b16 %v4000
      %v4120 = vunpack.c.l.b16 %v4001
      %v4121 = vunpack.c.h.b16 %v4001
      %v4122 = vunpack.c.l.b16 %v4002
      %v4123 = vunpack.c.h.b16 %v4002
      %v4124 = vunpack.c.l.b16 %v4003
      %v4125 = vunpack.c.h.b16 %v4003
      %v4126 = vunpack.c.l.b16 %v4004
      %v4127 = vunpack.c.h.b16 %v4004
      %v4128 = vunpack.c.l.b16 %v4005
      %v4129 = vunpack.c.h.b16 %v4005
      %v4130 = vunpack.c.l.b16 %v4006
      %v4131 = vunpack.c.h.b16 %v4006
      %v4132 = vunpack.c.l.b16 %v4007
      %v4133 = vunpack.c.h.b16 %v4007
      %v4134 = vunpack.c.l.b16 %v4008
      %v4135 = vunpack.c.h.b16 %v4008
      %v4136 = vunpack.c.l.b16 %v4009
      %v4137 = vunpack.c.h.b16 %v4009
      %v4138 = vunpack.c.l.b16 %v4010
      %v4139 = vunpack.c.h.b16 %v4010
      %v4140 = vunpack.c.l.b16 %v4011
      %v4141 = vunpack.c.h.b16 %v4011
      %v4142 = vunpack.c.l.b16 %v4012
      %v4143 = vunpack.c.h.b16 %v4012
      %v4144 = vunpack.c.l.b16 %v4013
      %v4145 = vunpack.c.h.b16 %v4013
      %v4146 = vunpack.c.l.b16 %v4014
      %v4147 = vunpack.c.h.b16 %v4014
      %v4148 = vunpack.c.l.b16 %v4015
      %v4149 = vunpack.c.h.b16 %v4015
      %v4150 = vunpack.c.l.b16 %v4016
      %v4151 = vunpack.c.h.b16 %v4016
      %v4152 = vunpack.c.l.b16 %v4017
      %v4153 = vunpack.c.h.b16 %v4017
      %v4154 = vunpack.c.l.b16 %v4018
      %v4155 = vunpack.c.h.b16 %v4018
      %v4156 = vunpack.c.l.b16 %v4019
      %v4157 = vunpack.c.h.b16 %v4019
      %v4158 = vunpack.c.l.b16 %v4020
      %v4159 = vunpack.c.h.b16 %v4020
      %v4160 = vunpack.c.l.b16 %v4021
      %v4161 = vunpack.c.h.b16 %v4021
      %v4162 = vunpack.c.l.b16 %v4022
      %v4163 = vunpack.c.h.b16 %v4022
      %v4164 = vunpack.c.l.b16 %v4023
      %v4165 = vunpack.c.h.b16 %v4023
      %v4166 = vunpack.c.l.b16 %v4024
      %v4167 = vunpack.c.h.b16 %v4024
      %v4168 = vunpack.c.l.b16 %v4025
      %v4169 = vunpack.c.h.b16 %v4025
      %v4170 = vpack.c.b16 %v4076, %v4074
      %v4171 = vpack.c.b16 %v4077, %v4075
      %v4172 = vpack.c.b16 %v4080, %v4078
      %v4173 = vpack.c.b16 %v4081, %v4079
      %v4174 = vpack.c.b16 %v4084, %v4082
      %v4175 = vpack.c.b16 %v4085, %v4083
      %v4176 = vpack.c.b16 %v4088, %v4086
      %v4177 = vpack.c.b16 %v4089, %v4087
      %v4178 = vpack.c.b16 %v4092, %v4090
      %v4179 = vpack.c.b16 %v4093, %v4091
      %v4180 = vpack.c.b16 %v4096, %v4094
      %v4181 = vpack.c.b16 %v4097, %v4095
      %v4182 = vpack.c.b16 %v4100, %v4098
      %v4183 = vpack.c.b16 %v4101, %v4099
      %v4184 = vpack.c.b16 %v4104, %v4102
      %v4185 = vpack.c.b16 %v4105, %v4103
      %v4186 = vpack.c.b16 %v4108, %v4106
      %v4187 = vpack.c.b16 %v4109, %v4107
      %v4188 = vpack.c.b16 %v4112, %v4110
      %v4189 = vpack.c.b16 %v4113, %v4111
      %v4190 = vpack.c.b16 %v4116, %v4114
      %v4191 = vpack.c.b16 %v4117, %v4115
      %v4192 = vpack.c.b16 %v4120, %v4118
      %v4193 = vpack.c.b16 %v4121, %v4119
      %v4194 = vpack.c.b16 %v4124, %v4122
      %v4195 = vpack.c.b16 %v4125, %v4123
      %v4196 = vpack.c.b16 %v4128, %v4126
      %v4197 = vpack.c.b16 %v4129, %v4127
      %v4198 = vpack.c.b16 %v4132, %v4130
      %v4199 = vpack.c.b16 %v4133, %v4131
      %v4200 = vpack.c.b16 %v4136, %v4134
      %v4201 = vpack.c.b16 %v4137, %v4135
      %v4202 = vpack.c.b16 %v4140, %v4138
      %v4203 = vpack.c.b16 %v4141, %v4139
      %v4204 = vpack.c.b16 %v4144, %v4142
      %v4205 = vpack.c.b16 %v4145, %v4143
      %v4206 = vpack.c.b16 %v4148, %v4146
      %v4207 = vpack.c.b16 %v4149, %v4147
      %v4208 = vpack.c.b16 %v4152, %v4150
      %v4209 = vpack.c.b16 %v4153, %v4151
      %v4210 = vpack.c.b16 %v4156, %v4154
      %v4211 = vpack.c.b16 %v4157, %v4155
      %v4212 = vpack.c.b16 %v4160, %v4158
      %v4213 = vpack.c.b16 %v4161, %v4159
      %v4214 = vpack.c.b16 %v4164, %v4162
      %v4215 = vpack.c.b16 %v4165, %v4163
      %v4216 = vpack.c.b16 %v4168, %v4166
      %v4217 = vpack.c.b16 %v4169, %v4167
      %4266 = vmatprep.subr.bf16.mxu0 %v4171
      %4267 = vmatpush1.bf16.msra.mxu0 %v4170
      %4268 = vmatprep.subr.bf16.mxu0 %v4173
      %4269 = vmatpush1.bf16.msra.mxu0 %v4172
      %4270 = vmatprep.subr.bf16.mxu0 %v4175
      %4271 = vmatpush1.bf16.msra.mxu0 %v4174
      %4272 = vmatprep.subr.bf16.mxu0 %v4177
      %4273 = vmatpush1.bf16.msra.mxu0 %v4176
      %4274 = vmatprep.subr.bf16.mxu0 %v4179
      %4275 = vmatpush1.bf16.msra.mxu0 %v4178
      %4276 = vmatprep.subr.bf16.mxu0 %v4181
      %4277 = vmatpush1.bf16.msra.mxu0 %v4180
      %4278 = vmatprep.subr.bf16.mxu0 %v4183
      %4279 = vmatpush1.bf16.msra.mxu0 %v4182
      %4280 = vmatprep.subr.bf16.mxu0 %v4185
      %4281 = vmatpush1.bf16.msra.mxu0 %v4184
      %4282 = vmatprep.subr.bf16.mxu0 %v4187
      %4283 = vmatpush1.bf16.msra.mxu0 %v4186
      %4284 = vmatprep.subr.bf16.mxu0 %v4189
      %4285 = vmatpush1.bf16.msra.mxu0 %v4188
      %4286 = vmatprep.subr.bf16.mxu0 %v4191
      %4287 = vmatpush1.bf16.msra.mxu0 %v4190
      %4288 = vmatprep.subr.bf16.mxu0 %v4193
      %4289 = vmatpush1.bf16.msra.mxu0 %v4192
      %4290 = vmatprep.subr.bf16.mxu0 %v4195
      %4291 = vmatpush1.bf16.msra.mxu0 %v4194
      %4292 = vmatprep.subr.bf16.mxu0 %v4197
      %4293 = vmatpush1.bf16.msra.mxu0 %v4196
      %4294 = vmatprep.subr.bf16.mxu0 %v4199
      %4295 = vmatpush1.bf16.msra.mxu0 %v4198
      %4296 = vmatprep.subr.bf16.mxu0 %v4201
      %4297 = vmatpush1.bf16.msra.mxu0 %v4200
      %4298 = vmatprep.mubr.bf16.mxu0 %v3936
      %4299 = vmatmul.mubr.bf16.gmra.mrb[0].mxu0 %v3935
      %v4300 = vpop.f32.mrb[0].mxu0
      %v4301 = vadd.f32 0.0, %v4300
      %v4302 = vpop.f32.mrb[0].mxu0
      %v4303 = vadd.f32 0.0, %v4302
      %v4304 = vpop.f32.mrb[0].mxu0
      %v4305 = vadd.f32 0.0, %v4304
      %v4306 = vpop.f32.mrb[0].mxu0
      %v4307 = vadd.f32 0.0, %v4306
      %4308 = vmatprep.mubr.bf16.mxu0 %v3939
      %4309 = vmatmul.mubr.bf16.gmra.mrb[0].mxu0 %v3938
      %v4310 = vpop.f32.mrb[0].mxu0
      %v4311 = vadd.f32 0.0, %v4310
      %v4312 = vpop.f32.mrb[0].mxu0
      %v4313 = vadd.f32 0.0, %v4312
      %v4314 = vpop.f32.mrb[0].mxu0
      %v4315 = vadd.f32 0.0, %v4314
      %v4316 = vpop.f32.mrb[0].mxu0
      %v4317 = vadd.f32 0.0, %v4316
      %4318 = vmatprep.mubr.bf16.mxu0 %v3942
      %4319 = vmatmul.mubr.bf16.gmra.mrb[0].mxu0 %v3941
      %v4320 = vpop.f32.mrb[0].mxu0
      %v4321 = vadd.f32 0.0, %v4320
      %v4322 = vpop.f32.mrb[0].mxu0
      %v4323 = vadd.f32 0.0, %v4322
      %v4324 = vpop.f32.mrb[0].mxu0
      %v4325 = vadd.f32 0.0, %v4324
      %v4326 = vpop.f32.mrb[0].mxu0
      %v4327 = vadd.f32 0.0, %v4326
      %4328 = vmatprep.mubr.bf16.mxu0 %v3945
      %4329 = vmatmul.mubr.bf16.gmra.mrb[0].mxu0 %v3944
      %v4330 = vpop.f32.mrb[0].mxu0
      %v4331 = vadd.f32 0.0, %v4330
      %v4332 = vpop.f32.mrb[0].mxu0
      %v4333 = vadd.f32 0.0, %v4332
      %v4334 = vpop.f32.mrb[0].mxu0
      %v4335 = vadd.f32 0.0, %v4334
      %v4336 = vpop.f32.mrb[0].mxu0
      %v4337 = vadd.f32 0.0, %v4336
      %4338 = vmatprep.mubr.bf16.mxu0 %v3948
      %4339 = vmatmul.mubr.bf16.gmra.mrb[0].mxu0 %v3947
      %v4340 = vpop.f32.mrb[0].mxu0
      %v4341 = vadd.f32 0.0, %v4340
      %v4342 = vpop.f32.mrb[0].mxu0
      %v4343 = vadd.f32 0.0, %v4342
      %v4344 = vpop.f32.mrb[0].mxu0
      %v4345 = vadd.f32 0.0, %v4344
      %v4346 = vpop.f32.mrb[0].mxu0
      %v4347 = vadd.f32 0.0, %v4346
      %4348 = vmatprep.mubr.bf16.mxu0 %v3951
      %4349 = vmatmul.mubr.bf16.gmra.mrb[0].mxu0 %v3950
      %v4350 = vpop.f32.mrb[0].mxu0
      %v4351 = vadd.f32 0.0, %v4350
      %v4352 = vpop.f32.mrb[0].mxu0
      %v4353 = vadd.f32 0.0, %v4352
      %v4354 = vpop.f32.mrb[0].mxu0
      %v4355 = vadd.f32 0.0, %v4354
      %v4356 = vpop.f32.mrb[0].mxu0
      %v4357 = vadd.f32 0.0, %v4356
      %4358 = vmatprep.mubr.bf16.mxu0 %v3954
      %4359 = vmatmul.mubr.bf16.gmra.mrb[0].mxu0 %v3953
      %v4360 = vpop.f32.mrb[0].mxu0
      %v4361 = vadd.f32 0.0, %v4360
      %v4362 = vpop.f32.mrb[0].mxu0
      %v4363 = vadd.f32 0.0, %v4362
      %v4364 = vpop.f32.mrb[0].mxu0
      %v4365 = vadd.f32 0.0, %v4364
      %v4366 = vpop.f32.mrb[0].mxu0
      %v4367 = vadd.f32 0.0, %v4366
      %4368 = vmatprep.mubr.bf16.mxu0 %v3957
      %4369 = vmatmul.mubr.bf16.gmra.mrb[0].mxu0 %v3956
      %v4370 = vpop.f32.mrb[0].mxu0
      %v4371 = vadd.f32 0.0, %v4370
      %v4372 = vpop.f32.mrb[0].mxu0
      %v4373 = vadd.f32 0.0, %v4372
      %v4374 = vpop.f32.mrb[0].mxu0
      %v4375 = vadd.f32 0.0, %v4374
      %v4376 = vpop.f32.mrb[0].mxu0
      %v4377 = vadd.f32 0.0, %v4376
      %4378 = vmatprep.mubr.bf16.mxu0 %v3960
      %4379 = vmatmul.mubr.bf16.gmra.mrb[0].mxu0 %v3959
      %v4380 = vpop.f32.mrb[0].mxu0
      %v4381 = vadd.f32 0.0, %v4380
      %v4382 = vpop.f32.mrb[0].mxu0
      %v4383 = vadd.f32 0.0, %v4382
      %v4384 = vpop.f32.mrb[0].mxu0
      %v4385 = vadd.f32 0.0, %v4384
      %v4386 = vpop.f32.mrb[0].mxu0
      %v4387 = vadd.f32 0.0, %v4386
      %4388 = vmatprep.mubr.bf16.mxu0 %v3963
      %4389 = vmatmul.mubr.bf16.gmra.mrb[0].mxu0 %v3962
      %v4390 = vpop.f32.mrb[0].mxu0
      %v4391 = vadd.f32 0.0, %v4390
      %v4392 = vpop.f32.mrb[0].mxu0
      %v4393 = vadd.f32 0.0, %v4392
      %v4394 = vpop.f32.mrb[0].mxu0
      %v4395 = vadd.f32 0.0, %v4394
      %v4396 = vpop.f32.mrb[0].mxu0
      %v4397 = vadd.f32 0.0, %v4396
      %4398 = vmatprep.mubr.bf16.mxu0 %v3966
      %4399 = vmatmul.mubr.bf16.gmra.mrb[0].mxu0 %v3965
      %v4400 = vpop.f32.mrb[0].mxu0
      %v4401 = vadd.f32 0.0, %v4400
      %v4402 = vpop.f32.mrb[0].mxu0
      %v4403 = vadd.f32 0.0, %v4402
      %v4404 = vpop.f32.mrb[0].mxu0
      %v4405 = vadd.f32 0.0, %v4404
      %v4406 = vpop.f32.mrb[0].mxu0
      %v4407 = vadd.f32 0.0, %v4406
      %4408 = vmatprep.mubr.bf16.mxu0 %v3969
      %4409 = vmatmul.mubr.bf16.gmra.mrb[0].mxu0 %v3968
      %v4410 = vpop.f32.mrb[0].mxu0
      %v4411 = vadd.f32 0.0, %v4410
      %v4412 = vpop.f32.mrb[0].mxu0
      %v4413 = vadd.f32 0.0, %v4412
      %v4414 = vpop.f32.mrb[0].mxu0
      %v4415 = vadd.f32 0.0, %v4414
      %v4416 = vpop.f32.mrb[0].mxu0
      %v4417 = vadd.f32 0.0, %v4416
      %4418 = vmatprep.mubr.bf16.mxu0 %v3972
      %4419 = vmatmul.mubr.bf16.gmra.mrb[0].mxu0 %v3971
      %v4420 = vpop.f32.mrb[0].mxu0
      %v4421 = vpop.f32.mrb[0].mxu0
      %v4422 = vpop.f32.mrb[0].mxu0
      %v4423 = vpop.f32.mrb[0].mxu0
      %4424 = vmatprep.mubr.bf16.mxu0 %v3975
      %4425 = vmatmul.mubr.bf16.gmra.mrb[0].mxu0 %v3974
      %v4426 = vpop.f32.mrb[0].mxu0
      %v4427 = vpop.f32.mrb[0].mxu0
      %v4428 = vpop.f32.mrb[0].mxu0
      %v4429 = vpop.f32.mrb[0].mxu0
      %4430 = vdwg.mxu0
      %4431 = vmatprep.subr.bf16.mxu0 %v4203
      %4432 = vmatpush1.bf16.msra.mxu0 %v4202
      %4433 = vmatprep.subr.bf16.mxu0 %v4205
      %4434 = vmatpush1.bf16.msra.mxu0 %v4204
      %4435 = vmatprep.subr.bf16.mxu0 %v4207
      %4436 = vmatpush1.bf16.msra.mxu0 %v4206
      %4437 = vmatprep.subr.bf16.mxu0 %v4209
      %4438 = vmatpush1.bf16.msra.mxu0 %v4208
      %4439 = vmatprep.subr.bf16.mxu0 %v4211
      %4440 = vmatpush1.bf16.msra.mxu0 %v4210
      %4441 = vmatprep.subr.bf16.mxu0 %v4213
      %4442 = vmatpush1.bf16.msra.mxu0 %v4212
      %4443 = vmatprep.subr.bf16.mxu0 %v4215
      %4444 = vmatpush1.bf16.msra.mxu0 %v4214
      %4445 = vmatprep.subr.bf16.mxu0 %v4217
      %4446 = vmatpush1.bf16.msra.mxu0 %v4216
      %4447 = vmatprep.subr.bf16.mxu0 0
      %4448 = vmatpush1.bf16.msra.mxu0 0
      %4449 = vmatprep.subr.bf16.mxu0 0
      %4450 = vmatpush1.bf16.msra.mxu0 0
      %4451 = vmatprep.subr.bf16.mxu0 0
      %4452 = vmatpush1.bf16.msra.mxu0 0
      %4453 = vmatprep.subr.bf16.mxu0 0
      %4454 = vmatpush1.bf16.msra.mxu0 0
      %4455 = vmatprep.subr.bf16.mxu0 0
      %4456 = vmatpush1.bf16.msra.mxu0 0
      %4457 = vmatprep.subr.bf16.mxu0 0
      %4458 = vmatpush1.bf16.msra.mxu0 0
      %4459 = vmatprep.subr.bf16.mxu0 0
      %4460 = vmatpush1.bf16.msra.mxu0 0
      %4461 = vmatprep.subr.bf16.mxu0 0
      %4462 = vmatpush1.bf16.msra.mxu0 0
      %4463 = vmatprep.mubr.bf16.mxu0 0
      %4464 = vmatmul.mubr.bf16.gmra.mrb[0].mxu0 %v3937
      %v4465 = vpop.f32.mrb[0].mxu0
      %v4466 = vadd.f32 %v4301, %v4465
      %v4467 = vpop.f32.mrb[0].mxu0
      %v4468 = vadd.f32 %v4303, %v4467
      %v4469 = vpop.f32.mrb[0].mxu0
      %v4470 = vadd.f32 %v4305, %v4469
      %v4471 = vpop.f32.mrb[0].mxu0
      %v4472 = vadd.f32 %v4307, %v4471
      %4473 = vmatprep.mubr.bf16.mxu0 0
      %4474 = vmatmul.mubr.bf16.gmra.mrb[0].mxu0 %v3940
      %v4475 = vpop.f32.mrb[0].mxu0
      %v4476 = vadd.f32 %v4311, %v4475
      %v4477 = vpop.f32.mrb[0].mxu0
      %v4478 = vadd.f32 %v4313, %v4477
      %v4479 = vpop.f32.mrb[0].mxu0
      %v4480 = vadd.f32 %v4315, %v4479
      %v4481 = vpop.f32.mrb[0].mxu0
      %v4482 = vadd.f32 %v4317, %v4481
      %4483 = vmatprep.mubr.bf16.mxu0 0
      %4484 = vmatmul.mubr.bf16.gmra.mrb[0].mxu0 %v3943
      %v4485 = vpop.f32.mrb[0].mxu0
      %v4486 = vadd.f32 %v4321, %v4485
      %v4487 = vpop.f32.mrb[0].mxu0
      %v4488 = vadd.f32 %v4323, %v4487
      %v4489 = vpop.f32.mrb[0].mxu0
      %v4490 = vadd.f32 %v4325, %v4489
      %v4491 = vpop.f32.mrb[0].mxu0
      %v4492 = vadd.f32 %v4327, %v4491
      %4493 = vmatprep.mubr.bf16.mxu0 0
      %4494 = vmatmul.mubr.bf16.gmra.mrb[0].mxu0 %v3946
      %v4495 = vpop.f32.mrb[0].mxu0
      %v4496 = vadd.f32 %v4331, %v4495
      %v4497 = vpop.f32.mrb[0].mxu0
      %v4498 = vadd.f32 %v4333, %v4497
      %v4499 = vpop.f32.mrb[0].mxu0
      %v4500 = vadd.f32 %v4335, %v4499
      %v4501 = vpop.f32.mrb[0].mxu0
      %v4502 = vadd.f32 %v4337, %v4501
      %4503 = vmatprep.mubr.bf16.mxu0 0
      %4504 = vmatmul.mubr.bf16.gmra.mrb[0].mxu0 %v3949
      %v4505 = vpop.f32.mrb[0].mxu0
      %v4506 = vadd.f32 %v4341, %v4505
      %v4507 = vpop.f32.mrb[0].mxu0
      %v4508 = vadd.f32 %v4343, %v4507
      %v4509 = vpop.f32.mrb[0].mxu0
      %v4510 = vadd.f32 %v4345, %v4509
      %v4511 = vpop.f32.mrb[0].mxu0
      %v4512 = vadd.f32 %v4347, %v4511
      %4513 = vmatprep.mubr.bf16.mxu0 0
      %4514 = vmatmul.mubr.bf16.gmra.mrb[0].mxu0 %v3952
      %v4515 = vpop.f32.mrb[0].mxu0
      %v4516 = vadd.f32 %v4351, %v4515
      %v4517 = vpop.f32.mrb[0].mxu0
      %v4518 = vadd.f32 %v4353, %v4517
      %v4519 = vpop.f32.mrb[0].mxu0
      %v4520 = vadd.f32 %v4355, %v4519
      %v4521 = vpop.f32.mrb[0].mxu0
      %v4522 = vadd.f32 %v4357, %v4521
      %4523 = vmatprep.mubr.bf16.mxu0 0
      %4524 = vmatmul.mubr.bf16.gmra.mrb[0].mxu0 %v3955
      %v4525 = vpop.f32.mrb[0].mxu0
      %v4526 = vadd.f32 %v4361, %v4525
      %v4527 = vpop.f32.mrb[0].mxu0
      %v4528 = vadd.f32 %v4363, %v4527
      %v4529 = vpop.f32.mrb[0].mxu0
      %v4530 = vadd.f32 %v4365, %v4529
      %v4531 = vpop.f32.mrb[0].mxu0
      %v4532 = vadd.f32 %v4367, %v4531
      %4533 = vmatprep.mubr.bf16.mxu0 0
      %4534 = vmatmul.mubr.bf16.gmra.mrb[0].mxu0 %v3958
      %v4535 = vpop.f32.mrb[0].mxu0
      %v4536 = vadd.f32 %v4371, %v4535
      %v4537 = vpop.f32.mrb[0].mxu0
      %v4538 = vadd.f32 %v4373, %v4537
      %v4539 = vpop.f32.mrb[0].mxu0
      %v4540 = vadd.f32 %v4375, %v4539
      %v4541 = vpop.f32.mrb[0].mxu0
      %v4542 = vadd.f32 %v4377, %v4541
      %4543 = vmatprep.mubr.bf16.mxu0 0
      %4544 = vmatmul.mubr.bf16.gmra.mrb[0].mxu0 %v3961
      %v4545 = vpop.f32.mrb[0].mxu0
      %v4546 = vadd.f32 %v4381, %v4545
      %v4547 = vpop.f32.mrb[0].mxu0
      %v4548 = vadd.f32 %v4383, %v4547
      %v4549 = vpop.f32.mrb[0].mxu0
      %v4550 = vadd.f32 %v4385, %v4549
      %v4551 = vpop.f32.mrb[0].mxu0
      %v4552 = vadd.f32 %v4387, %v4551
      %4553 = vmatprep.mubr.bf16.mxu0 0
      %4554 = vmatmul.mubr.bf16.gmra.mrb[0].mxu0 %v3964
      %v4555 = vpop.f32.mrb[0].mxu0
      %v4556 = vadd.f32 %v4391, %v4555
      %v4557 = vpop.f32.mrb[0].mxu0
      %v4558 = vadd.f32 %v4393, %v4557
      %v4559 = vpop.f32.mrb[0].mxu0
      %v4560 = vadd.f32 %v4395, %v4559
      %v4561 = vpop.f32.mrb[0].mxu0
      %v4562 = vadd.f32 %v4397, %v4561
      %4563 = vmatprep.mubr.bf16.mxu0 0
      %4564 = vmatmul.mubr.bf16.gmra.mrb[0].mxu0 %v3967
      %v4565 = vpop.f32.mrb[0].mxu0
      %v4566 = vadd.f32 %v4401, %v4565
      %v4567 = vpop.f32.mrb[0].mxu0
      %v4568 = vadd.f32 %v4403, %v4567
      %v4569 = vpop.f32.mrb[0].mxu0
      %v4570 = vadd.f32 %v4405, %v4569
      %v4571 = vpop.f32.mrb[0].mxu0
      %v4572 = vadd.f32 %v4407, %v4571
      %4573 = vmatprep.mubr.bf16.mxu0 0
      %4574 = vmatmul.mubr.bf16.gmra.mrb[0].mxu0 %v3970
      %v4575 = vpop.f32.mrb[0].mxu0
      %v4576 = vadd.f32 %v4411, %v4575
      %v4577 = vpop.f32.mrb[0].mxu0
      %v4578 = vadd.f32 %v4413, %v4577
      %v4579 = vpop.f32.mrb[0].mxu0
      %v4580 = vadd.f32 %v4415, %v4579
      %v4581 = vpop.f32.mrb[0].mxu0
      %v4582 = vadd.f32 %v4417, %v4581
      %4583 = vmatprep.mubr.bf16.mxu0 0
      %4584 = vmatmul.mubr.bf16.gmra.mrb[0].mxu0 %v3973
      %v4585 = vpop.f32.mrb[0].mxu0
      %v4586 = vpop.f32.mrb[0].mxu0
      %v4587 = vpop.f32.mrb[0].mxu0
      %v4588 = vpop.f32.mrb[0].mxu0
      %4589 = vmatprep.mubr.bf16.mxu0 0
      %4590 = vmatmul.mubr.bf16.gmra.mrb[0].mxu0 %v3976
      %v4591 = vpop.f32.mrb[0].mxu0
      %v4592 = vpop.f32.mrb[0].mxu0
      %v4593 = vpop.f32.mrb[0].mxu0
      %v4594 = vpop.f32.mrb[0].mxu0
      %4595 = vdwg.mxu0
      %v4644 = vunpack.c.l.b16 %v3886
      %v4645 = vunpack.c.h.b16 %v3886
      %v4646 = vunpack.c.l.b16 %v3887
      %v4647 = vunpack.c.h.b16 %v3887
      %v4648 = vunpack.c.l.b16 %v3888
      %v4649 = vunpack.c.h.b16 %v3888
      %v4650 = vunpack.c.l.b16 %v3889
      %v4651 = vunpack.c.h.b16 %v3889
      %v4652 = vunpack.c.l.b16 %v3890
      %v4653 = vunpack.c.h.b16 %v3890
      %v4654 = vunpack.c.l.b16 %v3891
      %v4655 = vunpack.c.h.b16 %v3891
      %v4656 = vunpack.c.l.b16 %v3892
      %v4657 = vunpack.c.h.b16 %v3892
      %v4658 = vunpack.c.l.b16 %v3893
      %v4659 = vunpack.c.h.b16 %v3893
      %v4660 = vunpack.c.l.b16 %v3894
      %v4661 = vunpack.c.h.b16 %v3894
      %v4662 = vunpack.c.l.b16 %v3895
      %v4663 = vunpack.c.h.b16 %v3895
      %v4664 = vunpack.c.l.b16 %v3896
      %v4665 = vunpack.c.h.b16 %v3896
      %v4666 = vunpack.c.l.b16 %v3897
      %v4667 = vunpack.c.h.b16 %v3897
      %v4668 = vunpack.c.l.b16 %v3898
      %v4669 = vunpack.c.h.b16 %v3898
      %v4670 = vunpack.c.l.b16 %v3899
      %v4671 = vunpack.c.h.b16 %v3899
      %v4672 = vunpack.c.l.b16 %v3900
      %v4673 = vunpack.c.h.b16 %v3900
      %v4674 = vunpack.c.l.b16 %v3901
      %v4675 = vunpack.c.h.b16 %v3901
      %v4676 = vunpack.c.l.b16 %v3902
      %v4677 = vunpack.c.h.b16 %v3902
      %v4678 = vunpack.c.l.b16 %v3903
      %v4679 = vunpack.c.h.b16 %v3903
      %v4680 = vunpack.c.l.b16 %v3904
      %v4681 = vunpack.c.h.b16 %v3904
      %v4682 = vunpack.c.l.b16 %v3905
      %v4683 = vunpack.c.h.b16 %v3905
      %v4684 = vunpack.c.l.b16 %v3906
      %v4685 = vunpack.c.h.b16 %v3906
      %v4686 = vunpack.c.l.b16 %v3907
      %v4687 = vunpack.c.h.b16 %v3907
      %v4688 = vunpack.c.l.b16 %v3908
      %v4689 = vunpack.c.h.b16 %v3908
      %v4690 = vunpack.c.l.b16 %v3909
      %v4691 = vunpack.c.h.b16 %v3909
      %v4692 = vunpack.c.l.b16 %v3910
      %v4693 = vunpack.c.h.b16 %v3910
      %v4694 = vunpack.c.l.b16 %v3911
      %v4695 = vunpack.c.h.b16 %v3911
      %v4696 = vunpack.c.l.b16 %v3912
      %v4697 = vunpack.c.h.b16 %v3912
      %v4698 = vunpack.c.l.b16 %v3913
      %v4699 = vunpack.c.h.b16 %v3913
      %v4700 = vunpack.c.l.b16 %v3914
      %v4701 = vunpack.c.h.b16 %v3914
      %v4702 = vunpack.c.l.b16 %v3915
      %v4703 = vunpack.c.h.b16 %v3915
      %v4704 = vunpack.c.l.b16 %v3916
      %v4705 = vunpack.c.h.b16 %v3916
      %v4706 = vunpack.c.l.b16 %v3917
      %v4707 = vunpack.c.h.b16 %v3917
      %v4708 = vunpack.c.l.b16 %v3918
      %v4709 = vunpack.c.h.b16 %v3918
      %v4710 = vunpack.c.l.b16 %v3919
      %v4711 = vunpack.c.h.b16 %v3919
      %v4712 = vunpack.c.l.b16 %v3920
      %v4713 = vunpack.c.h.b16 %v3920
      %v4714 = vunpack.c.l.b16 %v3921
      %v4715 = vunpack.c.h.b16 %v3921
      %v4716 = vunpack.c.l.b16 %v3922
      %v4717 = vunpack.c.h.b16 %v3922
      %v4718 = vunpack.c.l.b16 %v3923
      %v4719 = vunpack.c.h.b16 %v3923
      %v4720 = vunpack.c.l.b16 %v3924
      %v4721 = vunpack.c.h.b16 %v3924
      %v4722 = vunpack.c.l.b16 %v3925
      %v4723 = vunpack.c.h.b16 %v3925
      %v4724 = vunpack.c.l.b16 %v3926
      %v4725 = vunpack.c.h.b16 %v3926
      %v4726 = vunpack.c.l.b16 %v3927
      %v4727 = vunpack.c.h.b16 %v3927
      %v4728 = vunpack.c.l.b16 %v3928
      %v4729 = vunpack.c.h.b16 %v3928
      %v4730 = vunpack.c.l.b16 %v3929
      %v4731 = vunpack.c.h.b16 %v3929
      %v4732 = vunpack.c.l.b16 %v3930
      %v4733 = vunpack.c.h.b16 %v3930
      %v4734 = vunpack.c.l.b16 %v3931
      %v4735 = vunpack.c.h.b16 %v3931
      %v4736 = vunpack.c.l.b16 %v3932
      %v4737 = vunpack.c.h.b16 %v3932
      %v4738 = vunpack.c.l.b16 %v3933
      %v4739 = vunpack.c.h.b16 %v3933
      %v4740 = vpack.c.b16 %v4646, %v4644
      %v4741 = vpack.c.b16 %v4647, %v4645
      %v4742 = vpack.c.b16 %v4650, %v4648
      %v4743 = vpack.c.b16 %v4651, %v4649
      %v4744 = vpack.c.b16 %v4654, %v4652
      %v4745 = vpack.c.b16 %v4655, %v4653
      %v4746 = vpack.c.b16 %v4658, %v4656
      %v4747 = vpack.c.b16 %v4659, %v4657
      %v4748 = vpack.c.b16 %v4662, %v4660
      %v4749 = vpack.c.b16 %v4663, %v4661
      %v4750 = vpack.c.b16 %v4666, %v4664
      %v4751 = vpack.c.b16 %v4667, %v4665
      %v4752 = vpack.c.b16 %v4670, %v4668
      %v4753 = vpack.c.b16 %v4671, %v4669
      %v4754 = vpack.c.b16 %v4674, %v4672
      %v4755 = vpack.c.b16 %v4675, %v4673
      %v4756 = vpack.c.b16 %v4678, %v4676
      %v4757 = vpack.c.b16 %v4679, %v4677
      %v4758 = vpack.c.b16 %v4682, %v4680
      %v4759 = vpack.c.b16 %v4683, %v4681
      %v4760 = vpack.c.b16 %v4686, %v4684
      %v4761 = vpack.c.b16 %v4687, %v4685
      %v4762 = vpack.c.b16 %v4690, %v4688
      %v4763 = vpack.c.b16 %v4691, %v4689
      %v4764 = vpack.c.b16 %v4694, %v4692
      %v4765 = vpack.c.b16 %v4695, %v4693
      %v4766 = vpack.c.b16 %v4698, %v4696
      %v4767 = vpack.c.b16 %v4699, %v4697
      %v4768 = vpack.c.b16 %v4702, %v4700
      %v4769 = vpack.c.b16 %v4703, %v4701
      %v4770 = vpack.c.b16 %v4706, %v4704
      %v4771 = vpack.c.b16 %v4707, %v4705
      %v4772 = vpack.c.b16 %v4710, %v4708
      %v4773 = vpack.c.b16 %v4711, %v4709
      %v4774 = vpack.c.b16 %v4714, %v4712
      %v4775 = vpack.c.b16 %v4715, %v4713
      %v4776 = vpack.c.b16 %v4718, %v4716
      %v4777 = vpack.c.b16 %v4719, %v4717
      %v4778 = vpack.c.b16 %v4722, %v4720
      %v4779 = vpack.c.b16 %v4723, %v4721
      %v4780 = vpack.c.b16 %v4726, %v4724
      %v4781 = vpack.c.b16 %v4727, %v4725
      %v4782 = vpack.c.b16 %v4730, %v4728
      %v4783 = vpack.c.b16 %v4731, %v4729
      %v4784 = vpack.c.b16 %v4734, %v4732
      %v4785 = vpack.c.b16 %v4735, %v4733
      %v4786 = vpack.c.b16 %v4738, %v4736
      %v4787 = vpack.c.b16 %v4739, %v4737
      %4836 = vmatprep.subr.bf16.mxu0 %v4741
      %4837 = vmatpush1.bf16.msra.mxu0 %v4740
      %4838 = vmatprep.subr.bf16.mxu0 %v4743
      %4839 = vmatpush1.bf16.msra.mxu0 %v4742
      %4840 = vmatprep.subr.bf16.mxu0 %v4745
      %4841 = vmatpush1.bf16.msra.mxu0 %v4744
      %4842 = vmatprep.subr.bf16.mxu0 %v4747
      %4843 = vmatpush1.bf16.msra.mxu0 %v4746
      %4844 = vmatprep.subr.bf16.mxu0 %v4749
      %4845 = vmatpush1.bf16.msra.mxu0 %v4748
      %4846 = vmatprep.subr.bf16.mxu0 %v4751
      %4847 = vmatpush1.bf16.msra.mxu0 %v4750
      %4848 = vmatprep.subr.bf16.mxu0 %v4753
      %4849 = vmatpush1.bf16.msra.mxu0 %v4752
      %4850 = vmatprep.subr.bf16.mxu0 %v4755
      %4851 = vmatpush1.bf16.msra.mxu0 %v4754
      %4852 = vmatprep.subr.bf16.mxu0 %v4757
      %4853 = vmatpush1.bf16.msra.mxu0 %v4756
      %4854 = vmatprep.subr.bf16.mxu0 %v4759
      %4855 = vmatpush1.bf16.msra.mxu0 %v4758
      %4856 = vmatprep.subr.bf16.mxu0 %v4761
      %4857 = vmatpush1.bf16.msra.mxu0 %v4760
      %4858 = vmatprep.subr.bf16.mxu0 %v4763
      %4859 = vmatpush1.bf16.msra.mxu0 %v4762
      %4860 = vmatprep.subr.bf16.mxu0 %v4765
      %4861 = vmatpush1.bf16.msra.mxu0 %v4764
      %4862 = vmatprep.subr.bf16.mxu0 %v4767
      %4863 = vmatpush1.bf16.msra.mxu0 %v4766
      %4864 = vmatprep.subr.bf16.mxu0 %v4769
      %4865 = vmatpush1.bf16.msra.mxu0 %v4768
      %4866 = vmatprep.subr.bf16.mxu0 %v4771
      %4867 = vmatpush1.bf16.msra.mxu0 %v4770
      %4868 = vmatprep.mubr.bf16.mxu0 %v3845
      %4869 = vmatmul.mubr.bf16.gmra.mrb[0].mxu0 %v3844
      %v4870 = vpop.f32.mrb[0].mxu0
      %v4871 = vadd.f32 %v4466, %v4870
      %v4872 = vpop.f32.mrb[0].mxu0
      %v4873 = vadd.f32 %v4468, %v4872
      %v4874 = vpop.f32.mrb[0].mxu0
      %v4875 = vadd.f32 %v4470, %v4874
      %v4876 = vpop.f32.mrb[0].mxu0
      %v4877 = vadd.f32 %v4472, %v4876
      %4878 = vmatprep.mubr.bf16.mxu0 %v3848
      %4879 = vmatmul.mubr.bf16.gmra.mrb[0].mxu0 %v3847
      %v4880 = vpop.f32.mrb[0].mxu0
      %v4881 = vadd.f32 %v4476, %v4880
      %v4882 = vpop.f32.mrb[0].mxu0
      %v4883 = vadd.f32 %v4478, %v4882
      %v4884 = vpop.f32.mrb[0].mxu0
      %v4885 = vadd.f32 %v4480, %v4884
      %v4886 = vpop.f32.mrb[0].mxu0
      %v4887 = vadd.f32 %v4482, %v4886
      %4888 = vmatprep.mubr.bf16.mxu0 %v3851
      %4889 = vmatmul.mubr.bf16.gmra.mrb[0].mxu0 %v3850
      %v4890 = vpop.f32.mrb[0].mxu0
      %v4891 = vadd.f32 %v4486, %v4890
      %v4892 = vpop.f32.mrb[0].mxu0
      %v4893 = vadd.f32 %v4488, %v4892
      %v4894 = vpop.f32.mrb[0].mxu0
      %v4895 = vadd.f32 %v4490, %v4894
      %v4896 = vpop.f32.mrb[0].mxu0
      %v4897 = vadd.f32 %v4492, %v4896
      %4898 = vmatprep.mubr.bf16.mxu0 %v3854
      %4899 = vmatmul.mubr.bf16.gmra.mrb[0].mxu0 %v3853
      %v4900 = vpop.f32.mrb[0].mxu0
      %v4901 = vadd.f32 %v4496, %v4900
      %v4902 = vpop.f32.mrb[0].mxu0
      %v4903 = vadd.f32 %v4498, %v4902
      %v4904 = vpop.f32.mrb[0].mxu0
      %v4905 = vadd.f32 %v4500, %v4904
      %v4906 = vpop.f32.mrb[0].mxu0
      %v4907 = vadd.f32 %v4502, %v4906
      %4908 = vmatprep.mubr.bf16.mxu0 %v3857
      %4909 = vmatmul.mubr.bf16.gmra.mrb[0].mxu0 %v3856
      %v4910 = vpop.f32.mrb[0].mxu0
      %v4911 = vadd.f32 %v4506, %v4910
      %v4912 = vpop.f32.mrb[0].mxu0
      %v4913 = vadd.f32 %v4508, %v4912
      %v4914 = vpop.f32.mrb[0].mxu0
      %v4915 = vadd.f32 %v4510, %v4914
      %v4916 = vpop.f32.mrb[0].mxu0
      %v4917 = vadd.f32 %v4512, %v4916
      %4918 = vmatprep.mubr.bf16.mxu0 %v3860
      %4919 = vmatmul.mubr.bf16.gmra.mrb[0].mxu0 %v3859
      %v4920 = vpop.f32.mrb[0].mxu0
      %v4921 = vadd.f32 %v4516, %v4920
      %v4922 = vpop.f32.mrb[0].mxu0
      %v4923 = vadd.f32 %v4518, %v4922
      %v4924 = vpop.f32.mrb[0].mxu0
      %v4925 = vadd.f32 %v4520, %v4924
      %v4926 = vpop.f32.mrb[0].mxu0
      %v4927 = vadd.f32 %v4522, %v4926
      %4928 = vmatprep.mubr.bf16.mxu0 %v3863
      %4929 = vmatmul.mubr.bf16.gmra.mrb[0].mxu0 %v3862
      %v4930 = vpop.f32.mrb[0].mxu0
      %v4931 = vadd.f32 %v4526, %v4930
      %v4932 = vpop.f32.mrb[0].mxu0
      %v4933 = vadd.f32 %v4528, %v4932
      %v4934 = vpop.f32.mrb[0].mxu0
      %v4935 = vadd.f32 %v4530, %v4934
      %v4936 = vpop.f32.mrb[0].mxu0
      %v4937 = vadd.f32 %v4532, %v4936
      %4938 = vmatprep.mubr.bf16.mxu0 %v3866
      %4939 = vmatmul.mubr.bf16.gmra.mrb[0].mxu0 %v3865
      %v4940 = vpop.f32.mrb[0].mxu0
      %v4941 = vadd.f32 %v4536, %v4940
      %v4942 = vpop.f32.mrb[0].mxu0
      %v4943 = vadd.f32 %v4538, %v4942
      %v4944 = vpop.f32.mrb[0].mxu0
      %v4945 = vadd.f32 %v4540, %v4944
      %v4946 = vpop.f32.mrb[0].mxu0
      %v4947 = vadd.f32 %v4542, %v4946
      %4948 = vmatprep.mubr.bf16.mxu0 %v3869
      %4949 = vmatmul.mubr.bf16.gmra.mrb[0].mxu0 %v3868
      %v4950 = vpop.f32.mrb[0].mxu0
      %v4951 = vadd.f32 %v4546, %v4950
      %v4952 = vpop.f32.mrb[0].mxu0
      %v4953 = vadd.f32 %v4548, %v4952
      %v4954 = vpop.f32.mrb[0].mxu0
      %v4955 = vadd.f32 %v4550, %v4954
      %v4956 = vpop.f32.mrb[0].mxu0
      %v4957 = vadd.f32 %v4552, %v4956
      %4958 = vmatprep.mubr.bf16.mxu0 %v3872
      %4959 = vmatmul.mubr.bf16.gmra.mrb[0].mxu0 %v3871
      %v4960 = vpop.f32.mrb[0].mxu0
      %v4961 = vadd.f32 %v4556, %v4960
      %v4962 = vpop.f32.mrb[0].mxu0
      %v4963 = vadd.f32 %v4558, %v4962
      %v4964 = vpop.f32.mrb[0].mxu0
      %v4965 = vadd.f32 %v4560, %v4964
      %v4966 = vpop.f32.mrb[0].mxu0
      %v4967 = vadd.f32 %v4562, %v4966
      %4968 = vmatprep.mubr.bf16.mxu0 %v3875
      %4969 = vmatmul.mubr.bf16.gmra.mrb[0].mxu0 %v3874
      %v4970 = vpop.f32.mrb[0].mxu0
      %v4971 = vadd.f32 %v4566, %v4970
      %v4972 = vpop.f32.mrb[0].mxu0
      %v4973 = vadd.f32 %v4568, %v4972
      %v4974 = vpop.f32.mrb[0].mxu0
      %v4975 = vadd.f32 %v4570, %v4974
      %v4976 = vpop.f32.mrb[0].mxu0
      %v4977 = vadd.f32 %v4572, %v4976
      %4978 = vmatprep.mubr.bf16.mxu0 %v3878
      %4979 = vmatmul.mubr.bf16.gmra.mrb[0].mxu0 %v3877
      %v4980 = vpop.f32.mrb[0].mxu0
      %v4981 = vadd.f32 %v4576, %v4980
      %v4982 = vpop.f32.mrb[0].mxu0
      %v4983 = vadd.f32 %v4578, %v4982
      %v4984 = vpop.f32.mrb[0].mxu0
      %v4985 = vadd.f32 %v4580, %v4984
      %v4986 = vpop.f32.mrb[0].mxu0
      %v4987 = vadd.f32 %v4582, %v4986
      %4988 = vmatprep.mubr.bf16.mxu0 %v3881
      %4989 = vmatmul.mubr.bf16.gmra.mrb[0].mxu0 %v3880
      %v4990 = vpop.f32.mrb[0].mxu0
      %v4991 = vpop.f32.mrb[0].mxu0
      %v4992 = vpop.f32.mrb[0].mxu0
      %v4993 = vpop.f32.mrb[0].mxu0
      %4994 = vmatprep.mubr.bf16.mxu0 %v3884
      %4995 = vmatmul.mubr.bf16.gmra.mrb[0].mxu0 %v3883
      %v4996 = vpop.f32.mrb[0].mxu0
      %v4997 = vpop.f32.mrb[0].mxu0
      %v4998 = vpop.f32.mrb[0].mxu0
      %v4999 = vpop.f32.mrb[0].mxu0
      %5000 = vdwg.mxu0
      %5001 = vmatprep.subr.bf16.mxu0 %v4773
      %5002 = vmatpush1.bf16.msra.mxu0 %v4772
      %5003 = vmatprep.subr.bf16.mxu0 %v4775
      %5004 = vmatpush1.bf16.msra.mxu0 %v4774
      %5005 = vmatprep.subr.bf16.mxu0 %v4777
      %5006 = vmatpush1.bf16.msra.mxu0 %v4776
      %5007 = vmatprep.subr.bf16.mxu0 %v4779
      %5008 = vmatpush1.bf16.msra.mxu0 %v4778
      %5009 = vmatprep.subr.bf16.mxu0 %v4781
      %5010 = vmatpush1.bf16.msra.mxu0 %v4780
      %5011 = vmatprep.subr.bf16.mxu0 %v4783
      %5012 = vmatpush1.bf16.msra.mxu0 %v4782
      %5013 = vmatprep.subr.bf16.mxu0 %v4785
      %5014 = vmatpush1.bf16.msra.mxu0 %v4784
      %5015 = vmatprep.subr.bf16.mxu0 %v4787
      %5016 = vmatpush1.bf16.msra.mxu0 %v4786
      %5017 = vmatprep.subr.bf16.mxu0 0
      %5018 = vmatpush1.bf16.msra.mxu0 0
      %5019 = vmatprep.subr.bf16.mxu0 0
      %5020 = vmatpush1.bf16.msra.mxu0 0
      %5021 = vmatprep.subr.bf16.mxu0 0
      %5022 = vmatpush1.bf16.msra.mxu0 0
      %5023 = vmatprep.subr.bf16.mxu0 0
      %5024 = vmatpush1.bf16.msra.mxu0 0
      %5025 = vmatprep.subr.bf16.mxu0 0
      %5026 = vmatpush1.bf16.msra.mxu0 0
      %5027 = vmatprep.subr.bf16.mxu0 0
      %5028 = vmatpush1.bf16.msra.mxu0 0
      %5029 = vmatprep.subr.bf16.mxu0 0
      %5030 = vmatpush1.bf16.msra.mxu0 0
      %5031 = vmatprep.subr.bf16.mxu0 0
      %5032 = vmatpush1.bf16.msra.mxu0 0
      %5033 = vmatprep.mubr.bf16.mxu0 0
      %5034 = vmatmul.mubr.bf16.gmra.mrb[0].mxu0 %v3846
      %v5035 = vpop.f32.mrb[0].mxu0
      %v5036 = vadd.f32 %v4871, %v5035
      %v5037 = vpop.f32.mrb[0].mxu0
      %v5038 = vadd.f32 %v4873, %v5037
      %v5039 = vpop.f32.mrb[0].mxu0
      %v5040 = vadd.f32 %v4875, %v5039
      %v5041 = vpop.f32.mrb[0].mxu0
      %v5042 = vadd.f32 %v4877, %v5041
      %5043 = vmatprep.mubr.bf16.mxu0 0
      %5044 = vmatmul.mubr.bf16.gmra.mrb[0].mxu0 %v3849
      %v5045 = vpop.f32.mrb[0].mxu0
      %v5046 = vadd.f32 %v4881, %v5045
      %v5047 = vpop.f32.mrb[0].mxu0
      %v5048 = vadd.f32 %v4883, %v5047
      %v5049 = vpop.f32.mrb[0].mxu0
      %v5050 = vadd.f32 %v4885, %v5049
      %v5051 = vpop.f32.mrb[0].mxu0
      %v5052 = vadd.f32 %v4887, %v5051
      %5053 = vmatprep.mubr.bf16.mxu0 0
      %5054 = vmatmul.mubr.bf16.gmra.mrb[0].mxu0 %v3852
      %v5055 = vpop.f32.mrb[0].mxu0
      %v5056 = vadd.f32 %v4891, %v5055
      %v5057 = vpop.f32.mrb[0].mxu0
      %v5058 = vadd.f32 %v4893, %v5057
      %v5059 = vpop.f32.mrb[0].mxu0
      %v5060 = vadd.f32 %v4895, %v5059
      %v5061 = vpop.f32.mrb[0].mxu0
      %v5062 = vadd.f32 %v4897, %v5061
      %5063 = vmatprep.mubr.bf16.mxu0 0
      %5064 = vmatmul.mubr.bf16.gmra.mrb[0].mxu0 %v3855
      %v5065 = vpop.f32.mrb[0].mxu0
      %v5066 = vadd.f32 %v4901, %v5065
      %v5067 = vpop.f32.mrb[0].mxu0
      %v5068 = vadd.f32 %v4903, %v5067
      %v5069 = vpop.f32.mrb[0].mxu0
      %v5070 = vadd.f32 %v4905, %v5069
      %v5071 = vpop.f32.mrb[0].mxu0
      %v5072 = vadd.f32 %v4907, %v5071
      %5073 = vmatprep.mubr.bf16.mxu0 0
      %5074 = vmatmul.mubr.bf16.gmra.mrb[0].mxu0 %v3858
      %v5075 = vpop.f32.mrb[0].mxu0
      %v5076 = vadd.f32 %v4911, %v5075
      %v5077 = vpop.f32.mrb[0].mxu0
      %v5078 = vadd.f32 %v4913, %v5077
      %v5079 = vpop.f32.mrb[0].mxu0
      %v5080 = vadd.f32 %v4915, %v5079
      %v5081 = vpop.f32.mrb[0].mxu0
      %v5082 = vadd.f32 %v4917, %v5081
      %5083 = vmatprep.mubr.bf16.mxu0 0
      %5084 = vmatmul.mubr.bf16.gmra.mrb[0].mxu0 %v3861
      %v5085 = vpop.f32.mrb[0].mxu0
      %v5086 = vadd.f32 %v4921, %v5085
      %v5087 = vpop.f32.mrb[0].mxu0
      %v5088 = vadd.f32 %v4923, %v5087
      %v5089 = vpop.f32.mrb[0].mxu0
      %v5090 = vadd.f32 %v4925, %v5089
      %v5091 = vpop.f32.mrb[0].mxu0
      %v5092 = vadd.f32 %v4927, %v5091
      %5093 = vmatprep.mubr.bf16.mxu0 0
      %5094 = vmatmul.mubr.bf16.gmra.mrb[0].mxu0 %v3864
      %v5095 = vpop.f32.mrb[0].mxu0
      %v5096 = vadd.f32 %v4931, %v5095
      %v5097 = vpop.f32.mrb[0].mxu0
      %v5098 = vadd.f32 %v4933, %v5097
      %v5099 = vpop.f32.mrb[0].mxu0
      %v5100 = vadd.f32 %v4935, %v5099
      %v5101 = vpop.f32.mrb[0].mxu0
      %v5102 = vadd.f32 %v4937, %v5101
      %5103 = vmatprep.mubr.bf16.mxu0 0
      %5104 = vmatmul.mubr.bf16.gmra.mrb[0].mxu0 %v3867
      %v5105 = vpop.f32.mrb[0].mxu0
      %v5106 = vadd.f32 %v4941, %v5105
      %v5107 = vpop.f32.mrb[0].mxu0
      %v5108 = vadd.f32 %v4943, %v5107
      %v5109 = vpop.f32.mrb[0].mxu0
      %v5110 = vadd.f32 %v4945, %v5109
      %v5111 = vpop.f32.mrb[0].mxu0
      %v5112 = vadd.f32 %v4947, %v5111
      %5113 = vmatprep.mubr.bf16.mxu0 0
      %5114 = vmatmul.mubr.bf16.gmra.mrb[0].mxu0 %v3870
      %v5115 = vpop.f32.mrb[0].mxu0
      %v5116 = vadd.f32 %v4951, %v5115
      %v5117 = vpop.f32.mrb[0].mxu0
      %v5118 = vadd.f32 %v4953, %v5117
      %v5119 = vpop.f32.mrb[0].mxu0
      %v5120 = vadd.f32 %v4955, %v5119
      %v5121 = vpop.f32.mrb[0].mxu0
      %v5122 = vadd.f32 %v4957, %v5121
      %5123 = vmatprep.mubr.bf16.mxu0 0
      %5124 = vmatmul.mubr.bf16.gmra.mrb[0].mxu0 %v3873
      %v5125 = vpop.f32.mrb[0].mxu0
      %v5126 = vadd.f32 %v4961, %v5125
      %v5127 = vpop.f32.mrb[0].mxu0
      %v5128 = vadd.f32 %v4963, %v5127
      %v5129 = vpop.f32.mrb[0].mxu0
      %v5130 = vadd.f32 %v4965, %v5129
      %v5131 = vpop.f32.mrb[0].mxu0
      %v5132 = vadd.f32 %v4967, %v5131
      %5133 = vmatprep.mubr.bf16.mxu0 0
      %5134 = vmatmul.mubr.bf16.gmra.mrb[0].mxu0 %v3876
      %v5135 = vpop.f32.mrb[0].mxu0
      %v5136 = vadd.f32 %v4971, %v5135
      %v5137 = vpop.f32.mrb[0].mxu0
      %v5138 = vadd.f32 %v4973, %v5137
      %v5139 = vpop.f32.mrb[0].mxu0
      %v5140 = vadd.f32 %v4975, %v5139
      %v5141 = vpop.f32.mrb[0].mxu0
      %v5142 = vadd.f32 %v4977, %v5141
      %5143 = vmatprep.mubr.bf16.mxu0 0
      %5144 = vmatmul.mubr.bf16.gmra.mrb[0].mxu0 %v3879
      %v5145 = vpop.f32.mrb[0].mxu0
      %v5146 = vadd.f32 %v4981, %v5145
      %v5147 = vpop.f32.mrb[0].mxu0
      %v5148 = vadd.f32 %v4983, %v5147
      %v5149 = vpop.f32.mrb[0].mxu0
      %v5150 = vadd.f32 %v4985, %v5149
      %v5151 = vpop.f32.mrb[0].mxu0
      %v5152 = vadd.f32 %v4987, %v5151
      %5153 = vmatprep.mubr.bf16.mxu0 0
      %5154 = vmatmul.mubr.bf16.gmra.mrb[0].mxu0 %v3882
      %v5155 = vpop.f32.mrb[0].mxu0
      %v5156 = vpop.f32.mrb[0].mxu0
      %v5157 = vpop.f32.mrb[0].mxu0
      %v5158 = vpop.f32.mrb[0].mxu0
      %5159 = vmatprep.mubr.bf16.mxu0 0
      %5160 = vmatmul.mubr.bf16.gmra.mrb[0].mxu0 %v3885
      %v5161 = vpop.f32.mrb[0].mxu0
      %v5162 = vpop.f32.mrb[0].mxu0
      %v5163 = vpop.f32.mrb[0].mxu0
      %v5164 = vpop.f32.mrb[0].mxu0
      %5165 = vdwg.mxu0
      %s5166 = scalar_lea.vmem [#allocation3], 192
      %v5167 = vld [vmem:[%s5166] sm:$0xff]
      %v5168 = vld [vmem:[%s5166 + $0x8] sm:$0xff]
      %v5169 = vld [vmem:[%s5166 + $0x10] sm:$0xff]
      %v5170 = vld [vmem:[%s5166 + $0x18] sm:$0xff]
      %v5171 = vld [vmem:[%s5166 + $0x20] sm:$0xff]
      %v5172 = vld [vmem:[%s5166 + $0x28] sm:$0xff]
      %v5173 = vld [vmem:[%s5166 + $0x90] sm:$0xff]
      %v5174 = vld [vmem:[%s5166 + $0x98] sm:$0xff]
      %v5175 = vld [vmem:[%s5166 + $0xa0] sm:$0xff]
      %v5176 = vld [vmem:[%s5166 + $0xa8] sm:$0xff]
      %v5177 = vld [vmem:[%s5166 + $0xb0] sm:$0xff]
      %v5178 = vld [vmem:[%s5166 + $0xb8] sm:$0xff]
      %v5179 = vld [vmem:[%s5166 + $0x120] sm:$0xff]
      %v5180 = vld [vmem:[%s5166 + $0x128] sm:$0xff]
      %v5181 = vld [vmem:[%s5166 + $0x130] sm:$0xff]
      %v5182 = vld [vmem:[%s5166 + $0x138] sm:$0xff]
      %v5183 = vld [vmem:[%s5166 + $0x140] sm:$0xff]
      %v5184 = vld [vmem:[%s5166 + $0x148] sm:$0xff]
      %v5185 = vld [vmem:[%s5166 + $0x1b0] sm:$0xff]
      %v5186 = vld [vmem:[%s5166 + $0x1b8] sm:$0xff]
      %v5187 = vld [vmem:[%s5166 + $0x1c0] sm:$0xff]
      %v5188 = vld [vmem:[%s5166 + $0x1c8] sm:$0xff]
      %v5189 = vld [vmem:[%s5166 + $0x1d0] sm:$0xff]
      %v5190 = vld [vmem:[%s5166 + $0x1d8] sm:$0xff]
      %v5191 = vld [vmem:[%s5166 + $0x240] sm:$0xff]
      %v5192 = vld [vmem:[%s5166 + $0x248] sm:$0xff]
      %v5193 = vld [vmem:[%s5166 + $0x250] sm:$0xff]
      %v5194 = vld [vmem:[%s5166 + $0x258] sm:$0xff]
      %v5195 = vld [vmem:[%s5166 + $0x260] sm:$0xff]
      %v5196 = vld [vmem:[%s5166 + $0x268] sm:$0xff]
      %v5197 = vld [vmem:[%s5166 + $0x2d0] sm:$0xff]
      %v5198 = vld [vmem:[%s5166 + $0x2d8] sm:$0xff]
      %v5199 = vld [vmem:[%s5166 + $0x2e0] sm:$0xff]
      %v5200 = vld [vmem:[%s5166 + $0x2e8] sm:$0xff]
      %v5201 = vld [vmem:[%s5166 + $0x2f0] sm:$0xff]
      %v5202 = vld [vmem:[%s5166 + $0x2f8] sm:$0xff]
      %v5203 = vld [vmem:[%s5166 + $0x360] sm:$0xff]
      %v5204 = vld [vmem:[%s5166 + $0x368] sm:$0xff]
      %v5205 = vld [vmem:[%s5166 + $0x370] sm:$0xff]
      %v5206 = vld [vmem:[%s5166 + $0x378] sm:$0xff]
      %v5207 = vld [vmem:[%s5166 + $0x380] sm:$0xff]
      %v5208 = vld [vmem:[%s5166 + $0x388] sm:$0xff]
      %s5209 = scalar_lea.vmem %s7, 768
      %v5210 = vld [vmem:[%s5209] sm:$0xff]
      %v5211 = vld [vmem:[%s5209 + $0x8] sm:$0xff]
      %v5212 = vld [vmem:[%s5209 + $0x10] sm:$0xff]
      %v5213 = vld [vmem:[%s5209 + $0x18] sm:$0xff]
      %v5214 = vld [vmem:[%s5209 + $0x20] sm:$0xff]
      %v5215 = vld [vmem:[%s5209 + $0x28] sm:$0xff]
      %v5216 = vld [vmem:[%s5209 + $0x30] sm:$0xff]
      %v5217 = vld [vmem:[%s5209 + $0x38] sm:$0xff]
      %v5218 = vld [vmem:[%s5209 + $0x40] sm:$0xff]
      %v5219 = vld [vmem:[%s5209 + $0x48] sm:$0xff]
      %v5220 = vld [vmem:[%s5209 + $0x50] sm:$0xff]
      %v5221 = vld [vmem:[%s5209 + $0x58] sm:$0xff]
      %v5222 = vld [vmem:[%s5209 + $0x60] sm:$0xff]
      %v5223 = vld [vmem:[%s5209 + $0x68] sm:$0xff]
      %v5224 = vld [vmem:[%s5209 + $0x70] sm:$0xff]
      %v5225 = vld [vmem:[%s5209 + $0x78] sm:$0xff]
      %v5226 = vld [vmem:[%s5209 + $0x80] sm:$0xff]
      %v5227 = vld [vmem:[%s5209 + $0x88] sm:$0xff]
      %v5228 = vld [vmem:[%s5209 + $0x90] sm:$0xff]
      %v5229 = vld [vmem:[%s5209 + $0x98] sm:$0xff]
      %v5230 = vld [vmem:[%s5209 + $0xa0] sm:$0xff]
      %v5231 = vld [vmem:[%s5209 + $0xa8] sm:$0xff]
      %v5232 = vld [vmem:[%s5209 + $0xb0] sm:$0xff]
      %v5233 = vld [vmem:[%s5209 + $0xb8] sm:$0xff]
      %v5234 = vld [vmem:[%s5209 + $0xc0] sm:$0xff]
      %v5235 = vld [vmem:[%s5209 + $0xc8] sm:$0xff]
      %v5236 = vld [vmem:[%s5209 + $0xd0] sm:$0xff]
      %v5237 = vld [vmem:[%s5209 + $0xd8] sm:$0xff]
      %v5238 = vld [vmem:[%s5209 + $0xe0] sm:$0xff]
      %v5239 = vld [vmem:[%s5209 + $0xe8] sm:$0xff]
      %v5240 = vld [vmem:[%s5209 + $0xf0] sm:$0xff]
      %v5241 = vld [vmem:[%s5209 + $0xf8] sm:$0xff]
      %v5242 = vld [vmem:[%s5209 + $0x100] sm:$0xff]
      %v5243 = vld [vmem:[%s5209 + $0x108] sm:$0xff]
      %v5244 = vld [vmem:[%s5209 + $0x110] sm:$0xff]
      %v5245 = vld [vmem:[%s5209 + $0x118] sm:$0xff]
      %v5246 = vld [vmem:[%s5209 + $0x120] sm:$0xff]
      %v5247 = vld [vmem:[%s5209 + $0x128] sm:$0xff]
      %v5248 = vld [vmem:[%s5209 + $0x130] sm:$0xff]
      %v5249 = vld [vmem:[%s5209 + $0x138] sm:$0xff]
      %v5250 = vld [vmem:[%s5209 + $0x140] sm:$0xff]
      %v5251 = vld [vmem:[%s5209 + $0x148] sm:$0xff]
      %v5252 = vld [vmem:[%s5209 + $0x150] sm:$0xff]
      %v5253 = vld [vmem:[%s5209 + $0x158] sm:$0xff]
      %v5254 = vld [vmem:[%s5209 + $0x160] sm:$0xff]
      %v5255 = vld [vmem:[%s5209 + $0x168] sm:$0xff]
      %v5256 = vld [vmem:[%s5209 + $0x170] sm:$0xff]
      %v5257 = vld [vmem:[%s5209 + $0x178] sm:$0xff]
      %v5306 = vunpack.c.l.b16 %v5210
      %v5307 = vunpack.c.h.b16 %v5210
      %v5308 = vunpack.c.l.b16 %v5211
      %v5309 = vunpack.c.h.b16 %v5211
      %v5310 = vunpack.c.l.b16 %v5212
      %v5311 = vunpack.c.h.b16 %v5212
      %v5312 = vunpack.c.l.b16 %v5213
      %v5313 = vunpack.c.h.b16 %v5213
      %v5314 = vunpack.c.l.b16 %v5214
      %v5315 = vunpack.c.h.b16 %v5214
      %v5316 = vunpack.c.l.b16 %v5215
      %v5317 = vunpack.c.h.b16 %v5215
      %v5318 = vunpack.c.l.b16 %v5216
      %v5319 = vunpack.c.h.b16 %v5216
      %v5320 = vunpack.c.l.b16 %v5217
      %v5321 = vunpack.c.h.b16 %v5217
      %v5322 = vunpack.c.l.b16 %v5218
      %v5323 = vunpack.c.h.b16 %v5218
      %v5324 = vunpack.c.l.b16 %v5219
      %v5325 = vunpack.c.h.b16 %v5219
      %v5326 = vunpack.c.l.b16 %v5220
      %v5327 = vunpack.c.h.b16 %v5220
      %v5328 = vunpack.c.l.b16 %v5221
      %v5329 = vunpack.c.h.b16 %v5221
      %v5330 = vunpack.c.l.b16 %v5222
      %v5331 = vunpack.c.h.b16 %v5222
      %v5332 = vunpack.c.l.b16 %v5223
      %v5333 = vunpack.c.h.b16 %v5223
      %v5334 = vunpack.c.l.b16 %v5224
      %v5335 = vunpack.c.h.b16 %v5224
      %v5336 = vunpack.c.l.b16 %v5225
      %v5337 = vunpack.c.h.b16 %v5225
      %v5338 = vunpack.c.l.b16 %v5226
      %v5339 = vunpack.c.h.b16 %v5226
      %v5340 = vunpack.c.l.b16 %v5227
      %v5341 = vunpack.c.h.b16 %v5227
      %v5342 = vunpack.c.l.b16 %v5228
      %v5343 = vunpack.c.h.b16 %v5228
      %v5344 = vunpack.c.l.b16 %v5229
      %v5345 = vunpack.c.h.b16 %v5229
      %v5346 = vunpack.c.l.b16 %v5230
      %v5347 = vunpack.c.h.b16 %v5230
      %v5348 = vunpack.c.l.b16 %v5231
      %v5349 = vunpack.c.h.b16 %v5231
      %v5350 = vunpack.c.l.b16 %v5232
      %v5351 = vunpack.c.h.b16 %v5232
      %v5352 = vunpack.c.l.b16 %v5233
      %v5353 = vunpack.c.h.b16 %v5233
      %v5354 = vunpack.c.l.b16 %v5234
      %v5355 = vunpack.c.h.b16 %v5234
      %v5356 = vunpack.c.l.b16 %v5235
      %v5357 = vunpack.c.h.b16 %v5235
      %v5358 = vunpack.c.l.b16 %v5236
      %v5359 = vunpack.c.h.b16 %v5236
      %v5360 = vunpack.c.l.b16 %v5237
      %v5361 = vunpack.c.h.b16 %v5237
      %v5362 = vunpack.c.l.b16 %v5238
      %v5363 = vunpack.c.h.b16 %v5238
      %v5364 = vunpack.c.l.b16 %v5239
      %v5365 = vunpack.c.h.b16 %v5239
      %v5366 = vunpack.c.l.b16 %v5240
      %v5367 = vunpack.c.h.b16 %v5240
      %v5368 = vunpack.c.l.b16 %v5241
      %v5369 = vunpack.c.h.b16 %v5241
      %v5370 = vunpack.c.l.b16 %v5242
      %v5371 = vunpack.c.h.b16 %v5242
      %v5372 = vunpack.c.l.b16 %v5243
      %v5373 = vunpack.c.h.b16 %v5243
      %v5374 = vunpack.c.l.b16 %v5244
      %v5375 = vunpack.c.h.b16 %v5244
      %v5376 = vunpack.c.l.b16 %v5245
      %v5377 = vunpack.c.h.b16 %v5245
      %v5378 = vunpack.c.l.b16 %v5246
      %v5379 = vunpack.c.h.b16 %v5246
      %v5380 = vunpack.c.l.b16 %v5247
      %v5381 = vunpack.c.h.b16 %v5247
      %v5382 = vunpack.c.l.b16 %v5248
      %v5383 = vunpack.c.h.b16 %v5248
      %v5384 = vunpack.c.l.b16 %v5249
      %v5385 = vunpack.c.h.b16 %v5249
      %v5386 = vunpack.c.l.b16 %v5250
      %v5387 = vunpack.c.h.b16 %v5250
      %v5388 = vunpack.c.l.b16 %v5251
      %v5389 = vunpack.c.h.b16 %v5251
      %v5390 = vunpack.c.l.b16 %v5252
      %v5391 = vunpack.c.h.b16 %v5252
      %v5392 = vunpack.c.l.b16 %v5253
      %v5393 = vunpack.c.h.b16 %v5253
      %v5394 = vunpack.c.l.b16 %v5254
      %v5395 = vunpack.c.h.b16 %v5254
      %v5396 = vunpack.c.l.b16 %v5255
      %v5397 = vunpack.c.h.b16 %v5255
      %v5398 = vunpack.c.l.b16 %v5256
      %v5399 = vunpack.c.h.b16 %v5256
      %v5400 = vunpack.c.l.b16 %v5257
      %v5401 = vunpack.c.h.b16 %v5257
      %v5402 = vpack.c.b16 %v5308, %v5306
      %v5403 = vpack.c.b16 %v5309, %v5307
      %v5404 = vpack.c.b16 %v5312, %v5310
      %v5405 = vpack.c.b16 %v5313, %v5311
      %v5406 = vpack.c.b16 %v5316, %v5314
      %v5407 = vpack.c.b16 %v5317, %v5315
      %v5408 = vpack.c.b16 %v5320, %v5318
      %v5409 = vpack.c.b16 %v5321, %v5319
      %v5410 = vpack.c.b16 %v5324, %v5322
      %v5411 = vpack.c.b16 %v5325, %v5323
      %v5412 = vpack.c.b16 %v5328, %v5326
      %v5413 = vpack.c.b16 %v5329, %v5327
      %v5414 = vpack.c.b16 %v5332, %v5330
      %v5415 = vpack.c.b16 %v5333, %v5331
      %v5416 = vpack.c.b16 %v5336, %v5334
      %v5417 = vpack.c.b16 %v5337, %v5335
      %v5418 = vpack.c.b16 %v5340, %v5338
      %v5419 = vpack.c.b16 %v5341, %v5339
      %v5420 = vpack.c.b16 %v5344, %v5342
      %v5421 = vpack.c.b16 %v5345, %v5343
      %v5422 = vpack.c.b16 %v5348, %v5346
      %v5423 = vpack.c.b16 %v5349, %v5347
      %v5424 = vpack.c.b16 %v5352, %v5350
      %v5425 = vpack.c.b16 %v5353, %v5351
      %v5426 = vpack.c.b16 %v5356, %v5354
      %v5427 = vpack.c.b16 %v5357, %v5355
      %v5428 = vpack.c.b16 %v5360, %v5358
      %v5429 = vpack.c.b16 %v5361, %v5359
      %v5430 = vpack.c.b16 %v5364, %v5362
      %v5431 = vpack.c.b16 %v5365, %v5363
      %v5432 = vpack.c.b16 %v5368, %v5366
      %v5433 = vpack.c.b16 %v5369, %v5367
      %v5434 = vpack.c.b16 %v5372, %v5370
      %v5435 = vpack.c.b16 %v5373, %v5371
      %v5436 = vpack.c.b16 %v5376, %v5374
      %v5437 = vpack.c.b16 %v5377, %v5375
      %v5438 = vpack.c.b16 %v5380, %v5378
      %v5439 = vpack.c.b16 %v5381, %v5379
      %v5440 = vpack.c.b16 %v5384, %v5382
      %v5441 = vpack.c.b16 %v5385, %v5383
      %v5442 = vpack.c.b16 %v5388, %v5386
      %v5443 = vpack.c.b16 %v5389, %v5387
      %v5444 = vpack.c.b16 %v5392, %v5390
      %v5445 = vpack.c.b16 %v5393, %v5391
      %v5446 = vpack.c.b16 %v5396, %v5394
      %v5447 = vpack.c.b16 %v5397, %v5395
      %v5448 = vpack.c.b16 %v5400, %v5398
      %v5449 = vpack.c.b16 %v5401, %v5399
      %5498 = vmatprep.subr.bf16.mxu0 %v5403
      %5499 = vmatpush1.bf16.msra.mxu0 %v5402
      %5500 = vmatprep.subr.bf16.mxu0 %v5405
      %5501 = vmatpush1.bf16.msra.mxu0 %v5404
      %5502 = vmatprep.subr.bf16.mxu0 %v5407
      %5503 = vmatpush1.bf16.msra.mxu0 %v5406
      %5504 = vmatprep.subr.bf16.mxu0 %v5409
      %5505 = vmatpush1.bf16.msra.mxu0 %v5408
      %5506 = vmatprep.subr.bf16.mxu0 %v5411
      %5507 = vmatpush1.bf16.msra.mxu0 %v5410
      %5508 = vmatprep.subr.bf16.mxu0 %v5413
      %5509 = vmatpush1.bf16.msra.mxu0 %v5412
      %5510 = vmatprep.subr.bf16.mxu0 %v5415
      %5511 = vmatpush1.bf16.msra.mxu0 %v5414
      %5512 = vmatprep.subr.bf16.mxu0 %v5417
      %5513 = vmatpush1.bf16.msra.mxu0 %v5416
      %5514 = vmatprep.subr.bf16.mxu0 %v5419
      %5515 = vmatpush1.bf16.msra.mxu0 %v5418
      %5516 = vmatprep.subr.bf16.mxu0 %v5421
      %5517 = vmatpush1.bf16.msra.mxu0 %v5420
      %5518 = vmatprep.subr.bf16.mxu0 %v5423
      %5519 = vmatpush1.bf16.msra.mxu0 %v5422
      %5520 = vmatprep.subr.bf16.mxu0 %v5425
      %5521 = vmatpush1.bf16.msra.mxu0 %v5424
      %5522 = vmatprep.subr.bf16.mxu0 %v5427
      %5523 = vmatpush1.bf16.msra.mxu0 %v5426
      %5524 = vmatprep.subr.bf16.mxu0 %v5429
      %5525 = vmatpush1.bf16.msra.mxu0 %v5428
      %5526 = vmatprep.subr.bf16.mxu0 %v5431
      %5527 = vmatpush1.bf16.msra.mxu0 %v5430
      %5528 = vmatprep.subr.bf16.mxu0 %v5433
      %5529 = vmatpush1.bf16.msra.mxu0 %v5432
      %5530 = vmatprep.mubr.bf16.mxu0 %v5168
      %5531 = vmatmul.mubr.bf16.gmra.mrb[0].mxu0 %v5167
      %v5532 = vpop.f32.mrb[0].mxu0
      %v5533 = vadd.f32 0.0, %v5532
      %v5534 = vpop.f32.mrb[0].mxu0
      %v5535 = vadd.f32 0.0, %v5534
      %v5536 = vpop.f32.mrb[0].mxu0
      %v5537 = vadd.f32 0.0, %v5536
      %v5538 = vpop.f32.mrb[0].mxu0
      %v5539 = vadd.f32 0.0, %v5538
      %5540 = vmatprep.mubr.bf16.mxu0 %v5171
      %5541 = vmatmul.mubr.bf16.gmra.mrb[0].mxu0 %v5170
      %v5542 = vpop.f32.mrb[0].mxu0
      %v5543 = vadd.f32 0.0, %v5542
      %v5544 = vpop.f32.mrb[0].mxu0
      %v5545 = vadd.f32 0.0, %v5544
      %v5546 = vpop.f32.mrb[0].mxu0
      %v5547 = vadd.f32 0.0, %v5546
      %v5548 = vpop.f32.mrb[0].mxu0
      %v5549 = vadd.f32 0.0, %v5548
      %5550 = vmatprep.mubr.bf16.mxu0 %v5174
      %5551 = vmatmul.mubr.bf16.gmra.mrb[0].mxu0 %v5173
      %v5552 = vpop.f32.mrb[0].mxu0
      %v5553 = vadd.f32 0.0, %v5552
      %v5554 = vpop.f32.mrb[0].mxu0
      %v5555 = vadd.f32 0.0, %v5554
      %v5556 = vpop.f32.mrb[0].mxu0
      %v5557 = vadd.f32 0.0, %v5556
      %v5558 = vpop.f32.mrb[0].mxu0
      %v5559 = vadd.f32 0.0, %v5558
      %5560 = vmatprep.mubr.bf16.mxu0 %v5177
      %5561 = vmatmul.mubr.bf16.gmra.mrb[0].mxu0 %v5176
      %v5562 = vpop.f32.mrb[0].mxu0
      %v5563 = vadd.f32 0.0, %v5562
      %v5564 = vpop.f32.mrb[0].mxu0
      %v5565 = vadd.f32 0.0, %v5564
      %v5566 = vpop.f32.mrb[0].mxu0
      %v5567 = vadd.f32 0.0, %v5566
      %v5568 = vpop.f32.mrb[0].mxu0
      %v5569 = vadd.f32 0.0, %v5568
      %5570 = vmatprep.mubr.bf16.mxu0 %v5180
      %5571 = vmatmul.mubr.bf16.gmra.mrb[0].mxu0 %v5179
      %v5572 = vpop.f32.mrb[0].mxu0
      %v5573 = vadd.f32 0.0, %v5572
      %v5574 = vpop.f32.mrb[0].mxu0
      %v5575 = vadd.f32 0.0, %v5574
      %v5576 = vpop.f32.mrb[0].mxu0
      %v5577 = vadd.f32 0.0, %v5576
      %v5578 = vpop.f32.mrb[0].mxu0
      %v5579 = vadd.f32 0.0, %v5578
      %5580 = vmatprep.mubr.bf16.mxu0 %v5183
      %5581 = vmatmul.mubr.bf16.gmra.mrb[0].mxu0 %v5182
      %v5582 = vpop.f32.mrb[0].mxu0
      %v5583 = vadd.f32 0.0, %v5582
      %v5584 = vpop.f32.mrb[0].mxu0
      %v5585 = vadd.f32 0.0, %v5584
      %v5586 = vpop.f32.mrb[0].mxu0
      %v5587 = vadd.f32 0.0, %v5586
      %v5588 = vpop.f32.mrb[0].mxu0
      %v5589 = vadd.f32 0.0, %v5588
      %5590 = vmatprep.mubr.bf16.mxu0 %v5186
      %5591 = vmatmul.mubr.bf16.gmra.mrb[0].mxu0 %v5185
      %v5592 = vpop.f32.mrb[0].mxu0
      %v5593 = vadd.f32 0.0, %v5592
      %v5594 = vpop.f32.mrb[0].mxu0
      %v5595 = vadd.f32 0.0, %v5594
      %v5596 = vpop.f32.mrb[0].mxu0
      %v5597 = vadd.f32 0.0, %v5596
      %v5598 = vpop.f32.mrb[0].mxu0
      %v5599 = vadd.f32 0.0, %v5598
      %5600 = vmatprep.mubr.bf16.mxu0 %v5189
      %5601 = vmatmul.mubr.bf16.gmra.mrb[0].mxu0 %v5188
      %v5602 = vpop.f32.mrb[0].mxu0
      %v5603 = vadd.f32 0.0, %v5602
      %v5604 = vpop.f32.mrb[0].mxu0
      %v5605 = vadd.f32 0.0, %v5604
      %v5606 = vpop.f32.mrb[0].mxu0
      %v5607 = vadd.f32 0.0, %v5606
      %v5608 = vpop.f32.mrb[0].mxu0
      %v5609 = vadd.f32 0.0, %v5608
      %5610 = vmatprep.mubr.bf16.mxu0 %v5192
      %5611 = vmatmul.mubr.bf16.gmra.mrb[0].mxu0 %v5191
      %v5612 = vpop.f32.mrb[0].mxu0
      %v5613 = vadd.f32 0.0, %v5612
      %v5614 = vpop.f32.mrb[0].mxu0
      %v5615 = vadd.f32 0.0, %v5614
      %v5616 = vpop.f32.mrb[0].mxu0
      %v5617 = vadd.f32 0.0, %v5616
      %v5618 = vpop.f32.mrb[0].mxu0
      %v5619 = vadd.f32 0.0, %v5618
      %5620 = vmatprep.mubr.bf16.mxu0 %v5195
      %5621 = vmatmul.mubr.bf16.gmra.mrb[0].mxu0 %v5194
      %v5622 = vpop.f32.mrb[0].mxu0
      %v5623 = vadd.f32 0.0, %v5622
      %v5624 = vpop.f32.mrb[0].mxu0
      %v5625 = vadd.f32 0.0, %v5624
      %v5626 = vpop.f32.mrb[0].mxu0
      %v5627 = vadd.f32 0.0, %v5626
      %v5628 = vpop.f32.mrb[0].mxu0
      %v5629 = vadd.f32 0.0, %v5628
      %5630 = vmatprep.mubr.bf16.mxu0 %v5198
      %5631 = vmatmul.mubr.bf16.gmra.mrb[0].mxu0 %v5197
      %v5632 = vpop.f32.mrb[0].mxu0
      %v5633 = vadd.f32 0.0, %v5632
      %v5634 = vpop.f32.mrb[0].mxu0
      %v5635 = vadd.f32 0.0, %v5634
      %v5636 = vpop.f32.mrb[0].mxu0
      %v5637 = vadd.f32 0.0, %v5636
      %v5638 = vpop.f32.mrb[0].mxu0
      %v5639 = vadd.f32 0.0, %v5638
      %5640 = vmatprep.mubr.bf16.mxu0 %v5201
      %5641 = vmatmul.mubr.bf16.gmra.mrb[0].mxu0 %v5200
      %v5642 = vpop.f32.mrb[0].mxu0
      %v5643 = vadd.f32 0.0, %v5642
      %v5644 = vpop.f32.mrb[0].mxu0
      %v5645 = vadd.f32 0.0, %v5644
      %v5646 = vpop.f32.mrb[0].mxu0
      %v5647 = vadd.f32 0.0, %v5646
      %v5648 = vpop.f32.mrb[0].mxu0
      %v5649 = vadd.f32 0.0, %v5648
      %5650 = vmatprep.mubr.bf16.mxu0 %v5204
      %5651 = vmatmul.mubr.bf16.gmra.mrb[0].mxu0 %v5203
      %v5652 = vpop.f32.mrb[0].mxu0
      %v5653 = vpop.f32.mrb[0].mxu0
      %v5654 = vpop.f32.mrb[0].mxu0
      %v5655 = vpop.f32.mrb[0].mxu0
      %5656 = vmatprep.mubr.bf16.mxu0 %v5207
      %5657 = vmatmul.mubr.bf16.gmra.mrb[0].mxu0 %v5206
      %v5658 = vpop.f32.mrb[0].mxu0
      %v5659 = vpop.f32.mrb[0].mxu0
      %v5660 = vpop.f32.mrb[0].mxu0
      %v5661 = vpop.f32.mrb[0].mxu0
      %5662 = vdwg.mxu0
      %5663 = vmatprep.subr.bf16.mxu0 %v5435
      %5664 = vmatpush1.bf16.msra.mxu0 %v5434
      %5665 = vmatprep.subr.bf16.mxu0 %v5437
      %5666 = vmatpush1.bf16.msra.mxu0 %v5436
      %5667 = vmatprep.subr.bf16.mxu0 %v5439
      %5668 = vmatpush1.bf16.msra.mxu0 %v5438
      %5669 = vmatprep.subr.bf16.mxu0 %v5441
      %5670 = vmatpush1.bf16.msra.mxu0 %v5440
      %5671 = vmatprep.subr.bf16.mxu0 %v5443
      %5672 = vmatpush1.bf16.msra.mxu0 %v5442
      %5673 = vmatprep.subr.bf16.mxu0 %v5445
      %5674 = vmatpush1.bf16.msra.mxu0 %v5444
      %5675 = vmatprep.subr.bf16.mxu0 %v5447
      %5676 = vmatpush1.bf16.msra.mxu0 %v5446
      %5677 = vmatprep.subr.bf16.mxu0 %v5449
      %5678 = vmatpush1.bf16.msra.mxu0 %v5448
      %5679 = vmatprep.subr.bf16.mxu0 0
      %5680 = vmatpush1.bf16.msra.mxu0 0
      %5681 = vmatprep.subr.bf16.mxu0 0
      %5682 = vmatpush1.bf16.msra.mxu0 0
      %5683 = vmatprep.subr.bf16.mxu0 0
      %5684 = vmatpush1.bf16.msra.mxu0 0
      %5685 = vmatprep.subr.bf16.mxu0 0
      %5686 = vmatpush1.bf16.msra.mxu0 0
      %5687 = vmatprep.subr.bf16.mxu0 0
      %5688 = vmatpush1.bf16.msra.mxu0 0
      %5689 = vmatprep.subr.bf16.mxu0 0
      %5690 = vmatpush1.bf16.msra.mxu0 0
      %5691 = vmatprep.subr.bf16.mxu0 0
      %5692 = vmatpush1.bf16.msra.mxu0 0
      %5693 = vmatprep.subr.bf16.mxu0 0
      %5694 = vmatpush1.bf16.msra.mxu0 0
      %5695 = vmatprep.mubr.bf16.mxu0 0
      %5696 = vmatmul.mubr.bf16.gmra.mrb[0].mxu0 %v5169
      %v5697 = vpop.f32.mrb[0].mxu0
      %v5698 = vadd.f32 %v5533, %v5697
      %v5699 = vpop.f32.mrb[0].mxu0
      %v5700 = vadd.f32 %v5535, %v5699
      %v5701 = vpop.f32.mrb[0].mxu0
      %v5702 = vadd.f32 %v5537, %v5701
      %v5703 = vpop.f32.mrb[0].mxu0
      %v5704 = vadd.f32 %v5539, %v5703
      %5705 = vmatprep.mubr.bf16.mxu0 0
      %5706 = vmatmul.mubr.bf16.gmra.mrb[0].mxu0 %v5172
      %v5707 = vpop.f32.mrb[0].mxu0
      %v5708 = vadd.f32 %v5543, %v5707
      %v5709 = vpop.f32.mrb[0].mxu0
      %v5710 = vadd.f32 %v5545, %v5709
      %v5711 = vpop.f32.mrb[0].mxu0
      %v5712 = vadd.f32 %v5547, %v5711
      %v5713 = vpop.f32.mrb[0].mxu0
      %v5714 = vadd.f32 %v5549, %v5713
      %5715 = vmatprep.mubr.bf16.mxu0 0
      %5716 = vmatmul.mubr.bf16.gmra.mrb[0].mxu0 %v5175
      %v5717 = vpop.f32.mrb[0].mxu0
      %v5718 = vadd.f32 %v5553, %v5717
      %v5719 = vpop.f32.mrb[0].mxu0
      %v5720 = vadd.f32 %v5555, %v5719
      %v5721 = vpop.f32.mrb[0].mxu0
      %v5722 = vadd.f32 %v5557, %v5721
      %v5723 = vpop.f32.mrb[0].mxu0
      %v5724 = vadd.f32 %v5559, %v5723
      %5725 = vmatprep.mubr.bf16.mxu0 0
      %5726 = vmatmul.mubr.bf16.gmra.mrb[0].mxu0 %v5178
      %v5727 = vpop.f32.mrb[0].mxu0
      %v5728 = vadd.f32 %v5563, %v5727
      %v5729 = vpop.f32.mrb[0].mxu0
      %v5730 = vadd.f32 %v5565, %v5729
      %v5731 = vpop.f32.mrb[0].mxu0
      %v5732 = vadd.f32 %v5567, %v5731
      %v5733 = vpop.f32.mrb[0].mxu0
      %v5734 = vadd.f32 %v5569, %v5733
      %5735 = vmatprep.mubr.bf16.mxu0 0
      %5736 = vmatmul.mubr.bf16.gmra.mrb[0].mxu0 %v5181
      %v5737 = vpop.f32.mrb[0].mxu0
      %v5738 = vadd.f32 %v5573, %v5737
      %v5739 = vpop.f32.mrb[0].mxu0
      %v5740 = vadd.f32 %v5575, %v5739
      %v5741 = vpop.f32.mrb[0].mxu0
      %v5742 = vadd.f32 %v5577, %v5741
      %v5743 = vpop.f32.mrb[0].mxu0
      %v5744 = vadd.f32 %v5579, %v5743
      %5745 = vmatprep.mubr.bf16.mxu0 0
      %5746 = vmatmul.mubr.bf16.gmra.mrb[0].mxu0 %v5184
      %v5747 = vpop.f32.mrb[0].mxu0
      %v5748 = vadd.f32 %v5583, %v5747
      %v5749 = vpop.f32.mrb[0].mxu0
      %v5750 = vadd.f32 %v5585, %v5749
      %v5751 = vpop.f32.mrb[0].mxu0
      %v5752 = vadd.f32 %v5587, %v5751
      %v5753 = vpop.f32.mrb[0].mxu0
      %v5754 = vadd.f32 %v5589, %v5753
      %5755 = vmatprep.mubr.bf16.mxu0 0
      %5756 = vmatmul.mubr.bf16.gmra.mrb[0].mxu0 %v5187
      %v5757 = vpop.f32.mrb[0].mxu0
      %v5758 = vadd.f32 %v5593, %v5757
      %v5759 = vpop.f32.mrb[0].mxu0
      %v5760 = vadd.f32 %v5595, %v5759
      %v5761 = vpop.f32.mrb[0].mxu0
      %v5762 = vadd.f32 %v5597, %v5761
      %v5763 = vpop.f32.mrb[0].mxu0
      %v5764 = vadd.f32 %v5599, %v5763
      %5765 = vmatprep.mubr.bf16.mxu0 0
      %5766 = vmatmul.mubr.bf16.gmra.mrb[0].mxu0 %v5190
      %v5767 = vpop.f32.mrb[0].mxu0
      %v5768 = vadd.f32 %v5603, %v5767
      %v5769 = vpop.f32.mrb[0].mxu0
      %v5770 = vadd.f32 %v5605, %v5769
      %v5771 = vpop.f32.mrb[0].mxu0
      %v5772 = vadd.f32 %v5607, %v5771
      %v5773 = vpop.f32.mrb[0].mxu0
      %v5774 = vadd.f32 %v5609, %v5773
      %5775 = vmatprep.mubr.bf16.mxu0 0
      %5776 = vmatmul.mubr.bf16.gmra.mrb[0].mxu0 %v5193
      %v5777 = vpop.f32.mrb[0].mxu0
      %v5778 = vadd.f32 %v5613, %v5777
      %v5779 = vpop.f32.mrb[0].mxu0
      %v5780 = vadd.f32 %v5615, %v5779
      %v5781 = vpop.f32.mrb[0].mxu0
      %v5782 = vadd.f32 %v5617, %v5781
      %v5783 = vpop.f32.mrb[0].mxu0
      %v5784 = vadd.f32 %v5619, %v5783
      %5785 = vmatprep.mubr.bf16.mxu0 0
      %5786 = vmatmul.mubr.bf16.gmra.mrb[0].mxu0 %v5196
      %v5787 = vpop.f32.mrb[0].mxu0
      %v5788 = vadd.f32 %v5623, %v5787
      %v5789 = vpop.f32.mrb[0].mxu0
      %v5790 = vadd.f32 %v5625, %v5789
      %v5791 = vpop.f32.mrb[0].mxu0
      %v5792 = vadd.f32 %v5627, %v5791
      %v5793 = vpop.f32.mrb[0].mxu0
      %v5794 = vadd.f32 %v5629, %v5793
      %5795 = vmatprep.mubr.bf16.mxu0 0
      %5796 = vmatmul.mubr.bf16.gmra.mrb[0].mxu0 %v5199
      %v5797 = vpop.f32.mrb[0].mxu0
      %v5798 = vadd.f32 %v5633, %v5797
      %v5799 = vpop.f32.mrb[0].mxu0
      %v5800 = vadd.f32 %v5635, %v5799
      %v5801 = vpop.f32.mrb[0].mxu0
      %v5802 = vadd.f32 %v5637, %v5801
      %v5803 = vpop.f32.mrb[0].mxu0
      %v5804 = vadd.f32 %v5639, %v5803
      %5805 = vmatprep.mubr.bf16.mxu0 0
      %5806 = vmatmul.mubr.bf16.gmra.mrb[0].mxu0 %v5202
      %v5807 = vpop.f32.mrb[0].mxu0
      %v5808 = vadd.f32 %v5643, %v5807
      %v5809 = vpop.f32.mrb[0].mxu0
      %v5810 = vadd.f32 %v5645, %v5809
      %v5811 = vpop.f32.mrb[0].mxu0
      %v5812 = vadd.f32 %v5647, %v5811
      %v5813 = vpop.f32.mrb[0].mxu0
      %v5814 = vadd.f32 %v5649, %v5813
      %5815 = vmatprep.mubr.bf16.mxu0 0
      %5816 = vmatmul.mubr.bf16.gmra.mrb[0].mxu0 %v5205
      %v5817 = vpop.f32.mrb[0].mxu0
      %v5818 = vpop.f32.mrb[0].mxu0
      %v5819 = vpop.f32.mrb[0].mxu0
      %v5820 = vpop.f32.mrb[0].mxu0
      %5821 = vmatprep.mubr.bf16.mxu0 0
      %5822 = vmatmul.mubr.bf16.gmra.mrb[0].mxu0 %v5208
      %v5823 = vpop.f32.mrb[0].mxu0
      %v5824 = vpop.f32.mrb[0].mxu0
      %v5825 = vpop.f32.mrb[0].mxu0
      %v5826 = vpop.f32.mrb[0].mxu0
      %5827 = vdwg.mxu0
      %v5828 = vadd.f32 %v5036, %v5698
      %v5829 = vadd.f32 %v5038, %v5700
      %v5830 = vadd.f32 %v5040, %v5702
      %v5831 = vadd.f32 %v5042, %v5704
      %v5832 = vadd.f32 %v5046, %v5708
      %v5833 = vadd.f32 %v5048, %v5710
      %v5834 = vadd.f32 %v5050, %v5712
      %v5835 = vadd.f32 %v5052, %v5714
      %v5836 = vadd.f32 %v5056, %v5718
      %v5837 = vadd.f32 %v5058, %v5720
      %v5838 = vadd.f32 %v5060, %v5722
      %v5839 = vadd.f32 %v5062, %v5724
      %v5840 = vadd.f32 %v5066, %v5728
      %v5841 = vadd.f32 %v5068, %v5730
      %v5842 = vadd.f32 %v5070, %v5732
      %v5843 = vadd.f32 %v5072, %v5734
      %v5844 = vadd.f32 %v5076, %v5738
      %v5845 = vadd.f32 %v5078, %v5740
      %v5846 = vadd.f32 %v5080, %v5742
      %v5847 = vadd.f32 %v5082, %v5744
      %v5848 = vadd.f32 %v5086, %v5748
      %v5849 = vadd.f32 %v5088, %v5750
      %v5850 = vadd.f32 %v5090, %v5752
      %v5851 = vadd.f32 %v5092, %v5754
      %v5852 = vadd.f32 %v5096, %v5758
      %v5853 = vadd.f32 %v5098, %v5760
      %v5854 = vadd.f32 %v5100, %v5762
      %v5855 = vadd.f32 %v5102, %v5764
      %v5856 = vadd.f32 %v5106, %v5768
      %v5857 = vadd.f32 %v5108, %v5770
      %v5858 = vadd.f32 %v5110, %v5772
      %v5859 = vadd.f32 %v5112, %v5774
      %v5860 = vadd.f32 %v5116, %v5778
      %v5861 = vadd.f32 %v5118, %v5780
      %v5862 = vadd.f32 %v5120, %v5782
      %v5863 = vadd.f32 %v5122, %v5784
      %v5864 = vadd.f32 %v5126, %v5788
      %v5865 = vadd.f32 %v5128, %v5790
      %v5866 = vadd.f32 %v5130, %v5792
      %v5867 = vadd.f32 %v5132, %v5794
      %v5868 = vadd.f32 %v5136, %v5798
      %v5869 = vadd.f32 %v5138, %v5800
      %v5870 = vadd.f32 %v5140, %v5802
      %v5871 = vadd.f32 %v5142, %v5804
      %v5872 = vadd.f32 %v5146, %v5808
      %v5873 = vadd.f32 %v5148, %v5810
      %v5874 = vadd.f32 %v5150, %v5812
      %v5875 = vadd.f32 %v5152, %v5814
      %s5876 = scalar_lea.vmem [#allocation3], 288
      %v5877 = vld [vmem:[%s5876] sm:$0xff]
      %v5878 = vld [vmem:[%s5876 + $0x8] sm:$0xff]
      %v5879 = vld [vmem:[%s5876 + $0x10] sm:$0xff]
      %v5880 = vld [vmem:[%s5876 + $0x18] sm:$0xff]
      %v5881 = vld [vmem:[%s5876 + $0x20] sm:$0xff]
      %v5882 = vld [vmem:[%s5876 + $0x28] sm:$0xff]
      %v5883 = vld [vmem:[%s5876 + $0x90] sm:$0xff]
      %v5884 = vld [vmem:[%s5876 + $0x98] sm:$0xff]
      %v5885 = vld [vmem:[%s5876 + $0xa0] sm:$0xff]
      %v5886 = vld [vmem:[%s5876 + $0xa8] sm:$0xff]
      %v5887 = vld [vmem:[%s5876 + $0xb0] sm:$0xff]
      %v5888 = vld [vmem:[%s5876 + $0xb8] sm:$0xff]
      %v5889 = vld [vmem:[%s5876 + $0x120] sm:$0xff]
      %v5890 = vld [vmem:[%s5876 + $0x128] sm:$0xff]
      %v5891 = vld [vmem:[%s5876 + $0x130] sm:$0xff]
      %v5892 = vld [vmem:[%s5876 + $0x138] sm:$0xff]
      %v5893 = vld [vmem:[%s5876 + $0x140] sm:$0xff]
      %v5894 = vld [vmem:[%s5876 + $0x148] sm:$0xff]
      %v5895 = vld [vmem:[%s5876 + $0x1b0] sm:$0xff]
      %v5896 = vld [vmem:[%s5876 + $0x1b8] sm:$0xff]
      %v5897 = vld [vmem:[%s5876 + $0x1c0] sm:$0xff]
      %v5898 = vld [vmem:[%s5876 + $0x1c8] sm:$0xff]
      %v5899 = vld [vmem:[%s5876 + $0x1d0] sm:$0xff]
      %v5900 = vld [vmem:[%s5876 + $0x1d8] sm:$0xff]
      %v5901 = vld [vmem:[%s5876 + $0x240] sm:$0xff]
      %v5902 = vld [vmem:[%s5876 + $0x248] sm:$0xff]
      %v5903 = vld [vmem:[%s5876 + $0x250] sm:$0xff]
      %v5904 = vld [vmem:[%s5876 + $0x258] sm:$0xff]
      %v5905 = vld [vmem:[%s5876 + $0x260] sm:$0xff]
      %v5906 = vld [vmem:[%s5876 + $0x268] sm:$0xff]
      %v5907 = vld [vmem:[%s5876 + $0x2d0] sm:$0xff]
      %v5908 = vld [vmem:[%s5876 + $0x2d8] sm:$0xff]
      %v5909 = vld [vmem:[%s5876 + $0x2e0] sm:$0xff]
      %v5910 = vld [vmem:[%s5876 + $0x2e8] sm:$0xff]
      %v5911 = vld [vmem:[%s5876 + $0x2f0] sm:$0xff]
      %v5912 = vld [vmem:[%s5876 + $0x2f8] sm:$0xff]
      %v5913 = vld [vmem:[%s5876 + $0x360] sm:$0xff]
      %v5914 = vld [vmem:[%s5876 + $0x368] sm:$0xff]
      %v5915 = vld [vmem:[%s5876 + $0x370] sm:$0xff]
      %v5916 = vld [vmem:[%s5876 + $0x378] sm:$0xff]
      %v5917 = vld [vmem:[%s5876 + $0x380] sm:$0xff]
      %v5918 = vld [vmem:[%s5876 + $0x388] sm:$0xff]
      %s5919 = scalar_lea.vmem %s7, 1152
      %v5920 = vld [vmem:[%s5919] sm:$0xff]
      %v5921 = vld [vmem:[%s5919 + $0x8] sm:$0xff]
      %v5922 = vld [vmem:[%s5919 + $0x10] sm:$0xff]
      %v5923 = vld [vmem:[%s5919 + $0x18] sm:$0xff]
      %v5924 = vld [vmem:[%s5919 + $0x20] sm:$0xff]
      %v5925 = vld [vmem:[%s5919 + $0x28] sm:$0xff]
      %v5926 = vld [vmem:[%s5919 + $0x30] sm:$0xff]
      %v5927 = vld [vmem:[%s5919 + $0x38] sm:$0xff]
      %v5928 = vld [vmem:[%s5919 + $0x40] sm:$0xff]
      %v5929 = vld [vmem:[%s5919 + $0x48] sm:$0xff]
      %v5930 = vld [vmem:[%s5919 + $0x50] sm:$0xff]
      %v5931 = vld [vmem:[%s5919 + $0x58] sm:$0xff]
      %v5932 = vld [vmem:[%s5919 + $0x60] sm:$0xff]
      %v5933 = vld [vmem:[%s5919 + $0x68] sm:$0xff]
      %v5934 = vld [vmem:[%s5919 + $0x70] sm:$0xff]
      %v5935 = vld [vmem:[%s5919 + $0x78] sm:$0xff]
      %v5936 = vld [vmem:[%s5919 + $0x80] sm:$0xff]
      %v5937 = vld [vmem:[%s5919 + $0x88] sm:$0xff]
      %v5938 = vld [vmem:[%s5919 + $0x90] sm:$0xff]
      %v5939 = vld [vmem:[%s5919 + $0x98] sm:$0xff]
      %v5940 = vld [vmem:[%s5919 + $0xa0] sm:$0xff]
      %v5941 = vld [vmem:[%s5919 + $0xa8] sm:$0xff]
      %v5942 = vld [vmem:[%s5919 + $0xb0] sm:$0xff]
      %v5943 = vld [vmem:[%s5919 + $0xb8] sm:$0xff]
      %v5944 = vld [vmem:[%s5919 + $0xc0] sm:$0xff]
      %v5945 = vld [vmem:[%s5919 + $0xc8] sm:$0xff]
      %v5946 = vld [vmem:[%s5919 + $0xd0] sm:$0xff]
      %v5947 = vld [vmem:[%s5919 + $0xd8] sm:$0xff]
      %v5948 = vld [vmem:[%s5919 + $0xe0] sm:$0xff]
      %v5949 = vld [vmem:[%s5919 + $0xe8] sm:$0xff]
      %v5950 = vld [vmem:[%s5919 + $0xf0] sm:$0xff]
      %v5951 = vld [vmem:[%s5919 + $0xf8] sm:$0xff]
      %v5952 = vld [vmem:[%s5919 + $0x100] sm:$0xff]
      %v5953 = vld [vmem:[%s5919 + $0x108] sm:$0xff]
      %v5954 = vld [vmem:[%s5919 + $0x110] sm:$0xff]
      %v5955 = vld [vmem:[%s5919 + $0x118] sm:$0xff]
      %v5956 = vld [vmem:[%s5919 + $0x120] sm:$0xff]
      %v5957 = vld [vmem:[%s5919 + $0x128] sm:$0xff]
      %v5958 = vld [vmem:[%s5919 + $0x130] sm:$0xff]
      %v5959 = vld [vmem:[%s5919 + $0x138] sm:$0xff]
      %v5960 = vld [vmem:[%s5919 + $0x140] sm:$0xff]
      %v5961 = vld [vmem:[%s5919 + $0x148] sm:$0xff]
      %v5962 = vld [vmem:[%s5919 + $0x150] sm:$0xff]
      %v5963 = vld [vmem:[%s5919 + $0x158] sm:$0xff]
      %v5964 = vld [vmem:[%s5919 + $0x160] sm:$0xff]
      %v5965 = vld [vmem:[%s5919 + $0x168] sm:$0xff]
      %v5966 = vld [vmem:[%s5919 + $0x170] sm:$0xff]
      %v5967 = vld [vmem:[%s5919 + $0x178] sm:$0xff]
      %v6016 = vunpack.c.l.b16 %v5920
      %v6017 = vunpack.c.h.b16 %v5920
      %v6018 = vunpack.c.l.b16 %v5921
      %v6019 = vunpack.c.h.b16 %v5921
      %v6020 = vunpack.c.l.b16 %v5922
      %v6021 = vunpack.c.h.b16 %v5922
      %v6022 = vunpack.c.l.b16 %v5923
      %v6023 = vunpack.c.h.b16 %v5923
      %v6024 = vunpack.c.l.b16 %v5924
      %v6025 = vunpack.c.h.b16 %v5924
      %v6026 = vunpack.c.l.b16 %v5925
      %v6027 = vunpack.c.h.b16 %v5925
      %v6028 = vunpack.c.l.b16 %v5926
      %v6029 = vunpack.c.h.b16 %v5926
      %v6030 = vunpack.c.l.b16 %v5927
      %v6031 = vunpack.c.h.b16 %v5927
      %v6032 = vunpack.c.l.b16 %v5928
      %v6033 = vunpack.c.h.b16 %v5928
      %v6034 = vunpack.c.l.b16 %v5929
      %v6035 = vunpack.c.h.b16 %v5929
      %v6036 = vunpack.c.l.b16 %v5930
      %v6037 = vunpack.c.h.b16 %v5930
      %v6038 = vunpack.c.l.b16 %v5931
      %v6039 = vunpack.c.h.b16 %v5931
      %v6040 = vunpack.c.l.b16 %v5932
      %v6041 = vunpack.c.h.b16 %v5932
      %v6042 = vunpack.c.l.b16 %v5933
      %v6043 = vunpack.c.h.b16 %v5933
      %v6044 = vunpack.c.l.b16 %v5934
      %v6045 = vunpack.c.h.b16 %v5934
      %v6046 = vunpack.c.l.b16 %v5935
      %v6047 = vunpack.c.h.b16 %v5935
      %v6048 = vunpack.c.l.b16 %v5936
      %v6049 = vunpack.c.h.b16 %v5936
      %v6050 = vunpack.c.l.b16 %v5937
      %v6051 = vunpack.c.h.b16 %v5937
      %v6052 = vunpack.c.l.b16 %v5938
      %v6053 = vunpack.c.h.b16 %v5938
      %v6054 = vunpack.c.l.b16 %v5939
      %v6055 = vunpack.c.h.b16 %v5939
      %v6056 = vunpack.c.l.b16 %v5940
      %v6057 = vunpack.c.h.b16 %v5940
      %v6058 = vunpack.c.l.b16 %v5941
      %v6059 = vunpack.c.h.b16 %v5941
      %v6060 = vunpack.c.l.b16 %v5942
      %v6061 = vunpack.c.h.b16 %v5942
      %v6062 = vunpack.c.l.b16 %v5943
      %v6063 = vunpack.c.h.b16 %v5943
      %v6064 = vunpack.c.l.b16 %v5944
      %v6065 = vunpack.c.h.b16 %v5944
      %v6066 = vunpack.c.l.b16 %v5945
      %v6067 = vunpack.c.h.b16 %v5945
      %v6068 = vunpack.c.l.b16 %v5946
      %v6069 = vunpack.c.h.b16 %v5946
      %v6070 = vunpack.c.l.b16 %v5947
      %v6071 = vunpack.c.h.b16 %v5947
      %v6072 = vunpack.c.l.b16 %v5948
      %v6073 = vunpack.c.h.b16 %v5948
      %v6074 = vunpack.c.l.b16 %v5949
      %v6075 = vunpack.c.h.b16 %v5949
      %v6076 = vunpack.c.l.b16 %v5950
      %v6077 = vunpack.c.h.b16 %v5950
      %v6078 = vunpack.c.l.b16 %v5951
      %v6079 = vunpack.c.h.b16 %v5951
      %v6080 = vunpack.c.l.b16 %v5952
      %v6081 = vunpack.c.h.b16 %v5952
      %v6082 = vunpack.c.l.b16 %v5953
      %v6083 = vunpack.c.h.b16 %v5953
      %v6084 = vunpack.c.l.b16 %v5954
      %v6085 = vunpack.c.h.b16 %v5954
      %v6086 = vunpack.c.l.b16 %v5955
      %v6087 = vunpack.c.h.b16 %v5955
      %v6088 = vunpack.c.l.b16 %v5956
      %v6089 = vunpack.c.h.b16 %v5956
      %v6090 = vunpack.c.l.b16 %v5957
      %v6091 = vunpack.c.h.b16 %v5957
      %v6092 = vunpack.c.l.b16 %v5958
      %v6093 = vunpack.c.h.b16 %v5958
      %v6094 = vunpack.c.l.b16 %v5959
      %v6095 = vunpack.c.h.b16 %v5959
      %v6096 = vunpack.c.l.b16 %v5960
      %v6097 = vunpack.c.h.b16 %v5960
      %v6098 = vunpack.c.l.b16 %v5961
      %v6099 = vunpack.c.h.b16 %v5961
      %v6100 = vunpack.c.l.b16 %v5962
      %v6101 = vunpack.c.h.b16 %v5962
      %v6102 = vunpack.c.l.b16 %v5963
      %v6103 = vunpack.c.h.b16 %v5963
      %v6104 = vunpack.c.l.b16 %v5964
      %v6105 = vunpack.c.h.b16 %v5964
      %v6106 = vunpack.c.l.b16 %v5965
      %v6107 = vunpack.c.h.b16 %v5965
      %v6108 = vunpack.c.l.b16 %v5966
      %v6109 = vunpack.c.h.b16 %v5966
      %v6110 = vunpack.c.l.b16 %v5967
      %v6111 = vunpack.c.h.b16 %v5967
      %v6112 = vpack.c.b16 %v6018, %v6016
      %v6113 = vpack.c.b16 %v6019, %v6017
      %v6114 = vpack.c.b16 %v6022, %v6020
      %v6115 = vpack.c.b16 %v6023, %v6021
      %v6116 = vpack.c.b16 %v6026, %v6024
      %v6117 = vpack.c.b16 %v6027, %v6025
      %v6118 = vpack.c.b16 %v6030, %v6028
      %v6119 = vpack.c.b16 %v6031, %v6029
      %v6120 = vpack.c.b16 %v6034, %v6032
      %v6121 = vpack.c.b16 %v6035, %v6033
      %v6122 = vpack.c.b16 %v6038, %v6036
      %v6123 = vpack.c.b16 %v6039, %v6037
      %v6124 = vpack.c.b16 %v6042, %v6040
      %v6125 = vpack.c.b16 %v6043, %v6041
      %v6126 = vpack.c.b16 %v6046, %v6044
      %v6127 = vpack.c.b16 %v6047, %v6045
      %v6128 = vpack.c.b16 %v6050, %v6048
      %v6129 = vpack.c.b16 %v6051, %v6049
      %v6130 = vpack.c.b16 %v6054, %v6052
      %v6131 = vpack.c.b16 %v6055, %v6053
      %v6132 = vpack.c.b16 %v6058, %v6056
      %v6133 = vpack.c.b16 %v6059, %v6057
      %v6134 = vpack.c.b16 %v6062, %v6060
      %v6135 = vpack.c.b16 %v6063, %v6061
      %v6136 = vpack.c.b16 %v6066, %v6064
      %v6137 = vpack.c.b16 %v6067, %v6065
      %v6138 = vpack.c.b16 %v6070, %v6068
      %v6139 = vpack.c.b16 %v6071, %v6069
      %v6140 = vpack.c.b16 %v6074, %v6072
      %v6141 = vpack.c.b16 %v6075, %v6073
      %v6142 = vpack.c.b16 %v6078, %v6076
      %v6143 = vpack.c.b16 %v6079, %v6077
      %v6144 = vpack.c.b16 %v6082, %v6080
      %v6145 = vpack.c.b16 %v6083, %v6081
      %v6146 = vpack.c.b16 %v6086, %v6084
      %v6147 = vpack.c.b16 %v6087, %v6085
      %v6148 = vpack.c.b16 %v6090, %v6088
      %v6149 = vpack.c.b16 %v6091, %v6089
      %v6150 = vpack.c.b16 %v6094, %v6092
      %v6151 = vpack.c.b16 %v6095, %v6093
      %v6152 = vpack.c.b16 %v6098, %v6096
      %v6153 = vpack.c.b16 %v6099, %v6097
      %v6154 = vpack.c.b16 %v6102, %v6100
      %v6155 = vpack.c.b16 %v6103, %v6101
      %v6156 = vpack.c.b16 %v6106, %v6104
      %v6157 = vpack.c.b16 %v6107, %v6105
      %v6158 = vpack.c.b16 %v6110, %v6108
      %v6159 = vpack.c.b16 %v6111, %v6109
      %6208 = vmatprep.subr.bf16.mxu0 %v6113
      %6209 = vmatpush1.bf16.msra.mxu0 %v6112
      %6210 = vmatprep.subr.bf16.mxu0 %v6115
      %6211 = vmatpush1.bf16.msra.mxu0 %v6114
      %6212 = vmatprep.subr.bf16.mxu0 %v6117
      %6213 = vmatpush1.bf16.msra.mxu0 %v6116
      %6214 = vmatprep.subr.bf16.mxu0 %v6119
      %6215 = vmatpush1.bf16.msra.mxu0 %v6118
      %6216 = vmatprep.subr.bf16.mxu0 %v6121
      %6217 = vmatpush1.bf16.msra.mxu0 %v6120
      %6218 = vmatprep.subr.bf16.mxu0 %v6123
      %6219 = vmatpush1.bf16.msra.mxu0 %v6122
      %6220 = vmatprep.subr.bf16.mxu0 %v6125
      %6221 = vmatpush1.bf16.msra.mxu0 %v6124
      %6222 = vmatprep.subr.bf16.mxu0 %v6127
      %6223 = vmatpush1.bf16.msra.mxu0 %v6126
      %6224 = vmatprep.subr.bf16.mxu0 %v6129
      %6225 = vmatpush1.bf16.msra.mxu0 %v6128
      %6226 = vmatprep.subr.bf16.mxu0 %v6131
      %6227 = vmatpush1.bf16.msra.mxu0 %v6130
      %6228 = vmatprep.subr.bf16.mxu0 %v6133
      %6229 = vmatpush1.bf16.msra.mxu0 %v6132
      %6230 = vmatprep.subr.bf16.mxu0 %v6135
      %6231 = vmatpush1.bf16.msra.mxu0 %v6134
      %6232 = vmatprep.subr.bf16.mxu0 %v6137
      %6233 = vmatpush1.bf16.msra.mxu0 %v6136
      %6234 = vmatprep.subr.bf16.mxu0 %v6139
      %6235 = vmatpush1.bf16.msra.mxu0 %v6138
      %6236 = vmatprep.subr.bf16.mxu0 %v6141
      %6237 = vmatpush1.bf16.msra.mxu0 %v6140
      %6238 = vmatprep.subr.bf16.mxu0 %v6143
      %6239 = vmatpush1.bf16.msra.mxu0 %v6142
      %6240 = vmatprep.mubr.bf16.mxu0 %v5878
      %6241 = vmatmul.mubr.bf16.gmra.mrb[0].mxu0 %v5877
      %v6242 = vpop.f32.mrb[0].mxu0
      %v6243 = vadd.f32 0.0, %v6242
      %v6244 = vpop.f32.mrb[0].mxu0
      %v6245 = vadd.f32 0.0, %v6244
      %v6246 = vpop.f32.mrb[0].mxu0
      %v6247 = vadd.f32 0.0, %v6246
      %v6248 = vpop.f32.mrb[0].mxu0
      %v6249 = vadd.f32 0.0, %v6248
      %6250 = vmatprep.mubr.bf16.mxu0 %v5881
      %6251 = vmatmul.mubr.bf16.gmra.mrb[0].mxu0 %v5880
      %v6252 = vpop.f32.mrb[0].mxu0
      %v6253 = vadd.f32 0.0, %v6252
      %v6254 = vpop.f32.mrb[0].mxu0
      %v6255 = vadd.f32 0.0, %v6254
      %v6256 = vpop.f32.mrb[0].mxu0
      %v6257 = vadd.f32 0.0, %v6256
      %v6258 = vpop.f32.mrb[0].mxu0
      %v6259 = vadd.f32 0.0, %v6258
      %6260 = vmatprep.mubr.bf16.mxu0 %v5884
      %6261 = vmatmul.mubr.bf16.gmra.mrb[0].mxu0 %v5883
      %v6262 = vpop.f32.mrb[0].mxu0
      %v6263 = vadd.f32 0.0, %v6262
      %v6264 = vpop.f32.mrb[0].mxu0
      %v6265 = vadd.f32 0.0, %v6264
      %v6266 = vpop.f32.mrb[0].mxu0
      %v6267 = vadd.f32 0.0, %v6266
      %v6268 = vpop.f32.mrb[0].mxu0
      %v6269 = vadd.f32 0.0, %v6268
      %6270 = vmatprep.mubr.bf16.mxu0 %v5887
      %6271 = vmatmul.mubr.bf16.gmra.mrb[0].mxu0 %v5886
      %v6272 = vpop.f32.mrb[0].mxu0
      %v6273 = vadd.f32 0.0, %v6272
      %v6274 = vpop.f32.mrb[0].mxu0
      %v6275 = vadd.f32 0.0, %v6274
      %v6276 = vpop.f32.mrb[0].mxu0
      %v6277 = vadd.f32 0.0, %v6276
      %v6278 = vpop.f32.mrb[0].mxu0
      %v6279 = vadd.f32 0.0, %v6278
      %6280 = vmatprep.mubr.bf16.mxu0 %v5890
      %6281 = vmatmul.mubr.bf16.gmra.mrb[0].mxu0 %v5889
      %v6282 = vpop.f32.mrb[0].mxu0
      %v6283 = vadd.f32 0.0, %v6282
      %v6284 = vpop.f32.mrb[0].mxu0
      %v6285 = vadd.f32 0.0, %v6284
      %v6286 = vpop.f32.mrb[0].mxu0
      %v6287 = vadd.f32 0.0, %v6286
      %v6288 = vpop.f32.mrb[0].mxu0
      %v6289 = vadd.f32 0.0, %v6288
      %6290 = vmatprep.mubr.bf16.mxu0 %v5893
      %6291 = vmatmul.mubr.bf16.gmra.mrb[0].mxu0 %v5892
      %v6292 = vpop.f32.mrb[0].mxu0
      %v6293 = vadd.f32 0.0, %v6292
      %v6294 = vpop.f32.mrb[0].mxu0
      %v6295 = vadd.f32 0.0, %v6294
      %v6296 = vpop.f32.mrb[0].mxu0
      %v6297 = vadd.f32 0.0, %v6296
      %v6298 = vpop.f32.mrb[0].mxu0
      %v6299 = vadd.f32 0.0, %v6298
      %6300 = vmatprep.mubr.bf16.mxu0 %v5896
      %6301 = vmatmul.mubr.bf16.gmra.mrb[0].mxu0 %v5895
      %v6302 = vpop.f32.mrb[0].mxu0
      %v6303 = vadd.f32 0.0, %v6302
      %v6304 = vpop.f32.mrb[0].mxu0
      %v6305 = vadd.f32 0.0, %v6304
      %v6306 = vpop.f32.mrb[0].mxu0
      %v6307 = vadd.f32 0.0, %v6306
      %v6308 = vpop.f32.mrb[0].mxu0
      %v6309 = vadd.f32 0.0, %v6308
      %6310 = vmatprep.mubr.bf16.mxu0 %v5899
      %6311 = vmatmul.mubr.bf16.gmra.mrb[0].mxu0 %v5898
      %v6312 = vpop.f32.mrb[0].mxu0
      %v6313 = vadd.f32 0.0, %v6312
      %v6314 = vpop.f32.mrb[0].mxu0
      %v6315 = vadd.f32 0.0, %v6314
      %v6316 = vpop.f32.mrb[0].mxu0
      %v6317 = vadd.f32 0.0, %v6316
      %v6318 = vpop.f32.mrb[0].mxu0
      %v6319 = vadd.f32 0.0, %v6318
      %6320 = vmatprep.mubr.bf16.mxu0 %v5902
      %6321 = vmatmul.mubr.bf16.gmra.mrb[0].mxu0 %v5901
      %v6322 = vpop.f32.mrb[0].mxu0
      %v6323 = vadd.f32 0.0, %v6322
      %v6324 = vpop.f32.mrb[0].mxu0
      %v6325 = vadd.f32 0.0, %v6324
      %v6326 = vpop.f32.mrb[0].mxu0
      %v6327 = vadd.f32 0.0, %v6326
      %v6328 = vpop.f32.mrb[0].mxu0
      %v6329 = vadd.f32 0.0, %v6328
      %6330 = vmatprep.mubr.bf16.mxu0 %v5905
      %6331 = vmatmul.mubr.bf16.gmra.mrb[0].mxu0 %v5904
      %v6332 = vpop.f32.mrb[0].mxu0
      %v6333 = vadd.f32 0.0, %v6332
      %v6334 = vpop.f32.mrb[0].mxu0
      %v6335 = vadd.f32 0.0, %v6334
      %v6336 = vpop.f32.mrb[0].mxu0
      %v6337 = vadd.f32 0.0, %v6336
      %v6338 = vpop.f32.mrb[0].mxu0
      %v6339 = vadd.f32 0.0, %v6338
      %6340 = vmatprep.mubr.bf16.mxu0 %v5908
      %6341 = vmatmul.mubr.bf16.gmra.mrb[0].mxu0 %v5907
      %v6342 = vpop.f32.mrb[0].mxu0
      %v6343 = vadd.f32 0.0, %v6342
      %v6344 = vpop.f32.mrb[0].mxu0
      %v6345 = vadd.f32 0.0, %v6344
      %v6346 = vpop.f32.mrb[0].mxu0
      %v6347 = vadd.f32 0.0, %v6346
      %v6348 = vpop.f32.mrb[0].mxu0
      %v6349 = vadd.f32 0.0, %v6348
      %6350 = vmatprep.mubr.bf16.mxu0 %v5911
      %6351 = vmatmul.mubr.bf16.gmra.mrb[0].mxu0 %v5910
      %v6352 = vpop.f32.mrb[0].mxu0
      %v6353 = vadd.f32 0.0, %v6352
      %v6354 = vpop.f32.mrb[0].mxu0
      %v6355 = vadd.f32 0.0, %v6354
      %v6356 = vpop.f32.mrb[0].mxu0
      %v6357 = vadd.f32 0.0, %v6356
      %v6358 = vpop.f32.mrb[0].mxu0
      %v6359 = vadd.f32 0.0, %v6358
      %6360 = vmatprep.mubr.bf16.mxu0 %v5914
      %6361 = vmatmul.mubr.bf16.gmra.mrb[0].mxu0 %v5913
      %v6362 = vpop.f32.mrb[0].mxu0
      %v6363 = vpop.f32.mrb[0].mxu0
      %v6364 = vpop.f32.mrb[0].mxu0
      %v6365 = vpop.f32.mrb[0].mxu0
      %6366 = vmatprep.mubr.bf16.mxu0 %v5917
      %6367 = vmatmul.mubr.bf16.gmra.mrb[0].mxu0 %v5916
      %v6368 = vpop.f32.mrb[0].mxu0
      %v6369 = vpop.f32.mrb[0].mxu0
      %v6370 = vpop.f32.mrb[0].mxu0
      %v6371 = vpop.f32.mrb[0].mxu0
      %6372 = vdwg.mxu0
      %6373 = vmatprep.subr.bf16.mxu0 %v6145
      %6374 = vmatpush1.bf16.msra.mxu0 %v6144
      %6375 = vmatprep.subr.bf16.mxu0 %v6147
      %6376 = vmatpush1.bf16.msra.mxu0 %v6146
      %6377 = vmatprep.subr.bf16.mxu0 %v6149
      %6378 = vmatpush1.bf16.msra.mxu0 %v6148
      %6379 = vmatprep.subr.bf16.mxu0 %v6151
      %6380 = vmatpush1.bf16.msra.mxu0 %v6150
      %6381 = vmatprep.subr.bf16.mxu0 %v6153
      %6382 = vmatpush1.bf16.msra.mxu0 %v6152
      %6383 = vmatprep.subr.bf16.mxu0 %v6155
      %6384 = vmatpush1.bf16.msra.mxu0 %v6154
      %6385 = vmatprep.subr.bf16.mxu0 %v6157
      %6386 = vmatpush1.bf16.msra.mxu0 %v6156
      %6387 = vmatprep.subr.bf16.mxu0 %v6159
      %6388 = vmatpush1.bf16.msra.mxu0 %v6158
      %6389 = vmatprep.subr.bf16.mxu0 0
      %6390 = vmatpush1.bf16.msra.mxu0 0
      %6391 = vmatprep.subr.bf16.mxu0 0
      %6392 = vmatpush1.bf16.msra.mxu0 0
      %6393 = vmatprep.subr.bf16.mxu0 0
      %6394 = vmatpush1.bf16.msra.mxu0 0
      %6395 = vmatprep.subr.bf16.mxu0 0
      %6396 = vmatpush1.bf16.msra.mxu0 0
      %6397 = vmatprep.subr.bf16.mxu0 0
      %6398 = vmatpush1.bf16.msra.mxu0 0
      %6399 = vmatprep.subr.bf16.mxu0 0
      %6400 = vmatpush1.bf16.msra.mxu0 0
      %6401 = vmatprep.subr.bf16.mxu0 0
      %6402 = vmatpush1.bf16.msra.mxu0 0
      %6403 = vmatprep.subr.bf16.mxu0 0
      %6404 = vmatpush1.bf16.msra.mxu0 0
      %6405 = vmatprep.mubr.bf16.mxu0 0
      %6406 = vmatmul.mubr.bf16.gmra.mrb[0].mxu0 %v5879
      %v6407 = vpop.f32.mrb[0].mxu0
      %v6408 = vadd.f32 %v6243, %v6407
      %v6409 = vpop.f32.mrb[0].mxu0
      %v6410 = vadd.f32 %v6245, %v6409
      %v6411 = vpop.f32.mrb[0].mxu0
      %v6412 = vadd.f32 %v6247, %v6411
      %v6413 = vpop.f32.mrb[0].mxu0
      %v6414 = vadd.f32 %v6249, %v6413
      %6415 = vmatprep.mubr.bf16.mxu0 0
      %6416 = vmatmul.mubr.bf16.gmra.mrb[0].mxu0 %v5882
      %v6417 = vpop.f32.mrb[0].mxu0
      %v6418 = vadd.f32 %v6253, %v6417
      %v6419 = vpop.f32.mrb[0].mxu0
      %v6420 = vadd.f32 %v6255, %v6419
      %v6421 = vpop.f32.mrb[0].mxu0
      %v6422 = vadd.f32 %v6257, %v6421
      %v6423 = vpop.f32.mrb[0].mxu0
      %v6424 = vadd.f32 %v6259, %v6423
      %6425 = vmatprep.mubr.bf16.mxu0 0
      %6426 = vmatmul.mubr.bf16.gmra.mrb[0].mxu0 %v5885
      %v6427 = vpop.f32.mrb[0].mxu0
      %v6428 = vadd.f32 %v6263, %v6427
      %v6429 = vpop.f32.mrb[0].mxu0
      %v6430 = vadd.f32 %v6265, %v6429
      %v6431 = vpop.f32.mrb[0].mxu0
      %v6432 = vadd.f32 %v6267, %v6431
      %v6433 = vpop.f32.mrb[0].mxu0
      %v6434 = vadd.f32 %v6269, %v6433
      %6435 = vmatprep.mubr.bf16.mxu0 0
      %6436 = vmatmul.mubr.bf16.gmra.mrb[0].mxu0 %v5888
      %v6437 = vpop.f32.mrb[0].mxu0
      %v6438 = vadd.f32 %v6273, %v6437
      %v6439 = vpop.f32.mrb[0].mxu0
      %v6440 = vadd.f32 %v6275, %v6439
      %v6441 = vpop.f32.mrb[0].mxu0
      %v6442 = vadd.f32 %v6277, %v6441
      %v6443 = vpop.f32.mrb[0].mxu0
      %v6444 = vadd.f32 %v6279, %v6443
      %6445 = vmatprep.mubr.bf16.mxu0 0
      %6446 = vmatmul.mubr.bf16.gmra.mrb[0].mxu0 %v5891
      %v6447 = vpop.f32.mrb[0].mxu0
      %v6448 = vadd.f32 %v6283, %v6447
      %v6449 = vpop.f32.mrb[0].mxu0
      %v6450 = vadd.f32 %v6285, %v6449
      %v6451 = vpop.f32.mrb[0].mxu0
      %v6452 = vadd.f32 %v6287, %v6451
      %v6453 = vpop.f32.mrb[0].mxu0
      %v6454 = vadd.f32 %v6289, %v6453
      %6455 = vmatprep.mubr.bf16.mxu0 0
      %6456 = vmatmul.mubr.bf16.gmra.mrb[0].mxu0 %v5894
      %v6457 = vpop.f32.mrb[0].mxu0
      %v6458 = vadd.f32 %v6293, %v6457
      %v6459 = vpop.f32.mrb[0].mxu0
      %v6460 = vadd.f32 %v6295, %v6459
      %v6461 = vpop.f32.mrb[0].mxu0
      %v6462 = vadd.f32 %v6297, %v6461
      %v6463 = vpop.f32.mrb[0].mxu0
      %v6464 = vadd.f32 %v6299, %v6463
      %6465 = vmatprep.mubr.bf16.mxu0 0
      %6466 = vmatmul.mubr.bf16.gmra.mrb[0].mxu0 %v5897
      %v6467 = vpop.f32.mrb[0].mxu0
      %v6468 = vadd.f32 %v6303, %v6467
      %v6469 = vpop.f32.mrb[0].mxu0
      %v6470 = vadd.f32 %v6305, %v6469
      %v6471 = vpop.f32.mrb[0].mxu0
      %v6472 = vadd.f32 %v6307, %v6471
      %v6473 = vpop.f32.mrb[0].mxu0
      %v6474 = vadd.f32 %v6309, %v6473
      %6475 = vmatprep.mubr.bf16.mxu0 0
      %6476 = vmatmul.mubr.bf16.gmra.mrb[0].mxu0 %v5900
      %v6477 = vpop.f32.mrb[0].mxu0
      %v6478 = vadd.f32 %v6313, %v6477
      %v6479 = vpop.f32.mrb[0].mxu0
      %v6480 = vadd.f32 %v6315, %v6479
      %v6481 = vpop.f32.mrb[0].mxu0
      %v6482 = vadd.f32 %v6317, %v6481
      %v6483 = vpop.f32.mrb[0].mxu0
      %v6484 = vadd.f32 %v6319, %v6483
      %6485 = vmatprep.mubr.bf16.mxu0 0
      %6486 = vmatmul.mubr.bf16.gmra.mrb[0].mxu0 %v5903
      %v6487 = vpop.f32.mrb[0].mxu0
      %v6488 = vadd.f32 %v6323, %v6487
      %v6489 = vpop.f32.mrb[0].mxu0
      %v6490 = vadd.f32 %v6325, %v6489
      %v6491 = vpop.f32.mrb[0].mxu0
      %v6492 = vadd.f32 %v6327, %v6491
      %v6493 = vpop.f32.mrb[0].mxu0
      %v6494 = vadd.f32 %v6329, %v6493
      %6495 = vmatprep.mubr.bf16.mxu0 0
      %6496 = vmatmul.mubr.bf16.gmra.mrb[0].mxu0 %v5906
      %v6497 = vpop.f32.mrb[0].mxu0
      %v6498 = vadd.f32 %v6333, %v6497
      %v6499 = vpop.f32.mrb[0].mxu0
      %v6500 = vadd.f32 %v6335, %v6499
      %v6501 = vpop.f32.mrb[0].mxu0
      %v6502 = vadd.f32 %v6337, %v6501
      %v6503 = vpop.f32.mrb[0].mxu0
      %v6504 = vadd.f32 %v6339, %v6503
      %6505 = vmatprep.mubr.bf16.mxu0 0
      %6506 = vmatmul.mubr.bf16.gmra.mrb[0].mxu0 %v5909
      %v6507 = vpop.f32.mrb[0].mxu0
      %v6508 = vadd.f32 %v6343, %v6507
      %v6509 = vpop.f32.mrb[0].mxu0
      %v6510 = vadd.f32 %v6345, %v6509
      %v6511 = vpop.f32.mrb[0].mxu0
      %v6512 = vadd.f32 %v6347, %v6511
      %v6513 = vpop.f32.mrb[0].mxu0
      %v6514 = vadd.f32 %v6349, %v6513
      %6515 = vmatprep.mubr.bf16.mxu0 0
      %6516 = vmatmul.mubr.bf16.gmra.mrb[0].mxu0 %v5912
      %v6517 = vpop.f32.mrb[0].mxu0
      %v6518 = vadd.f32 %v6353, %v6517
      %v6519 = vpop.f32.mrb[0].mxu0
      %v6520 = vadd.f32 %v6355, %v6519
      %v6521 = vpop.f32.mrb[0].mxu0
      %v6522 = vadd.f32 %v6357, %v6521
      %v6523 = vpop.f32.mrb[0].mxu0
      %v6524 = vadd.f32 %v6359, %v6523
      %6525 = vmatprep.mubr.bf16.mxu0 0
      %6526 = vmatmul.mubr.bf16.gmra.mrb[0].mxu0 %v5915
      %v6527 = vpop.f32.mrb[0].mxu0
      %v6528 = vpop.f32.mrb[0].mxu0
      %v6529 = vpop.f32.mrb[0].mxu0
      %v6530 = vpop.f32.mrb[0].mxu0
      %6531 = vmatprep.mubr.bf16.mxu0 0
      %6532 = vmatmul.mubr.bf16.gmra.mrb[0].mxu0 %v5918
      %v6533 = vpop.f32.mrb[0].mxu0
      %v6534 = vpop.f32.mrb[0].mxu0
      %v6535 = vpop.f32.mrb[0].mxu0
      %v6536 = vpop.f32.mrb[0].mxu0
      %6537 = vdwg.mxu0
      %v6538 = vadd.f32 %v5828, %v6408
      %v6539 = vadd.f32 %v5829, %v6410
      %v6540 = vadd.f32 %v5830, %v6412
      %v6541 = vadd.f32 %v5831, %v6414
      %v6542 = vadd.f32 %v5832, %v6418
      %v6543 = vadd.f32 %v5833, %v6420
      %v6544 = vadd.f32 %v5834, %v6422
      %v6545 = vadd.f32 %v5835, %v6424
      %v6546 = vadd.f32 %v5836, %v6428
      %v6547 = vadd.f32 %v5837, %v6430
      %v6548 = vadd.f32 %v5838, %v6432
      %v6549 = vadd.f32 %v5839, %v6434
      %v6550 = vadd.f32 %v5840, %v6438
      %v6551 = vadd.f32 %v5841, %v6440
      %v6552 = vadd.f32 %v5842, %v6442
      %v6553 = vadd.f32 %v5843, %v6444
      %v6554 = vadd.f32 %v5844, %v6448
      %v6555 = vadd.f32 %v5845, %v6450
      %v6556 = vadd.f32 %v5846, %v6452
      %v6557 = vadd.f32 %v5847, %v6454
      %v6558 = vadd.f32 %v5848, %v6458
      %v6559 = vadd.f32 %v5849, %v6460
      %v6560 = vadd.f32 %v5850, %v6462
      %v6561 = vadd.f32 %v5851, %v6464
      %v6562 = vadd.f32 %v5852, %v6468
      %v6563 = vadd.f32 %v5853, %v6470
      %v6564 = vadd.f32 %v5854, %v6472
      %v6565 = vadd.f32 %v5855, %v6474
      %v6566 = vadd.f32 %v5856, %v6478
      %v6567 = vadd.f32 %v5857, %v6480
      %v6568 = vadd.f32 %v5858, %v6482
      %v6569 = vadd.f32 %v5859, %v6484
      %v6570 = vadd.f32 %v5860, %v6488
      %v6571 = vadd.f32 %v5861, %v6490
      %v6572 = vadd.f32 %v5862, %v6492
      %v6573 = vadd.f32 %v5863, %v6494
      %v6574 = vadd.f32 %v5864, %v6498
      %v6575 = vadd.f32 %v5865, %v6500
      %v6576 = vadd.f32 %v5866, %v6502
      %v6577 = vadd.f32 %v5867, %v6504
      %v6578 = vadd.f32 %v5868, %v6508
      %v6579 = vadd.f32 %v5869, %v6510
      %v6580 = vadd.f32 %v5870, %v6512
      %v6581 = vadd.f32 %v5871, %v6514
      %v6582 = vadd.f32 %v5872, %v6518
      %v6583 = vadd.f32 %v5873, %v6520
      %v6584 = vadd.f32 %v5874, %v6522
      %v6585 = vadd.f32 %v5875, %v6524
      %s6586 = scalar_lea.vmem [#allocation3], 384
      %v6587 = vld [vmem:[%s6586] sm:$0xff]
      %v6588 = vld [vmem:[%s6586 + $0x8] sm:$0xff]
      %v6589 = vld [vmem:[%s6586 + $0x10] sm:$0xff]
      %v6590 = vld [vmem:[%s6586 + $0x18] sm:$0xff]
      %v6591 = vld [vmem:[%s6586 + $0x20] sm:$0xff]
      %v6592 = vld [vmem:[%s6586 + $0x28] sm:$0xff]
      %v6593 = vld [vmem:[%s6586 + $0x90] sm:$0xff]
      %v6594 = vld [vmem:[%s6586 + $0x98] sm:$0xff]
      %v6595 = vld [vmem:[%s6586 + $0xa0] sm:$0xff]
      %v6596 = vld [vmem:[%s6586 + $0xa8] sm:$0xff]
      %v6597 = vld [vmem:[%s6586 + $0xb0] sm:$0xff]
      %v6598 = vld [vmem:[%s6586 + $0xb8] sm:$0xff]
      %v6599 = vld [vmem:[%s6586 + $0x120] sm:$0xff]
      %v6600 = vld [vmem:[%s6586 + $0x128] sm:$0xff]
      %v6601 = vld [vmem:[%s6586 + $0x130] sm:$0xff]
      %v6602 = vld [vmem:[%s6586 + $0x138] sm:$0xff]
      %v6603 = vld [vmem:[%s6586 + $0x140] sm:$0xff]
      %v6604 = vld [vmem:[%s6586 + $0x148] sm:$0xff]
      %v6605 = vld [vmem:[%s6586 + $0x1b0] sm:$0xff]
      %v6606 = vld [vmem:[%s6586 + $0x1b8] sm:$0xff]
      %v6607 = vld [vmem:[%s6586 + $0x1c0] sm:$0xff]
      %v6608 = vld [vmem:[%s6586 + $0x1c8] sm:$0xff]
      %v6609 = vld [vmem:[%s6586 + $0x1d0] sm:$0xff]
      %v6610 = vld [vmem:[%s6586 + $0x1d8] sm:$0xff]
      %v6611 = vld [vmem:[%s6586 + $0x240] sm:$0xff]
      %v6612 = vld [vmem:[%s6586 + $0x248] sm:$0xff]
      %v6613 = vld [vmem:[%s6586 + $0x250] sm:$0xff]
      %v6614 = vld [vmem:[%s6586 + $0x258] sm:$0xff]
      %v6615 = vld [vmem:[%s6586 + $0x260] sm:$0xff]
      %v6616 = vld [vmem:[%s6586 + $0x268] sm:$0xff]
      %v6617 = vld [vmem:[%s6586 + $0x2d0] sm:$0xff]
      %v6618 = vld [vmem:[%s6586 + $0x2d8] sm:$0xff]
      %v6619 = vld [vmem:[%s6586 + $0x2e0] sm:$0xff]
      %v6620 = vld [vmem:[%s6586 + $0x2e8] sm:$0xff]
      %v6621 = vld [vmem:[%s6586 + $0x2f0] sm:$0xff]
      %v6622 = vld [vmem:[%s6586 + $0x2f8] sm:$0xff]
      %v6623 = vld [vmem:[%s6586 + $0x360] sm:$0xff]
      %v6624 = vld [vmem:[%s6586 + $0x368] sm:$0xff]
      %v6625 = vld [vmem:[%s6586 + $0x370] sm:$0xff]
      %v6626 = vld [vmem:[%s6586 + $0x378] sm:$0xff]
      %v6627 = vld [vmem:[%s6586 + $0x380] sm:$0xff]
      %v6628 = vld [vmem:[%s6586 + $0x388] sm:$0xff]
      %s6629 = scalar_lea.vmem %s7, 1536
      %v6630 = vld [vmem:[%s6629] sm:$0xff]
      %v6631 = vld [vmem:[%s6629 + $0x8] sm:$0xff]
      %v6632 = vld [vmem:[%s6629 + $0x10] sm:$0xff]
      %v6633 = vld [vmem:[%s6629 + $0x18] sm:$0xff]
      %v6634 = vld [vmem:[%s6629 + $0x20] sm:$0xff]
      %v6635 = vld [vmem:[%s6629 + $0x28] sm:$0xff]
      %v6636 = vld [vmem:[%s6629 + $0x30] sm:$0xff]
      %v6637 = vld [vmem:[%s6629 + $0x38] sm:$0xff]
      %v6638 = vld [vmem:[%s6629 + $0x40] sm:$0xff]
      %v6639 = vld [vmem:[%s6629 + $0x48] sm:$0xff]
      %v6640 = vld [vmem:[%s6629 + $0x50] sm:$0xff]
      %v6641 = vld [vmem:[%s6629 + $0x58] sm:$0xff]
      %v6642 = vld [vmem:[%s6629 + $0x60] sm:$0xff]
      %v6643 = vld [vmem:[%s6629 + $0x68] sm:$0xff]
      %v6644 = vld [vmem:[%s6629 + $0x70] sm:$0xff]
      %v6645 = vld [vmem:[%s6629 + $0x78] sm:$0xff]
      %v6646 = vld [vmem:[%s6629 + $0x80] sm:$0xff]
      %v6647 = vld [vmem:[%s6629 + $0x88] sm:$0xff]
      %v6648 = vld [vmem:[%s6629 + $0x90] sm:$0xff]
      %v6649 = vld [vmem:[%s6629 + $0x98] sm:$0xff]
      %v6650 = vld [vmem:[%s6629 + $0xa0] sm:$0xff]
      %v6651 = vld [vmem:[%s6629 + $0xa8] sm:$0xff]
      %v6652 = vld [vmem:[%s6629 + $0xb0] sm:$0xff]
      %v6653 = vld [vmem:[%s6629 + $0xb8] sm:$0xff]
      %v6654 = vld [vmem:[%s6629 + $0xc0] sm:$0xff]
      %v6655 = vld [vmem:[%s6629 + $0xc8] sm:$0xff]
      %v6656 = vld [vmem:[%s6629 + $0xd0] sm:$0xff]
      %v6657 = vld [vmem:[%s6629 + $0xd8] sm:$0xff]
      %v6658 = vld [vmem:[%s6629 + $0xe0] sm:$0xff]
      %v6659 = vld [vmem:[%s6629 + $0xe8] sm:$0xff]
      %v6660 = vld [vmem:[%s6629 + $0xf0] sm:$0xff]
      %v6661 = vld [vmem:[%s6629 + $0xf8] sm:$0xff]
      %v6662 = vld [vmem:[%s6629 + $0x100] sm:$0xff]
      %v6663 = vld [vmem:[%s6629 + $0x108] sm:$0xff]
      %v6664 = vld [vmem:[%s6629 + $0x110] sm:$0xff]
      %v6665 = vld [vmem:[%s6629 + $0x118] sm:$0xff]
      %v6666 = vld [vmem:[%s6629 + $0x120] sm:$0xff]
      %v6667 = vld [vmem:[%s6629 + $0x128] sm:$0xff]
      %v6668 = vld [vmem:[%s6629 + $0x130] sm:$0xff]
      %v6669 = vld [vmem:[%s6629 + $0x138] sm:$0xff]
      %v6670 = vld [vmem:[%s6629 + $0x140] sm:$0xff]
      %v6671 = vld [vmem:[%s6629 + $0x148] sm:$0xff]
      %v6672 = vld [vmem:[%s6629 + $0x150] sm:$0xff]
      %v6673 = vld [vmem:[%s6629 + $0x158] sm:$0xff]
      %v6674 = vld [vmem:[%s6629 + $0x160] sm:$0xff]
      %v6675 = vld [vmem:[%s6629 + $0x168] sm:$0xff]
      %v6676 = vld [vmem:[%s6629 + $0x170] sm:$0xff]
      %v6677 = vld [vmem:[%s6629 + $0x178] sm:$0xff]
      %v6726 = vunpack.c.l.b16 %v6630
      %v6727 = vunpack.c.h.b16 %v6630
      %v6728 = vunpack.c.l.b16 %v6631
      %v6729 = vunpack.c.h.b16 %v6631
      %v6730 = vunpack.c.l.b16 %v6632
      %v6731 = vunpack.c.h.b16 %v6632
      %v6732 = vunpack.c.l.b16 %v6633
      %v6733 = vunpack.c.h.b16 %v6633
      %v6734 = vunpack.c.l.b16 %v6634
      %v6735 = vunpack.c.h.b16 %v6634
      %v6736 = vunpack.c.l.b16 %v6635
      %v6737 = vunpack.c.h.b16 %v6635
      %v6738 = vunpack.c.l.b16 %v6636
      %v6739 = vunpack.c.h.b16 %v6636
      %v6740 = vunpack.c.l.b16 %v6637
      %v6741 = vunpack.c.h.b16 %v6637
      %v6742 = vunpack.c.l.b16 %v6638
      %v6743 = vunpack.c.h.b16 %v6638
      %v6744 = vunpack.c.l.b16 %v6639
      %v6745 = vunpack.c.h.b16 %v6639
      %v6746 = vunpack.c.l.b16 %v6640
      %v6747 = vunpack.c.h.b16 %v6640
      %v6748 = vunpack.c.l.b16 %v6641
      %v6749 = vunpack.c.h.b16 %v6641
      %v6750 = vunpack.c.l.b16 %v6642
      %v6751 = vunpack.c.h.b16 %v6642
      %v6752 = vunpack.c.l.b16 %v6643
      %v6753 = vunpack.c.h.b16 %v6643
      %v6754 = vunpack.c.l.b16 %v6644
      %v6755 = vunpack.c.h.b16 %v6644
      %v6756 = vunpack.c.l.b16 %v6645
      %v6757 = vunpack.c.h.b16 %v6645
      %v6758 = vunpack.c.l.b16 %v6646
      %v6759 = vunpack.c.h.b16 %v6646
      %v6760 = vunpack.c.l.b16 %v6647
      %v6761 = vunpack.c.h.b16 %v6647
      %v6762 = vunpack.c.l.b16 %v6648
      %v6763 = vunpack.c.h.b16 %v6648
      %v6764 = vunpack.c.l.b16 %v6649
      %v6765 = vunpack.c.h.b16 %v6649
      %v6766 = vunpack.c.l.b16 %v6650
      %v6767 = vunpack.c.h.b16 %v6650
      %v6768 = vunpack.c.l.b16 %v6651
      %v6769 = vunpack.c.h.b16 %v6651
      %v6770 = vunpack.c.l.b16 %v6652
      %v6771 = vunpack.c.h.b16 %v6652
      %v6772 = vunpack.c.l.b16 %v6653
      %v6773 = vunpack.c.h.b16 %v6653
      %v6774 = vunpack.c.l.b16 %v6654
      %v6775 = vunpack.c.h.b16 %v6654
      %v6776 = vunpack.c.l.b16 %v6655
      %v6777 = vunpack.c.h.b16 %v6655
      %v6778 = vunpack.c.l.b16 %v6656
      %v6779 = vunpack.c.h.b16 %v6656
      %v6780 = vunpack.c.l.b16 %v6657
      %v6781 = vunpack.c.h.b16 %v6657
      %v6782 = vunpack.c.l.b16 %v6658
      %v6783 = vunpack.c.h.b16 %v6658
      %v6784 = vunpack.c.l.b16 %v6659
      %v6785 = vunpack.c.h.b16 %v6659
      %v6786 = vunpack.c.l.b16 %v6660
      %v6787 = vunpack.c.h.b16 %v6660
      %v6788 = vunpack.c.l.b16 %v6661
      %v6789 = vunpack.c.h.b16 %v6661
      %v6790 = vunpack.c.l.b16 %v6662
      %v6791 = vunpack.c.h.b16 %v6662
      %v6792 = vunpack.c.l.b16 %v6663
      %v6793 = vunpack.c.h.b16 %v6663
      %v6794 = vunpack.c.l.b16 %v6664
      %v6795 = vunpack.c.h.b16 %v6664
      %v6796 = vunpack.c.l.b16 %v6665
      %v6797 = vunpack.c.h.b16 %v6665
      %v6798 = vunpack.c.l.b16 %v6666
      %v6799 = vunpack.c.h.b16 %v6666
      %v6800 = vunpack.c.l.b16 %v6667
      %v6801 = vunpack.c.h.b16 %v6667
      %v6802 = vunpack.c.l.b16 %v6668
      %v6803 = vunpack.c.h.b16 %v6668
      %v6804 = vunpack.c.l.b16 %v6669
      %v6805 = vunpack.c.h.b16 %v6669
      %v6806 = vunpack.c.l.b16 %v6670
      %v6807 = vunpack.c.h.b16 %v6670
      %v6808 = vunpack.c.l.b16 %v6671
      %v6809 = vunpack.c.h.b16 %v6671
      %v6810 = vunpack.c.l.b16 %v6672
      %v6811 = vunpack.c.h.b16 %v6672
      %v6812 = vunpack.c.l.b16 %v6673
      %v6813 = vunpack.c.h.b16 %v6673
      %v6814 = vunpack.c.l.b16 %v6674
      %v6815 = vunpack.c.h.b16 %v6674
      %v6816 = vunpack.c.l.b16 %v6675
      %v6817 = vunpack.c.h.b16 %v6675
      %v6818 = vunpack.c.l.b16 %v6676
      %v6819 = vunpack.c.h.b16 %v6676
      %v6820 = vunpack.c.l.b16 %v6677
      %v6821 = vunpack.c.h.b16 %v6677
      %v6822 = vpack.c.b16 %v6728, %v6726
      %v6823 = vpack.c.b16 %v6729, %v6727
      %v6824 = vpack.c.b16 %v6732, %v6730
      %v6825 = vpack.c.b16 %v6733, %v6731
      %v6826 = vpack.c.b16 %v6736, %v6734
      %v6827 = vpack.c.b16 %v6737, %v6735
      %v6828 = vpack.c.b16 %v6740, %v6738
      %v6829 = vpack.c.b16 %v6741, %v6739
      %v6830 = vpack.c.b16 %v6744, %v6742
      %v6831 = vpack.c.b16 %v6745, %v6743
      %v6832 = vpack.c.b16 %v6748, %v6746
      %v6833 = vpack.c.b16 %v6749, %v6747
      %v6834 = vpack.c.b16 %v6752, %v6750
      %v6835 = vpack.c.b16 %v6753, %v6751
      %v6836 = vpack.c.b16 %v6756, %v6754
      %v6837 = vpack.c.b16 %v6757, %v6755
      %v6838 = vpack.c.b16 %v6760, %v6758
      %v6839 = vpack.c.b16 %v6761, %v6759
      %v6840 = vpack.c.b16 %v6764, %v6762
      %v6841 = vpack.c.b16 %v6765, %v6763
      %v6842 = vpack.c.b16 %v6768, %v6766
      %v6843 = vpack.c.b16 %v6769, %v6767
      %v6844 = vpack.c.b16 %v6772, %v6770
      %v6845 = vpack.c.b16 %v6773, %v6771
      %v6846 = vpack.c.b16 %v6776, %v6774
      %v6847 = vpack.c.b16 %v6777, %v6775
      %v6848 = vpack.c.b16 %v6780, %v6778
      %v6849 = vpack.c.b16 %v6781, %v6779
      %v6850 = vpack.c.b16 %v6784, %v6782
      %v6851 = vpack.c.b16 %v6785, %v6783
      %v6852 = vpack.c.b16 %v6788, %v6786
      %v6853 = vpack.c.b16 %v6789, %v6787
      %v6854 = vpack.c.b16 %v6792, %v6790
      %v6855 = vpack.c.b16 %v6793, %v6791
      %v6856 = vpack.c.b16 %v6796, %v6794
      %v6857 = vpack.c.b16 %v6797, %v6795
      %v6858 = vpack.c.b16 %v6800, %v6798
      %v6859 = vpack.c.b16 %v6801, %v6799
      %v6860 = vpack.c.b16 %v6804, %v6802
      %v6861 = vpack.c.b16 %v6805, %v6803
      %v6862 = vpack.c.b16 %v6808, %v6806
      %v6863 = vpack.c.b16 %v6809, %v6807
      %v6864 = vpack.c.b16 %v6812, %v6810
      %v6865 = vpack.c.b16 %v6813, %v6811
      %v6866 = vpack.c.b16 %v6816, %v6814
      %v6867 = vpack.c.b16 %v6817, %v6815
      %v6868 = vpack.c.b16 %v6820, %v6818
      %v6869 = vpack.c.b16 %v6821, %v6819
      %6918 = vmatprep.subr.bf16.mxu0 %v6823
      %6919 = vmatpush1.bf16.msra.mxu0 %v6822
      %6920 = vmatprep.subr.bf16.mxu0 %v6825
      %6921 = vmatpush1.bf16.msra.mxu0 %v6824
      %6922 = vmatprep.subr.bf16.mxu0 %v6827
      %6923 = vmatpush1.bf16.msra.mxu0 %v6826
      %6924 = vmatprep.subr.bf16.mxu0 %v6829
      %6925 = vmatpush1.bf16.msra.mxu0 %v6828
      %6926 = vmatprep.subr.bf16.mxu0 %v6831
      %6927 = vmatpush1.bf16.msra.mxu0 %v6830
      %6928 = vmatprep.subr.bf16.mxu0 %v6833
      %6929 = vmatpush1.bf16.msra.mxu0 %v6832
      %6930 = vmatprep.subr.bf16.mxu0 %v6835
      %6931 = vmatpush1.bf16.msra.mxu0 %v6834
      %6932 = vmatprep.subr.bf16.mxu0 %v6837
      %6933 = vmatpush1.bf16.msra.mxu0 %v6836
      %6934 = vmatprep.subr.bf16.mxu0 %v6839
      %6935 = vmatpush1.bf16.msra.mxu0 %v6838
      %6936 = vmatprep.subr.bf16.mxu0 %v6841
      %6937 = vmatpush1.bf16.msra.mxu0 %v6840
      %6938 = vmatprep.subr.bf16.mxu0 %v6843
      %6939 = vmatpush1.bf16.msra.mxu0 %v6842
      %6940 = vmatprep.subr.bf16.mxu0 %v6845
      %6941 = vmatpush1.bf16.msra.mxu0 %v6844
      %6942 = vmatprep.subr.bf16.mxu0 %v6847
      %6943 = vmatpush1.bf16.msra.mxu0 %v6846
      %6944 = vmatprep.subr.bf16.mxu0 %v6849
      %6945 = vmatpush1.bf16.msra.mxu0 %v6848
      %6946 = vmatprep.subr.bf16.mxu0 %v6851
      %6947 = vmatpush1.bf16.msra.mxu0 %v6850
      %6948 = vmatprep.subr.bf16.mxu0 %v6853
      %6949 = vmatpush1.bf16.msra.mxu0 %v6852
      %6950 = vmatprep.mubr.bf16.mxu0 %v6588
      %6951 = vmatmul.mubr.bf16.gmra.mrb[0].mxu0 %v6587
      %v6952 = vpop.f32.mrb[0].mxu0
      %v6953 = vadd.f32 0.0, %v6952
      %v6954 = vpop.f32.mrb[0].mxu0
      %v6955 = vadd.f32 0.0, %v6954
      %v6956 = vpop.f32.mrb[0].mxu0
      %v6957 = vadd.f32 0.0, %v6956
      %v6958 = vpop.f32.mrb[0].mxu0
      %v6959 = vadd.f32 0.0, %v6958
      %6960 = vmatprep.mubr.bf16.mxu0 %v6591
      %6961 = vmatmul.mubr.bf16.gmra.mrb[0].mxu0 %v6590
      %v6962 = vpop.f32.mrb[0].mxu0
      %v6963 = vadd.f32 0.0, %v6962
      %v6964 = vpop.f32.mrb[0].mxu0
      %v6965 = vadd.f32 0.0, %v6964
      %v6966 = vpop.f32.mrb[0].mxu0
      %v6967 = vadd.f32 0.0, %v6966
      %v6968 = vpop.f32.mrb[0].mxu0
      %v6969 = vadd.f32 0.0, %v6968
      %6970 = vmatprep.mubr.bf16.mxu0 %v6594
      %6971 = vmatmul.mubr.bf16.gmra.mrb[0].mxu0 %v6593
      %v6972 = vpop.f32.mrb[0].mxu0
      %v6973 = vadd.f32 0.0, %v6972
      %v6974 = vpop.f32.mrb[0].mxu0
      %v6975 = vadd.f32 0.0, %v6974
      %v6976 = vpop.f32.mrb[0].mxu0
      %v6977 = vadd.f32 0.0, %v6976
      %v6978 = vpop.f32.mrb[0].mxu0
      %v6979 = vadd.f32 0.0, %v6978
      %6980 = vmatprep.mubr.bf16.mxu0 %v6597
      %6981 = vmatmul.mubr.bf16.gmra.mrb[0].mxu0 %v6596
      %v6982 = vpop.f32.mrb[0].mxu0
      %v6983 = vadd.f32 0.0, %v6982
      %v6984 = vpop.f32.mrb[0].mxu0
      %v6985 = vadd.f32 0.0, %v6984
      %v6986 = vpop.f32.mrb[0].mxu0
      %v6987 = vadd.f32 0.0, %v6986
      %v6988 = vpop.f32.mrb[0].mxu0
      %v6989 = vadd.f32 0.0, %v6988
      %6990 = vmatprep.mubr.bf16.mxu0 %v6600
      %6991 = vmatmul.mubr.bf16.gmra.mrb[0].mxu0 %v6599
      %v6992 = vpop.f32.mrb[0].mxu0
      %v6993 = vadd.f32 0.0, %v6992
      %v6994 = vpop.f32.mrb[0].mxu0
      %v6995 = vadd.f32 0.0, %v6994
      %v6996 = vpop.f32.mrb[0].mxu0
      %v6997 = vadd.f32 0.0, %v6996
      %v6998 = vpop.f32.mrb[0].mxu0
      %v6999 = vadd.f32 0.0, %v6998
      %7000 = vmatprep.mubr.bf16.mxu0 %v6603
      %7001 = vmatmul.mubr.bf16.gmra.mrb[0].mxu0 %v6602
      %v7002 = vpop.f32.mrb[0].mxu0
      %v7003 = vadd.f32 0.0, %v7002
      %v7004 = vpop.f32.mrb[0].mxu0
      %v7005 = vadd.f32 0.0, %v7004
      %v7006 = vpop.f32.mrb[0].mxu0
      %v7007 = vadd.f32 0.0, %v7006
      %v7008 = vpop.f32.mrb[0].mxu0
      %v7009 = vadd.f32 0.0, %v7008
      %7010 = vmatprep.mubr.bf16.mxu0 %v6606
      %7011 = vmatmul.mubr.bf16.gmra.mrb[0].mxu0 %v6605
      %v7012 = vpop.f32.mrb[0].mxu0
      %v7013 = vadd.f32 0.0, %v7012
      %v7014 = vpop.f32.mrb[0].mxu0
      %v7015 = vadd.f32 0.0, %v7014
      %v7016 = vpop.f32.mrb[0].mxu0
      %v7017 = vadd.f32 0.0, %v7016
      %v7018 = vpop.f32.mrb[0].mxu0
      %v7019 = vadd.f32 0.0, %v7018
      %7020 = vmatprep.mubr.bf16.mxu0 %v6609
      %7021 = vmatmul.mubr.bf16.gmra.mrb[0].mxu0 %v6608
      %v7022 = vpop.f32.mrb[0].mxu0
      %v7023 = vadd.f32 0.0, %v7022
      %v7024 = vpop.f32.mrb[0].mxu0
      %v7025 = vadd.f32 0.0, %v7024
      %v7026 = vpop.f32.mrb[0].mxu0
      %v7027 = vadd.f32 0.0, %v7026
      %v7028 = vpop.f32.mrb[0].mxu0
      %v7029 = vadd.f32 0.0, %v7028
      %7030 = vmatprep.mubr.bf16.mxu0 %v6612
      %7031 = vmatmul.mubr.bf16.gmra.mrb[0].mxu0 %v6611
      %v7032 = vpop.f32.mrb[0].mxu0
      %v7033 = vadd.f32 0.0, %v7032
      %v7034 = vpop.f32.mrb[0].mxu0
      %v7035 = vadd.f32 0.0, %v7034
      %v7036 = vpop.f32.mrb[0].mxu0
      %v7037 = vadd.f32 0.0, %v7036
      %v7038 = vpop.f32.mrb[0].mxu0
      %v7039 = vadd.f32 0.0, %v7038
      %7040 = vmatprep.mubr.bf16.mxu0 %v6615
      %7041 = vmatmul.mubr.bf16.gmra.mrb[0].mxu0 %v6614
      %v7042 = vpop.f32.mrb[0].mxu0
      %v7043 = vadd.f32 0.0, %v7042
      %v7044 = vpop.f32.mrb[0].mxu0
      %v7045 = vadd.f32 0.0, %v7044
      %v7046 = vpop.f32.mrb[0].mxu0
      %v7047 = vadd.f32 0.0, %v7046
      %v7048 = vpop.f32.mrb[0].mxu0
      %v7049 = vadd.f32 0.0, %v7048
      %7050 = vmatprep.mubr.bf16.mxu0 %v6618
      %7051 = vmatmul.mubr.bf16.gmra.mrb[0].mxu0 %v6617
      %v7052 = vpop.f32.mrb[0].mxu0
      %v7053 = vadd.f32 0.0, %v7052
      %v7054 = vpop.f32.mrb[0].mxu0
      %v7055 = vadd.f32 0.0, %v7054
      %v7056 = vpop.f32.mrb[0].mxu0
      %v7057 = vadd.f32 0.0, %v7056
      %v7058 = vpop.f32.mrb[0].mxu0
      %v7059 = vadd.f32 0.0, %v7058
      %7060 = vmatprep.mubr.bf16.mxu0 %v6621
      %7061 = vmatmul.mubr.bf16.gmra.mrb[0].mxu0 %v6620
      %v7062 = vpop.f32.mrb[0].mxu0
      %v7063 = vadd.f32 0.0, %v7062
      %v7064 = vpop.f32.mrb[0].mxu0
      %v7065 = vadd.f32 0.0, %v7064
      %v7066 = vpop.f32.mrb[0].mxu0
      %v7067 = vadd.f32 0.0, %v7066
      %v7068 = vpop.f32.mrb[0].mxu0
      %v7069 = vadd.f32 0.0, %v7068
      %7070 = vmatprep.mubr.bf16.mxu0 %v6624
      %7071 = vmatmul.mubr.bf16.gmra.mrb[0].mxu0 %v6623
      %v7072 = vpop.f32.mrb[0].mxu0
      %v7073 = vpop.f32.mrb[0].mxu0
      %v7074 = vpop.f32.mrb[0].mxu0
      %v7075 = vpop.f32.mrb[0].mxu0
      %7076 = vmatprep.mubr.bf16.mxu0 %v6627
      %7077 = vmatmul.mubr.bf16.gmra.mrb[0].mxu0 %v6626
      %v7078 = vpop.f32.mrb[0].mxu0
      %v7079 = vpop.f32.mrb[0].mxu0
      %v7080 = vpop.f32.mrb[0].mxu0
      %v7081 = vpop.f32.mrb[0].mxu0
      %7082 = vdwg.mxu0
      %7083 = vmatprep.subr.bf16.mxu0 %v6855
      %7084 = vmatpush1.bf16.msra.mxu0 %v6854
      %7085 = vmatprep.subr.bf16.mxu0 %v6857
      %7086 = vmatpush1.bf16.msra.mxu0 %v6856
      %7087 = vmatprep.subr.bf16.mxu0 %v6859
      %7088 = vmatpush1.bf16.msra.mxu0 %v6858
      %7089 = vmatprep.subr.bf16.mxu0 %v6861
      %7090 = vmatpush1.bf16.msra.mxu0 %v6860
      %7091 = vmatprep.subr.bf16.mxu0 %v6863
      %7092 = vmatpush1.bf16.msra.mxu0 %v6862
      %7093 = vmatprep.subr.bf16.mxu0 %v6865
      %7094 = vmatpush1.bf16.msra.mxu0 %v6864
      %7095 = vmatprep.subr.bf16.mxu0 %v6867
      %7096 = vmatpush1.bf16.msra.mxu0 %v6866
      %7097 = vmatprep.subr.bf16.mxu0 %v6869
      %7098 = vmatpush1.bf16.msra.mxu0 %v6868
      %7099 = vmatprep.subr.bf16.mxu0 0
      %7100 = vmatpush1.bf16.msra.mxu0 0
      %7101 = vmatprep.subr.bf16.mxu0 0
      %7102 = vmatpush1.bf16.msra.mxu0 0
      %7103 = vmatprep.subr.bf16.mxu0 0
      %7104 = vmatpush1.bf16.msra.mxu0 0
      %7105 = vmatprep.subr.bf16.mxu0 0
      %7106 = vmatpush1.bf16.msra.mxu0 0
      %7107 = vmatprep.subr.bf16.mxu0 0
      %7108 = vmatpush1.bf16.msra.mxu0 0
      %7109 = vmatprep.subr.bf16.mxu0 0
      %7110 = vmatpush1.bf16.msra.mxu0 0
      %7111 = vmatprep.subr.bf16.mxu0 0
      %7112 = vmatpush1.bf16.msra.mxu0 0
      %7113 = vmatprep.subr.bf16.mxu0 0
      %7114 = vmatpush1.bf16.msra.mxu0 0
      %7115 = vmatprep.mubr.bf16.mxu0 0
      %7116 = vmatmul.mubr.bf16.gmra.mrb[0].mxu0 %v6589
      %v7117 = vpop.f32.mrb[0].mxu0
      %v7118 = vadd.f32 %v6953, %v7117
      %v7119 = vpop.f32.mrb[0].mxu0
      %v7120 = vadd.f32 %v6955, %v7119
      %v7121 = vpop.f32.mrb[0].mxu0
      %v7122 = vadd.f32 %v6957, %v7121
      %v7123 = vpop.f32.mrb[0].mxu0
      %v7124 = vadd.f32 %v6959, %v7123
      %7125 = vmatprep.mubr.bf16.mxu0 0
      %7126 = vmatmul.mubr.bf16.gmra.mrb[0].mxu0 %v6592
      %v7127 = vpop.f32.mrb[0].mxu0
      %v7128 = vadd.f32 %v6963, %v7127
      %v7129 = vpop.f32.mrb[0].mxu0
      %v7130 = vadd.f32 %v6965, %v7129
      %v7131 = vpop.f32.mrb[0].mxu0
      %v7132 = vadd.f32 %v6967, %v7131
      %v7133 = vpop.f32.mrb[0].mxu0
      %v7134 = vadd.f32 %v6969, %v7133
      %7135 = vmatprep.mubr.bf16.mxu0 0
      %7136 = vmatmul.mubr.bf16.gmra.mrb[0].mxu0 %v6595
      %v7137 = vpop.f32.mrb[0].mxu0
      %v7138 = vadd.f32 %v6973, %v7137
      %v7139 = vpop.f32.mrb[0].mxu0
      %v7140 = vadd.f32 %v6975, %v7139
      %v7141 = vpop.f32.mrb[0].mxu0
      %v7142 = vadd.f32 %v6977, %v7141
      %v7143 = vpop.f32.mrb[0].mxu0
      %v7144 = vadd.f32 %v6979, %v7143
      %7145 = vmatprep.mubr.bf16.mxu0 0
      %7146 = vmatmul.mubr.bf16.gmra.mrb[0].mxu0 %v6598
      %v7147 = vpop.f32.mrb[0].mxu0
      %v7148 = vadd.f32 %v6983, %v7147
      %v7149 = vpop.f32.mrb[0].mxu0
      %v7150 = vadd.f32 %v6985, %v7149
      %v7151 = vpop.f32.mrb[0].mxu0
      %v7152 = vadd.f32 %v6987, %v7151
      %v7153 = vpop.f32.mrb[0].mxu0
      %v7154 = vadd.f32 %v6989, %v7153
      %7155 = vmatprep.mubr.bf16.mxu0 0
      %7156 = vmatmul.mubr.bf16.gmra.mrb[0].mxu0 %v6601
      %v7157 = vpop.f32.mrb[0].mxu0
      %v7158 = vadd.f32 %v6993, %v7157
      %v7159 = vpop.f32.mrb[0].mxu0
      %v7160 = vadd.f32 %v6995, %v7159
      %v7161 = vpop.f32.mrb[0].mxu0
      %v7162 = vadd.f32 %v6997, %v7161
      %v7163 = vpop.f32.mrb[0].mxu0
      %v7164 = vadd.f32 %v6999, %v7163
      %7165 = vmatprep.mubr.bf16.mxu0 0
      %7166 = vmatmul.mubr.bf16.gmra.mrb[0].mxu0 %v6604
      %v7167 = vpop.f32.mrb[0].mxu0
      %v7168 = vadd.f32 %v7003, %v7167
      %v7169 = vpop.f32.mrb[0].mxu0
      %v7170 = vadd.f32 %v7005, %v7169
      %v7171 = vpop.f32.mrb[0].mxu0
      %v7172 = vadd.f32 %v7007, %v7171
      %v7173 = vpop.f32.mrb[0].mxu0
      %v7174 = vadd.f32 %v7009, %v7173
      %7175 = vmatprep.mubr.bf16.mxu0 0
      %7176 = vmatmul.mubr.bf16.gmra.mrb[0].mxu0 %v6607
      %v7177 = vpop.f32.mrb[0].mxu0
      %v7178 = vadd.f32 %v7013, %v7177
      %v7179 = vpop.f32.mrb[0].mxu0
      %v7180 = vadd.f32 %v7015, %v7179
      %v7181 = vpop.f32.mrb[0].mxu0
      %v7182 = vadd.f32 %v7017, %v7181
      %v7183 = vpop.f32.mrb[0].mxu0
      %v7184 = vadd.f32 %v7019, %v7183
      %7185 = vmatprep.mubr.bf16.mxu0 0
      %7186 = vmatmul.mubr.bf16.gmra.mrb[0].mxu0 %v6610
      %v7187 = vpop.f32.mrb[0].mxu0
      %v7188 = vadd.f32 %v7023, %v7187
      %v7189 = vpop.f32.mrb[0].mxu0
      %v7190 = vadd.f32 %v7025, %v7189
      %v7191 = vpop.f32.mrb[0].mxu0
      %v7192 = vadd.f32 %v7027, %v7191
      %v7193 = vpop.f32.mrb[0].mxu0
      %v7194 = vadd.f32 %v7029, %v7193
      %7195 = vmatprep.mubr.bf16.mxu0 0
      %7196 = vmatmul.mubr.bf16.gmra.mrb[0].mxu0 %v6613
      %v7197 = vpop.f32.mrb[0].mxu0
      %v7198 = vadd.f32 %v7033, %v7197
      %v7199 = vpop.f32.mrb[0].mxu0
      %v7200 = vadd.f32 %v7035, %v7199
      %v7201 = vpop.f32.mrb[0].mxu0
      %v7202 = vadd.f32 %v7037, %v7201
      %v7203 = vpop.f32.mrb[0].mxu0
      %v7204 = vadd.f32 %v7039, %v7203
      %7205 = vmatprep.mubr.bf16.mxu0 0
      %7206 = vmatmul.mubr.bf16.gmra.mrb[0].mxu0 %v6616
      %v7207 = vpop.f32.mrb[0].mxu0
      %v7208 = vadd.f32 %v7043, %v7207
      %v7209 = vpop.f32.mrb[0].mxu0
      %v7210 = vadd.f32 %v7045, %v7209
      %v7211 = vpop.f32.mrb[0].mxu0
      %v7212 = vadd.f32 %v7047, %v7211
      %v7213 = vpop.f32.mrb[0].mxu0
      %v7214 = vadd.f32 %v7049, %v7213
      %7215 = vmatprep.mubr.bf16.mxu0 0
      %7216 = vmatmul.mubr.bf16.gmra.mrb[0].mxu0 %v6619
      %v7217 = vpop.f32.mrb[0].mxu0
      %v7218 = vadd.f32 %v7053, %v7217
      %v7219 = vpop.f32.mrb[0].mxu0
      %v7220 = vadd.f32 %v7055, %v7219
      %v7221 = vpop.f32.mrb[0].mxu0
      %v7222 = vadd.f32 %v7057, %v7221
      %v7223 = vpop.f32.mrb[0].mxu0
      %v7224 = vadd.f32 %v7059, %v7223
      %7225 = vmatprep.mubr.bf16.mxu0 0
      %7226 = vmatmul.mubr.bf16.gmra.mrb[0].mxu0 %v6622
      %v7227 = vpop.f32.mrb[0].mxu0
      %v7228 = vadd.f32 %v7063, %v7227
      %v7229 = vpop.f32.mrb[0].mxu0
      %v7230 = vadd.f32 %v7065, %v7229
      %v7231 = vpop.f32.mrb[0].mxu0
      %v7232 = vadd.f32 %v7067, %v7231
      %v7233 = vpop.f32.mrb[0].mxu0
      %v7234 = vadd.f32 %v7069, %v7233
      %7235 = vmatprep.mubr.bf16.mxu0 0
      %7236 = vmatmul.mubr.bf16.gmra.mrb[0].mxu0 %v6625
      %v7237 = vpop.f32.mrb[0].mxu0
      %v7238 = vpop.f32.mrb[0].mxu0
      %v7239 = vpop.f32.mrb[0].mxu0
      %v7240 = vpop.f32.mrb[0].mxu0
      %7241 = vmatprep.mubr.bf16.mxu0 0
      %7242 = vmatmul.mubr.bf16.gmra.mrb[0].mxu0 %v6628
      %v7243 = vpop.f32.mrb[0].mxu0
      %v7244 = vpop.f32.mrb[0].mxu0
      %v7245 = vpop.f32.mrb[0].mxu0
      %v7246 = vpop.f32.mrb[0].mxu0
      %7247 = vdwg.mxu0
      %v7248 = vadd.f32 %v6538, %v7118
      %v7249 = vadd.f32 %v6539, %v7120
      %v7250 = vadd.f32 %v6540, %v7122
      %v7251 = vadd.f32 %v6541, %v7124
      %v7252 = vadd.f32 %v6542, %v7128
      %v7253 = vadd.f32 %v6543, %v7130
      %v7254 = vadd.f32 %v6544, %v7132
      %v7255 = vadd.f32 %v6545, %v7134
      %v7256 = vadd.f32 %v6546, %v7138
      %v7257 = vadd.f32 %v6547, %v7140
      %v7258 = vadd.f32 %v6548, %v7142
      %v7259 = vadd.f32 %v6549, %v7144
      %v7260 = vadd.f32 %v6550, %v7148
      %v7261 = vadd.f32 %v6551, %v7150
      %v7262 = vadd.f32 %v6552, %v7152
      %v7263 = vadd.f32 %v6553, %v7154
      %v7264 = vadd.f32 %v6554, %v7158
      %v7265 = vadd.f32 %v6555, %v7160
      %v7266 = vadd.f32 %v6556, %v7162
      %v7267 = vadd.f32 %v6557, %v7164
      %v7268 = vadd.f32 %v6558, %v7168
      %v7269 = vadd.f32 %v6559, %v7170
      %v7270 = vadd.f32 %v6560, %v7172
      %v7271 = vadd.f32 %v6561, %v7174
      %v7272 = vadd.f32 %v6562, %v7178
      %v7273 = vadd.f32 %v6563, %v7180
      %v7274 = vadd.f32 %v6564, %v7182
      %v7275 = vadd.f32 %v6565, %v7184
      %v7276 = vadd.f32 %v6566, %v7188
      %v7277 = vadd.f32 %v6567, %v7190
      %v7278 = vadd.f32 %v6568, %v7192
      %v7279 = vadd.f32 %v6569, %v7194
      %v7280 = vadd.f32 %v6570, %v7198
      %v7281 = vadd.f32 %v6571, %v7200
      %v7282 = vadd.f32 %v6572, %v7202
      %v7283 = vadd.f32 %v6573, %v7204
      %v7284 = vadd.f32 %v6574, %v7208
      %v7285 = vadd.f32 %v6575, %v7210
      %v7286 = vadd.f32 %v6576, %v7212
      %v7287 = vadd.f32 %v6577, %v7214
      %v7288 = vadd.f32 %v6578, %v7218
      %v7289 = vadd.f32 %v6579, %v7220
      %v7290 = vadd.f32 %v6580, %v7222
      %v7291 = vadd.f32 %v6581, %v7224
      %v7292 = vadd.f32 %v6582, %v7228
      %v7293 = vadd.f32 %v6583, %v7230
      %v7294 = vadd.f32 %v6584, %v7232
      %v7295 = vadd.f32 %v6585, %v7234
      %v7296 = vld [vmem:[%s8] sm:$0x3]
      %v7298 = vlaneseq
      %v7299 = vshrl.u32 %v7298, 7
      %v7300 = vsub.s32 0, %v7299
      %v7301 = vrot.slane %v7296, %v7300
      %v7302 = vlaneseq
      %v7303 = vshrl.u32 %v7302, 7
      %v7304 = vsub.s32 1, %v7303
      %v7305 = vrot.slane %v7296, %v7304
      %v7308 = vmul.f32 %v7248, %v7301
      %v7309 = vmul.f32 %v7249, %v7305
      %v7310 = vmul.f32 %v7250, %v7301
      %v7311 = vmul.f32 %v7251, %v7305
      %v7312 = vmul.f32 %v7252, %v7301
      %v7313 = vmul.f32 %v7253, %v7305
      %v7314 = vmul.f32 %v7254, %v7301
      %v7315 = vmul.f32 %v7255, %v7305
      %v7316 = vmul.f32 %v7256, %v7301
      %v7317 = vmul.f32 %v7257, %v7305
      %v7318 = vmul.f32 %v7258, %v7301
      %v7319 = vmul.f32 %v7259, %v7305
      %v7320 = vmul.f32 %v7260, %v7301
      %v7321 = vmul.f32 %v7261, %v7305
      %v7322 = vmul.f32 %v7262, %v7301
      %v7323 = vmul.f32 %v7263, %v7305
      %v7324 = vmul.f32 %v7264, %v7301
      %v7325 = vmul.f32 %v7265, %v7305
      %v7326 = vmul.f32 %v7266, %v7301
      %v7327 = vmul.f32 %v7267, %v7305
      %v7328 = vmul.f32 %v7268, %v7301
      %v7329 = vmul.f32 %v7269, %v7305
      %v7330 = vmul.f32 %v7270, %v7301
      %v7331 = vmul.f32 %v7271, %v7305
      %v7332 = vmul.f32 %v7272, %v7301
      %v7333 = vmul.f32 %v7273, %v7305
      %v7334 = vmul.f32 %v7274, %v7301
      %v7335 = vmul.f32 %v7275, %v7305
      %v7336 = vmul.f32 %v7276, %v7301
      %v7337 = vmul.f32 %v7277, %v7305
      %v7338 = vmul.f32 %v7278, %v7301
      %v7339 = vmul.f32 %v7279, %v7305
      %v7340 = vmul.f32 %v7280, %v7301
      %v7341 = vmul.f32 %v7281, %v7305
      %v7342 = vmul.f32 %v7282, %v7301
      %v7343 = vmul.f32 %v7283, %v7305
      %v7344 = vmul.f32 %v7284, %v7301
      %v7345 = vmul.f32 %v7285, %v7305
      %v7346 = vmul.f32 %v7286, %v7301
      %v7347 = vmul.f32 %v7287, %v7305
      %v7348 = vmul.f32 %v7288, %v7301
      %v7349 = vmul.f32 %v7289, %v7305
      %v7350 = vmul.f32 %v7290, %v7301
      %v7351 = vmul.f32 %v7291, %v7305
      %v7352 = vmul.f32 %v7292, %v7301
      %v7353 = vmul.f32 %v7293, %v7305
      %v7354 = vmul.f32 %v7294, %v7301
      %v7355 = vmul.f32 %v7295, %v7305
      %v7356 = vld [vmem:[%s9] sm:$0x3]
      %v7358 = vlaneseq
      %v7359 = vshrl.u32 %v7358, 7
      %v7360 = vsub.s32 0, %v7359
      %v7361 = vrot.slane %v7356, %v7360
      %v7362 = vlaneseq
      %v7363 = vshrl.u32 %v7362, 7
      %v7364 = vsub.s32 1, %v7363
      %v7365 = vrot.slane %v7356, %v7364
      %v7368 = vadd.f32 %v7308, %v7361
      %v7369 = vadd.f32 %v7309, %v7365
      %v7370 = vadd.f32 %v7310, %v7361
      %v7371 = vadd.f32 %v7311, %v7365
      %v7372 = vadd.f32 %v7312, %v7361
      %v7373 = vadd.f32 %v7313, %v7365
      %v7374 = vadd.f32 %v7314, %v7361
      %v7375 = vadd.f32 %v7315, %v7365
      %v7376 = vadd.f32 %v7316, %v7361
      %v7377 = vadd.f32 %v7317, %v7365
      %v7378 = vadd.f32 %v7318, %v7361
      %v7379 = vadd.f32 %v7319, %v7365
      %v7380 = vadd.f32 %v7320, %v7361
      %v7381 = vadd.f32 %v7321, %v7365
      %v7382 = vadd.f32 %v7322, %v7361
      %v7383 = vadd.f32 %v7323, %v7365
      %v7384 = vadd.f32 %v7324, %v7361
      %v7385 = vadd.f32 %v7325, %v7365
      %v7386 = vadd.f32 %v7326, %v7361
      %v7387 = vadd.f32 %v7327, %v7365
      %v7388 = vadd.f32 %v7328, %v7361
      %v7389 = vadd.f32 %v7329, %v7365
      %v7390 = vadd.f32 %v7330, %v7361
      %v7391 = vadd.f32 %v7331, %v7365
      %v7392 = vadd.f32 %v7332, %v7361
      %v7393 = vadd.f32 %v7333, %v7365
      %v7394 = vadd.f32 %v7334, %v7361
      %v7395 = vadd.f32 %v7335, %v7365
      %v7396 = vadd.f32 %v7336, %v7361
      %v7397 = vadd.f32 %v7337, %v7365
      %v7398 = vadd.f32 %v7338, %v7361
      %v7399 = vadd.f32 %v7339, %v7365
      %v7400 = vadd.f32 %v7340, %v7361
      %v7401 = vadd.f32 %v7341, %v7365
      %v7402 = vadd.f32 %v7342, %v7361
      %v7403 = vadd.f32 %v7343, %v7365
      %v7404 = vadd.f32 %v7344, %v7361
      %v7405 = vadd.f32 %v7345, %v7365
      %v7406 = vadd.f32 %v7346, %v7361
      %v7407 = vadd.f32 %v7347, %v7365
      %v7408 = vadd.f32 %v7348, %v7361
      %v7409 = vadd.f32 %v7349, %v7365
      %v7410 = vadd.f32 %v7350, %v7361
      %v7411 = vadd.f32 %v7351, %v7365
      %v7412 = vadd.f32 %v7352, %v7361
      %v7413 = vadd.f32 %v7353, %v7365
      %v7414 = vadd.f32 %v7354, %v7361
      %v7415 = vadd.f32 %v7355, %v7365
      %v7416 = vmul.f32 %v7368, 0.01
      %v7417 = vmul.f32 %v7369, 0.01
      %v7418 = vmul.f32 %v7370, 0.01
      %v7419 = vmul.f32 %v7371, 0.01
      %v7420 = vmul.f32 %v7372, 0.01
      %v7421 = vmul.f32 %v7373, 0.01
      %v7422 = vmul.f32 %v7374, 0.01
      %v7423 = vmul.f32 %v7375, 0.01
      %v7424 = vmul.f32 %v7376, 0.01
      %v7425 = vmul.f32 %v7377, 0.01
      %v7426 = vmul.f32 %v7378, 0.01
      %v7427 = vmul.f32 %v7379, 0.01
      %v7428 = vmul.f32 %v7380, 0.01
      %v7429 = vmul.f32 %v7381, 0.01
      %v7430 = vmul.f32 %v7382, 0.01
      %v7431 = vmul.f32 %v7383, 0.01
      %v7432 = vmul.f32 %v7384, 0.01
      %v7433 = vmul.f32 %v7385, 0.01
      %v7434 = vmul.f32 %v7386, 0.01
      %v7435 = vmul.f32 %v7387, 0.01
      %v7436 = vmul.f32 %v7388, 0.01
      %v7437 = vmul.f32 %v7389, 0.01
      %v7438 = vmul.f32 %v7390, 0.01
      %v7439 = vmul.f32 %v7391, 0.01
      %v7440 = vmul.f32 %v7392, 0.01
      %v7441 = vmul.f32 %v7393, 0.01
      %v7442 = vmul.f32 %v7394, 0.01
      %v7443 = vmul.f32 %v7395, 0.01
      %v7444 = vmul.f32 %v7396, 0.01
      %v7445 = vmul.f32 %v7397, 0.01
      %v7446 = vmul.f32 %v7398, 0.01
      %v7447 = vmul.f32 %v7399, 0.01
      %v7448 = vmul.f32 %v7400, 0.01
      %v7449 = vmul.f32 %v7401, 0.01
      %v7450 = vmul.f32 %v7402, 0.01
      %v7451 = vmul.f32 %v7403, 0.01
      %v7452 = vmul.f32 %v7404, 0.01
      %v7453 = vmul.f32 %v7405, 0.01
      %v7454 = vmul.f32 %v7406, 0.01
      %v7455 = vmul.f32 %v7407, 0.01
      %v7456 = vmul.f32 %v7408, 0.01
      %v7457 = vmul.f32 %v7409, 0.01
      %v7458 = vmul.f32 %v7410, 0.01
      %v7459 = vmul.f32 %v7411, 0.01
      %v7460 = vmul.f32 %v7412, 0.01
      %v7461 = vmul.f32 %v7413, 0.01
      %v7462 = vmul.f32 %v7414, 0.01
      %v7463 = vmul.f32 %v7415, 0.01
      %v7464 = vmax.f32 %v7368, %v7416
      %v7465 = vmax.f32 %v7369, %v7417
      %v7466 = vmax.f32 %v7370, %v7418
      %v7467 = vmax.f32 %v7371, %v7419
      %v7468 = vmax.f32 %v7372, %v7420
      %v7469 = vmax.f32 %v7373, %v7421
      %v7470 = vmax.f32 %v7374, %v7422
      %v7471 = vmax.f32 %v7375, %v7423
      %v7472 = vmax.f32 %v7376, %v7424
      %v7473 = vmax.f32 %v7377, %v7425
      %v7474 = vmax.f32 %v7378, %v7426
      %v7475 = vmax.f32 %v7379, %v7427
      %v7476 = vmax.f32 %v7380, %v7428
      %v7477 = vmax.f32 %v7381, %v7429
      %v7478 = vmax.f32 %v7382, %v7430
      %v7479 = vmax.f32 %v7383, %v7431
      %v7480 = vmax.f32 %v7384, %v7432
      %v7481 = vmax.f32 %v7385, %v7433
      %v7482 = vmax.f32 %v7386, %v7434
      %v7483 = vmax.f32 %v7387, %v7435
      %v7484 = vmax.f32 %v7388, %v7436
      %v7485 = vmax.f32 %v7389, %v7437
      %v7486 = vmax.f32 %v7390, %v7438
      %v7487 = vmax.f32 %v7391, %v7439
      %v7488 = vmax.f32 %v7392, %v7440
      %v7489 = vmax.f32 %v7393, %v7441
      %v7490 = vmax.f32 %v7394, %v7442
      %v7491 = vmax.f32 %v7395, %v7443
      %v7492 = vmax.f32 %v7396, %v7444
      %v7493 = vmax.f32 %v7397, %v7445
      %v7494 = vmax.f32 %v7398, %v7446
      %v7495 = vmax.f32 %v7399, %v7447
      %v7496 = vmax.f32 %v7400, %v7448
      %v7497 = vmax.f32 %v7401, %v7449
      %v7498 = vmax.f32 %v7402, %v7450
      %v7499 = vmax.f32 %v7403, %v7451
      %v7500 = vmax.f32 %v7404, %v7452
      %v7501 = vmax.f32 %v7405, %v7453
      %v7502 = vmax.f32 %v7406, %v7454
      %v7503 = vmax.f32 %v7407, %v7455
      %v7504 = vmax.f32 %v7408, %v7456
      %v7505 = vmax.f32 %v7409, %v7457
      %v7506 = vmax.f32 %v7410, %v7458
      %v7507 = vmax.f32 %v7411, %v7459
      %v7508 = vmax.f32 %v7412, %v7460
      %v7509 = vmax.f32 %v7413, %v7461
      %v7510 = vmax.f32 %v7414, %v7462
      %v7511 = vmax.f32 %v7415, %v7463
      %v7512 = vmax.f32 %v7464, %v7472
      %v7513 = vmax.f32 %v7465, %v7473
      %v7514 = vmax.f32 %v7466, %v7474
      %v7515 = vmax.f32 %v7467, %v7475
      %v7516 = vmax.f32 %v7468, %v7476
      %v7517 = vmax.f32 %v7469, %v7477
      %v7518 = vmax.f32 %v7470, %v7478
      %v7519 = vmax.f32 %v7471, %v7479
      %v7520 = vmax.f32 %v7480, %v7488
      %v7521 = vmax.f32 %v7481, %v7489
      %v7522 = vmax.f32 %v7482, %v7490
      %v7523 = vmax.f32 %v7483, %v7491
      %v7524 = vmax.f32 %v7484, %v7492
      %v7525 = vmax.f32 %v7485, %v7493
      %v7526 = vmax.f32 %v7486, %v7494
      %v7527 = vmax.f32 %v7487, %v7495
      %v7528 = vmax.f32 %v7496, %v7504
      %v7529 = vmax.f32 %v7497, %v7505
      %v7530 = vmax.f32 %v7498, %v7506
      %v7531 = vmax.f32 %v7499, %v7507
      %v7532 = vmax.f32 %v7500, %v7508
      %v7533 = vmax.f32 %v7501, %v7509
      %v7534 = vmax.f32 %v7502, %v7510
      %v7535 = vmax.f32 %v7503, %v7511
      %v7536 = vld [vmem:[%s10] sm:$0xff]
      %v7537 = vld [vmem:[%s10 + $0x8] sm:$0xff]
      %v7538 = vld [vmem:[%s10 + $0x10] sm:$0xff]
      %v7539 = vld [vmem:[%s10 + $0x18] sm:$0xff]
      %v7540 = vld [vmem:[%s10 + $0x20] sm:$0xff]
      %v7541 = vld [vmem:[%s10 + $0x28] sm:$0xff]
      %v7542 = vld [vmem:[%s10 + $0x30] sm:$0xff]
      %v7543 = vld [vmem:[%s10 + $0x38] sm:$0xff]
      %v7544 = vld [vmem:[%s10 + $0x40] sm:$0xff]
      %v7545 = vld [vmem:[%s10 + $0x48] sm:$0xff]
      %v7546 = vld [vmem:[%s10 + $0x50] sm:$0xff]
      %v7547 = vld [vmem:[%s10 + $0x58] sm:$0xff]
      %v7548 = vld [vmem:[%s10 + $0x60] sm:$0xff]
      %v7549 = vld [vmem:[%s10 + $0x68] sm:$0xff]
      %v7550 = vld [vmem:[%s10 + $0x70] sm:$0xff]
      %v7551 = vld [vmem:[%s10 + $0x78] sm:$0xff]
      %v7552 = vld [vmem:[%s10 + $0x80] sm:$0xff]
      %v7553 = vld [vmem:[%s10 + $0x88] sm:$0xff]
      %v7554 = vld [vmem:[%s10 + $0x90] sm:$0xff]
      %v7555 = vld [vmem:[%s10 + $0x98] sm:$0xff]
      %v7556 = vld [vmem:[%s10 + $0xa0] sm:$0xff]
      %v7557 = vld [vmem:[%s10 + $0xa8] sm:$0xff]
      %v7558 = vld [vmem:[%s10 + $0xb0] sm:$0xff]
      %v7559 = vld [vmem:[%s10 + $0xb8] sm:$0xff]
      %v7560 = vunpack.c.l.bf16 %v7536
      %v7561 = vunpack.c.h.bf16 %v7536
      %v7562 = vunpack.c.l.bf16 %v7537
      %v7563 = vunpack.c.h.bf16 %v7537
      %v7564 = vunpack.c.l.bf16 %v7538
      %v7565 = vunpack.c.h.bf16 %v7538
      %v7566 = vunpack.c.l.bf16 %v7539
      %v7567 = vunpack.c.h.bf16 %v7539
      %v7568 = vunpack.c.l.bf16 %v7540
      %v7569 = vunpack.c.h.bf16 %v7540
      %v7570 = vunpack.c.l.bf16 %v7541
      %v7571 = vunpack.c.h.bf16 %v7541
      %v7572 = vunpack.c.l.bf16 %v7542
      %v7573 = vunpack.c.h.bf16 %v7542
      %v7574 = vunpack.c.l.bf16 %v7543
      %v7575 = vunpack.c.h.bf16 %v7543
      %v7576 = vunpack.c.l.bf16 %v7544
      %v7577 = vunpack.c.h.bf16 %v7544
      %v7578 = vunpack.c.l.bf16 %v7545
      %v7579 = vunpack.c.h.bf16 %v7545
      %v7580 = vunpack.c.l.bf16 %v7546
      %v7581 = vunpack.c.h.bf16 %v7546
      %v7582 = vunpack.c.l.bf16 %v7547
      %v7583 = vunpack.c.h.bf16 %v7547
      %v7584 = vunpack.c.l.bf16 %v7548
      %v7585 = vunpack.c.h.bf16 %v7548
      %v7586 = vunpack.c.l.bf16 %v7549
      %v7587 = vunpack.c.h.bf16 %v7549
      %v7588 = vunpack.c.l.bf16 %v7550
      %v7589 = vunpack.c.h.bf16 %v7550
      %v7590 = vunpack.c.l.bf16 %v7551
      %v7591 = vunpack.c.h.bf16 %v7551
      %v7592 = vunpack.c.l.bf16 %v7552
      %v7593 = vunpack.c.h.bf16 %v7552
      %v7594 = vunpack.c.l.bf16 %v7553
      %v7595 = vunpack.c.h.bf16 %v7553
      %v7596 = vunpack.c.l.bf16 %v7554
      %v7597 = vunpack.c.h.bf16 %v7554
      %v7598 = vunpack.c.l.bf16 %v7555
      %v7599 = vunpack.c.h.bf16 %v7555
      %v7600 = vunpack.c.l.bf16 %v7556
      %v7601 = vunpack.c.h.bf16 %v7556
      %v7602 = vunpack.c.l.bf16 %v7557
      %v7603 = vunpack.c.h.bf16 %v7557
      %v7604 = vunpack.c.l.bf16 %v7558
      %v7605 = vunpack.c.h.bf16 %v7558
      %v7606 = vunpack.c.l.bf16 %v7559
      %v7607 = vunpack.c.h.bf16 %v7559
      %v7608 = vmul.f32 %v7512, %v7560
      %v7609 = vmul.f32 %v7513, %v7561
      %v7610 = vmul.f32 %v7514, %v7562
      %v7611 = vmul.f32 %v7515, %v7563
      %v7612 = vmul.f32 %v7516, %v7564
      %v7613 = vmul.f32 %v7517, %v7565
      %v7614 = vmul.f32 %v7518, %v7566
      %v7615 = vmul.f32 %v7519, %v7567
      %v7616 = vmul.f32 %v7520, %v7568
      %v7617 = vmul.f32 %v7521, %v7569
      %v7618 = vmul.f32 %v7522, %v7570
      %v7619 = vmul.f32 %v7523, %v7571
      %v7620 = vmul.f32 %v7524, %v7572
      %v7621 = vmul.f32 %v7525, %v7573
      %v7622 = vmul.f32 %v7526, %v7574
      %v7623 = vmul.f32 %v7527, %v7575
      %v7624 = vmul.f32 %v7528, %v7576
      %v7625 = vmul.f32 %v7529, %v7577
      %v7626 = vmul.f32 %v7530, %v7578
      %v7627 = vmul.f32 %v7531, %v7579
      %v7628 = vmul.f32 %v7532, %v7580
      %v7629 = vmul.f32 %v7533, %v7581
      %v7630 = vmul.f32 %v7534, %v7582
      %v7631 = vmul.f32 %v7535, %v7583
      %v7632 = vmul.f32 %v7512, %v7584
      %v7633 = vmul.f32 %v7513, %v7585
      %v7634 = vmul.f32 %v7514, %v7586
      %v7635 = vmul.f32 %v7515, %v7587
      %v7636 = vmul.f32 %v7516, %v7588
      %v7637 = vmul.f32 %v7517, %v7589
      %v7638 = vmul.f32 %v7518, %v7590
      %v7639 = vmul.f32 %v7519, %v7591
      %v7640 = vmul.f32 %v7520, %v7592
      %v7641 = vmul.f32 %v7521, %v7593
      %v7642 = vmul.f32 %v7522, %v7594
      %v7643 = vmul.f32 %v7523, %v7595
      %v7644 = vmul.f32 %v7524, %v7596
      %v7645 = vmul.f32 %v7525, %v7597
      %v7646 = vmul.f32 %v7526, %v7598
      %v7647 = vmul.f32 %v7527, %v7599
      %v7648 = vmul.f32 %v7528, %v7600
      %v7649 = vmul.f32 %v7529, %v7601
      %v7650 = vmul.f32 %v7530, %v7602
      %v7651 = vmul.f32 %v7531, %v7603
      %v7652 = vmul.f32 %v7532, %v7604
      %v7653 = vmul.f32 %v7533, %v7605
      %v7654 = vmul.f32 %v7534, %v7606
      %v7655 = vmul.f32 %v7535, %v7607
      %v7656 = vadd.f32 %v7608, %v7609
      %7657 = vadd.xlane.f32.xlu0 %v7656
      %v7658 = vpop.xlane.xlu0 %7657
      %v7659 = vadd.f32 %v7610, %v7611
      %7660 = vadd.xlane.f32.xlu0 %v7659
      %v7661 = vpop.xlane.xlu0 %7660
      %v7662 = vadd.f32 %v7612, %v7613
      %7663 = vadd.xlane.f32.xlu0 %v7662
      %v7664 = vpop.xlane.xlu0 %7663
      %v7665 = vadd.f32 %v7614, %v7615
      %7666 = vadd.xlane.f32.xlu0 %v7665
      %v7667 = vpop.xlane.xlu0 %7666
      %v7668 = vadd.f32 %v7616, %v7617
      %7669 = vadd.xlane.f32.xlu0 %v7668
      %v7670 = vpop.xlane.xlu0 %7669
      %v7671 = vadd.f32 %v7618, %v7619
      %7672 = vadd.xlane.f32.xlu0 %v7671
      %v7673 = vpop.xlane.xlu0 %7672
      %v7674 = vadd.f32 %v7620, %v7621
      %7675 = vadd.xlane.f32.xlu0 %v7674
      %v7676 = vpop.xlane.xlu0 %7675
      %v7677 = vadd.f32 %v7622, %v7623
      %7678 = vadd.xlane.f32.xlu0 %v7677
      %v7679 = vpop.xlane.xlu0 %7678
      %v7680 = vadd.f32 %v7624, %v7625
      %7681 = vadd.xlane.f32.xlu0 %v7680
      %v7682 = vpop.xlane.xlu0 %7681
      %v7683 = vadd.f32 %v7626, %v7627
      %7684 = vadd.xlane.f32.xlu0 %v7683
      %v7685 = vpop.xlane.xlu0 %7684
      %v7686 = vadd.f32 %v7628, %v7629
      %7687 = vadd.xlane.f32.xlu0 %v7686
      %v7688 = vpop.xlane.xlu0 %7687
      %v7689 = vadd.f32 %v7630, %v7631
      %7690 = vadd.xlane.f32.xlu0 %v7689
      %v7691 = vpop.xlane.xlu0 %7690
      %v7692 = vadd.f32 %v7632, %v7633
      %7693 = vadd.xlane.f32.xlu0 %v7692
      %v7694 = vpop.xlane.xlu0 %7693
      %v7695 = vadd.f32 %v7634, %v7635
      %7696 = vadd.xlane.f32.xlu0 %v7695
      %v7697 = vpop.xlane.xlu0 %7696
      %v7698 = vadd.f32 %v7636, %v7637
      %7699 = vadd.xlane.f32.xlu0 %v7698
      %v7700 = vpop.xlane.xlu0 %7699
      %v7701 = vadd.f32 %v7638, %v7639
      %7702 = vadd.xlane.f32.xlu0 %v7701
      %v7703 = vpop.xlane.xlu0 %7702
      %v7704 = vadd.f32 %v7640, %v7641
      %7705 = vadd.xlane.f32.xlu0 %v7704
      %v7706 = vpop.xlane.xlu0 %7705
      %v7707 = vadd.f32 %v7642, %v7643
      %7708 = vadd.xlane.f32.xlu0 %v7707
      %v7709 = vpop.xlane.xlu0 %7708
      %v7710 = vadd.f32 %v7644, %v7645
      %7711 = vadd.xlane.f32.xlu0 %v7710
      %v7712 = vpop.xlane.xlu0 %7711
      %v7713 = vadd.f32 %v7646, %v7647
      %7714 = vadd.xlane.f32.xlu0 %v7713
      %v7715 = vpop.xlane.xlu0 %7714
      %v7716 = vadd.f32 %v7648, %v7649
      %7717 = vadd.xlane.f32.xlu0 %v7716
      %v7718 = vpop.xlane.xlu0 %7717
      %v7719 = vadd.f32 %v7650, %v7651
      %7720 = vadd.xlane.f32.xlu0 %v7719
      %v7721 = vpop.xlane.xlu0 %7720
      %v7722 = vadd.f32 %v7652, %v7653
      %7723 = vadd.xlane.f32.xlu0 %v7722
      %v7724 = vpop.xlane.xlu0 %7723
      %v7725 = vadd.f32 %v7654, %v7655
      %7726 = vadd.xlane.f32.xlu0 %v7725
      %v7727 = vpop.xlane.xlu0 %7726
      %v7728 = vadd.f32 %v7658, %v7661
      %v7729 = vadd.f32 %v7728, %v7664
      %v7730 = vadd.f32 %v7729, %v7667
      %v7731 = vrot.slane %v7730, 4
      %v7732 = vadd.f32 %v7730, %v7731
      %v7733 = vrot.slane %v7732, 2
      %v7734 = vadd.f32 %v7732, %v7733
      %v7735 = vrot.slane %v7734, 1
      %v7736 = vadd.f32 %v7734, %v7735
      %v7737 = vadd.f32 %v7670, %v7673
      %v7738 = vadd.f32 %v7737, %v7676
      %v7739 = vadd.f32 %v7738, %v7679
      %v7740 = vrot.slane %v7739, 4
      %v7741 = vadd.f32 %v7739, %v7740
      %v7742 = vrot.slane %v7741, 2
      %v7743 = vadd.f32 %v7741, %v7742
      %v7744 = vrot.slane %v7743, 1
      %v7745 = vadd.f32 %v7743, %v7744
      %v7746 = vadd.f32 %v7682, %v7685
      %v7747 = vadd.f32 %v7746, %v7688
      %v7748 = vadd.f32 %v7747, %v7691
      %v7749 = vrot.slane %v7748, 4
      %v7750 = vadd.f32 %v7748, %v7749
      %v7751 = vrot.slane %v7750, 2
      %v7752 = vadd.f32 %v7750, %v7751
      %v7753 = vrot.slane %v7752, 1
      %v7754 = vadd.f32 %v7752, %v7753
      %v7755 = vadd.f32 %v7694, %v7697
      %v7756 = vadd.f32 %v7755, %v7700
      %v7757 = vadd.f32 %v7756, %v7703
      %v7758 = vrot.slane %v7757, 4
      %v7759 = vadd.f32 %v7757, %v7758
      %v7760 = vrot.slane %v7759, 2
      %v7761 = vadd.f32 %v7759, %v7760
      %v7762 = vrot.slane %v7761, 1
      %v7763 = vadd.f32 %v7761, %v7762
      %v7764 = vadd.f32 %v7706, %v7709
      %v7765 = vadd.f32 %v7764, %v7712
      %v7766 = vadd.f32 %v7765, %v7715
      %v7767 = vrot.slane %v7766, 4
      %v7768 = vadd.f32 %v7766, %v7767
      %v7769 = vrot.slane %v7768, 2
      %v7770 = vadd.f32 %v7768, %v7769
      %v7771 = vrot.slane %v7770, 1
      %v7772 = vadd.f32 %v7770, %v7771
      %v7773 = vadd.f32 %v7718, %v7721
      %v7774 = vadd.f32 %v7773, %v7724
      %v7775 = vadd.f32 %v7774, %v7727
      %v7776 = vrot.slane %v7775, 4
      %v7777 = vadd.f32 %v7775, %v7776
      %v7778 = vrot.slane %v7777, 2
      %v7779 = vadd.f32 %v7777, %v7778
      %v7780 = vrot.slane %v7779, 1
      %v7781 = vadd.f32 %v7779, %v7780
      %v7782 = vadd.f32 %v7736, %v7745
      %v7783 = vadd.f32 %v7782, %v7754
      %v7784 = vadd.f32 %v7763, %v7772
      %v7785 = vadd.f32 %v7784, %v7781
      %v7786 = vld [vmem:[%s11] sm:$0x3]
      %v7788 = vrot.slane %v7786, 1
      %v7791 = vadd.f32 %v7783, %v7786
      %v7792 = vadd.f32 %v7785, %v7788
      %v7793 = vmax.f32 %v7791, %v7792
      %v7794 = vsub.f32 %v7791, %v7793
      %v7795 = vmul.f32 %v7794, 1.442695
      %v7796 = vpow.pop %v7795
      %v7797 = vsub.f32 %v7792, %v7793
      %v7798 = vmul.f32 %v7797, 1.442695
      %v7799 = vpow.pop %v7798
      %v7800 = vadd.f32 %v7796, %v7799
      %v7801 = vrcp.pop %v7800
      %v7802 = vmul.f32 1.0, %v7801
      %v7803 = vmul.f32 %v7796, %v7802
      %v7804 = vmul.f32 %v7799, %v7802
      %v7805 = vlaneseq
      %v7806 = vand.u32 %v7805, 127
      %vm7807 = vcmp.eq.s32.totalorder %v7806, 0
      %vm7808 = vcmp.eq.s32.totalorder %v7806, 1
      %s7810 = vtos %v7804
      %v7811 = vstv %s7810
      %v7813 = vsel %vm7808, %v7811, 0.0
      %s7815 = vtos %v7803
      %v7816 = vstv %s7815
      %v7818 = vsel %vm7807, %v7816, %v7813
      %7819 = vst [vmem:[%s411] sm:$0xff] %v7818
      %p7820 = scmp.lt.s32.totalorder %s23, 1
      %s7821 = scalar_select %p7820, %s23, 1
      %s7822 = smul.addr %s7821, 8
      %s7823 = scalar_lea.vmem %s12, %s7822
      // Predicated region
      $region69: #{net_forward.1} parent=67 // pred_check
        %p7824 = pneg %p298
      $region70: #{net_forward.1} parent=67 // pred_check_branch
        %7826 = sbr.rel (%p7824) target = $region72
      $region71: #{net_forward.1} parent=67 // pred_region
        _
      $region72: #{net_forward.1} parent=67 // pred_fallthru
        _
    $region68: #{net_forward.1} parent=5 // pred_fallthru
      _
    %p7827 = scmp.le.s32.totalorder 2, %s18
    // Predicated region
    $region73: #{net_forward.1} parent=5 // pred_check
      %p7828 = pneg %p7827
    $region74: #{net_forward.1} parent=5 // pred_check_branch
      %7830 = sbr.rel (%p7828) target = $region76
    $region75: #{net_forward.1} parent=5 // pred_region
      %s7831 = ssub.s32 %s18, 2
      // Predicated region
      $region77: #{net_forward.1} parent=75 // pred_check
        %p7832 = pneg %p304
      $region78: #{net_forward.1} parent=75 // pred_check_branch
        %7834 = sbr.rel (%p7832) target = $region80
      $region79: #{net_forward.1} parent=75 // pred_region
        %p7835 = scmp.lt.s32.totalorder %s24, 1
        %s7836 = scalar_select %p7835, %s24, 1
        %s7837 = smul.addr %s7836, 8
        %s7838 = scalar_lea.vmem %s12, %s7837
      $region80: #{net_forward.1} parent=75 // pred_fallthru
        _
    $region76: #{net_forward.1} parent=5 // pred_fallthru
      _
  $region6: #{net_forward.1} parent=0 // loop_footer
    %s22 = sadd.s32 1, %s18
  $region7: #{net_forward.1} parent=0 // loop_footer_branch
    %17 = sbr.rel target = $region3
  $region8: #{net_forward.1} parent=0 // loop_exit
    _

</llo_original>
